<compile_context>
chip_gen: v6e
topology: v6e:2x2x1
jax: 0.10.0
libtpu: 0.0.40
codegen_flags: <defaults>
</compile_context>

<pallas_src>
import functools

import jax
import jax.numpy as jnp
from jax import lax
from jax.experimental import pallas as pl
from jax.experimental.pallas import tpu as pltpu

SCORE_LANES = 128  # lane-dense width of the packed attention-score projection


# ------------------------------------------------------------------ kernel 1 ---
# Fused encoder: x1 = ReLU(x@W0+b0); h_cat = x1@[Ws|Wt] + [bs|bt];
# scores = h_cat @ A_pack  (columns: [src_s, src_t, dst_s, dst_t, 0...]).

def _encoder_kernel(x_ref, w0_ref, b0_ref, wst_ref, bst_ref, apack_ref,
                    h_ref, sc_ref):
    x1 = jnp.dot(x_ref[...], w0_ref[...], preferred_element_type=jnp.float32)
    x1 = jnp.maximum(x1 + b0_ref[...], 0.0)
    h = jnp.dot(x1, wst_ref[...], preferred_element_type=jnp.float32) + bst_ref[...]
    # Attention-score projection from the f32 h (before the bf16 storage cast).
    sc_ref[...] = jnp.dot(h, apack_ref[...],
                          preferred_element_type=jnp.float32).astype(sc_ref.dtype)
    h_ref[...] = h.astype(h_ref.dtype)   # bf16 storage: halves kernel-2's re-read stream


def encoder_fused(x, w0, b0, w_st, b_st, a_pack, *, tm):
    n, f = x.shape
    hdim = w0.shape[1]
    h2 = w_st.shape[1]
    return pl.pallas_call(
        _encoder_kernel,
        out_shape=(jax.ShapeDtypeStruct((n, h2), jnp.bfloat16),
                   jax.ShapeDtypeStruct((n, SCORE_LANES), jnp.float32)),
        grid=(n // tm,),
        in_specs=[
            pl.BlockSpec((tm, f), lambda i: (i, 0)),
            pl.BlockSpec((f, hdim), lambda i: (0, 0)),
            pl.BlockSpec((1, hdim), lambda i: (0, 0)),
            pl.BlockSpec((hdim, h2), lambda i: (0, 0)),
            pl.BlockSpec((1, h2), lambda i: (0, 0)),
            pl.BlockSpec((h2, SCORE_LANES), lambda i: (0, 0)),
        ],
        out_specs=(pl.BlockSpec((tm, h2), lambda i: (i, 0)),
                   pl.BlockSpec((tm, SCORE_LANES), lambda i: (i, 0))),
        compiler_params=pltpu.CompilerParams(dimension_semantics=("parallel",)),
    )(x, w0, b0, w_st, b_st, a_pack)


# ------------------------------------------------------------------ kernel 2 ---
# Both-direction GAT aggregation with online (flash-style) masked softmax.
# Grid: (row tiles, neighbor tiles); neighbor axis is the reduction axis (last).

def _attention_kernel(h_nbr_ref, sc_row_ref, dst_ref, mp_ref,
                      s_ref, t_ref,
                      m_s, l_s, acc_s, m_t, l_t, acc_t, *, d, slope):
    k = pl.program_id(1)

    @pl.when(k == 0)
    def _():
        neg = jnp.full(m_s.shape, -jnp.inf, jnp.float32)
        m_s[...] = neg
        m_t[...] = neg
        l_s[...] = jnp.zeros(l_s.shape, jnp.float32)
        l_t[...] = jnp.zeros(l_t.shape, jnp.float32)
        acc_s[...] = jnp.zeros(acc_s.shape, jnp.float32)
        acc_t[...] = jnp.zeros(acc_t.shape, jnp.float32)

    h_nbr = h_nbr_ref[...]                 # (TK, 2D) bf16 neighbor features [h_s | h_t]
    hs_nbr = h_nbr[:, :d]
    ht_nbr = h_nbr[:, d:]
    sc = sc_row_ref[...]                   # (TM, 128) f32: cols 0/1 = src_s / src_t per query row
    dst = dst_ref[...]                     # (8,  TK)  f32: rows 0/1 = dst_s / dst_t per neighbor
    m_pack = mp_ref[...].astype(jnp.int32)  # (TM, TK) packed int8 bitmask: bit0 = out, bit1 = in

    def update(src_col, dst_row, mask, h_n, m_r, l_r, a_r):
        maskf = mask.astype(jnp.float32)
        e = src_col + dst_row                         # (TM, TK) VPU broadcast add
        e = jnp.maximum(e, slope * e)                 # LeakyReLU(0.2): one mul + one max
        e = jnp.where(mask, e, -1e9)                  # guard the running max
        m_new = jnp.maximum(m_r[...], jnp.max(e, axis=-1, keepdims=True))
        scale = jnp.exp(m_r[...] - m_new)
        p = jnp.exp(e - m_new) * maskf                # multiplicative mask: exact zero on masked entries
        l_r[...] = scale * l_r[...] + jnp.sum(p, axis=-1, keepdims=True)
        # bf16 MXU operands, f32 accumulation (flash-attention precision trade).
        a_r[...] = scale * a_r[...] + jnp.dot(p.astype(jnp.bfloat16), h_n,
                                              preferred_element_type=jnp.float32)
        m_r[...] = m_new

    update(sc[:, 0:1], dst[0:1, :], (m_pack & 1) > 0, hs_nbr, m_s, l_s, acc_s)
    update(sc[:, 1:2], dst[1:2, :], (m_pack & 2) > 0, ht_nbr, m_t, l_t, acc_t)

    @pl.when(k == pl.num_programs(1) - 1)
    def _():
        def finish(a_r, l_r, o_ref):
            inv = pl.reciprocal(l_r[...], approx=True)   # EUP slot
            inv = inv * (2.0 - l_r[...] * inv)           # one Newton step -> f32-accurate
            o_ref[...] = jnp.maximum(a_r[...] * inv, 0.0).astype(o_ref.dtype)
        finish(acc_s, l_s, s_ref)
        finish(acc_t, l_t, t_ref)


def attention_fused(h_cat, scores, dst_rows, mask_pack, *, d, tm, tk, slope=0.2):
    n = h_cat.shape[0]
    kernel = functools.partial(_attention_kernel, d=d, slope=slope)
    return pl.pallas_call(
        kernel,
        out_shape=(jax.ShapeDtypeStruct((n, d), jnp.bfloat16),
                   jax.ShapeDtypeStruct((n, d), jnp.bfloat16)),
        grid=(n // tm, n // tk),
        in_specs=[
            pl.BlockSpec((tk, 2 * d), lambda i, k: (k, 0)),        # neighbor h tile (bf16)
            pl.BlockSpec((tm, SCORE_LANES), lambda i, k: (i, 0)),  # src scores (row tile)
            pl.BlockSpec((8, tk), lambda i, k: (0, k)),            # dst scores (lane-major)
            pl.BlockSpec((tm, tk), lambda i, k: (i, k)),           # packed int8 bitmask tile
        ],
        out_specs=(pl.BlockSpec((tm, d), lambda i, k: (i, 0)),
                   pl.BlockSpec((tm, d), lambda i, k: (i, 0))),
        scratch_shapes=[
            pltpu.VMEM((tm, 1), jnp.float32),   # m_s
            pltpu.VMEM((tm, 1), jnp.float32),   # l_s
            pltpu.VMEM((tm, d), jnp.float32),   # acc_s
            pltpu.VMEM((tm, 1), jnp.float32),   # m_t
            pltpu.VMEM((tm, 1), jnp.float32),   # l_t
            pltpu.VMEM((tm, d), jnp.float32),   # acc_t
        ],
        compiler_params=pltpu.CompilerParams(
            dimension_semantics=("parallel", "arbitrary")),
    )(h_cat, scores, dst_rows, mask_pack)


# ------------------------------------------------------------------ kernel 3 ---
# Decoder: adj = sigmoid(s @ t^T). s/t tiles are bf16 (MXU-native); the logit
# accumulation and sigmoid output stay f32.

def _decoder_kernel(s_ref, t_ref, o_ref):
    logits = lax.dot_general(s_ref[...], t_ref[...], (((1,), (1,)), ((), ())),
                             preferred_element_type=jnp.float32)
    o_ref[...] = jax.nn.sigmoid(logits).astype(o_ref.dtype)


def decode_all(s, t, *, tm, tn):
    n, d = s.shape
    return pl.pallas_call(
        _decoder_kernel,
        out_shape=jax.ShapeDtypeStruct((n, n), jnp.float32),
        grid=(n // tm, n // tn),
        in_specs=[pl.BlockSpec((tm, d), lambda i, j: (i, 0)),
                  pl.BlockSpec((tn, d), lambda i, j: (j, 0))],
        out_specs=pl.BlockSpec((tm, tn), lambda i, j: (i, j)),
        compiler_params=pltpu.CompilerParams(
            dimension_semantics=("parallel", "parallel")),
    )(s, t)


# --------------------------------------------------------------------- glue ---

def build_mask_pack(edge_index, n):
    """Packed int8 bitmask (with self loops): bit0 = out-neighbor, bit1 = in-neighbor."""
    src, dst = edge_index[0], edge_index[1]
    adj = jnp.zeros((n, n), jnp.bool_).at[src, dst].set(True)
    eye = jnp.eye(n, dtype=jnp.bool_)
    mask_out = (adj | eye).astype(jnp.int8)       # row i: out-neighbors of i (+ self)
    mask_in = (adj.T | eye).astype(jnp.int8)      # row i: in-neighbors of i (+ self)
    return mask_out | (mask_in << 1)


def init_params(key, f_in, hidden, out_dim):
    ks = jax.random.split(key, 10)
    sc = 0.1
    return {
        "w0": sc * jax.random.normal(ks[0], (f_in, hidden), jnp.float32),
        "b0": sc * jax.random.normal(ks[1], (1, hidden), jnp.float32),
        "w_s": sc * jax.random.normal(ks[2], (hidden, out_dim), jnp.float32),
        "b_s": sc * jax.random.normal(ks[3], (1, out_dim), jnp.float32),
        "w_t": sc * jax.random.normal(ks[4], (hidden, out_dim), jnp.float32),
        "b_t": sc * jax.random.normal(ks[5], (1, out_dim), jnp.float32),
        "a_src_s": sc * jax.random.normal(ks[6], (out_dim, 1), jnp.float32),
        "a_dst_s": sc * jax.random.normal(ks[7], (out_dim, 1), jnp.float32),
        "a_src_t": sc * jax.random.normal(ks[8], (out_dim, 1), jnp.float32),
        "a_dst_t": sc * jax.random.normal(ks[9], (out_dim, 1), jnp.float32),
    }


def attention_digae_forward(params, x, mask_pack, *, tm=512, tk=256, tn=512):
    """tm: row tile (encoder / attention / decoder rows); tk: attention neighbor
    tile (MXU contraction depth); tn: decoder column tile."""
    n = x.shape[0]
    d = params["w_s"].shape[1]

    tm = min(tm, n)
    tk = min(tk, n)
    tn = min(tn, n)
    assert n % tm == 0 and n % tk == 0 and n % tn == 0 and n % 8 == 0, \
        "node count must be a multiple of the tile sizes (pad upstream otherwise)"

    # Pack both direction linears and all four attention vectors (param plumbing).
    w_st = jnp.concatenate([params["w_s"], params["w_t"]], axis=1)      # (H, 2D)
    b_st = jnp.concatenate([params["b_s"], params["b_t"]], axis=1)      # (1, 2D)
    a_pack = jnp.zeros((2 * d, SCORE_LANES), jnp.float32)
    a_pack = a_pack.at[:d, 0].set(params["a_src_s"][:, 0])
    a_pack = a_pack.at[d:, 1].set(params["a_src_t"][:, 0])
    a_pack = a_pack.at[:d, 2].set(params["a_dst_s"][:, 0])
    a_pack = a_pack.at[d:, 3].set(params["a_dst_t"][:, 0])

    # Kernel 1: fused encoder (x1 + both linears + packed score projection).
    h_cat, scores = encoder_fused(x, params["w0"], params["b0"],
                                  w_st, b_st, a_pack, tm=tm)

    # Tiny lane-major repack of the dst scores (avoids any rank-1 broadcast matmul
    # inside the attention kernel): rows 0/1 = dst_s / dst_t.
    dst_rows = jnp.zeros((8, n), jnp.float32).at[0:2, :].set(scores[:, 2:4].T)

    # Kernel 2: both-direction attention aggregation with online masked softmax.
    s, t = attention_fused(h_cat, scores, dst_rows, mask_pack, d=d, tm=tm, tk=tk)

    # Kernel 3: decoder.forward_all
    return decode_all(s, t, tm=tm, tn=tn)


# -------------------------------------------------------- pure-JAX reference ---

def _reference_forward(params, x, mask_pack):
    mask_out = (mask_pack & 1) > 0
    mask_in = (mask_pack & 2) > 0

    x1 = jnp.maximum(x @ params["w0"] + params["b0"], 0.0)
    h_s = x1 @ params["w_s"] + params["b_s"]
    h_t = x1 @ params["w_t"] + params["b_t"]

    def agg(h, a_src, a_dst, mask):
        src = h @ a_src                      # (N, 1)
        dst = h @ a_dst                      # (N, 1)
        e = src + dst.T
        e = jnp.where(e > 0, e, 0.2 * e)
        e = jnp.where(mask, e, -1e9)
        m = jnp.max(e, axis=-1, keepdims=True)
        p = jnp.exp(e - m)
        alpha = p / jnp.sum(p, axis=-1, keepdims=True)
        return jnp.maximum(alpha @ h, 0.0)

    s = agg(h_s, params["a_src_s"], params["a_dst_s"], mask_out)
    t = agg(h_t, params["a_src_t"], params["a_dst_t"], mask_in)
    return jax.nn.sigmoid(s @ t.T)


# --------------------------------------------------------------------- main ---

if __name__ == "__main__":
    N, F_IN, HIDDEN, OUT = 512, 64, 128, 128   # lane-dense feature dims
    TM, TK, TN = 256, 256, 256                 # 2x2 tile grids -> even "parallel" tiles (v7x)
    N_EDGES = 2048

    key = jax.random.PRNGKey(0)
    k_x, k_e, k_p = jax.random.split(key, 3)

    x = jax.random.normal(k_x, (N, F_IN), jnp.float32)
    edge_index = jax.random.randint(k_e, (2, N_EDGES), 0, N, dtype=jnp.int32)
    params = init_params(k_p, F_IN, HIDDEN, OUT)
    mask_pack = build_mask_pack(edge_index, N)

    fwd = jax.jit(functools.partial(attention_digae_forward, tm=TM, tk=TK, tn=TN))
    adj_pred = fwd(params, x, mask_pack)
    adj_pred = jax.block_until_ready(adj_pred)

    ref = _reference_forward(params, x, mask_pack)
    assert adj_pred.shape == (N, N)
    assert bool(jnp.all(jnp.isfinite(adj_pred)))
    # Tolerance covers bf16 MXU operands (p@h, s@t^T), bf16 h_cat / s / t storage and
    # the approx-reciprocal; accumulation is f32 and the sigmoid output is bounded in
    # [0, 1], so the absolute drift stays a few percent at most.
    assert bool(jnp.allclose(adj_pred, ref, atol=4e-2, rtol=4e-2))

    print("KERNEL_OK")
</pallas_src>

<mosaic_0001>
module attributes {stable_mosaic.version = 11 : i64} {
  func.func @_encoder_kernel(%arg0: i32, %arg1: memref<256x64xf32, #tpu.memory_space<vmem>>, %arg2: memref<64x128xf32, #tpu.memory_space<vmem>>, %arg3: memref<1x128xf32, #tpu.memory_space<vmem>>, %arg4: memref<128x256xf32, #tpu.memory_space<vmem>>, %arg5: memref<1x256xf32, #tpu.memory_space<vmem>>, %arg6: memref<256x128xf32, #tpu.memory_space<vmem>>, %arg7: memref<256x256xbf16, #tpu.memory_space<vmem>>, %arg8: memref<256x128xf32, #tpu.memory_space<vmem>>) attributes {dimension_semantics = [#tpu.dimension_semantics<parallel>], iteration_bounds = array<i64: 2>, scalar_prefetch = 0 : i64, scratch_operands = 0 : i64, tpu.core_type = #tpu.core_type<tc>, window_params = [{transform_indices = @transform_0, window_bounds = array<i64: 256, 64>}, {pipeline_mode = #tpu.pipeline_mode<synchronous>, transform_indices = @transform_1, window_bounds = array<i64: 64, 128>}, {pipeline_mode = #tpu.pipeline_mode<synchronous>, transform_indices = @transform_2, window_bounds = array<i64: 1, 128>}, {pipeline_mode = #tpu.pipeline_mode<synchronous>, transform_indices = @transform_3, window_bounds = array<i64: 128, 256>}, {pipeline_mode = #tpu.pipeline_mode<synchronous>, transform_indices = @transform_4, window_bounds = array<i64: 1, 256>}, {pipeline_mode = #tpu.pipeline_mode<synchronous>, transform_indices = @transform_5, window_bounds = array<i64: 256, 128>}, {transform_indices = @transform_6, window_bounds = array<i64: 256, 256>}, {transform_indices = @transform_7, window_bounds = array<i64: 256, 128>}]} {
    %c0 = arith.constant 0 : index
    %c0_0 = arith.constant 0 : index
    %0 = vector.load %arg1[%c0, %c0_0] : memref<256x64xf32, #tpu.memory_space<vmem>>, vector<256x64xf32>
    %c0_1 = arith.constant 0 : index
    %c0_2 = arith.constant 0 : index
    %1 = vector.load %arg2[%c0_1, %c0_2] : memref<64x128xf32, #tpu.memory_space<vmem>>, vector<64x128xf32>
    %cst = arith.constant dense<0.000000e+00> : vector<256x128xf32>
    %2 = tpu.matmul %0, %1, %cst {dimension_numbers = #tpu.dot_dimension_numbers<[1], [0], [0], [1], [0, 0, 1, 1], [], []>} : vector<256x64xf32>, vector<64x128xf32>, vector<256x128xf32> -> vector<256x128xf32>
    %c0_3 = arith.constant 0 : index
    %c0_4 = arith.constant 0 : index
    %3 = vector.load %arg3[%c0_3, %c0_4] : memref<1x128xf32, #tpu.memory_space<vmem>>, vector<1x128xf32>
    %4 = vector.broadcast %3 : vector<1x128xf32> to vector<256x128xf32>
    %5 = arith.addf %2, %4 : vector<256x128xf32>
    %cst_5 = arith.constant 0.000000e+00 : f32
    %6 = vector.broadcast %cst_5 : f32 to vector<256x128xf32>
    %7 = arith.maximumf %5, %6 : vector<256x128xf32>
    %c0_6 = arith.constant 0 : index
    %c0_7 = arith.constant 0 : index
    %8 = vector.load %arg4[%c0_6, %c0_7] : memref<128x256xf32, #tpu.memory_space<vmem>>, vector<128x256xf32>
    %cst_8 = arith.constant dense<0.000000e+00> : vector<256x256xf32>
    %9 = tpu.matmul %7, %8, %cst_8 {dimension_numbers = #tpu.dot_dimension_numbers<[1], [0], [0], [1], [0, 0, 1, 1], [], []>} : vector<256x128xf32>, vector<128x256xf32>, vector<256x256xf32> -> vector<256x256xf32>
    %c0_9 = arith.constant 0 : index
    %c0_10 = arith.constant 0 : index
    %10 = vector.load %arg5[%c0_9, %c0_10] : memref<1x256xf32, #tpu.memory_space<vmem>>, vector<1x256xf32>
    %11 = vector.broadcast %10 : vector<1x256xf32> to vector<256x256xf32>
    %12 = arith.addf %9, %11 : vector<256x256xf32>
    %c0_11 = arith.constant 0 : index
    %c0_12 = arith.constant 0 : index
    %13 = vector.load %arg6[%c0_11, %c0_12] : memref<256x128xf32, #tpu.memory_space<vmem>>, vector<256x128xf32>
    %cst_13 = arith.constant dense<0.000000e+00> : vector<256x128xf32>
    %14 = tpu.matmul %12, %13, %cst_13 {dimension_numbers = #tpu.dot_dimension_numbers<[1], [0], [0], [1], [0, 0, 1, 1], [], []>} : vector<256x256xf32>, vector<256x128xf32>, vector<256x128xf32> -> vector<256x128xf32>
    %c0_14 = arith.constant 0 : index
    %c0_15 = arith.constant 0 : index
    %15 = vector.load %arg8[%c0_14, %c0_15] : memref<256x128xf32, #tpu.memory_space<vmem>>, vector<256x128xf32>
    tpu.vector_store %arg8[%c0_14, %c0_15], %14 {strides = array<i32>} : memref<256x128xf32, #tpu.memory_space<vmem>>, vector<256x128xf32>,
    %16 = arith.truncf %12 : vector<256x256xf32> to vector<256x256xbf16>
    %c0_16 = arith.constant 0 : index
    %c0_17 = arith.constant 0 : index
    %17 = vector.load %arg7[%c0_16, %c0_17] : memref<256x256xbf16, #tpu.memory_space<vmem>>, vector<256x256xbf16>
    tpu.vector_store %arg7[%c0_16, %c0_17], %16 {strides = array<i32>} : memref<256x256xbf16, #tpu.memory_space<vmem>>, vector<256x256xbf16>,
    return
  }
  func.func @transform_0(%arg0: i32) -> (i32, i32) {
    %c0_i32 = arith.constant 0 : i32
    %c0_i32_0 = arith.constant 0 : i32
    return %arg0, %c0_i32 : i32, i32
  }
  func.func @transform_1(%arg0: i32) -> (i32, i32) {
    %c0_i32 = arith.constant 0 : i32
    %c0_i32_0 = arith.constant 0 : i32
    %c0_i32_1 = arith.constant 0 : i32
    return %c0_i32, %c0_i32_0 : i32, i32
  }
  func.func @transform_2(%arg0: i32) -> (i32, i32) {
    %c0_i32 = arith.constant 0 : i32
    %c0_i32_0 = arith.constant 0 : i32
    %c0_i32_1 = arith.constant 0 : i32
    return %c0_i32, %c0_i32_0 : i32, i32
  }
  func.func @transform_3(%arg0: i32) -> (i32, i32) {
    %c0_i32 = arith.constant 0 : i32
    %c0_i32_0 = arith.constant 0 : i32
    %c0_i32_1 = arith.constant 0 : i32
    return %c0_i32, %c0_i32_0 : i32, i32
  }
  func.func @transform_4(%arg0: i32) -> (i32, i32) {
    %c0_i32 = arith.constant 0 : i32
    %c0_i32_0 = arith.constant 0 : i32
    %c0_i32_1 = arith.constant 0 : i32
    return %c0_i32, %c0_i32_0 : i32, i32
  }
  func.func @transform_5(%arg0: i32) -> (i32, i32) {
    %c0_i32 = arith.constant 0 : i32
    %c0_i32_0 = arith.constant 0 : i32
    %c0_i32_1 = arith.constant 0 : i32
    return %c0_i32, %c0_i32_0 : i32, i32
  }
  func.func @transform_6(%arg0: i32) -> (i32, i32) {
    %c0_i32 = arith.constant 0 : i32
    %c0_i32_0 = arith.constant 0 : i32
    return %arg0, %c0_i32 : i32, i32
  }
  func.func @transform_7(%arg0: i32) -> (i32, i32) {
    %c0_i32 = arith.constant 0 : i32
    %c0_i32_0 = arith.constant 0 : i32
    return %arg0, %c0_i32 : i32, i32
  }
}

module attributes {stable_mosaic.version = 11 : i64} {
  func.func @_decoder_kernel(%arg0: i32, %arg1: i32, %arg2: memref<256x128xbf16, #tpu.memory_space<vmem>>, %arg3: memref<256x128xbf16, #tpu.memory_space<vmem>>, %arg4: memref<256x256xf32, #tpu.memory_space<vmem>>) attributes {dimension_semantics = [#tpu.dimension_semantics<parallel>, #tpu.dimension_semantics<parallel>], iteration_bounds = array<i64: 2, 2>, scalar_prefetch = 0 : i64, scratch_operands = 0 : i64, tpu.core_type = #tpu.core_type<tc>, window_params = [{transform_indices = @transform_0, window_bounds = array<i64: 256, 128>}, {transform_indices = @transform_1, window_bounds = array<i64: 256, 128>}, {transform_indices = @transform_2, window_bounds = array<i64: 256, 256>}]} {
    %c0 = arith.constant 0 : index
    %c0_0 = arith.constant 0 : index
    %0 = vector.load %arg2[%c0, %c0_0] : memref<256x128xbf16, #tpu.memory_space<vmem>>, vector<256x128xbf16>
    %c0_1 = arith.constant 0 : index
    %c0_2 = arith.constant 0 : index
    %1 = vector.load %arg3[%c0_1, %c0_2] : memref<256x128xbf16, #tpu.memory_space<vmem>>, vector<256x128xbf16>
    %cst = arith.constant dense<0.000000e+00> : vector<256x256xf32>
    %2 = tpu.matmul %0, %1, %cst {dimension_numbers = #tpu.dot_dimension_numbers<[1], [1], [0], [0], [0, 0, 1, 0], [], []>} : vector<256x128xbf16>, vector<256x128xbf16>, vector<256x256xf32> -> vector<256x256xf32>
    %3 = arith.negf %2 : vector<256x256xf32>
    %4 = math.exp %3 : vector<256x256xf32>
    %cst_3 = arith.constant 1.000000e+00 : f32
    %5 = vector.broadcast %cst_3 : f32 to vector<256x256xf32>
    %6 = arith.addf %5, %4 : vector<256x256xf32>
    %7 = arith.divf %5, %6 : vector<256x256xf32>
    %c0_4 = arith.constant 0 : index
    %c0_5 = arith.constant 0 : index
    %8 = vector.load %arg4[%c0_4, %c0_5] : memref<256x256xf32, #tpu.memory_space<vmem>>, vector<256x256xf32>
    tpu.vector_store %arg4[%c0_4, %c0_5], %7 {strides = array<i32>} : memref<256x256xf32, #tpu.memory_space<vmem>>, vector<256x256xf32>,
    return
  }
  func.func @transform_0(%arg0: i32, %arg1: i32) -> (i32, i32) {
    %c0_i32 = arith.constant 0 : i32
    %c0_i32_0 = arith.constant 0 : i32
    return %arg0, %c0_i32 : i32, i32
  }
  func.func @transform_1(%arg0: i32, %arg1: i32) -> (i32, i32) {
    %c0_i32 = arith.constant 0 : i32
    %c0_i32_0 = arith.constant 0 : i32
    return %arg1, %c0_i32 : i32, i32
  }
  func.func @transform_2(%arg0: i32, %arg1: i32) -> (i32, i32) {
    %c0_i32 = arith.constant 0 : i32
    return %arg0, %arg1 : i32, i32
  }
}

module attributes {stable_mosaic.version = 11 : i64} {
  func.func @_attention_kernel(%arg0: i32, %arg1: i32, %arg2: memref<256x256xbf16, #tpu.memory_space<vmem>>, %arg3: memref<256x128xf32, #tpu.memory_space<vmem>>, %arg4: memref<8x256xf32, #tpu.memory_space<vmem>>, %arg5: memref<256x256xi8, #tpu.memory_space<vmem>>, %arg6: memref<256x128xbf16, #tpu.memory_space<vmem>>, %arg7: memref<256x128xbf16, #tpu.memory_space<vmem>>, %arg8: memref<256x1xf32, #tpu.memory_space<vmem>>, %arg9: memref<256x1xf32, #tpu.memory_space<vmem>>, %arg10: memref<256x128xf32, #tpu.memory_space<vmem>>, %arg11: memref<256x1xf32, #tpu.memory_space<vmem>>, %arg12: memref<256x1xf32, #tpu.memory_space<vmem>>, %arg13: memref<256x128xf32, #tpu.memory_space<vmem>>) attributes {dimension_semantics = [#tpu.dimension_semantics<parallel>, #tpu.dimension_semantics<arbitrary>], iteration_bounds = array<i64: 2, 2>, scalar_prefetch = 0 : i64, scratch_operands = 6 : i64, tpu.core_type = #tpu.core_type<tc>, window_params = [{transform_indices = @transform_0, window_bounds = array<i64: 256, 256>}, {transform_indices = @transform_1, window_bounds = array<i64: 256, 128>}, {transform_indices = @transform_2, window_bounds = array<i64: 8, 256>}, {transform_indices = @transform_3, window_bounds = array<i64: 256, 256>}, {transform_indices = @transform_4, window_bounds = array<i64: 256, 128>}, {transform_indices = @transform_5, window_bounds = array<i64: 256, 128>}]} {
    %c0_i32 = arith.constant 0 : i32
    %0 = arith.cmpi eq, %arg1, %c0_i32 : i32
    %1 = arith.extui %0 : i1 to i32
    %c0_i32_0 = arith.constant 0 : i32
    %2 = arith.cmpi ne, %1, %c0_i32_0 : i32
    scf.if %2 {
      %cst_49 = arith.constant 0xFF800000 : f32
      %95 = vector.broadcast %cst_49 : f32 to vector<256x1xf32>
      %c0_50 = arith.constant 0 : index
      %c0_51 = arith.constant 0 : index
      %96 = vector.load %arg8[%c0_50, %c0_51] : memref<256x1xf32, #tpu.memory_space<vmem>>, vector<256x1xf32>
      tpu.vector_store %arg8[%c0_50, %c0_51], %95 {strides = array<i32>} : memref<256x1xf32, #tpu.memory_space<vmem>>, vector<256x1xf32>,
      %c0_52 = arith.constant 0 : index
      %c0_53 = arith.constant 0 : index
      %97 = vector.load %arg11[%c0_52, %c0_53] : memref<256x1xf32, #tpu.memory_space<vmem>>, vector<256x1xf32>
      tpu.vector_store %arg11[%c0_52, %c0_53], %95 {strides = array<i32>} : memref<256x1xf32, #tpu.memory_space<vmem>>, vector<256x1xf32>,
      %cst_54 = arith.constant 0.000000e+00 : f32
      %98 = vector.broadcast %cst_54 : f32 to vector<256x1xf32>
      %c0_55 = arith.constant 0 : index
      %c0_56 = arith.constant 0 : index
      %99 = vector.load %arg9[%c0_55, %c0_56] : memref<256x1xf32, #tpu.memory_space<vmem>>, vector<256x1xf32>
      tpu.vector_store %arg9[%c0_55, %c0_56], %98 {strides = array<i32>} : memref<256x1xf32, #tpu.memory_space<vmem>>, vector<256x1xf32>,
      %cst_57 = arith.constant 0.000000e+00 : f32
      %100 = vector.broadcast %cst_57 : f32 to vector<256x1xf32>
      %c0_58 = arith.constant 0 : index
      %c0_59 = arith.constant 0 : index
      %101 = vector.load %arg12[%c0_58, %c0_59] : memref<256x1xf32, #tpu.memory_space<vmem>>, vector<256x1xf32>
      tpu.vector_store %arg12[%c0_58, %c0_59], %100 {strides = array<i32>} : memref<256x1xf32, #tpu.memory_space<vmem>>, vector<256x1xf32>,
      %cst_60 = arith.constant 0.000000e+00 : f32
      %102 = vector.broadcast %cst_60 : f32 to vector<256x128xf32>
      %c0_61 = arith.constant 0 : index
      %c0_62 = arith.constant 0 : index
      %103 = vector.load %arg10[%c0_61, %c0_62] : memref<256x128xf32, #tpu.memory_space<vmem>>, vector<256x128xf32>
      tpu.vector_store %arg10[%c0_61, %c0_62], %102 {strides = array<i32>} : memref<256x128xf32, #tpu.memory_space<vmem>>, vector<256x128xf32>,
      %cst_63 = arith.constant 0.000000e+00 : f32
      %104 = vector.broadcast %cst_63 : f32 to vector<256x128xf32>
      %c0_64 = arith.constant 0 : index
      %c0_65 = arith.constant 0 : index
      %105 = vector.load %arg13[%c0_64, %c0_65] : memref<256x128xf32, #tpu.memory_space<vmem>>, vector<256x128xf32>
      tpu.vector_store %arg13[%c0_64, %c0_65], %104 {strides = array<i32>} : memref<256x128xf32, #tpu.memory_space<vmem>>, vector<256x128xf32>,
    } else {
    }
    %c0 = arith.constant 0 : index
    %c0_1 = arith.constant 0 : index
    %3 = vector.load %arg2[%c0, %c0_1] : memref<256x256xbf16, #tpu.memory_space<vmem>>, vector<256x256xbf16>
    %4 = vector.extract_strided_slice %3 {offsets = [0, 0], sizes = [256, 128], strides = [1, 1]} : vector<256x256xbf16> to vector<256x128xbf16>
    %5 = vector.extract_strided_slice %3 {offsets = [0, 128], sizes = [256, 128], strides = [1, 1]} : vector<256x256xbf16> to vector<256x128xbf16>
    %c0_2 = arith.constant 0 : index
    %c0_3 = arith.constant 0 : index
    %6 = vector.load %arg3[%c0_2, %c0_3] : memref<256x128xf32, #tpu.memory_space<vmem>>, vector<256x128xf32>
    %c0_4 = arith.constant 0 : index
    %c0_5 = arith.constant 0 : index
    %7 = vector.load %arg4[%c0_4, %c0_5] : memref<8x256xf32, #tpu.memory_space<vmem>>, vector<8x256xf32>
    %c0_6 = arith.constant 0 : index
    %c0_7 = arith.constant 0 : index
    %8 = vector.load %arg5[%c0_6, %c0_7] : memref<256x256xi8, #tpu.memory_space<vmem>>, vector<256x256xi8>
    %9 = arith.extsi %8 : vector<256x256xi8> to vector<256x256xi32>
    %10 = vector.extract_strided_slice %6 {offsets = [0, 0], sizes = [256, 1], strides = [1, 1]} : vector<256x128xf32> to vector<256x1xf32>
    %11 = vector.extract_strided_slice %7 {offsets = [0, 0], sizes = [1, 256], strides = [1, 1]} : vector<8x256xf32> to vector<1x256xf32>
    %c1_i32 = arith.constant 1 : i32
    %12 = vector.broadcast %c1_i32 : i32 to vector<256x256xi32>
    %13 = arith.andi %9, %12 : vector<256x256xi32>
    %c0_i32_8 = arith.constant 0 : i32
    %14 = vector.broadcast %c0_i32_8 : i32 to vector<256x256xi32>
    %15 = arith.cmpi sgt, %13, %14 : vector<256x256xi32>
    %16 = arith.extui %15 : vector<256x256xi1> to vector<256x256xi32>
    %17 = arith.sitofp %16 : vector<256x256xi32> to vector<256x256xf32>
    %18 = vector.broadcast %10 : vector<256x1xf32> to vector<256x256xf32>
    %19 = vector.broadcast %11 : vector<1x256xf32> to vector<256x256xf32>
    %20 = arith.addf %18, %19 : vector<256x256xf32>
    %cst = arith.constant 2.000000e-01 : f32
    %21 = vector.broadcast %cst : f32 to vector<256x256xf32>
    %22 = arith.mulf %21, %20 : vector<256x256xf32>
    %23 = arith.maximumf %20, %22 : vector<256x256xf32>
    %cst_9 = arith.constant -1.000000e+09 : f32
    %24 = vector.broadcast %cst_9 : f32 to vector<256x256xf32>
    %25 = arith.select %15, %23, %24 : vector<256x256xi1>, vector<256x256xf32>
    %c0_10 = arith.constant 0 : index
    %c0_11 = arith.constant 0 : index
    %26 = vector.load %arg8[%c0_10, %c0_11] : memref<256x1xf32, #tpu.memory_space<vmem>>, vector<256x1xf32>
    %cst_12 = arith.constant dense<0xFF800000> : vector<256xf32>
    %27 = vector.multi_reduction <maximumf>, %25, %cst_12 [1] : vector<256x256xf32> to vector<256xf32>
    %28 = vector.shape_cast %27 : vector<256xf32> to vector<256x1xf32>
    %29 = arith.maximumf %26, %28 : vector<256x1xf32>
    %c0_13 = arith.constant 0 : index
    %c0_14 = arith.constant 0 : index
    %30 = vector.load %arg8[%c0_13, %c0_14] : memref<256x1xf32, #tpu.memory_space<vmem>>, vector<256x1xf32>
    %31 = arith.subf %30, %29 : vector<256x1xf32>
    %32 = math.exp %31 : vector<256x1xf32>
    %33 = vector.broadcast %29 : vector<256x1xf32> to vector<256x256xf32>
    %34 = arith.subf %25, %33 : vector<256x256xf32>
    %35 = math.exp %34 : vector<256x256xf32>
    %36 = arith.mulf %35, %17 : vector<256x256xf32>
    %c0_15 = arith.constant 0 : index
    %c0_16 = arith.constant 0 : index
    %37 = vector.load %arg9[%c0_15, %c0_16] : memref<256x1xf32, #tpu.memory_space<vmem>>, vector<256x1xf32>
    %38 = arith.mulf %32, %37 : vector<256x1xf32>
    %cst_17 = arith.constant dense<0.000000e+00> : vector<256xf32>
    %39 = vector.multi_reduction <add>, %36, %cst_17 [1] : vector<256x256xf32> to vector<256xf32>
    %40 = vector.shape_cast %39 : vector<256xf32> to vector<256x1xf32>
    %41 = arith.addf %38, %40 : vector<256x1xf32>
    %c0_18 = arith.constant 0 : index
    %c0_19 = arith.constant 0 : index
    %42 = vector.load %arg9[%c0_18, %c0_19] : memref<256x1xf32, #tpu.memory_space<vmem>>, vector<256x1xf32>
    tpu.vector_store %arg9[%c0_18, %c0_19], %41 {strides = array<i32>} : memref<256x1xf32, #tpu.memory_space<vmem>>, vector<256x1xf32>,
    %c0_20 = arith.constant 0 : index
    %c0_21 = arith.constant 0 : index
    %43 = vector.load %arg10[%c0_20, %c0_21] : memref<256x128xf32, #tpu.memory_space<vmem>>, vector<256x128xf32>
    %44 = vector.broadcast %32 : vector<256x1xf32> to vector<256x128xf32>
    %45 = arith.mulf %44, %43 : vector<256x128xf32>
    %46 = arith.truncf %36 : vector<256x256xf32> to vector<256x256xbf16>
    %cst_22 = arith.constant dense<0.000000e+00> : vector<256x128xf32>
    %47 = tpu.matmul %46, %4, %cst_22 {dimension_numbers = #tpu.dot_dimension_numbers<[1], [0], [0], [1], [0, 0, 1, 1], [], []>} : vector<256x256xbf16>, vector<256x128xbf16>, vector<256x128xf32> -> vector<256x128xf32>
    %48 = arith.addf %45, %47 : vector<256x128xf32>
    %c0_23 = arith.constant 0 : index
    %c0_24 = arith.constant 0 : index
    %49 = vector.load %arg10[%c0_23, %c0_24] : memref<256x128xf32, #tpu.memory_space<vmem>>, vector<256x128xf32>
    tpu.vector_store %arg10[%c0_23, %c0_24], %48 {strides = array<i32>} : memref<256x128xf32, #tpu.memory_space<vmem>>, vector<256x128xf32>,
    %c0_25 = arith.constant 0 : index
    %c0_26 = arith.constant 0 : index
    %50 = vector.load %arg8[%c0_25, %c0_26] : memref<256x1xf32, #tpu.memory_space<vmem>>, vector<256x1xf32>
    tpu.vector_store %arg8[%c0_25, %c0_26], %29 {strides = array<i32>} : memref<256x1xf32, #tpu.memory_space<vmem>>, vector<256x1xf32>,
    %51 = vector.extract_strided_slice %6 {offsets = [0, 1], sizes = [256, 1], strides = [1, 1]} : vector<256x128xf32> to vector<256x1xf32>
    %52 = vector.extract_strided_slice %7 {offsets = [1, 0], sizes = [1, 256], strides = [1, 1]} : vector<8x256xf32> to vector<1x256xf32>
    %c2_i32 = arith.constant 2 : i32
    %53 = vector.broadcast %c2_i32 : i32 to vector<256x256xi32>
    %54 = arith.andi %9, %53 : vector<256x256xi32>
    %c0_i32_27 = arith.constant 0 : i32
    %55 = vector.broadcast %c0_i32_27 : i32 to vector<256x256xi32>
    %56 = arith.cmpi sgt, %54, %55 : vector<256x256xi32>
    %57 = arith.extui %56 : vector<256x256xi1> to vector<256x256xi32>
    %58 = arith.sitofp %57 : vector<256x256xi32> to vector<256x256xf32>
    %59 = vector.broadcast %51 : vector<256x1xf32> to vector<256x256xf32>
    %60 = vector.broadcast %52 : vector<1x256xf32> to vector<256x256xf32>
    %61 = arith.addf %59, %60 : vector<256x256xf32>
    %cst_28 = arith.constant 2.000000e-01 : f32
    %62 = vector.broadcast %cst_28 : f32 to vector<256x256xf32>
    %63 = arith.mulf %62, %61 : vector<256x256xf32>
    %64 = arith.maximumf %61, %63 : vector<256x256xf32>
    %cst_29 = arith.constant -1.000000e+09 : f32
    %65 = vector.broadcast %cst_29 : f32 to vector<256x256xf32>
    %66 = arith.select %56, %64, %65 : vector<256x256xi1>, vector<256x256xf32>
    %c0_30 = arith.constant 0 : index
    %c0_31 = arith.constant 0 : index
    %67 = vector.load %arg11[%c0_30, %c0_31] : memref<256x1xf32, #tpu.memory_space<vmem>>, vector<256x1xf32>
    %cst_32 = arith.constant dense<0xFF800000> : vector<256xf32>
    %68 = vector.multi_reduction <maximumf>, %66, %cst_32 [1] : vector<256x256xf32> to vector<256xf32>
    %69 = vector.shape_cast %68 : vector<256xf32> to vector<256x1xf32>
    %70 = arith.maximumf %67, %69 : vector<256x1xf32>
    %c0_33 = arith.constant 0 : index
    %c0_34 = arith.constant 0 : index
    %71 = vector.load %arg11[%c0_33, %c0_34] : memref<256x1xf32, #tpu.memory_space<vmem>>, vector<256x1xf32>
    %72 = arith.subf %71, %70 : vector<256x1xf32>
    %73 = math.exp %72 : vector<256x1xf32>
    %74 = vector.broadcast %70 : vector<256x1xf32> to vector<256x256xf32>
    %75 = arith.subf %66, %74 : vector<256x256xf32>
    %76 = math.exp %75 : vector<256x256xf32>
    %77 = arith.mulf %76, %58 : vector<256x256xf32>
    %c0_35 = arith.constant 0 : index
    %c0_36 = arith.constant 0 : index
    %78 = vector.load %arg12[%c0_35, %c0_36] : memref<256x1xf32, #tpu.memory_space<vmem>>, vector<256x1xf32>
    %79 = arith.mulf %73, %78 : vector<256x1xf32>
    %cst_37 = arith.constant dense<0.000000e+00> : vector<256xf32>
    %80 = vector.multi_reduction <add>, %77, %cst_37 [1] : vector<256x256xf32> to vector<256xf32>
    %81 = vector.shape_cast %80 : vector<256xf32> to vector<256x1xf32>
    %82 = arith.addf %79, %81 : vector<256x1xf32>
    %c0_38 = arith.constant 0 : index
    %c0_39 = arith.constant 0 : index
    %83 = vector.load %arg12[%c0_38, %c0_39] : memref<256x1xf32, #tpu.memory_space<vmem>>, vector<256x1xf32>
    tpu.vector_store %arg12[%c0_38, %c0_39], %82 {strides = array<i32>} : memref<256x1xf32, #tpu.memory_space<vmem>>, vector<256x1xf32>,
    %c0_40 = arith.constant 0 : index
    %c0_41 = arith.constant 0 : index
    %84 = vector.load %arg13[%c0_40, %c0_41] : memref<256x128xf32, #tpu.memory_space<vmem>>, vector<256x128xf32>
    %85 = vector.broadcast %73 : vector<256x1xf32> to vector<256x128xf32>
    %86 = arith.mulf %85, %84 : vector<256x128xf32>
    %87 = arith.truncf %77 : vector<256x256xf32> to vector<256x256xbf16>
    %cst_42 = arith.constant dense<0.000000e+00> : vector<256x128xf32>
    %88 = tpu.matmul %87, %5, %cst_42 {dimension_numbers = #tpu.dot_dimension_numbers<[1], [0], [0], [1], [0, 0, 1, 1], [], []>} : vector<256x256xbf16>, vector<256x128xbf16>, vector<256x128xf32> -> vector<256x128xf32>
    %89 = arith.addf %86, %88 : vector<256x128xf32>
    %c0_43 = arith.constant 0 : index
    %c0_44 = arith.constant 0 : index
    %90 = vector.load %arg13[%c0_43, %c0_44] : memref<256x128xf32, #tpu.memory_space<vmem>>, vector<256x128xf32>
    tpu.vector_store %arg13[%c0_43, %c0_44], %89 {strides = array<i32>} : memref<256x128xf32, #tpu.memory_space<vmem>>, vector<256x128xf32>,
    %c0_45 = arith.constant 0 : index
    %c0_46 = arith.constant 0 : index
    %91 = vector.load %arg11[%c0_45, %c0_46] : memref<256x1xf32, #tpu.memory_space<vmem>>, vector<256x1xf32>
    tpu.vector_store %arg11[%c0_45, %c0_46], %70 {strides = array<i32>} : memref<256x1xf32, #tpu.memory_space<vmem>>, vector<256x1xf32>,
    %c1_i32_47 = arith.constant 1 : i32
    %92 = arith.cmpi eq, %arg1, %c1_i32_47 : i32
    %93 = arith.extui %92 : i1 to i32
    %c0_i32_48 = arith.constant 0 : i32
    %94 = arith.cmpi ne, %93, %c0_i32_48 : i32
    scf.if %94 {
      %c0_49 = arith.constant 0 : index
      %c0_50 = arith.constant 0 : index
      %95 = vector.load %arg9[%c0_49, %c0_50] : memref<256x1xf32, #tpu.memory_space<vmem>>, vector<256x1xf32>
      %96 = tpu.reciprocal %95 {approx = true} : vector<256x1xf32> -> vector<256x1xf32>
      %c0_51 = arith.constant 0 : index
      %c0_52 = arith.constant 0 : index
      %97 = vector.load %arg9[%c0_51, %c0_52] : memref<256x1xf32, #tpu.memory_space<vmem>>, vector<256x1xf32>
      %98 = arith.mulf %97, %96 : vector<256x1xf32>
      %cst_53 = arith.constant 2.000000e+00 : f32
      %99 = vector.broadcast %cst_53 : f32 to vector<256x1xf32>
      %100 = arith.subf %99, %98 : vector<256x1xf32>
      %101 = arith.mulf %96, %100 : vector<256x1xf32>
      %c0_54 = arith.constant 0 : index
      %c0_55 = arith.constant 0 : index
      %102 = vector.load %arg10[%c0_54, %c0_55] : memref<256x128xf32, #tpu.memory_space<vmem>>, vector<256x128xf32>
      %103 = vector.broadcast %101 : vector<256x1xf32> to vector<256x128xf32>
      %104 = arith.mulf %102, %103 : vector<256x128xf32>
      %cst_56 = arith.constant 0.000000e+00 : f32
      %105 = vector.broadcast %cst_56 : f32 to vector<256x128xf32>
      %106 = arith.maximumf %104, %105 : vector<256x128xf32>
      %107 = arith.truncf %106 : vector<256x128xf32> to vector<256x128xbf16>
      %c0_57 = arith.constant 0 : index
      %c0_58 = arith.constant 0 : index
      %108 = vector.load %arg6[%c0_57, %c0_58] : memref<256x128xbf16, #tpu.memory_space<vmem>>, vector<256x128xbf16>
      tpu.vector_store %arg6[%c0_57, %c0_58], %107 {strides = array<i32>} : memref<256x128xbf16, #tpu.memory_space<vmem>>, vector<256x128xbf16>,
      %c0_59 = arith.constant 0 : index
      %c0_60 = arith.constant 0 : index
      %109 = vector.load %arg12[%c0_59, %c0_60] : memref<256x1xf32, #tpu.memory_space<vmem>>, vector<256x1xf32>
      %110 = tpu.reciprocal %109 {approx = true} : vector<256x1xf32> -> vector<256x1xf32>
      %c0_61 = arith.constant 0 : index
      %c0_62 = arith.constant 0 : index
      %111 = vector.load %arg12[%c0_61, %c0_62] : memref<256x1xf32, #tpu.memory_space<vmem>>, vector<256x1xf32>
      %112 = arith.mulf %111, %110 : vector<256x1xf32>
      %cst_63 = arith.constant 2.000000e+00 : f32
      %113 = vector.broadcast %cst_63 : f32 to vector<256x1xf32>
      %114 = arith.subf %113, %112 : vector<256x1xf32>
      %115 = arith.mulf %110, %114 : vector<256x1xf32>
      %c0_64 = arith.constant 0 : index
      %c0_65 = arith.constant 0 : index
      %116 = vector.load %arg13[%c0_64, %c0_65] : memref<256x128xf32, #tpu.memory_space<vmem>>, vector<256x128xf32>
      %117 = vector.broadcast %115 : vector<256x1xf32> to vector<256x128xf32>
      %118 = arith.mulf %116, %117 : vector<256x128xf32>
      %cst_66 = arith.constant 0.000000e+00 : f32
      %119 = vector.broadcast %cst_66 : f32 to vector<256x128xf32>
      %120 = arith.maximumf %118, %119 : vector<256x128xf32>
      %121 = arith.truncf %120 : vector<256x128xf32> to vector<256x128xbf16>
      %c0_67 = arith.constant 0 : index
      %c0_68 = arith.constant 0 : index
      %122 = vector.load %arg7[%c0_67, %c0_68] : memref<256x128xbf16, #tpu.memory_space<vmem>>, vector<256x128xbf16>
      tpu.vector_store %arg7[%c0_67, %c0_68], %121 {strides = array<i32>} : memref<256x128xbf16, #tpu.memory_space<vmem>>, vector<256x128xbf16>,
    } else {
    }
    return
  }
  func.func @transform_0(%arg0: i32, %arg1: i32) -> (i32, i32) {
    %c0_i32 = arith.constant 0 : i32
    %c0_i32_0 = arith.constant 0 : i32
    return %arg1, %c0_i32 : i32, i32
  }
  func.func @transform_1(%arg0: i32, %arg1: i32) -> (i32, i32) {
    %c0_i32 = arith.constant 0 : i32
    %c0_i32_0 = arith.constant 0 : i32
    return %arg0, %c0_i32 : i32, i32
  }
  func.func @transform_2(%arg0: i32, %arg1: i32) -> (i32, i32) {
    %c0_i32 = arith.constant 0 : i32
    %c0_i32_0 = arith.constant 0 : i32
    return %c0_i32, %arg1 : i32, i32
  }
  func.func @transform_3(%arg0: i32, %arg1: i32) -> (i32, i32) {
    %c0_i32 = arith.constant 0 : i32
    return %arg0, %arg1 : i32, i32
  }
  func.func @transform_4(%arg0: i32, %arg1: i32) -> (i32, i32) {
    %c0_i32 = arith.constant 0 : i32
    %c0_i32_0 = arith.constant 0 : i32
    return %arg0, %c0_i32 : i32, i32
  }
  func.func @transform_5(%arg0: i32, %arg1: i32) -> (i32, i32) {
    %c0_i32 = arith.constant 0 : i32
    %c0_i32_0 = arith.constant 0 : i32
    return %arg0, %c0_i32 : i32, i32
  }
}

</mosaic_0001>

<llo_original>
// kernel: attention_digae_forward.3
$region0: #{attention_digae_forward.3}
  #allocation0 [shape = 'u32[]', space=smem, size = 0x4, offset = 0x4, fixed_abs, tag = 'smem constant byte address 0x4 - core index']
  #allocation1 [shape = 'u32[144,128]{1,0:T(1,128)}', space=vmem, size = 0x12000, scoped, tag = 'internal scratch']
  %s0 = inlined_call_operand.vmem [shape: f32[512,64], index: 0, kind: input, shape index: {}]
  %s1 = inlined_call_operand.vmem [shape: f32[64,128], index: 1, kind: input, shape index: {}]
  %s2 = inlined_call_operand.vmem [shape: f32[1,128], index: 2, kind: input, shape index: {}]
  %s3 = inlined_call_operand.vmem [shape: f32[128,256], index: 3, kind: input, shape index: {}]
  %s4 = inlined_call_operand.vmem [shape: f32[1,256], index: 4, kind: input, shape index: {}]
  %s5 = inlined_call_operand.vmem [shape: f32[256,128], index: 5, kind: input, shape index: {}]
  %s6 = inlined_call_operand.vmem [shape: bf16[512,256], index: 6, kind: output, shape index: {0}]
  %s7 = inlined_call_operand.vmem [shape: f32[512,128], index: 7, kind: output, shape index: {1}]
  %8 = xla_tuple %s6, %s7
  %s9 = sld [smem:[#allocation0]]
  $region65: #{attention_digae_forward.3} parent=0
    _
  %s11 = ssub.s32 1, %s9
  %s12 = scalar_select 0, %s11, %s9
  loop: start=0, step=1, limit=4
  $region2: #{attention_digae_forward.3} parent=0 // loop_pre_header
    _
  $region3: #{attention_digae_forward.3} parent=0 // loop_header
    %s14 = sphi 0, %s18
    %p15 = scmp.ge.s32.totalorder %s14, 4
    %s24 = sphi 0, %s26
    %s27 = sphi 0, %s24
    %s28 = sphi 0, %s27
    %s44 = sphi 0, %s28
    %s48 = sphi 0, %s48
    %s50 = sphi 0, %s48
    %s51 = sphi 0, %s50
    %s65 = sphi 0, %s51
    %s69 = sphi 0, %s69
    %s71 = sphi 0, %s69
    %s72 = sphi 0, %s71
    %s86 = sphi 0, %s72
    %s90 = sphi 0, %s90
    %s92 = sphi 0, %s90
    %s93 = sphi 0, %s92
    %s107 = sphi 0, %s93
    %s111 = sphi 0, %s111
    %s113 = sphi 0, %s111
    %s114 = sphi 0, %s113
    %s128 = sphi 0, %s114
    %s132 = sphi 0, %s132
    %s134 = sphi 0, %s132
    %s135 = sphi 0, %s134
    %s149 = sphi 0, %s135
    %s155 = sphi 0, %s157
    %s158 = sphi 0, %s155
    %s159 = sphi 0, %s158
    %s175 = sphi 0, %s159
    %s181 = sphi 0, %s183
    %s184 = sphi 0, %s181
    %s185 = sphi 0, %s184
    %s201 = sphi 0, %s185
  $region4: #{attention_digae_forward.3} parent=0 // loop_header_branch
    %17 = sbr.rel (%p15) target = $region8
  $region5: #{attention_digae_forward.3} parent=0 // loop_body
    %s19 = ssub.s32 %s14, 1
    %s20 = ssub.s32 %s14, 2
    %s21 = sadd.s32 %s14, 1
    %s22 = ssub.s32 %s14, %s21
    %p23 = scmp.eq.s32.totalorder %s22, 0
    %s25 = sadd.s32 %s24, 1
    %s26 = scalar_select %p23, %s24, %s25
    %p29 = pneg %p23
    %p30 = scmp.eq.s32.totalorder %s14, 1
    %p31 = por %p29, %p30
    %p32 = scmp.ne.s32.totalorder %s24, %s27
    %p33 = scmp.eq.s32.totalorder %s14, 0
    %p34 = por %p32, %p33
    %p35 = scmp.ne.s32.totalorder %s24, %s27
    %p36 = scmp.eq.s32.totalorder %s19, 1
    %p37 = por %p35, %p36
    %p38 = scmp.ne.s32.totalorder %s27, %s28
    %p39 = scmp.eq.s32.totalorder %s19, 0
    %p40 = por %p38, %p39
    %p41 = scmp.ne.s32.totalorder %s27, %s28
    %p42 = scmp.eq.s32.totalorder %s20, 1
    %p43 = por %p41, %p42
    %p45 = scmp.ne.s32.totalorder %s28, %s44
    %p46 = scmp.eq.s32.totalorder %s20, 0
    %p47 = por %p45, %p46
    %s49 = sadd.s32 %s48, 1
    %p52 = scmp.eq.s32.totalorder %s14, 1
    %p53 = scmp.ne.s32.totalorder %s48, %s50
    %p54 = scmp.eq.s32.totalorder %s14, 0
    %p55 = por %p53, %p54
    %p56 = scmp.ne.s32.totalorder %s48, %s50
    %p57 = scmp.eq.s32.totalorder %s19, 1
    %p58 = por %p56, %p57
    %p59 = scmp.ne.s32.totalorder %s50, %s51
    %p60 = scmp.eq.s32.totalorder %s19, 0
    %p61 = por %p59, %p60
    %p62 = scmp.ne.s32.totalorder %s50, %s51
    %p63 = scmp.eq.s32.totalorder %s20, 1
    %p64 = por %p62, %p63
    %p66 = scmp.ne.s32.totalorder %s51, %s65
    %p67 = scmp.eq.s32.totalorder %s20, 0
    %p68 = por %p66, %p67
    %s70 = sadd.s32 %s69, 1
    %p73 = scmp.eq.s32.totalorder %s14, 1
    %p74 = scmp.ne.s32.totalorder %s69, %s71
    %p75 = scmp.eq.s32.totalorder %s14, 0
    %p76 = por %p74, %p75
    %p77 = scmp.ne.s32.totalorder %s69, %s71
    %p78 = scmp.eq.s32.totalorder %s19, 1
    %p79 = por %p77, %p78
    %p80 = scmp.ne.s32.totalorder %s71, %s72
    %p81 = scmp.eq.s32.totalorder %s19, 0
    %p82 = por %p80, %p81
    %p83 = scmp.ne.s32.totalorder %s71, %s72
    %p84 = scmp.eq.s32.totalorder %s20, 1
    %p85 = por %p83, %p84
    %p87 = scmp.ne.s32.totalorder %s72, %s86
    %p88 = scmp.eq.s32.totalorder %s20, 0
    %p89 = por %p87, %p88
    %s91 = sadd.s32 %s90, 1
    %p94 = scmp.eq.s32.totalorder %s14, 1
    %p95 = scmp.ne.s32.totalorder %s90, %s92
    %p96 = scmp.eq.s32.totalorder %s14, 0
    %p97 = por %p95, %p96
    %p98 = scmp.ne.s32.totalorder %s90, %s92
    %p99 = scmp.eq.s32.totalorder %s19, 1
    %p100 = por %p98, %p99
    %p101 = scmp.ne.s32.totalorder %s92, %s93
    %p102 = scmp.eq.s32.totalorder %s19, 0
    %p103 = por %p101, %p102
    %p104 = scmp.ne.s32.totalorder %s92, %s93
    %p105 = scmp.eq.s32.totalorder %s20, 1
    %p106 = por %p104, %p105
    %p108 = scmp.ne.s32.totalorder %s93, %s107
    %p109 = scmp.eq.s32.totalorder %s20, 0
    %p110 = por %p108, %p109
    %s112 = sadd.s32 %s111, 1
    %p115 = scmp.eq.s32.totalorder %s14, 1
    %p116 = scmp.ne.s32.totalorder %s111, %s113
    %p117 = scmp.eq.s32.totalorder %s14, 0
    %p118 = por %p116, %p117
    %p119 = scmp.ne.s32.totalorder %s111, %s113
    %p120 = scmp.eq.s32.totalorder %s19, 1
    %p121 = por %p119, %p120
    %p122 = scmp.ne.s32.totalorder %s113, %s114
    %p123 = scmp.eq.s32.totalorder %s19, 0
    %p124 = por %p122, %p123
    %p125 = scmp.ne.s32.totalorder %s113, %s114
    %p126 = scmp.eq.s32.totalorder %s20, 1
    %p127 = por %p125, %p126
    %p129 = scmp.ne.s32.totalorder %s114, %s128
    %p130 = scmp.eq.s32.totalorder %s20, 0
    %p131 = por %p129, %p130
    %s133 = sadd.s32 %s132, 1
    %p136 = scmp.eq.s32.totalorder %s14, 1
    %p137 = scmp.ne.s32.totalorder %s132, %s134
    %p138 = scmp.eq.s32.totalorder %s14, 0
    %p139 = por %p137, %p138
    %p140 = scmp.ne.s32.totalorder %s132, %s134
    %p141 = scmp.eq.s32.totalorder %s19, 1
    %p142 = por %p140, %p141
    %p143 = scmp.ne.s32.totalorder %s134, %s135
    %p144 = scmp.eq.s32.totalorder %s19, 0
    %p145 = por %p143, %p144
    %p146 = scmp.ne.s32.totalorder %s134, %s135
    %p147 = scmp.eq.s32.totalorder %s20, 1
    %p148 = por %p146, %p147
    %p150 = scmp.ne.s32.totalorder %s135, %s149
    %p151 = scmp.eq.s32.totalorder %s20, 0
    %p152 = por %p150, %p151
    %s153 = ssub.s32 %s14, %s21
    %p154 = scmp.eq.s32.totalorder %s153, 0
    %s156 = sadd.s32 %s155, 1
    %s157 = scalar_select %p154, %s155, %s156
    %p160 = pneg %p154
    %p161 = scmp.eq.s32.totalorder %s14, 1
    %p162 = por %p160, %p161
    %p163 = scmp.ne.s32.totalorder %s155, %s158
    %p164 = scmp.eq.s32.totalorder %s14, 0
    %p165 = por %p163, %p164
    %p166 = scmp.ne.s32.totalorder %s155, %s158
    %p167 = scmp.eq.s32.totalorder %s19, 1
    %p168 = por %p166, %p167
    %p169 = scmp.ne.s32.totalorder %s158, %s159
    %p170 = scmp.eq.s32.totalorder %s19, 0
    %p171 = por %p169, %p170
    %p172 = scmp.ne.s32.totalorder %s158, %s159
    %p173 = scmp.eq.s32.totalorder %s20, 1
    %p174 = por %p172, %p173
    %p176 = scmp.ne.s32.totalorder %s159, %s175
    %p177 = scmp.eq.s32.totalorder %s20, 0
    %p178 = por %p176, %p177
    %s179 = ssub.s32 %s14, %s21
    %p180 = scmp.eq.s32.totalorder %s179, 0
    %s182 = sadd.s32 %s181, 1
    %s183 = scalar_select %p180, %s181, %s182
    %p186 = pneg %p180
    %p187 = scmp.eq.s32.totalorder %s14, 1
    %p188 = por %p186, %p187
    %p189 = scmp.ne.s32.totalorder %s181, %s184
    %p190 = scmp.eq.s32.totalorder %s14, 0
    %p191 = por %p189, %p190
    %p192 = scmp.ne.s32.totalorder %s181, %s184
    %p193 = scmp.eq.s32.totalorder %s19, 1
    %p194 = por %p192, %p193
    %p195 = scmp.ne.s32.totalorder %s184, %s185
    %p196 = scmp.eq.s32.totalorder %s19, 0
    %p197 = por %p195, %p196
    %p198 = scmp.ne.s32.totalorder %s184, %s185
    %p199 = scmp.eq.s32.totalorder %s20, 1
    %p200 = por %p198, %p199
    %p202 = scmp.ne.s32.totalorder %s185, %s201
    %p203 = scmp.eq.s32.totalorder %s20, 0
    %p204 = por %p202, %p203
    %p205 = scmp.le.s32.totalorder 1, %s14
    %p206 = scmp.lt.s32.totalorder %s14, 3
    %p207 = pnand %p205, %p206
    %p208 = pneg %p207
    // Predicated region
    $region9: #{attention_digae_forward.3} parent=5 // pred_check
      _
    $region10: #{attention_digae_forward.3} parent=5 // pred_check_branch
      %210 = sbr.rel (%p207) target = $region12
    $region11: #{attention_digae_forward.3} parent=5 // pred_region
      %s211 = ssub.s32 %s14, 1
      // Predicated region
      $region13: #{attention_digae_forward.3} parent=11 // pred_check
        %p212 = pneg %p61
      $region14: #{attention_digae_forward.3} parent=11 // pred_check_branch
        %214 = sbr.rel (%p212) target = $region16
      $region15: #{attention_digae_forward.3} parent=11 // pred_region
        _
      $region16: #{attention_digae_forward.3} parent=11 // pred_fallthru
        _
      // Predicated region
      $region17: #{attention_digae_forward.3} parent=11 // pred_check
        %p215 = pneg %p82
      $region18: #{attention_digae_forward.3} parent=11 // pred_check_branch
        %217 = sbr.rel (%p215) target = $region20
      $region19: #{attention_digae_forward.3} parent=11 // pred_region
        _
      $region20: #{attention_digae_forward.3} parent=11 // pred_fallthru
        _
      // Predicated region
      $region21: #{attention_digae_forward.3} parent=11 // pred_check
        %p218 = pneg %p103
      $region22: #{attention_digae_forward.3} parent=11 // pred_check_branch
        %220 = sbr.rel (%p218) target = $region24
      $region23: #{attention_digae_forward.3} parent=11 // pred_region
        _
      $region24: #{attention_digae_forward.3} parent=11 // pred_fallthru
        _
      // Predicated region
      $region25: #{attention_digae_forward.3} parent=11 // pred_check
        %p221 = pneg %p124
      $region26: #{attention_digae_forward.3} parent=11 // pred_check_branch
        %223 = sbr.rel (%p221) target = $region28
      $region27: #{attention_digae_forward.3} parent=11 // pred_region
        _
      $region28: #{attention_digae_forward.3} parent=11 // pred_fallthru
        _
      // Predicated region
      $region29: #{attention_digae_forward.3} parent=11 // pred_check
        %p224 = pneg %p145
      $region30: #{attention_digae_forward.3} parent=11 // pred_check_branch
        %226 = sbr.rel (%p224) target = $region32
      $region31: #{attention_digae_forward.3} parent=11 // pred_region
        _
      $region32: #{attention_digae_forward.3} parent=11 // pred_fallthru
        _
    $region12: #{attention_digae_forward.3} parent=5 // pred_fallthru
      _
    %p227 = scmp.lt.s32.totalorder %s14, 2
    // Predicated region
    $region33: #{attention_digae_forward.3} parent=5 // pred_check
      %p228 = pneg %p227
    $region34: #{attention_digae_forward.3} parent=5 // pred_check_branch
      %230 = sbr.rel (%p228) target = $region36
    $region35: #{attention_digae_forward.3} parent=5 // pred_region
      // Predicated region
      $region37: #{attention_digae_forward.3} parent=35 // pred_check
        %p231 = pneg %p34
      $region38: #{attention_digae_forward.3} parent=35 // pred_check_branch
        %233 = sbr.rel (%p231) target = $region40
      $region39: #{attention_digae_forward.3} parent=35 // pred_region
        %s234 = smul.u32 32, %s14
        %p235 = scmp.lt.s32.totalorder %s234, 63
        %s236 = scalar_select %p235, %s234, 63
        %s237 = smul.addr %s236, 8
        %s238 = scalar_lea.vmem %s0, %s237
        %s239 = smul.u32 32, %s14
      $region40: #{attention_digae_forward.3} parent=35 // pred_fallthru
        _
    $region36: #{attention_digae_forward.3} parent=5 // pred_fallthru
      _
    %p240 = scmp.le.s32.totalorder 1, %s14
    %p241 = scmp.lt.s32.totalorder %s14, 3
    %p242 = pnand %p240, %p241
    %p243 = pneg %p242
    // Predicated region
    $region41: #{attention_digae_forward.3} parent=5 // pred_check
      _
    $region42: #{attention_digae_forward.3} parent=5 // pred_check_branch
      %245 = sbr.rel (%p242) target = $region44
    $region43: #{attention_digae_forward.3} parent=5 // pred_region
      %s246 = ssub.s32 %s14, 1
      %s247 = smul.u32 32, %s19
      %p248 = scmp.lt.s32.totalorder %s247, 63
      %s249 = scalar_select %p248, %s247, 63
      %s250 = smul.addr %s249, 8
      %s251 = scalar_lea.vmem %s0, %s250
      %p252 = pneg %p40
      %p253 = pneg %p37
      %p254 = pneg %p61
      %p255 = pneg %p58
      %p256 = pneg %p82
      %p257 = pneg %p79
      %p258 = pneg %p103
      %p259 = pneg %p100
      %p260 = pneg %p124
      %p261 = pneg %p121
      %p262 = pneg %p145
      %p263 = pneg %p142
      %p264 = pneg %p171
      %p265 = pneg %p168
      %s266 = smul.u32 32, %s19
      %p267 = scmp.lt.s32.totalorder %s266, 63
      %s268 = scalar_select %p267, %s266, 63
      %s269 = smul.addr %s268, 2
      %s270 = smul.addr %s269, 4
      %s271 = scalar_lea.vmem %s6, %s270
      %p272 = pneg %p197
      %p273 = pneg %p194
      %s274 = smul.u32 32, %s19
      %p275 = scmp.lt.s32.totalorder %s274, 63
      %s276 = scalar_select %p275, %s274, 63
      %s277 = smul.addr %s276, 8
      %s278 = scalar_lea.vmem %s7, %s277
      %s279 = smul.u32 32, %s19
      %p280 = scmp.lt.s32.totalorder %s279, 63
      %s281 = scalar_select %p280, %s279, 63
      %s282 = smul.addr %s281, 8
      %s283 = scalar_lea.vmem %s0, %s282
      %s284 = smul.u32 32, %s19
      %s285 = smul.u32 32, %s19
      %p286 = scmp.lt.s32.totalorder %s285, 63
      %s287 = scalar_select %p286, %s285, 63
      %s288 = smul.addr %s287, 2
      %s289 = smul.addr %s288, 4
      %s290 = scalar_lea.vmem %s6, %s289
      %s291 = smul.u32 32, %s19
      %s292 = smul.u32 32, %s19
      %p293 = scmp.lt.s32.totalorder %s292, 63
      %s294 = scalar_select %p293, %s292, 63
      %s295 = smul.addr %s294, 8
      %s296 = scalar_lea.vmem %s7, %s295
      %s297 = smul.u32 32, %s19
      %v298 = vld [vmem:[%s283] sm:$0xff]
      %v299 = vld [vmem:[%s283 + $0x8] sm:$0xff]
      %v300 = vld [vmem:[%s283 + $0x10] sm:$0xff]
      %v301 = vld [vmem:[%s283 + $0x18] sm:$0xff]
      %v302 = vld [vmem:[%s283 + $0x20] sm:$0xff]
      %v303 = vld [vmem:[%s283 + $0x28] sm:$0xff]
      %v304 = vld [vmem:[%s283 + $0x30] sm:$0xff]
      %v305 = vld [vmem:[%s283 + $0x38] sm:$0xff]
      %v306 = vld [vmem:[%s283 + $0x40] sm:$0xff]
      %v307 = vld [vmem:[%s283 + $0x48] sm:$0xff]
      %v308 = vld [vmem:[%s283 + $0x50] sm:$0xff]
      %v309 = vld [vmem:[%s283 + $0x58] sm:$0xff]
      %v310 = vld [vmem:[%s283 + $0x60] sm:$0xff]
      %v311 = vld [vmem:[%s283 + $0x68] sm:$0xff]
      %v312 = vld [vmem:[%s283 + $0x70] sm:$0xff]
      %v313 = vld [vmem:[%s283 + $0x78] sm:$0xff]
      %v314 = vld [vmem:[%s283 + $0x80] sm:$0xff]
      %v315 = vld [vmem:[%s283 + $0x88] sm:$0xff]
      %v316 = vld [vmem:[%s283 + $0x90] sm:$0xff]
      %v317 = vld [vmem:[%s283 + $0x98] sm:$0xff]
      %v318 = vld [vmem:[%s283 + $0xa0] sm:$0xff]
      %v319 = vld [vmem:[%s283 + $0xa8] sm:$0xff]
      %v320 = vld [vmem:[%s283 + $0xb0] sm:$0xff]
      %v321 = vld [vmem:[%s283 + $0xb8] sm:$0xff]
      %v322 = vld [vmem:[%s283 + $0xc0] sm:$0xff]
      %v323 = vld [vmem:[%s283 + $0xc8] sm:$0xff]
      %v324 = vld [vmem:[%s283 + $0xd0] sm:$0xff]
      %v325 = vld [vmem:[%s283 + $0xd8] sm:$0xff]
      %v326 = vld [vmem:[%s283 + $0xe0] sm:$0xff]
      %v327 = vld [vmem:[%s283 + $0xe8] sm:$0xff]
      %v328 = vld [vmem:[%s283 + $0xf0] sm:$0xff]
      %v329 = vld [vmem:[%s283 + $0xf8] sm:$0xff]
      %v330 = vld [vmem:[%s1] sm:$0xff]
      %v331 = vld [vmem:[%s1 + $0x8] sm:$0xff]
      %v332 = vld [vmem:[%s1 + $0x10] sm:$0xff]
      %v333 = vld [vmem:[%s1 + $0x18] sm:$0xff]
      %v334 = vld [vmem:[%s1 + $0x20] sm:$0xff]
      %v335 = vld [vmem:[%s1 + $0x28] sm:$0xff]
      %v336 = vld [vmem:[%s1 + $0x30] sm:$0xff]
      %v337 = vld [vmem:[%s1 + $0x38] sm:$0xff]
      %v338 = vld [vmem:[%s2] sm:$0x1]
      %v340 = vlaneseq
      %v341 = vshrl.u32 %v340, 7
      %v342 = vsub.s32 0, %v341
      %v343 = vrot.slane %v338, %v342
      %vm345 = vcmask 523264
      %v347 = vsel %vm345, %v298, 0
      %v350 = vsel %vm345, %v299, 0
      %v353 = vsel %vm345, %v300, 0
      %v356 = vsel %vm345, %v301, 0
      %v359 = vsel %vm345, %v302, 0
      %v362 = vsel %vm345, %v303, 0
      %v365 = vsel %vm345, %v304, 0
      %v368 = vsel %vm345, %v305, 0
      %v371 = vsel %vm345, %v306, 0
      %v374 = vsel %vm345, %v307, 0
      %v377 = vsel %vm345, %v308, 0
      %v380 = vsel %vm345, %v309, 0
      %v383 = vsel %vm345, %v310, 0
      %v386 = vsel %vm345, %v311, 0
      %v389 = vsel %vm345, %v312, 0
      %v392 = vsel %vm345, %v313, 0
      %v395 = vsel %vm345, %v314, 0
      %v398 = vsel %vm345, %v315, 0
      %v401 = vsel %vm345, %v316, 0
      %v404 = vsel %vm345, %v317, 0
      %v407 = vsel %vm345, %v318, 0
      %v410 = vsel %vm345, %v319, 0
      %v413 = vsel %vm345, %v320, 0
      %v416 = vsel %vm345, %v321, 0
      %v419 = vsel %vm345, %v322, 0
      %v422 = vsel %vm345, %v323, 0
      %v425 = vsel %vm345, %v324, 0
      %v428 = vsel %vm345, %v325, 0
      %v431 = vsel %vm345, %v326, 0
      %v434 = vsel %vm345, %v327, 0
      %v437 = vsel %vm345, %v328, 0
      %v440 = vsel %vm345, %v329, 0
      %442 = vmatprep.subr.mxu0 0.0
      %443 = vmatpush1.msra.mxu0 0.0
      %444 = vmatprep.subr.mxu0 0.0
      %445 = vmatpush1.msra.mxu0 0.0
      %446 = vmatprep.subr.mxu0 0.0
      %447 = vmatpush1.msra.mxu0 0.0
      %448 = vmatprep.subr.mxu0 0.0
      %449 = vmatpush1.msra.mxu0 0.0
      %450 = vmatprep.subr.mxu0 0.0
      %451 = vmatpush1.msra.mxu0 0.0
      %452 = vmatprep.subr.mxu0 0.0
      %453 = vmatpush1.msra.mxu0 0.0
      %454 = vmatprep.subr.mxu0 0.0
      %455 = vmatpush1.msra.mxu0 0.0
      %456 = vmatprep.subr.mxu0 0.0
      %457 = vmatpush1.msra.mxu0 0.0
      %458 = vmatprep.subr.mxu0 0.0
      %459 = vmatpush1.msra.mxu0 %v337
      %460 = vmatprep.subr.mxu0 0.0
      %461 = vmatpush1.msra.mxu0 %v336
      %462 = vmatprep.subr.mxu0 0.0
      %463 = vmatpush1.msra.mxu0 %v335
      %464 = vmatprep.subr.mxu0 0.0
      %465 = vmatpush1.msra.mxu0 %v334
      %466 = vmatprep.subr.mxu0 0.0
      %467 = vmatpush1.msra.mxu0 %v333
      %468 = vmatprep.subr.mxu0 0.0
      %469 = vmatpush1.msra.mxu0 %v332
      %470 = vmatprep.subr.mxu0 0.0
      %471 = vmatpush1.msra.mxu0 %v331
      %472 = vmatprep.subr.mxu0 0.0
      %473 = vmatpush1.msra.mxu0 %v330
      %474 = vmatprep.subr.mxu0 0.0
      %475 = vmatpush2.msra.mxu0 0.0
      %476 = vmatprep.subr.mxu0 0.0
      %477 = vmatpush2.msra.mxu0 0.0
      %478 = vmatprep.subr.mxu0 0.0
      %479 = vmatpush2.msra.mxu0 0.0
      %480 = vmatprep.subr.mxu0 0.0
      %481 = vmatpush2.msra.mxu0 0.0
      %482 = vmatprep.subr.mxu0 0.0
      %483 = vmatpush2.msra.mxu0 0.0
      %484 = vmatprep.subr.mxu0 0.0
      %485 = vmatpush2.msra.mxu0 0.0
      %486 = vmatprep.subr.mxu0 0.0
      %487 = vmatpush2.msra.mxu0 0.0
      %488 = vmatprep.subr.mxu0 0.0
      %489 = vmatpush2.msra.mxu0 0.0
      %490 = vmatprep.subr.mxu0 0.0
      %491 = vmatpush2.msra.mxu0 0.0
      %492 = vmatprep.subr.mxu0 0.0
      %493 = vmatpush2.msra.mxu0 0.0
      %494 = vmatprep.subr.mxu0 0.0
      %495 = vmatpush2.msra.mxu0 0.0
      %496 = vmatprep.subr.mxu0 0.0
      %497 = vmatpush2.msra.mxu0 0.0
      %498 = vmatprep.subr.mxu0 0.0
      %499 = vmatpush2.msra.mxu0 0.0
      %500 = vmatprep.subr.mxu0 0.0
      %501 = vmatpush2.msra.mxu0 0.0
      %502 = vmatprep.subr.mxu0 0.0
      %503 = vmatpush2.msra.mxu0 0.0
      %504 = vmatprep.subr.mxu0 0.0
      %505 = vmatpush2.msra.mxu0 0.0
      %506 = vmatprep.mubr.f32.mxu0 0.0
      %507 = vmatmul.mubr.f32.gmra.mxu0 %v347
      %v508 = vpop.f32.mrf.mxu0
      %v509 = vadd.f32 %v343, %v508
      %v510 = vpop.f32.mrf.mxu0
      %511 = vmatprep.mubr.f32.mxu0 0.0
      %512 = vmatmul.mubr.f32.gmra.mxu0 %v350
      %v513 = vpop.f32.mrf.mxu0
      %v514 = vadd.f32 %v343, %v513
      %v515 = vpop.f32.mrf.mxu0
      %516 = vmatprep.mubr.f32.mxu0 0.0
      %517 = vmatmul.mubr.f32.gmra.mxu0 %v353
      %v518 = vpop.f32.mrf.mxu0
      %v519 = vadd.f32 %v343, %v518
      %v520 = vpop.f32.mrf.mxu0
      %521 = vmatprep.mubr.f32.mxu0 0.0
      %522 = vmatmul.mubr.f32.gmra.mxu0 %v356
      %v523 = vpop.f32.mrf.mxu0
      %v524 = vadd.f32 %v343, %v523
      %v525 = vpop.f32.mrf.mxu0
      %526 = vmatprep.mubr.f32.mxu0 0.0
      %527 = vmatmul.mubr.f32.gmra.mxu0 %v359
      %v528 = vpop.f32.mrf.mxu0
      %v529 = vadd.f32 %v343, %v528
      %v530 = vpop.f32.mrf.mxu0
      %531 = vmatprep.mubr.f32.mxu0 0.0
      %532 = vmatmul.mubr.f32.gmra.mxu0 %v362
      %v533 = vpop.f32.mrf.mxu0
      %v534 = vadd.f32 %v343, %v533
      %v535 = vpop.f32.mrf.mxu0
      %536 = vmatprep.mubr.f32.mxu0 0.0
      %537 = vmatmul.mubr.f32.gmra.mxu0 %v365
      %v538 = vpop.f32.mrf.mxu0
      %v539 = vadd.f32 %v343, %v538
      %v540 = vpop.f32.mrf.mxu0
      %541 = vmatprep.mubr.f32.mxu0 0.0
      %542 = vmatmul.mubr.f32.gmra.mxu0 %v368
      %v543 = vpop.f32.mrf.mxu0
      %v544 = vadd.f32 %v343, %v543
      %v545 = vpop.f32.mrf.mxu0
      %546 = vmatprep.mubr.f32.mxu0 0.0
      %547 = vmatmul.mubr.f32.gmra.mxu0 %v371
      %v548 = vpop.f32.mrf.mxu0
      %v549 = vadd.f32 %v343, %v548
      %v550 = vpop.f32.mrf.mxu0
      %551 = vmatprep.mubr.f32.mxu0 0.0
      %552 = vmatmul.mubr.f32.gmra.mxu0 %v374
      %v553 = vpop.f32.mrf.mxu0
      %v554 = vadd.f32 %v343, %v553
      %v555 = vpop.f32.mrf.mxu0
      %556 = vmatprep.mubr.f32.mxu0 0.0
      %557 = vmatmul.mubr.f32.gmra.mxu0 %v377
      %v558 = vpop.f32.mrf.mxu0
      %v559 = vadd.f32 %v343, %v558
      %v560 = vpop.f32.mrf.mxu0
      %561 = vmatprep.mubr.f32.mxu0 0.0
      %562 = vmatmul.mubr.f32.gmra.mxu0 %v380
      %v563 = vpop.f32.mrf.mxu0
      %v564 = vadd.f32 %v343, %v563
      %v565 = vpop.f32.mrf.mxu0
      %566 = vmatprep.mubr.f32.mxu0 0.0
      %567 = vmatmul.mubr.f32.gmra.mxu0 %v383
      %v568 = vpop.f32.mrf.mxu0
      %v569 = vadd.f32 %v343, %v568
      %v570 = vpop.f32.mrf.mxu0
      %571 = vmatprep.mubr.f32.mxu0 0.0
      %572 = vmatmul.mubr.f32.gmra.mxu0 %v386
      %v573 = vpop.f32.mrf.mxu0
      %v574 = vadd.f32 %v343, %v573
      %v575 = vpop.f32.mrf.mxu0
      %576 = vmatprep.mubr.f32.mxu0 0.0
      %577 = vmatmul.mubr.f32.gmra.mxu0 %v389
      %v578 = vpop.f32.mrf.mxu0
      %v579 = vadd.f32 %v343, %v578
      %v580 = vpop.f32.mrf.mxu0
      %581 = vmatprep.mubr.f32.mxu0 0.0
      %582 = vmatmul.mubr.f32.gmra.mxu0 %v392
      %v583 = vpop.f32.mrf.mxu0
      %v584 = vadd.f32 %v343, %v583
      %v585 = vpop.f32.mrf.mxu0
      %586 = vmatprep.mubr.f32.mxu0 0.0
      %587 = vmatmul.mubr.f32.gmra.mxu0 %v395
      %v588 = vpop.f32.mrf.mxu0
      %v589 = vadd.f32 %v343, %v588
      %v590 = vpop.f32.mrf.mxu0
      %591 = vmatprep.mubr.f32.mxu0 0.0
      %592 = vmatmul.mubr.f32.gmra.mxu0 %v398
      %v593 = vpop.f32.mrf.mxu0
      %v594 = vadd.f32 %v343, %v593
      %v595 = vpop.f32.mrf.mxu0
      %596 = vmatprep.mubr.f32.mxu0 0.0
      %597 = vmatmul.mubr.f32.gmra.mxu0 %v401
      %v598 = vpop.f32.mrf.mxu0
      %v599 = vadd.f32 %v343, %v598
      %v600 = vpop.f32.mrf.mxu0
      %601 = vmatprep.mubr.f32.mxu0 0.0
      %602 = vmatmul.mubr.f32.gmra.mxu0 %v404
      %v603 = vpop.f32.mrf.mxu0
      %v604 = vadd.f32 %v343, %v603
      %v605 = vpop.f32.mrf.mxu0
      %606 = vmatprep.mubr.f32.mxu0 0.0
      %607 = vmatmul.mubr.f32.gmra.mxu0 %v407
      %v608 = vpop.f32.mrf.mxu0
      %v609 = vadd.f32 %v343, %v608
      %v610 = vpop.f32.mrf.mxu0
      %611 = vmatprep.mubr.f32.mxu0 0.0
      %612 = vmatmul.mubr.f32.gmra.mxu0 %v410
      %v613 = vpop.f32.mrf.mxu0
      %v614 = vadd.f32 %v343, %v613
      %v615 = vpop.f32.mrf.mxu0
      %616 = vmatprep.mubr.f32.mxu0 0.0
      %617 = vmatmul.mubr.f32.gmra.mxu0 %v413
      %v618 = vpop.f32.mrf.mxu0
      %v619 = vadd.f32 %v343, %v618
      %v620 = vpop.f32.mrf.mxu0
      %621 = vmatprep.mubr.f32.mxu0 0.0
      %622 = vmatmul.mubr.f32.gmra.mxu0 %v416
      %v623 = vpop.f32.mrf.mxu0
      %v624 = vadd.f32 %v343, %v623
      %v625 = vpop.f32.mrf.mxu0
      %626 = vmatprep.mubr.f32.mxu0 0.0
      %627 = vmatmul.mubr.f32.gmra.mxu0 %v419
      %v628 = vpop.f32.mrf.mxu0
      %v629 = vadd.f32 %v343, %v628
      %v630 = vpop.f32.mrf.mxu0
      %631 = vmatprep.mubr.f32.mxu0 0.0
      %632 = vmatmul.mubr.f32.gmra.mxu0 %v422
      %v633 = vpop.f32.mrf.mxu0
      %v634 = vadd.f32 %v343, %v633
      %v635 = vpop.f32.mrf.mxu0
      %636 = vmatprep.mubr.f32.mxu0 0.0
      %637 = vmatmul.mubr.f32.gmra.mxu0 %v425
      %v638 = vpop.f32.mrf.mxu0
      %v639 = vadd.f32 %v343, %v638
      %v640 = vpop.f32.mrf.mxu0
      %641 = vmatprep.mubr.f32.mxu0 0.0
      %642 = vmatmul.mubr.f32.gmra.mxu0 %v428
      %v643 = vpop.f32.mrf.mxu0
      %v644 = vadd.f32 %v343, %v643
      %v645 = vpop.f32.mrf.mxu0
      %646 = vmatprep.mubr.f32.mxu0 0.0
      %647 = vmatmul.mubr.f32.gmra.mxu0 %v431
      %v648 = vpop.f32.mrf.mxu0
      %v649 = vadd.f32 %v343, %v648
      %v650 = vpop.f32.mrf.mxu0
      %651 = vmatprep.mubr.f32.mxu0 0.0
      %652 = vmatmul.mubr.f32.gmra.mxu0 %v434
      %v653 = vpop.f32.mrf.mxu0
      %v654 = vadd.f32 %v343, %v653
      %v655 = vpop.f32.mrf.mxu0
      %656 = vmatprep.mubr.f32.mxu0 0.0
      %657 = vmatmul.mubr.f32.gmra.mxu0 %v437
      %v658 = vpop.f32.mrf.mxu0
      %v659 = vadd.f32 %v343, %v658
      %v660 = vpop.f32.mrf.mxu0
      %661 = vmatprep.mubr.f32.mxu0 0.0
      %662 = vmatmul.mubr.f32.gmra.mxu0 %v440
      %v663 = vpop.f32.mrf.mxu0
      %v664 = vadd.f32 %v343, %v663
      %v665 = vpop.f32.mrf.mxu0
      %666 = vdwg.mxu0
      %v667 = vmax.f32 %v509, 0.0
      %v668 = vmax.f32 %v514, 0.0
      %v669 = vmax.f32 %v519, 0.0
      %v670 = vmax.f32 %v524, 0.0
      %v671 = vmax.f32 %v529, 0.0
      %v672 = vmax.f32 %v534, 0.0
      %v673 = vmax.f32 %v539, 0.0
      %v674 = vmax.f32 %v544, 0.0
      %v675 = vmax.f32 %v549, 0.0
      %v676 = vmax.f32 %v554, 0.0
      %v677 = vmax.f32 %v559, 0.0
      %v678 = vmax.f32 %v564, 0.0
      %v679 = vmax.f32 %v569, 0.0
      %v680 = vmax.f32 %v574, 0.0
      %v681 = vmax.f32 %v579, 0.0
      %v682 = vmax.f32 %v584, 0.0
      %v683 = vmax.f32 %v589, 0.0
      %v684 = vmax.f32 %v594, 0.0
      %v685 = vmax.f32 %v599, 0.0
      %v686 = vmax.f32 %v604, 0.0
      %v687 = vmax.f32 %v609, 0.0
      %v688 = vmax.f32 %v614, 0.0
      %v689 = vmax.f32 %v619, 0.0
      %v690 = vmax.f32 %v624, 0.0
      %v691 = vmax.f32 %v629, 0.0
      %v692 = vmax.f32 %v634, 0.0
      %v693 = vmax.f32 %v639, 0.0
      %v694 = vmax.f32 %v644, 0.0
      %v695 = vmax.f32 %v649, 0.0
      %v696 = vmax.f32 %v654, 0.0
      %v697 = vmax.f32 %v659, 0.0
      %v698 = vmax.f32 %v664, 0.0
      %v699 = vld [vmem:[%s3] sm:$0xff]
      %v700 = vld [vmem:[%s3 + $0x8] sm:$0xff]
      %v701 = vld [vmem:[%s3 + $0x10] sm:$0xff]
      %v702 = vld [vmem:[%s3 + $0x18] sm:$0xff]
      %v703 = vld [vmem:[%s3 + $0x20] sm:$0xff]
      %v704 = vld [vmem:[%s3 + $0x28] sm:$0xff]
      %v705 = vld [vmem:[%s3 + $0x30] sm:$0xff]
      %v706 = vld [vmem:[%s3 + $0x38] sm:$0xff]
      %v707 = vld [vmem:[%s3 + $0x40] sm:$0xff]
      %v708 = vld [vmem:[%s3 + $0x48] sm:$0xff]
      %v709 = vld [vmem:[%s3 + $0x50] sm:$0xff]
      %v710 = vld [vmem:[%s3 + $0x58] sm:$0xff]
      %v711 = vld [vmem:[%s3 + $0x60] sm:$0xff]
      %v712 = vld [vmem:[%s3 + $0x68] sm:$0xff]
      %v713 = vld [vmem:[%s3 + $0x70] sm:$0xff]
      %v714 = vld [vmem:[%s3 + $0x78] sm:$0xff]
      %v715 = vld [vmem:[%s3 + $0x80] sm:$0xff]
      %v716 = vld [vmem:[%s3 + $0x88] sm:$0xff]
      %v717 = vld [vmem:[%s3 + $0x90] sm:$0xff]
      %v718 = vld [vmem:[%s3 + $0x98] sm:$0xff]
      %v719 = vld [vmem:[%s3 + $0xa0] sm:$0xff]
      %v720 = vld [vmem:[%s3 + $0xa8] sm:$0xff]
      %v721 = vld [vmem:[%s3 + $0xb0] sm:$0xff]
      %v722 = vld [vmem:[%s3 + $0xb8] sm:$0xff]
      %v723 = vld [vmem:[%s3 + $0xc0] sm:$0xff]
      %v724 = vld [vmem:[%s3 + $0xc8] sm:$0xff]
      %v725 = vld [vmem:[%s3 + $0xd0] sm:$0xff]
      %v726 = vld [vmem:[%s3 + $0xd8] sm:$0xff]
      %v727 = vld [vmem:[%s3 + $0xe0] sm:$0xff]
      %v728 = vld [vmem:[%s3 + $0xe8] sm:$0xff]
      %v729 = vld [vmem:[%s3 + $0xf0] sm:$0xff]
      %v730 = vld [vmem:[%s3 + $0xf8] sm:$0xff]
      %v731 = vld [vmem:[%s4] sm:$0x3]
      %v733 = vlaneseq
      %v734 = vshrl.u32 %v733, 7
      %v735 = vsub.s32 0, %v734
      %v736 = vrot.slane %v731, %v735
      %v737 = vlaneseq
      %v738 = vshrl.u32 %v737, 7
      %v739 = vsub.s32 1, %v738
      %v740 = vrot.slane %v731, %v739
      %743 = vmatprep.subr.mxu0 %v730
      %744 = vmatpush1.msra.mxu0 %v729
      %745 = vmatprep.subr.mxu0 %v728
      %746 = vmatpush1.msra.mxu0 %v727
      %747 = vmatprep.subr.mxu0 %v726
      %748 = vmatpush1.msra.mxu0 %v725
      %749 = vmatprep.subr.mxu0 %v724
      %750 = vmatpush1.msra.mxu0 %v723
      %751 = vmatprep.subr.mxu0 %v722
      %752 = vmatpush1.msra.mxu0 %v721
      %753 = vmatprep.subr.mxu0 %v720
      %754 = vmatpush1.msra.mxu0 %v719
      %755 = vmatprep.subr.mxu0 %v718
      %756 = vmatpush1.msra.mxu0 %v717
      %757 = vmatprep.subr.mxu0 %v716
      %758 = vmatpush1.msra.mxu0 %v715
      %759 = vmatprep.subr.mxu0 %v714
      %760 = vmatpush1.msra.mxu0 %v713
      %761 = vmatprep.subr.mxu0 %v712
      %762 = vmatpush1.msra.mxu0 %v711
      %763 = vmatprep.subr.mxu0 %v710
      %764 = vmatpush1.msra.mxu0 %v709
      %765 = vmatprep.subr.mxu0 %v708
      %766 = vmatpush1.msra.mxu0 %v707
      %767 = vmatprep.subr.mxu0 %v706
      %768 = vmatpush1.msra.mxu0 %v705
      %769 = vmatprep.subr.mxu0 %v704
      %770 = vmatpush1.msra.mxu0 %v703
      %771 = vmatprep.subr.mxu0 %v702
      %772 = vmatpush1.msra.mxu0 %v701
      %773 = vmatprep.subr.mxu0 %v700
      %774 = vmatpush1.msra.mxu0 %v699
      %775 = vmatprep.subr.mxu0 0.0
      %776 = vmatpush2.msra.mxu0 0.0
      %777 = vmatprep.subr.mxu0 0.0
      %778 = vmatpush2.msra.mxu0 0.0
      %779 = vmatprep.subr.mxu0 0.0
      %780 = vmatpush2.msra.mxu0 0.0
      %781 = vmatprep.subr.mxu0 0.0
      %782 = vmatpush2.msra.mxu0 0.0
      %783 = vmatprep.subr.mxu0 0.0
      %784 = vmatpush2.msra.mxu0 0.0
      %785 = vmatprep.subr.mxu0 0.0
      %786 = vmatpush2.msra.mxu0 0.0
      %787 = vmatprep.subr.mxu0 0.0
      %788 = vmatpush2.msra.mxu0 0.0
      %789 = vmatprep.subr.mxu0 0.0
      %790 = vmatpush2.msra.mxu0 0.0
      %791 = vmatprep.subr.mxu0 0.0
      %792 = vmatpush2.msra.mxu0 0.0
      %793 = vmatprep.subr.mxu0 0.0
      %794 = vmatpush2.msra.mxu0 0.0
      %795 = vmatprep.subr.mxu0 0.0
      %796 = vmatpush2.msra.mxu0 0.0
      %797 = vmatprep.subr.mxu0 0.0
      %798 = vmatpush2.msra.mxu0 0.0
      %799 = vmatprep.subr.mxu0 0.0
      %800 = vmatpush2.msra.mxu0 0.0
      %801 = vmatprep.subr.mxu0 0.0
      %802 = vmatpush2.msra.mxu0 0.0
      %803 = vmatprep.subr.mxu0 0.0
      %804 = vmatpush2.msra.mxu0 0.0
      %805 = vmatprep.subr.mxu0 0.0
      %806 = vmatpush2.msra.mxu0 0.0
      %807 = vmatprep.mubr.f32.mxu0 0.0
      %808 = vmatmul.mubr.f32.gmra.mxu0 %v667
      %v809 = vpop.f32.mrf.mxu0
      %v810 = vadd.f32 %v736, %v809
      %v811 = vpop.f32.mrf.mxu0
      %v812 = vadd.f32 %v740, %v811
      %813 = vmatprep.mubr.f32.mxu0 0.0
      %814 = vmatmul.mubr.f32.gmra.mxu0 %v668
      %v815 = vpop.f32.mrf.mxu0
      %v816 = vadd.f32 %v736, %v815
      %v817 = vpop.f32.mrf.mxu0
      %v818 = vadd.f32 %v740, %v817
      %819 = vmatprep.mubr.f32.mxu0 0.0
      %820 = vmatmul.mubr.f32.gmra.mxu0 %v669
      %v821 = vpop.f32.mrf.mxu0
      %v822 = vadd.f32 %v736, %v821
      %v823 = vpop.f32.mrf.mxu0
      %v824 = vadd.f32 %v740, %v823
      %825 = vmatprep.mubr.f32.mxu0 0.0
      %826 = vmatmul.mubr.f32.gmra.mxu0 %v670
      %v827 = vpop.f32.mrf.mxu0
      %v828 = vadd.f32 %v736, %v827
      %v829 = vpop.f32.mrf.mxu0
      %v830 = vadd.f32 %v740, %v829
      %831 = vmatprep.mubr.f32.mxu0 0.0
      %832 = vmatmul.mubr.f32.gmra.mxu0 %v671
      %v833 = vpop.f32.mrf.mxu0
      %v834 = vadd.f32 %v736, %v833
      %v835 = vpop.f32.mrf.mxu0
      %v836 = vadd.f32 %v740, %v835
      %837 = vmatprep.mubr.f32.mxu0 0.0
      %838 = vmatmul.mubr.f32.gmra.mxu0 %v672
      %v839 = vpop.f32.mrf.mxu0
      %v840 = vadd.f32 %v736, %v839
      %v841 = vpop.f32.mrf.mxu0
      %v842 = vadd.f32 %v740, %v841
      %843 = vmatprep.mubr.f32.mxu0 0.0
      %844 = vmatmul.mubr.f32.gmra.mxu0 %v673
      %v845 = vpop.f32.mrf.mxu0
      %v846 = vadd.f32 %v736, %v845
      %v847 = vpop.f32.mrf.mxu0
      %v848 = vadd.f32 %v740, %v847
      %849 = vmatprep.mubr.f32.mxu0 0.0
      %850 = vmatmul.mubr.f32.gmra.mxu0 %v674
      %v851 = vpop.f32.mrf.mxu0
      %v852 = vadd.f32 %v736, %v851
      %v853 = vpop.f32.mrf.mxu0
      %v854 = vadd.f32 %v740, %v853
      %855 = vmatprep.mubr.f32.mxu0 0.0
      %856 = vmatmul.mubr.f32.gmra.mxu0 %v675
      %v857 = vpop.f32.mrf.mxu0
      %v858 = vadd.f32 %v736, %v857
      %v859 = vpop.f32.mrf.mxu0
      %v860 = vadd.f32 %v740, %v859
      %861 = vmatprep.mubr.f32.mxu0 0.0
      %862 = vmatmul.mubr.f32.gmra.mxu0 %v676
      %v863 = vpop.f32.mrf.mxu0
      %v864 = vadd.f32 %v736, %v863
      %v865 = vpop.f32.mrf.mxu0
      %v866 = vadd.f32 %v740, %v865
      %867 = vmatprep.mubr.f32.mxu0 0.0
      %868 = vmatmul.mubr.f32.gmra.mxu0 %v677
      %v869 = vpop.f32.mrf.mxu0
      %v870 = vadd.f32 %v736, %v869
      %v871 = vpop.f32.mrf.mxu0
      %v872 = vadd.f32 %v740, %v871
      %873 = vmatprep.mubr.f32.mxu0 0.0
      %874 = vmatmul.mubr.f32.gmra.mxu0 %v678
      %v875 = vpop.f32.mrf.mxu0
      %v876 = vadd.f32 %v736, %v875
      %v877 = vpop.f32.mrf.mxu0
      %v878 = vadd.f32 %v740, %v877
      %879 = vmatprep.mubr.f32.mxu0 0.0
      %880 = vmatmul.mubr.f32.gmra.mxu0 %v679
      %v881 = vpop.f32.mrf.mxu0
      %v882 = vadd.f32 %v736, %v881
      %v883 = vpop.f32.mrf.mxu0
      %v884 = vadd.f32 %v740, %v883
      %885 = vmatprep.mubr.f32.mxu0 0.0
      %886 = vmatmul.mubr.f32.gmra.mxu0 %v680
      %v887 = vpop.f32.mrf.mxu0
      %v888 = vadd.f32 %v736, %v887
      %v889 = vpop.f32.mrf.mxu0
      %v890 = vadd.f32 %v740, %v889
      %891 = vmatprep.mubr.f32.mxu0 0.0
      %892 = vmatmul.mubr.f32.gmra.mxu0 %v681
      %v893 = vpop.f32.mrf.mxu0
      %v894 = vadd.f32 %v736, %v893
      %v895 = vpop.f32.mrf.mxu0
      %v896 = vadd.f32 %v740, %v895
      %897 = vmatprep.mubr.f32.mxu0 0.0
      %898 = vmatmul.mubr.f32.gmra.mxu0 %v682
      %v899 = vpop.f32.mrf.mxu0
      %v900 = vadd.f32 %v736, %v899
      %v901 = vpop.f32.mrf.mxu0
      %v902 = vadd.f32 %v740, %v901
      %903 = vmatprep.mubr.f32.mxu0 0.0
      %904 = vmatmul.mubr.f32.gmra.mxu0 %v683
      %v905 = vpop.f32.mrf.mxu0
      %v906 = vadd.f32 %v736, %v905
      %v907 = vpop.f32.mrf.mxu0
      %v908 = vadd.f32 %v740, %v907
      %909 = vmatprep.mubr.f32.mxu0 0.0
      %910 = vmatmul.mubr.f32.gmra.mxu0 %v684
      %v911 = vpop.f32.mrf.mxu0
      %v912 = vadd.f32 %v736, %v911
      %v913 = vpop.f32.mrf.mxu0
      %v914 = vadd.f32 %v740, %v913
      %915 = vmatprep.mubr.f32.mxu0 0.0
      %916 = vmatmul.mubr.f32.gmra.mxu0 %v685
      %v917 = vpop.f32.mrf.mxu0
      %v918 = vadd.f32 %v736, %v917
      %v919 = vpop.f32.mrf.mxu0
      %v920 = vadd.f32 %v740, %v919
      %921 = vmatprep.mubr.f32.mxu0 0.0
      %922 = vmatmul.mubr.f32.gmra.mxu0 %v686
      %v923 = vpop.f32.mrf.mxu0
      %v924 = vadd.f32 %v736, %v923
      %v925 = vpop.f32.mrf.mxu0
      %v926 = vadd.f32 %v740, %v925
      %927 = vmatprep.mubr.f32.mxu0 0.0
      %928 = vmatmul.mubr.f32.gmra.mxu0 %v687
      %v929 = vpop.f32.mrf.mxu0
      %v930 = vadd.f32 %v736, %v929
      %v931 = vpop.f32.mrf.mxu0
      %v932 = vadd.f32 %v740, %v931
      %933 = vmatprep.mubr.f32.mxu0 0.0
      %934 = vmatmul.mubr.f32.gmra.mxu0 %v688
      %v935 = vpop.f32.mrf.mxu0
      %v936 = vadd.f32 %v736, %v935
      %v937 = vpop.f32.mrf.mxu0
      %v938 = vadd.f32 %v740, %v937
      %939 = vmatprep.mubr.f32.mxu0 0.0
      %940 = vmatmul.mubr.f32.gmra.mxu0 %v689
      %v941 = vpop.f32.mrf.mxu0
      %v942 = vadd.f32 %v736, %v941
      %v943 = vpop.f32.mrf.mxu0
      %v944 = vadd.f32 %v740, %v943
      %945 = vmatprep.mubr.f32.mxu0 0.0
      %946 = vmatmul.mubr.f32.gmra.mxu0 %v690
      %v947 = vpop.f32.mrf.mxu0
      %v948 = vadd.f32 %v736, %v947
      %v949 = vpop.f32.mrf.mxu0
      %v950 = vadd.f32 %v740, %v949
      %951 = vmatprep.mubr.f32.mxu0 0.0
      %952 = vmatmul.mubr.f32.gmra.mxu0 %v691
      %v953 = vpop.f32.mrf.mxu0
      %v954 = vadd.f32 %v736, %v953
      %v955 = vpop.f32.mrf.mxu0
      %v956 = vadd.f32 %v740, %v955
      %957 = vmatprep.mubr.f32.mxu0 0.0
      %958 = vmatmul.mubr.f32.gmra.mxu0 %v692
      %v959 = vpop.f32.mrf.mxu0
      %v960 = vadd.f32 %v736, %v959
      %v961 = vpop.f32.mrf.mxu0
      %v962 = vadd.f32 %v740, %v961
      %963 = vmatprep.mubr.f32.mxu0 0.0
      %964 = vmatmul.mubr.f32.gmra.mxu0 %v693
      %v965 = vpop.f32.mrf.mxu0
      %v966 = vadd.f32 %v736, %v965
      %v967 = vpop.f32.mrf.mxu0
      %v968 = vadd.f32 %v740, %v967
      %969 = vmatprep.mubr.f32.mxu0 0.0
      %970 = vmatmul.mubr.f32.gmra.mxu0 %v694
      %v971 = vpop.f32.mrf.mxu0
      %v972 = vadd.f32 %v736, %v971
      %v973 = vpop.f32.mrf.mxu0
      %v974 = vadd.f32 %v740, %v973
      %975 = vmatprep.mubr.f32.mxu0 0.0
      %976 = vmatmul.mubr.f32.gmra.mxu0 %v695
      %v977 = vpop.f32.mrf.mxu0
      %v978 = vadd.f32 %v736, %v977
      %v979 = vpop.f32.mrf.mxu0
      %v980 = vadd.f32 %v740, %v979
      %981 = vmatprep.mubr.f32.mxu0 0.0
      %982 = vmatmul.mubr.f32.gmra.mxu0 %v696
      %v983 = vpop.f32.mrf.mxu0
      %v984 = vadd.f32 %v736, %v983
      %v985 = vpop.f32.mrf.mxu0
      %v986 = vadd.f32 %v740, %v985
      %987 = vmatprep.mubr.f32.mxu0 0.0
      %988 = vmatmul.mubr.f32.gmra.mxu0 %v697
      %v989 = vpop.f32.mrf.mxu0
      %v990 = vadd.f32 %v736, %v989
      %v991 = vpop.f32.mrf.mxu0
      %v992 = vadd.f32 %v740, %v991
      %993 = vmatprep.mubr.f32.mxu0 0.0
      %994 = vmatmul.mubr.f32.gmra.mxu0 %v698
      %v995 = vpop.f32.mrf.mxu0
      %v996 = vadd.f32 %v736, %v995
      %v997 = vpop.f32.mrf.mxu0
      %v998 = vadd.f32 %v740, %v997
      %999 = vdwg.mxu0
      %v1000 = vld [vmem:[%s5] sm:$0xff]
      %v1001 = vld [vmem:[%s5 + $0x8] sm:$0xff]
      %v1002 = vld [vmem:[%s5 + $0x10] sm:$0xff]
      %v1003 = vld [vmem:[%s5 + $0x18] sm:$0xff]
      %v1004 = vld [vmem:[%s5 + $0x20] sm:$0xff]
      %v1005 = vld [vmem:[%s5 + $0x28] sm:$0xff]
      %v1006 = vld [vmem:[%s5 + $0x30] sm:$0xff]
      %v1007 = vld [vmem:[%s5 + $0x38] sm:$0xff]
      %v1008 = vld [vmem:[%s5 + $0x40] sm:$0xff]
      %v1009 = vld [vmem:[%s5 + $0x48] sm:$0xff]
      %v1010 = vld [vmem:[%s5 + $0x50] sm:$0xff]
      %v1011 = vld [vmem:[%s5 + $0x58] sm:$0xff]
      %v1012 = vld [vmem:[%s5 + $0x60] sm:$0xff]
      %v1013 = vld [vmem:[%s5 + $0x68] sm:$0xff]
      %v1014 = vld [vmem:[%s5 + $0x70] sm:$0xff]
      %v1015 = vld [vmem:[%s5 + $0x78] sm:$0xff]
      %v1016 = vld [vmem:[%s5 + $0x80] sm:$0xff]
      %v1017 = vld [vmem:[%s5 + $0x88] sm:$0xff]
      %v1018 = vld [vmem:[%s5 + $0x90] sm:$0xff]
      %v1019 = vld [vmem:[%s5 + $0x98] sm:$0xff]
      %v1020 = vld [vmem:[%s5 + $0xa0] sm:$0xff]
      %v1021 = vld [vmem:[%s5 + $0xa8] sm:$0xff]
      %v1022 = vld [vmem:[%s5 + $0xb0] sm:$0xff]
      %v1023 = vld [vmem:[%s5 + $0xb8] sm:$0xff]
      %v1024 = vld [vmem:[%s5 + $0xc0] sm:$0xff]
      %v1025 = vld [vmem:[%s5 + $0xc8] sm:$0xff]
      %v1026 = vld [vmem:[%s5 + $0xd0] sm:$0xff]
      %v1027 = vld [vmem:[%s5 + $0xd8] sm:$0xff]
      %v1028 = vld [vmem:[%s5 + $0xe0] sm:$0xff]
      %v1029 = vld [vmem:[%s5 + $0xe8] sm:$0xff]
      %v1030 = vld [vmem:[%s5 + $0xf0] sm:$0xff]
      %v1031 = vld [vmem:[%s5 + $0xf8] sm:$0xff]
      %1032 = vmatprep.subr.mxu0 0.0
      %1033 = vmatpush1.msra.mxu0 %v1015
      %1034 = vmatprep.subr.mxu0 0.0
      %1035 = vmatpush1.msra.mxu0 %v1014
      %1036 = vmatprep.subr.mxu0 0.0
      %1037 = vmatpush1.msra.mxu0 %v1013
      %1038 = vmatprep.subr.mxu0 0.0
      %1039 = vmatpush1.msra.mxu0 %v1012
      %1040 = vmatprep.subr.mxu0 0.0
      %1041 = vmatpush1.msra.mxu0 %v1011
      %1042 = vmatprep.subr.mxu0 0.0
      %1043 = vmatpush1.msra.mxu0 %v1010
      %1044 = vmatprep.subr.mxu0 0.0
      %1045 = vmatpush1.msra.mxu0 %v1009
      %1046 = vmatprep.subr.mxu0 0.0
      %1047 = vmatpush1.msra.mxu0 %v1008
      %1048 = vmatprep.subr.mxu0 0.0
      %1049 = vmatpush1.msra.mxu0 %v1007
      %1050 = vmatprep.subr.mxu0 0.0
      %1051 = vmatpush1.msra.mxu0 %v1006
      %1052 = vmatprep.subr.mxu0 0.0
      %1053 = vmatpush1.msra.mxu0 %v1005
      %1054 = vmatprep.subr.mxu0 0.0
      %1055 = vmatpush1.msra.mxu0 %v1004
      %1056 = vmatprep.subr.mxu0 0.0
      %1057 = vmatpush1.msra.mxu0 %v1003
      %1058 = vmatprep.subr.mxu0 0.0
      %1059 = vmatpush1.msra.mxu0 %v1002
      %1060 = vmatprep.subr.mxu0 0.0
      %1061 = vmatpush1.msra.mxu0 %v1001
      %1062 = vmatprep.subr.mxu0 0.0
      %1063 = vmatpush1.msra.mxu0 %v1000
      %1064 = vmatprep.subr.mxu0 0.0
      %1065 = vmatpush2.msra.mxu0 %v1031
      %1066 = vmatprep.subr.mxu0 0.0
      %1067 = vmatpush2.msra.mxu0 %v1030
      %1068 = vmatprep.subr.mxu0 0.0
      %1069 = vmatpush2.msra.mxu0 %v1029
      %1070 = vmatprep.subr.mxu0 0.0
      %1071 = vmatpush2.msra.mxu0 %v1028
      %1072 = vmatprep.subr.mxu0 0.0
      %1073 = vmatpush2.msra.mxu0 %v1027
      %1074 = vmatprep.subr.mxu0 0.0
      %1075 = vmatpush2.msra.mxu0 %v1026
      %1076 = vmatprep.subr.mxu0 0.0
      %1077 = vmatpush2.msra.mxu0 %v1025
      %1078 = vmatprep.subr.mxu0 0.0
      %1079 = vmatpush2.msra.mxu0 %v1024
      %1080 = vmatprep.subr.mxu0 0.0
      %1081 = vmatpush2.msra.mxu0 %v1023
      %1082 = vmatprep.subr.mxu0 0.0
      %1083 = vmatpush2.msra.mxu0 %v1022
      %1084 = vmatprep.subr.mxu0 0.0
      %1085 = vmatpush2.msra.mxu0 %v1021
      %1086 = vmatprep.subr.mxu0 0.0
      %1087 = vmatpush2.msra.mxu0 %v1020
      %1088 = vmatprep.subr.mxu0 0.0
      %1089 = vmatpush2.msra.mxu0 %v1019
      %1090 = vmatprep.subr.mxu0 0.0
      %1091 = vmatpush2.msra.mxu0 %v1018
      %1092 = vmatprep.subr.mxu0 0.0
      %1093 = vmatpush2.msra.mxu0 %v1017
      %1094 = vmatprep.subr.mxu0 0.0
      %1095 = vmatpush2.msra.mxu0 %v1016
      %1096 = vmatprep.mubr.f32.mxu0 %v812
      %1097 = vmatmul.mubr.f32.gmra.mxu0 %v810
      %v1098 = vpop.f32.mrf.mxu0
      %v1099 = vadd.f32 0.0, %v1098
      %v1100 = vpop.f32.mrf.mxu0
      %1101 = vmatprep.mubr.f32.mxu0 %v818
      %1102 = vmatmul.mubr.f32.gmra.mxu0 %v816
      %v1103 = vpop.f32.mrf.mxu0
      %v1104 = vadd.f32 0.0, %v1103
      %v1105 = vpop.f32.mrf.mxu0
      %1106 = vmatprep.mubr.f32.mxu0 %v824
      %1107 = vmatmul.mubr.f32.gmra.mxu0 %v822
      %v1108 = vpop.f32.mrf.mxu0
      %v1109 = vadd.f32 0.0, %v1108
      %v1110 = vpop.f32.mrf.mxu0
      %1111 = vmatprep.mubr.f32.mxu0 %v830
      %1112 = vmatmul.mubr.f32.gmra.mxu0 %v828
      %v1113 = vpop.f32.mrf.mxu0
      %v1114 = vadd.f32 0.0, %v1113
      %v1115 = vpop.f32.mrf.mxu0
      %1116 = vmatprep.mubr.f32.mxu0 %v836
      %1117 = vmatmul.mubr.f32.gmra.mxu0 %v834
      %v1118 = vpop.f32.mrf.mxu0
      %v1119 = vadd.f32 0.0, %v1118
      %v1120 = vpop.f32.mrf.mxu0
      %1121 = vmatprep.mubr.f32.mxu0 %v842
      %1122 = vmatmul.mubr.f32.gmra.mxu0 %v840
      %v1123 = vpop.f32.mrf.mxu0
      %v1124 = vadd.f32 0.0, %v1123
      %v1125 = vpop.f32.mrf.mxu0
      %1126 = vmatprep.mubr.f32.mxu0 %v848
      %1127 = vmatmul.mubr.f32.gmra.mxu0 %v846
      %v1128 = vpop.f32.mrf.mxu0
      %v1129 = vadd.f32 0.0, %v1128
      %v1130 = vpop.f32.mrf.mxu0
      %1131 = vmatprep.mubr.f32.mxu0 %v854
      %1132 = vmatmul.mubr.f32.gmra.mxu0 %v852
      %v1133 = vpop.f32.mrf.mxu0
      %v1134 = vadd.f32 0.0, %v1133
      %v1135 = vpop.f32.mrf.mxu0
      %1136 = vmatprep.mubr.f32.mxu0 %v860
      %1137 = vmatmul.mubr.f32.gmra.mxu0 %v858
      %v1138 = vpop.f32.mrf.mxu0
      %v1139 = vadd.f32 0.0, %v1138
      %v1140 = vpop.f32.mrf.mxu0
      %1141 = vmatprep.mubr.f32.mxu0 %v866
      %1142 = vmatmul.mubr.f32.gmra.mxu0 %v864
      %v1143 = vpop.f32.mrf.mxu0
      %v1144 = vadd.f32 0.0, %v1143
      %v1145 = vpop.f32.mrf.mxu0
      %1146 = vmatprep.mubr.f32.mxu0 %v872
      %1147 = vmatmul.mubr.f32.gmra.mxu0 %v870
      %v1148 = vpop.f32.mrf.mxu0
      %v1149 = vadd.f32 0.0, %v1148
      %v1150 = vpop.f32.mrf.mxu0
      %1151 = vmatprep.mubr.f32.mxu0 %v878
      %1152 = vmatmul.mubr.f32.gmra.mxu0 %v876
      %v1153 = vpop.f32.mrf.mxu0
      %v1154 = vadd.f32 0.0, %v1153
      %v1155 = vpop.f32.mrf.mxu0
      %1156 = vmatprep.mubr.f32.mxu0 %v884
      %1157 = vmatmul.mubr.f32.gmra.mxu0 %v882
      %v1158 = vpop.f32.mrf.mxu0
      %v1159 = vadd.f32 0.0, %v1158
      %v1160 = vpop.f32.mrf.mxu0
      %1161 = vmatprep.mubr.f32.mxu0 %v890
      %1162 = vmatmul.mubr.f32.gmra.mxu0 %v888
      %v1163 = vpop.f32.mrf.mxu0
      %v1164 = vadd.f32 0.0, %v1163
      %v1165 = vpop.f32.mrf.mxu0
      %1166 = vmatprep.mubr.f32.mxu0 %v896
      %1167 = vmatmul.mubr.f32.gmra.mxu0 %v894
      %v1168 = vpop.f32.mrf.mxu0
      %v1169 = vadd.f32 0.0, %v1168
      %v1170 = vpop.f32.mrf.mxu0
      %1171 = vmatprep.mubr.f32.mxu0 %v902
      %1172 = vmatmul.mubr.f32.gmra.mxu0 %v900
      %v1173 = vpop.f32.mrf.mxu0
      %v1174 = vadd.f32 0.0, %v1173
      %v1175 = vpop.f32.mrf.mxu0
      %1176 = vmatprep.mubr.f32.mxu0 %v908
      %1177 = vmatmul.mubr.f32.gmra.mxu0 %v906
      %v1178 = vpop.f32.mrf.mxu0
      %v1179 = vadd.f32 0.0, %v1178
      %v1180 = vpop.f32.mrf.mxu0
      %1181 = vmatprep.mubr.f32.mxu0 %v914
      %1182 = vmatmul.mubr.f32.gmra.mxu0 %v912
      %v1183 = vpop.f32.mrf.mxu0
      %v1184 = vadd.f32 0.0, %v1183
      %v1185 = vpop.f32.mrf.mxu0
      %1186 = vmatprep.mubr.f32.mxu0 %v920
      %1187 = vmatmul.mubr.f32.gmra.mxu0 %v918
      %v1188 = vpop.f32.mrf.mxu0
      %v1189 = vadd.f32 0.0, %v1188
      %v1190 = vpop.f32.mrf.mxu0
      %1191 = vmatprep.mubr.f32.mxu0 %v926
      %1192 = vmatmul.mubr.f32.gmra.mxu0 %v924
      %v1193 = vpop.f32.mrf.mxu0
      %v1194 = vadd.f32 0.0, %v1193
      %v1195 = vpop.f32.mrf.mxu0
      %1196 = vmatprep.mubr.f32.mxu0 %v932
      %1197 = vmatmul.mubr.f32.gmra.mxu0 %v930
      %v1198 = vpop.f32.mrf.mxu0
      %v1199 = vadd.f32 0.0, %v1198
      %v1200 = vpop.f32.mrf.mxu0
      %1201 = vmatprep.mubr.f32.mxu0 %v938
      %1202 = vmatmul.mubr.f32.gmra.mxu0 %v936
      %v1203 = vpop.f32.mrf.mxu0
      %v1204 = vadd.f32 0.0, %v1203
      %v1205 = vpop.f32.mrf.mxu0
      %1206 = vmatprep.mubr.f32.mxu0 %v944
      %1207 = vmatmul.mubr.f32.gmra.mxu0 %v942
      %v1208 = vpop.f32.mrf.mxu0
      %v1209 = vadd.f32 0.0, %v1208
      %v1210 = vpop.f32.mrf.mxu0
      %1211 = vmatprep.mubr.f32.mxu0 %v950
      %1212 = vmatmul.mubr.f32.gmra.mxu0 %v948
      %v1213 = vpop.f32.mrf.mxu0
      %v1214 = vadd.f32 0.0, %v1213
      %v1215 = vpop.f32.mrf.mxu0
      %1216 = vmatprep.mubr.f32.mxu0 %v956
      %1217 = vmatmul.mubr.f32.gmra.mxu0 %v954
      %v1218 = vpop.f32.mrf.mxu0
      %v1219 = vadd.f32 0.0, %v1218
      %v1220 = vpop.f32.mrf.mxu0
      %1221 = vmatprep.mubr.f32.mxu0 %v962
      %1222 = vmatmul.mubr.f32.gmra.mxu0 %v960
      %v1223 = vpop.f32.mrf.mxu0
      %v1224 = vadd.f32 0.0, %v1223
      %v1225 = vpop.f32.mrf.mxu0
      %1226 = vmatprep.mubr.f32.mxu0 %v968
      %1227 = vmatmul.mubr.f32.gmra.mxu0 %v966
      %v1228 = vpop.f32.mrf.mxu0
      %v1229 = vadd.f32 0.0, %v1228
      %v1230 = vpop.f32.mrf.mxu0
      %1231 = vmatprep.mubr.f32.mxu0 %v974
      %1232 = vmatmul.mubr.f32.gmra.mxu0 %v972
      %v1233 = vpop.f32.mrf.mxu0
      %v1234 = vadd.f32 0.0, %v1233
      %v1235 = vpop.f32.mrf.mxu0
      %1236 = vmatprep.mubr.f32.mxu0 %v980
      %1237 = vmatmul.mubr.f32.gmra.mxu0 %v978
      %v1238 = vpop.f32.mrf.mxu0
      %v1239 = vadd.f32 0.0, %v1238
      %v1240 = vpop.f32.mrf.mxu0
      %1241 = vmatprep.mubr.f32.mxu0 %v986
      %1242 = vmatmul.mubr.f32.gmra.mxu0 %v984
      %v1243 = vpop.f32.mrf.mxu0
      %v1244 = vadd.f32 0.0, %v1243
      %v1245 = vpop.f32.mrf.mxu0
      %1246 = vmatprep.mubr.f32.mxu0 %v992
      %1247 = vmatmul.mubr.f32.gmra.mxu0 %v990
      %v1248 = vpop.f32.mrf.mxu0
      %v1249 = vadd.f32 0.0, %v1248
      %v1250 = vpop.f32.mrf.mxu0
      %1251 = vmatprep.mubr.f32.mxu0 %v998
      %1252 = vmatmul.mubr.f32.gmra.mxu0 %v996
      %v1253 = vpop.f32.mrf.mxu0
      %v1254 = vadd.f32 0.0, %v1253
      %v1255 = vpop.f32.mrf.mxu0
      %1256 = vdwg.mxu0
      %1257 = vst [vmem:[%s296] sm:$0xff] %v1099
      %1258 = vst [vmem:[%s296 + $0x8] sm:$0xff] %v1104
      %1259 = vst [vmem:[%s296 + $0x10] sm:$0xff] %v1109
      %1260 = vst [vmem:[%s296 + $0x18] sm:$0xff] %v1114
      %1261 = vst [vmem:[%s296 + $0x20] sm:$0xff] %v1119
      %1262 = vst [vmem:[%s296 + $0x28] sm:$0xff] %v1124
      %1263 = vst [vmem:[%s296 + $0x30] sm:$0xff] %v1129
      %1264 = vst [vmem:[%s296 + $0x38] sm:$0xff] %v1134
      %1265 = vst [vmem:[%s296 + $0x40] sm:$0xff] %v1139
      %1266 = vst [vmem:[%s296 + $0x48] sm:$0xff] %v1144
      %1267 = vst [vmem:[%s296 + $0x50] sm:$0xff] %v1149
      %1268 = vst [vmem:[%s296 + $0x58] sm:$0xff] %v1154
      %1269 = vst [vmem:[%s296 + $0x60] sm:$0xff] %v1159
      %1270 = vst [vmem:[%s296 + $0x68] sm:$0xff] %v1164
      %1271 = vst [vmem:[%s296 + $0x70] sm:$0xff] %v1169
      %1272 = vst [vmem:[%s296 + $0x78] sm:$0xff] %v1174
      %1273 = vst [vmem:[%s296 + $0x80] sm:$0xff] %v1179
      %1274 = vst [vmem:[%s296 + $0x88] sm:$0xff] %v1184
      %1275 = vst [vmem:[%s296 + $0x90] sm:$0xff] %v1189
      %1276 = vst [vmem:[%s296 + $0x98] sm:$0xff] %v1194
      %1277 = vst [vmem:[%s296 + $0xa0] sm:$0xff] %v1199
      %1278 = vst [vmem:[%s296 + $0xa8] sm:$0xff] %v1204
      %1279 = vst [vmem:[%s296 + $0xb0] sm:$0xff] %v1209
      %1280 = vst [vmem:[%s296 + $0xb8] sm:$0xff] %v1214
      %1281 = vst [vmem:[%s296 + $0xc0] sm:$0xff] %v1219
      %1282 = vst [vmem:[%s296 + $0xc8] sm:$0xff] %v1224
      %1283 = vst [vmem:[%s296 + $0xd0] sm:$0xff] %v1229
      %1284 = vst [vmem:[%s296 + $0xd8] sm:$0xff] %v1234
      %1285 = vst [vmem:[%s296 + $0xe0] sm:$0xff] %v1239
      %1286 = vst [vmem:[%s296 + $0xe8] sm:$0xff] %v1244
      %1287 = vst [vmem:[%s296 + $0xf0] sm:$0xff] %v1249
      %1288 = vst [vmem:[%s296 + $0xf8] sm:$0xff] %v1254
      %v1289 = vpack.c.bf16 %v816, %v810
      %v1290 = vpack.c.bf16 %v818, %v812
      %v1291 = vpack.c.bf16 %v828, %v822
      %v1292 = vpack.c.bf16 %v830, %v824
      %v1293 = vpack.c.bf16 %v840, %v834
      %v1294 = vpack.c.bf16 %v842, %v836
      %v1295 = vpack.c.bf16 %v852, %v846
      %v1296 = vpack.c.bf16 %v854, %v848
      %v1297 = vpack.c.bf16 %v864, %v858
      %v1298 = vpack.c.bf16 %v866, %v860
      %v1299 = vpack.c.bf16 %v876, %v870
      %v1300 = vpack.c.bf16 %v878, %v872
      %v1301 = vpack.c.bf16 %v888, %v882
      %v1302 = vpack.c.bf16 %v890, %v884
      %v1303 = vpack.c.bf16 %v900, %v894
      %v1304 = vpack.c.bf16 %v902, %v896
      %v1305 = vpack.c.bf16 %v912, %v906
      %v1306 = vpack.c.bf16 %v914, %v908
      %v1307 = vpack.c.bf16 %v924, %v918
      %v1308 = vpack.c.bf16 %v926, %v920
      %v1309 = vpack.c.bf16 %v936, %v930
      %v1310 = vpack.c.bf16 %v938, %v932
      %v1311 = vpack.c.bf16 %v948, %v942
      %v1312 = vpack.c.bf16 %v950, %v944
      %v1313 = vpack.c.bf16 %v960, %v954
      %v1314 = vpack.c.bf16 %v962, %v956
      %v1315 = vpack.c.bf16 %v972, %v966
      %v1316 = vpack.c.bf16 %v974, %v968
      %v1317 = vpack.c.bf16 %v984, %v978
      %v1318 = vpack.c.bf16 %v986, %v980
      %v1319 = vpack.c.bf16 %v996, %v990
      %v1320 = vpack.c.bf16 %v998, %v992
      %v1353 = vunpack.c.l.b16 %v1289
      %v1354 = vunpack.c.l.b16 %v1290
      %v1355 = vunpack.c.h.b16 %v1289
      %v1356 = vunpack.c.h.b16 %v1290
      %v1357 = vunpack.c.l.b16 %v1291
      %v1358 = vunpack.c.l.b16 %v1292
      %v1359 = vunpack.c.h.b16 %v1291
      %v1360 = vunpack.c.h.b16 %v1292
      %v1361 = vunpack.c.l.b16 %v1293
      %v1362 = vunpack.c.l.b16 %v1294
      %v1363 = vunpack.c.h.b16 %v1293
      %v1364 = vunpack.c.h.b16 %v1294
      %v1365 = vunpack.c.l.b16 %v1295
      %v1366 = vunpack.c.l.b16 %v1296
      %v1367 = vunpack.c.h.b16 %v1295
      %v1368 = vunpack.c.h.b16 %v1296
      %v1369 = vunpack.c.l.b16 %v1297
      %v1370 = vunpack.c.l.b16 %v1298
      %v1371 = vunpack.c.h.b16 %v1297
      %v1372 = vunpack.c.h.b16 %v1298
      %v1373 = vunpack.c.l.b16 %v1299
      %v1374 = vunpack.c.l.b16 %v1300
      %v1375 = vunpack.c.h.b16 %v1299
      %v1376 = vunpack.c.h.b16 %v1300
      %v1377 = vunpack.c.l.b16 %v1301
      %v1378 = vunpack.c.l.b16 %v1302
      %v1379 = vunpack.c.h.b16 %v1301
      %v1380 = vunpack.c.h.b16 %v1302
      %v1381 = vunpack.c.l.b16 %v1303
      %v1382 = vunpack.c.l.b16 %v1304
      %v1383 = vunpack.c.h.b16 %v1303
      %v1384 = vunpack.c.h.b16 %v1304
      %v1385 = vunpack.c.l.b16 %v1305
      %v1386 = vunpack.c.l.b16 %v1306
      %v1387 = vunpack.c.h.b16 %v1305
      %v1388 = vunpack.c.h.b16 %v1306
      %v1389 = vunpack.c.l.b16 %v1307
      %v1390 = vunpack.c.l.b16 %v1308
      %v1391 = vunpack.c.h.b16 %v1307
      %v1392 = vunpack.c.h.b16 %v1308
      %v1393 = vunpack.c.l.b16 %v1309
      %v1394 = vunpack.c.l.b16 %v1310
      %v1395 = vunpack.c.h.b16 %v1309
      %v1396 = vunpack.c.h.b16 %v1310
      %v1397 = vunpack.c.l.b16 %v1311
      %v1398 = vunpack.c.l.b16 %v1312
      %v1399 = vunpack.c.h.b16 %v1311
      %v1400 = vunpack.c.h.b16 %v1312
      %v1401 = vunpack.c.l.b16 %v1313
      %v1402 = vunpack.c.l.b16 %v1314
      %v1403 = vunpack.c.h.b16 %v1313
      %v1404 = vunpack.c.h.b16 %v1314
      %v1405 = vunpack.c.l.b16 %v1315
      %v1406 = vunpack.c.l.b16 %v1316
      %v1407 = vunpack.c.h.b16 %v1315
      %v1408 = vunpack.c.h.b16 %v1316
      %v1409 = vunpack.c.l.b16 %v1317
      %v1410 = vunpack.c.l.b16 %v1318
      %v1411 = vunpack.c.h.b16 %v1317
      %v1412 = vunpack.c.h.b16 %v1318
      %v1413 = vunpack.c.l.b16 %v1319
      %v1414 = vunpack.c.l.b16 %v1320
      %v1415 = vunpack.c.h.b16 %v1319
      %v1416 = vunpack.c.h.b16 %v1320
      %v1417 = vpack.c.b16 %v1354, %v1353
      %v1418 = vpack.c.b16 %v1356, %v1355
      %v1419 = vpack.c.b16 %v1358, %v1357
      %v1420 = vpack.c.b16 %v1360, %v1359
      %v1421 = vpack.c.b16 %v1362, %v1361
      %v1422 = vpack.c.b16 %v1364, %v1363
      %v1423 = vpack.c.b16 %v1366, %v1365
      %v1424 = vpack.c.b16 %v1368, %v1367
      %v1425 = vpack.c.b16 %v1370, %v1369
      %v1426 = vpack.c.b16 %v1372, %v1371
      %v1427 = vpack.c.b16 %v1374, %v1373
      %v1428 = vpack.c.b16 %v1376, %v1375
      %v1429 = vpack.c.b16 %v1378, %v1377
      %v1430 = vpack.c.b16 %v1380, %v1379
      %v1431 = vpack.c.b16 %v1382, %v1381
      %v1432 = vpack.c.b16 %v1384, %v1383
      %v1433 = vpack.c.b16 %v1386, %v1385
      %v1434 = vpack.c.b16 %v1388, %v1387
      %v1435 = vpack.c.b16 %v1390, %v1389
      %v1436 = vpack.c.b16 %v1392, %v1391
      %v1437 = vpack.c.b16 %v1394, %v1393
      %v1438 = vpack.c.b16 %v1396, %v1395
      %v1439 = vpack.c.b16 %v1398, %v1397
      %v1440 = vpack.c.b16 %v1400, %v1399
      %v1441 = vpack.c.b16 %v1402, %v1401
      %v1442 = vpack.c.b16 %v1404, %v1403
      %v1443 = vpack.c.b16 %v1406, %v1405
      %v1444 = vpack.c.b16 %v1408, %v1407
      %v1445 = vpack.c.b16 %v1410, %v1409
      %v1446 = vpack.c.b16 %v1412, %v1411
      %v1447 = vpack.c.b16 %v1414, %v1413
      %v1448 = vpack.c.b16 %v1416, %v1415
      %1481 = vst [vmem:[%s290] sm:$0xff] %v1417
      %1482 = vst [vmem:[%s290 + $0x8] sm:$0xff] %v1418
      %1483 = vst [vmem:[%s290 + $0x10] sm:$0xff] %v1419
      %1484 = vst [vmem:[%s290 + $0x18] sm:$0xff] %v1420
      %1485 = vst [vmem:[%s290 + $0x20] sm:$0xff] %v1421
      %1486 = vst [vmem:[%s290 + $0x28] sm:$0xff] %v1422
      %1487 = vst [vmem:[%s290 + $0x30] sm:$0xff] %v1423
      %1488 = vst [vmem:[%s290 + $0x38] sm:$0xff] %v1424
      %1489 = vst [vmem:[%s290 + $0x40] sm:$0xff] %v1425
      %1490 = vst [vmem:[%s290 + $0x48] sm:$0xff] %v1426
      %1491 = vst [vmem:[%s290 + $0x50] sm:$0xff] %v1427
      %1492 = vst [vmem:[%s290 + $0x58] sm:$0xff] %v1428
      %1493 = vst [vmem:[%s290 + $0x60] sm:$0xff] %v1429
      %1494 = vst [vmem:[%s290 + $0x68] sm:$0xff] %v1430
      %1495 = vst [vmem:[%s290 + $0x70] sm:$0xff] %v1431
      %1496 = vst [vmem:[%s290 + $0x78] sm:$0xff] %v1432
      %1497 = vst [vmem:[%s290 + $0x80] sm:$0xff] %v1433
      %1498 = vst [vmem:[%s290 + $0x88] sm:$0xff] %v1434
      %1499 = vst [vmem:[%s290 + $0x90] sm:$0xff] %v1435
      %1500 = vst [vmem:[%s290 + $0x98] sm:$0xff] %v1436
      %1501 = vst [vmem:[%s290 + $0xa0] sm:$0xff] %v1437
      %1502 = vst [vmem:[%s290 + $0xa8] sm:$0xff] %v1438
      %1503 = vst [vmem:[%s290 + $0xb0] sm:$0xff] %v1439
      %1504 = vst [vmem:[%s290 + $0xb8] sm:$0xff] %v1440
      %1505 = vst [vmem:[%s290 + $0xc0] sm:$0xff] %v1441
      %1506 = vst [vmem:[%s290 + $0xc8] sm:$0xff] %v1442
      %1507 = vst [vmem:[%s290 + $0xd0] sm:$0xff] %v1443
      %1508 = vst [vmem:[%s290 + $0xd8] sm:$0xff] %v1444
      %1509 = vst [vmem:[%s290 + $0xe0] sm:$0xff] %v1445
      %1510 = vst [vmem:[%s290 + $0xe8] sm:$0xff] %v1446
      %1511 = vst [vmem:[%s290 + $0xf0] sm:$0xff] %v1447
      %1512 = vst [vmem:[%s290 + $0xf8] sm:$0xff] %v1448
      %s1513 = smul.u32 32, %s19
      %p1514 = scmp.lt.s32.totalorder %s1513, 63
      %s1515 = scalar_select %p1514, %s1513, 63
      %s1516 = smul.addr %s1515, 2
      %s1517 = smul.addr %s1516, 4
      %s1518 = scalar_lea.vmem %s6, %s1517
      %s1519 = smul.u32 32, %s19
      %p1520 = scmp.lt.s32.totalorder %s1519, 63
      %s1521 = scalar_select %p1520, %s1519, 63
      %s1522 = smul.addr %s1521, 8
      %s1523 = scalar_lea.vmem %s7, %s1522
      // Predicated region
      $region45: #{attention_digae_forward.3} parent=43 // pred_check
        %p1524 = pneg %p168
      $region46: #{attention_digae_forward.3} parent=43 // pred_check_branch
        %1526 = sbr.rel (%p1524) target = $region48
      $region47: #{attention_digae_forward.3} parent=43 // pred_region
        %s1527 = smul.u32 32, %s19
      $region48: #{attention_digae_forward.3} parent=43 // pred_fallthru
        _
      // Predicated region
      $region49: #{attention_digae_forward.3} parent=43 // pred_check
        %p1528 = pneg %p194
      $region50: #{attention_digae_forward.3} parent=43 // pred_check_branch
        %1530 = sbr.rel (%p1528) target = $region52
      $region51: #{attention_digae_forward.3} parent=43 // pred_region
        %s1531 = smul.u32 32, %s19
      $region52: #{attention_digae_forward.3} parent=43 // pred_fallthru
        _
    $region44: #{attention_digae_forward.3} parent=5 // pred_fallthru
      _
    %p1532 = scmp.le.s32.totalorder 2, %s14
    // Predicated region
    $region53: #{attention_digae_forward.3} parent=5 // pred_check
      %p1533 = pneg %p1532
    $region54: #{attention_digae_forward.3} parent=5 // pred_check_branch
      %1535 = sbr.rel (%p1533) target = $region56
    $region55: #{attention_digae_forward.3} parent=5 // pred_region
      %s1536 = ssub.s32 %s14, 2
      // Predicated region
      $region57: #{attention_digae_forward.3} parent=55 // pred_check
        %p1537 = pneg %p174
      $region58: #{attention_digae_forward.3} parent=55 // pred_check_branch
        %1539 = sbr.rel (%p1537) target = $region60
      $region59: #{attention_digae_forward.3} parent=55 // pred_region
        %s1540 = smul.u32 32, %s20
        %p1541 = scmp.lt.s32.totalorder %s1540, 63
        %s1542 = scalar_select %p1541, %s1540, 63
        %s1543 = smul.addr %s1542, 2
        %s1544 = smul.addr %s1543, 4
        %s1545 = scalar_lea.vmem %s6, %s1544
      $region60: #{attention_digae_forward.3} parent=55 // pred_fallthru
        _
      // Predicated region
      $region61: #{attention_digae_forward.3} parent=55 // pred_check
        %p1546 = pneg %p200
      $region62: #{attention_digae_forward.3} parent=55 // pred_check_branch
        %1548 = sbr.rel (%p1546) target = $region64
      $region63: #{attention_digae_forward.3} parent=55 // pred_region
        %s1549 = smul.u32 32, %s20
        %p1550 = scmp.lt.s32.totalorder %s1549, 63
        %s1551 = scalar_select %p1550, %s1549, 63
        %s1552 = smul.addr %s1551, 8
        %s1553 = scalar_lea.vmem %s7, %s1552
      $region64: #{attention_digae_forward.3} parent=55 // pred_fallthru
        _
    $region56: #{attention_digae_forward.3} parent=5 // pred_fallthru
      _
  $region6: #{attention_digae_forward.3} parent=0 // loop_footer
    %s18 = sadd.s32 1, %s14
  $region7: #{attention_digae_forward.3} parent=0 // loop_footer_branch
    %13 = sbr.rel target = $region3
  $region8: #{attention_digae_forward.3} parent=0 // loop_exit
    _

// kernel: attention_digae_forward.5
$region0: #{attention_digae_forward.5}
  #allocation0 [shape = 'u32[]', space=smem, size = 0x4, offset = 0x4, fixed_abs, tag = 'smem constant byte address 0x4 - core index']
  #allocation1 [shape = 'u32[144,128]{1,0:T(1,128)}', space=vmem, size = 0x12000, scoped, tag = 'internal scratch']
  %s0 = inlined_call_operand.vmem [shape: bf16[512,128], index: 0, kind: input, shape index: {}]
  %s1 = inlined_call_operand.vmem [shape: bf16[512,128], index: 1, kind: input, shape index: {}]
  %s2 = inlined_call_operand.hbm [shape: f32[512,512], index: 2, kind: output, shape index: {}]
  %s3 = sld [smem:[#allocation0]]
  $region41: #{attention_digae_forward.5} parent=0
    _
  %s5 = ssub.s32 1, %s3
  %s6 = scalar_select 0, %s5, %s3
  $region1: #{attention_digae_forward.5} parent=0
    #allocation2 [shape = 'u8[524288]{0}', space=vmem, size = 0x80000, scoped, tag = 'output window, operand 0']
    #allocation3 [shape = 's32[2]{0}', space=sflag, size = 0x8, scoped, tag = 'scoped memory for attention_digae_forward.5']
    %7 = vsyncpa [#allocation3], 0
    %s8 = scalar_lea.sflag [#allocation3], 1
    %9 = vsyncpa %s8, 0
    loop: start=0, step=1, limit=6
    $region2: #{attention_digae_forward.5} parent=1 // loop_pre_header
      _
    $region3: #{attention_digae_forward.5} parent=1 // loop_header
      %s11 = sphi 0, %s15
      %p12 = scmp.ge.s32.totalorder %s11, 6
      %s18 = sphi 0, %s30
      %s19 = sphi 0, %s26
      %s20 = sphi 0, %s18
      %s21 = sphi 0, %s19
      %s22 = sphi 0, %s20
      %s23 = sphi 0, %s21
      %s33 = sphi 0, %s35
      %s36 = sphi 0, %s33
      %s37 = sphi 0, %s36
      %s53 = sphi 0, %s37
      %s59 = sphi 0, %s61
      %s62 = sphi 0, %s59
      %s63 = sphi 0, %s62
      %s79 = sphi 0, %s63
      %s87 = sphi 0, %s89
      %s90 = sphi 0, %s87
      %s91 = sphi 0, %s90
      %s107 = sphi 0, %s91
    $region4: #{attention_digae_forward.5} parent=1 // loop_header_branch
      %14 = sbr.rel (%p12) target = $region8
    $region5: #{attention_digae_forward.5} parent=1 // loop_body
      %s16 = ssub.s32 %s11, 1
      %s17 = ssub.s32 %s11, 2
      %s24 = sadd.s32 1, %s19
      %p25 = scmp.ge.s32.totalorder %s24, 2
      %s26 = scalar_select %p25, 0, %s24
      %s27 = sadd.s32 1, %s18
      %s28 = scalar_select %p25, %s27, %s18
      %p29 = scmp.ge.s32.totalorder %s28, 2
      %s30 = scalar_select %p29, 0, %s28
      %s31 = ssub.s32 %s18, %s30
      %p32 = scmp.eq.s32.totalorder %s31, 0
      %s34 = sadd.s32 %s33, 1
      %s35 = scalar_select %p32, %s33, %s34
      %p38 = pneg %p32
      %p39 = scmp.eq.s32.totalorder %s11, 3
      %p40 = por %p38, %p39
      %p41 = scmp.ne.s32.totalorder %s33, %s36
      %p42 = scmp.eq.s32.totalorder %s11, 0
      %p43 = por %p41, %p42
      %p44 = scmp.ne.s32.totalorder %s33, %s36
      %p45 = scmp.eq.s32.totalorder %s16, 3
      %p46 = por %p44, %p45
      %p47 = scmp.ne.s32.totalorder %s36, %s37
      %p48 = scmp.eq.s32.totalorder %s16, 0
      %p49 = por %p47, %p48
      %p50 = scmp.ne.s32.totalorder %s36, %s37
      %p51 = scmp.eq.s32.totalorder %s17, 3
      %p52 = por %p50, %p51
      %p54 = scmp.ne.s32.totalorder %s37, %s53
      %p55 = scmp.eq.s32.totalorder %s17, 0
      %p56 = por %p54, %p55
      %s57 = ssub.s32 %s19, %s26
      %p58 = scmp.eq.s32.totalorder %s57, 0
      %s60 = sadd.s32 %s59, 1
      %s61 = scalar_select %p58, %s59, %s60
      %p64 = pneg %p58
      %p65 = scmp.eq.s32.totalorder %s11, 3
      %p66 = por %p64, %p65
      %p67 = scmp.ne.s32.totalorder %s59, %s62
      %p68 = scmp.eq.s32.totalorder %s11, 0
      %p69 = por %p67, %p68
      %p70 = scmp.ne.s32.totalorder %s59, %s62
      %p71 = scmp.eq.s32.totalorder %s16, 3
      %p72 = por %p70, %p71
      %p73 = scmp.ne.s32.totalorder %s62, %s63
      %p74 = scmp.eq.s32.totalorder %s16, 0
      %p75 = por %p73, %p74
      %p76 = scmp.ne.s32.totalorder %s62, %s63
      %p77 = scmp.eq.s32.totalorder %s17, 3
      %p78 = por %p76, %p77
      %p80 = scmp.ne.s32.totalorder %s63, %s79
      %p81 = scmp.eq.s32.totalorder %s17, 0
      %p82 = por %p80, %p81
      %s83 = ssub.s32 %s18, %s30
      %s84 = ssub.s32 %s19, %s26
      %s85 = sor.u32 %s83, %s84
      %p86 = scmp.eq.s32.totalorder %s85, 0
      %s88 = sadd.s32 %s87, 1
      %s89 = scalar_select %p86, %s87, %s88
      %p92 = pneg %p86
      %p93 = scmp.eq.s32.totalorder %s11, 3
      %p94 = por %p92, %p93
      %p95 = scmp.ne.s32.totalorder %s87, %s90
      %p96 = scmp.eq.s32.totalorder %s11, 0
      %p97 = por %p95, %p96
      %p98 = scmp.ne.s32.totalorder %s87, %s90
      %p99 = scmp.eq.s32.totalorder %s16, 3
      %p100 = por %p98, %p99
      %p101 = scmp.ne.s32.totalorder %s90, %s91
      %p102 = scmp.eq.s32.totalorder %s16, 0
      %p103 = por %p101, %p102
      %p104 = scmp.ne.s32.totalorder %s90, %s91
      %p105 = scmp.eq.s32.totalorder %s17, 3
      %p106 = por %p104, %p105
      %p108 = scmp.ne.s32.totalorder %s91, %s107
      %p109 = scmp.eq.s32.totalorder %s17, 0
      %p110 = por %p108, %p109
      %p111 = scmp.le.s32.totalorder 1, %s11
      %p112 = scmp.lt.s32.totalorder %s11, 5
      %p113 = pnand %p111, %p112
      %p114 = pneg %p113
      // Predicated region
      $region9: #{attention_digae_forward.5} parent=5 // pred_check
        _
      $region10: #{attention_digae_forward.5} parent=5 // pred_check_branch
        %116 = sbr.rel (%p113) target = $region12
      $region11: #{attention_digae_forward.5} parent=5 // pred_region
        %s117 = ssub.s32 %s11, 1
      $region12: #{attention_digae_forward.5} parent=5 // pred_fallthru
        _
      %p118 = scmp.lt.s32.totalorder %s11, 4
      // Predicated region
      $region13: #{attention_digae_forward.5} parent=5 // pred_check
        %p119 = pneg %p118
      $region14: #{attention_digae_forward.5} parent=5 // pred_check_branch
        %121 = sbr.rel (%p119) target = $region16
      $region15: #{attention_digae_forward.5} parent=5 // pred_region
        // Predicated region
        $region17: #{attention_digae_forward.5} parent=15 // pred_check
          %p122 = pneg %p43
        $region18: #{attention_digae_forward.5} parent=15 // pred_check_branch
          %124 = sbr.rel (%p122) target = $region20
        $region19: #{attention_digae_forward.5} parent=15 // pred_region
          %s125 = smul.u32 32, %s18
          %p126 = scmp.lt.s32.totalorder %s125, 63
          %s127 = scalar_select %p126, %s125, 63
          %s128 = smul.addr %s127, 4
          %s129 = scalar_lea.vmem %s0, %s128
          %s130 = smul.u32 32, %s18
        $region20: #{attention_digae_forward.5} parent=15 // pred_fallthru
          _
        // Predicated region
        $region21: #{attention_digae_forward.5} parent=15 // pred_check
          %p131 = pneg %p69
        $region22: #{attention_digae_forward.5} parent=15 // pred_check_branch
          %133 = sbr.rel (%p131) target = $region24
        $region23: #{attention_digae_forward.5} parent=15 // pred_region
          %s134 = smul.u32 32, %s19
          %p135 = scmp.lt.s32.totalorder %s134, 63
          %s136 = scalar_select %p135, %s134, 63
          %s137 = smul.addr %s136, 4
          %s138 = scalar_lea.vmem %s1, %s137
          %s139 = smul.u32 32, %s19
        $region24: #{attention_digae_forward.5} parent=15 // pred_fallthru
          _
      $region16: #{attention_digae_forward.5} parent=5 // pred_fallthru
        _
      %p140 = scmp.le.s32.totalorder 1, %s11
      %p141 = scmp.lt.s32.totalorder %s11, 5
      %p142 = pnand %p140, %p141
      %p143 = pneg %p142
      // Predicated region
      $region25: #{attention_digae_forward.5} parent=5 // pred_check
        _
      $region26: #{attention_digae_forward.5} parent=5 // pred_check_branch
        %145 = sbr.rel (%p142) target = $region28
      $region27: #{attention_digae_forward.5} parent=5 // pred_region
        %s146 = ssub.s32 %s11, 1
        %s147 = smul.u32 32, %s20
        %p148 = scmp.lt.s32.totalorder %s147, 63
        %s149 = scalar_select %p148, %s147, 63
        %s150 = smul.addr %s149, 4
        %s151 = scalar_lea.vmem %s0, %s150
        %p152 = pneg %p49
        %p153 = pneg %p46
        %s154 = smul.u32 32, %s21
        %p155 = scmp.lt.s32.totalorder %s154, 63
        %s156 = scalar_select %p155, %s154, 63
        %s157 = smul.addr %s156, 4
        %s158 = scalar_lea.vmem %s1, %s157
        %p159 = pneg %p75
        %p160 = pneg %p72
        %p161 = pneg %p103
        %p162 = pneg %p100
        %s163 = sand.u32 %s90, 1
        %s164 = scalar_lea.sflag [#allocation3], %s163
        %s165 = sand.u32 %s90, 1
        %s166 = smul.addr %s165, 512
        %s167 = scalar_lea.vmem [#allocation2], %s166
        %s168 = smul.u32 32, %s20
        %p169 = scmp.lt.s32.totalorder %s168, 63
        %s170 = scalar_select %p169, %s168, 63
        %s171 = smul.addr %s170, 4
        %s172 = scalar_lea.vmem %s0, %s171
        %s173 = smul.u32 32, %s20
        %s174 = smul.u32 32, %s21
        %p175 = scmp.lt.s32.totalorder %s174, 63
        %s176 = scalar_select %p175, %s174, 63
        %s177 = smul.addr %s176, 4
        %s178 = scalar_lea.vmem %s1, %s177
        %s179 = smul.u32 32, %s21
        %s180 = smul.u32 32, %s20
        %s181 = smul.u32 2, %s21
        %v183 = vld [vmem:[%s172] sm:$0xf]
        %v184 = vld [vmem:[%s172 + $0x4] sm:$0xf]
        %v185 = vld [vmem:[%s172 + $0x8] sm:$0xf]
        %v186 = vld [vmem:[%s172 + $0xc] sm:$0xf]
        %v187 = vld [vmem:[%s172 + $0x10] sm:$0xf]
        %v188 = vld [vmem:[%s172 + $0x14] sm:$0xf]
        %v189 = vld [vmem:[%s172 + $0x18] sm:$0xf]
        %v190 = vld [vmem:[%s172 + $0x1c] sm:$0xf]
        %v191 = vld [vmem:[%s172 + $0x20] sm:$0xf]
        %v192 = vld [vmem:[%s172 + $0x24] sm:$0xf]
        %v193 = vld [vmem:[%s172 + $0x28] sm:$0xf]
        %v194 = vld [vmem:[%s172 + $0x2c] sm:$0xf]
        %v195 = vld [vmem:[%s172 + $0x30] sm:$0xf]
        %v196 = vld [vmem:[%s172 + $0x34] sm:$0xf]
        %v197 = vld [vmem:[%s172 + $0x38] sm:$0xf]
        %v198 = vld [vmem:[%s172 + $0x3c] sm:$0xf]
        %v199 = vld [vmem:[%s172 + $0x40] sm:$0xf]
        %v200 = vld [vmem:[%s172 + $0x44] sm:$0xf]
        %v201 = vld [vmem:[%s172 + $0x48] sm:$0xf]
        %v202 = vld [vmem:[%s172 + $0x4c] sm:$0xf]
        %v203 = vld [vmem:[%s172 + $0x50] sm:$0xf]
        %v204 = vld [vmem:[%s172 + $0x54] sm:$0xf]
        %v205 = vld [vmem:[%s172 + $0x58] sm:$0xf]
        %v206 = vld [vmem:[%s172 + $0x5c] sm:$0xf]
        %v207 = vld [vmem:[%s172 + $0x60] sm:$0xf]
        %v208 = vld [vmem:[%s172 + $0x64] sm:$0xf]
        %v209 = vld [vmem:[%s172 + $0x68] sm:$0xf]
        %v210 = vld [vmem:[%s172 + $0x6c] sm:$0xf]
        %v211 = vld [vmem:[%s172 + $0x70] sm:$0xf]
        %v212 = vld [vmem:[%s172 + $0x74] sm:$0xf]
        %v213 = vld [vmem:[%s172 + $0x78] sm:$0xf]
        %v214 = vld [vmem:[%s172 + $0x7c] sm:$0xf]
        %v215 = vld [vmem:[%s178] sm:$0xf]
        %v216 = vld [vmem:[%s178 + $0x4] sm:$0xf]
        %v217 = vld [vmem:[%s178 + $0x8] sm:$0xf]
        %v218 = vld [vmem:[%s178 + $0xc] sm:$0xf]
        %v219 = vld [vmem:[%s178 + $0x10] sm:$0xf]
        %v220 = vld [vmem:[%s178 + $0x14] sm:$0xf]
        %v221 = vld [vmem:[%s178 + $0x18] sm:$0xf]
        %v222 = vld [vmem:[%s178 + $0x1c] sm:$0xf]
        %v223 = vld [vmem:[%s178 + $0x20] sm:$0xf]
        %v224 = vld [vmem:[%s178 + $0x24] sm:$0xf]
        %v225 = vld [vmem:[%s178 + $0x28] sm:$0xf]
        %v226 = vld [vmem:[%s178 + $0x2c] sm:$0xf]
        %v227 = vld [vmem:[%s178 + $0x30] sm:$0xf]
        %v228 = vld [vmem:[%s178 + $0x34] sm:$0xf]
        %v229 = vld [vmem:[%s178 + $0x38] sm:$0xf]
        %v230 = vld [vmem:[%s178 + $0x3c] sm:$0xf]
        %v231 = vld [vmem:[%s178 + $0x40] sm:$0xf]
        %v232 = vld [vmem:[%s178 + $0x44] sm:$0xf]
        %v233 = vld [vmem:[%s178 + $0x48] sm:$0xf]
        %v234 = vld [vmem:[%s178 + $0x4c] sm:$0xf]
        %v235 = vld [vmem:[%s178 + $0x50] sm:$0xf]
        %v236 = vld [vmem:[%s178 + $0x54] sm:$0xf]
        %v237 = vld [vmem:[%s178 + $0x58] sm:$0xf]
        %v238 = vld [vmem:[%s178 + $0x5c] sm:$0xf]
        %v239 = vld [vmem:[%s178 + $0x60] sm:$0xf]
        %v240 = vld [vmem:[%s178 + $0x64] sm:$0xf]
        %v241 = vld [vmem:[%s178 + $0x68] sm:$0xf]
        %v242 = vld [vmem:[%s178 + $0x6c] sm:$0xf]
        %v243 = vld [vmem:[%s178 + $0x70] sm:$0xf]
        %v244 = vld [vmem:[%s178 + $0x74] sm:$0xf]
        %v245 = vld [vmem:[%s178 + $0x78] sm:$0xf]
        %v246 = vld [vmem:[%s178 + $0x7c] sm:$0xf]
        %v279 = vunpack.c.l.b16 %v183
        %v280 = vunpack.c.l.b16 %v184
        %v281 = vunpack.c.l.b16 %v185
        %v282 = vunpack.c.l.b16 %v186
        %v283 = vunpack.c.l.b16 %v187
        %v284 = vunpack.c.l.b16 %v188
        %v285 = vunpack.c.l.b16 %v189
        %v286 = vunpack.c.l.b16 %v190
        %v287 = vunpack.c.l.b16 %v191
        %v288 = vunpack.c.l.b16 %v192
        %v289 = vunpack.c.l.b16 %v193
        %v290 = vunpack.c.l.b16 %v194
        %v291 = vunpack.c.l.b16 %v195
        %v292 = vunpack.c.l.b16 %v196
        %v293 = vunpack.c.l.b16 %v197
        %v294 = vunpack.c.l.b16 %v198
        %v295 = vunpack.c.l.b16 %v199
        %v296 = vunpack.c.l.b16 %v200
        %v297 = vunpack.c.l.b16 %v201
        %v298 = vunpack.c.l.b16 %v202
        %v299 = vunpack.c.l.b16 %v203
        %v300 = vunpack.c.l.b16 %v204
        %v301 = vunpack.c.l.b16 %v205
        %v302 = vunpack.c.l.b16 %v206
        %v303 = vunpack.c.l.b16 %v207
        %v304 = vunpack.c.l.b16 %v208
        %v305 = vunpack.c.l.b16 %v209
        %v306 = vunpack.c.l.b16 %v210
        %v307 = vunpack.c.l.b16 %v211
        %v308 = vunpack.c.l.b16 %v212
        %v309 = vunpack.c.l.b16 %v213
        %v310 = vunpack.c.l.b16 %v214
        %v311 = vpack.c.b16 %v280, %v279
        %v312 = vpack.c.b16 %v282, %v281
        %v313 = vpack.c.b16 %v284, %v283
        %v314 = vpack.c.b16 %v286, %v285
        %v315 = vpack.c.b16 %v288, %v287
        %v316 = vpack.c.b16 %v290, %v289
        %v317 = vpack.c.b16 %v292, %v291
        %v318 = vpack.c.b16 %v294, %v293
        %v319 = vpack.c.b16 %v296, %v295
        %v320 = vpack.c.b16 %v298, %v297
        %v321 = vpack.c.b16 %v300, %v299
        %v322 = vpack.c.b16 %v302, %v301
        %v323 = vpack.c.b16 %v304, %v303
        %v324 = vpack.c.b16 %v306, %v305
        %v325 = vpack.c.b16 %v308, %v307
        %v326 = vpack.c.b16 %v310, %v309
        %v375 = vunpack.c.l.b16 %v215
        %v376 = vunpack.c.l.b16 %v216
        %v377 = vunpack.c.l.b16 %v217
        %v378 = vunpack.c.l.b16 %v218
        %v379 = vunpack.c.l.b16 %v219
        %v380 = vunpack.c.l.b16 %v220
        %v381 = vunpack.c.l.b16 %v221
        %v382 = vunpack.c.l.b16 %v222
        %v383 = vunpack.c.l.b16 %v223
        %v384 = vunpack.c.l.b16 %v224
        %v385 = vunpack.c.l.b16 %v225
        %v386 = vunpack.c.l.b16 %v226
        %v387 = vunpack.c.l.b16 %v227
        %v388 = vunpack.c.l.b16 %v228
        %v389 = vunpack.c.l.b16 %v229
        %v390 = vunpack.c.l.b16 %v230
        %v391 = vunpack.c.l.b16 %v231
        %v392 = vunpack.c.l.b16 %v232
        %v393 = vunpack.c.l.b16 %v233
        %v394 = vunpack.c.l.b16 %v234
        %v395 = vunpack.c.l.b16 %v235
        %v396 = vunpack.c.l.b16 %v236
        %v397 = vunpack.c.l.b16 %v237
        %v398 = vunpack.c.l.b16 %v238
        %v399 = vunpack.c.l.b16 %v239
        %v400 = vunpack.c.l.b16 %v240
        %v401 = vunpack.c.l.b16 %v241
        %v402 = vunpack.c.l.b16 %v242
        %v403 = vunpack.c.l.b16 %v243
        %v404 = vunpack.c.l.b16 %v244
        %v405 = vunpack.c.l.b16 %v245
        %v406 = vunpack.c.l.b16 %v246
        %v407 = vpack.c.b16 %v376, %v375
        %v408 = vpack.c.b16 %v378, %v377
        %v409 = vpack.c.b16 %v380, %v379
        %v410 = vpack.c.b16 %v382, %v381
        %v411 = vpack.c.b16 %v384, %v383
        %v412 = vpack.c.b16 %v386, %v385
        %v413 = vpack.c.b16 %v388, %v387
        %v414 = vpack.c.b16 %v390, %v389
        %v415 = vpack.c.b16 %v392, %v391
        %v416 = vpack.c.b16 %v394, %v393
        %v417 = vpack.c.b16 %v396, %v395
        %v418 = vpack.c.b16 %v398, %v397
        %v419 = vpack.c.b16 %v400, %v399
        %v420 = vpack.c.b16 %v402, %v401
        %v421 = vpack.c.b16 %v404, %v403
        %v422 = vpack.c.b16 %v406, %v405
        %439 = vmatprep.subr.bf16.mxu0 0
        %440 = vmatpush1.bf16.xpose.msra.mxu0 %v414
        %441 = vmatprep.subr.bf16.mxu0 0
        %442 = vmatpush1.bf16.xpose.msra.mxu0 %v413
        %443 = vmatprep.subr.bf16.mxu0 0
        %444 = vmatpush1.bf16.xpose.msra.mxu0 %v412
        %445 = vmatprep.subr.bf16.mxu0 0
        %446 = vmatpush1.bf16.xpose.msra.mxu0 %v411
        %447 = vmatprep.subr.bf16.mxu0 0
        %448 = vmatpush1.bf16.xpose.msra.mxu0 %v410
        %449 = vmatprep.subr.bf16.mxu0 0
        %450 = vmatpush1.bf16.xpose.msra.mxu0 %v409
        %451 = vmatprep.subr.bf16.mxu0 0
        %452 = vmatpush1.bf16.xpose.msra.mxu0 %v408
        %453 = vmatprep.subr.bf16.mxu0 0
        %454 = vmatpush1.bf16.xpose.msra.mxu0 %v407
        %455 = vmatprep.subr.bf16.mxu0 0
        %456 = vmatpush2.bf16.xpose.msra.mxu0 %v422
        %457 = vmatprep.subr.bf16.mxu0 0
        %458 = vmatpush2.bf16.xpose.msra.mxu0 %v421
        %459 = vmatprep.subr.bf16.mxu0 0
        %460 = vmatpush2.bf16.xpose.msra.mxu0 %v420
        %461 = vmatprep.subr.bf16.mxu0 0
        %462 = vmatpush2.bf16.xpose.msra.mxu0 %v419
        %463 = vmatprep.subr.bf16.mxu0 0
        %464 = vmatpush2.bf16.xpose.msra.mxu0 %v418
        %465 = vmatprep.subr.bf16.mxu0 0
        %466 = vmatpush2.bf16.xpose.msra.mxu0 %v417
        %467 = vmatprep.subr.bf16.mxu0 0
        %468 = vmatpush2.bf16.xpose.msra.mxu0 %v416
        %469 = vmatprep.subr.bf16.mxu0 0
        %470 = vmatpush2.bf16.xpose.msra.mxu0 %v415
        %471 = vmatprep.mubr.bf16.mxu0 0
        %472 = vmatmul.mubr.bf16.gmra.mxu0 %v311
        %v473 = vpop.f32.mrf.mxu0
        %v474 = vadd.f32 0.0, %v473
        %v475 = vpop.f32.mrf.mxu0
        %v476 = vadd.f32 0.0, %v475
        %v477 = vpop.f32.mrf.mxu0
        %v478 = vadd.f32 0.0, %v477
        %v479 = vpop.f32.mrf.mxu0
        %v480 = vadd.f32 0.0, %v479
        %481 = vmatprep.mubr.bf16.mxu0 0
        %482 = vmatmul.mubr.bf16.gmra.mxu0 %v312
        %v483 = vpop.f32.mrf.mxu0
        %v484 = vadd.f32 0.0, %v483
        %v485 = vpop.f32.mrf.mxu0
        %v486 = vadd.f32 0.0, %v485
        %v487 = vpop.f32.mrf.mxu0
        %v488 = vadd.f32 0.0, %v487
        %v489 = vpop.f32.mrf.mxu0
        %v490 = vadd.f32 0.0, %v489
        %491 = vmatprep.mubr.bf16.mxu0 0
        %492 = vmatmul.mubr.bf16.gmra.mxu0 %v313
        %v493 = vpop.f32.mrf.mxu0
        %v494 = vadd.f32 0.0, %v493
        %v495 = vpop.f32.mrf.mxu0
        %v496 = vadd.f32 0.0, %v495
        %v497 = vpop.f32.mrf.mxu0
        %v498 = vadd.f32 0.0, %v497
        %v499 = vpop.f32.mrf.mxu0
        %v500 = vadd.f32 0.0, %v499
        %501 = vmatprep.mubr.bf16.mxu0 0
        %502 = vmatmul.mubr.bf16.gmra.mxu0 %v314
        %v503 = vpop.f32.mrf.mxu0
        %v504 = vadd.f32 0.0, %v503
        %v505 = vpop.f32.mrf.mxu0
        %v506 = vadd.f32 0.0, %v505
        %v507 = vpop.f32.mrf.mxu0
        %v508 = vadd.f32 0.0, %v507
        %v509 = vpop.f32.mrf.mxu0
        %v510 = vadd.f32 0.0, %v509
        %511 = vmatprep.mubr.bf16.mxu0 0
        %512 = vmatmul.mubr.bf16.gmra.mxu0 %v315
        %v513 = vpop.f32.mrf.mxu0
        %v514 = vadd.f32 0.0, %v513
        %v515 = vpop.f32.mrf.mxu0
        %v516 = vadd.f32 0.0, %v515
        %v517 = vpop.f32.mrf.mxu0
        %v518 = vadd.f32 0.0, %v517
        %v519 = vpop.f32.mrf.mxu0
        %v520 = vadd.f32 0.0, %v519
        %521 = vmatprep.mubr.bf16.mxu0 0
        %522 = vmatmul.mubr.bf16.gmra.mxu0 %v316
        %v523 = vpop.f32.mrf.mxu0
        %v524 = vadd.f32 0.0, %v523
        %v525 = vpop.f32.mrf.mxu0
        %v526 = vadd.f32 0.0, %v525
        %v527 = vpop.f32.mrf.mxu0
        %v528 = vadd.f32 0.0, %v527
        %v529 = vpop.f32.mrf.mxu0
        %v530 = vadd.f32 0.0, %v529
        %531 = vmatprep.mubr.bf16.mxu0 0
        %532 = vmatmul.mubr.bf16.gmra.mxu0 %v317
        %v533 = vpop.f32.mrf.mxu0
        %v534 = vadd.f32 0.0, %v533
        %v535 = vpop.f32.mrf.mxu0
        %v536 = vadd.f32 0.0, %v535
        %v537 = vpop.f32.mrf.mxu0
        %v538 = vadd.f32 0.0, %v537
        %v539 = vpop.f32.mrf.mxu0
        %v540 = vadd.f32 0.0, %v539
        %541 = vmatprep.mubr.bf16.mxu0 0
        %542 = vmatmul.mubr.bf16.gmra.mxu0 %v318
        %v543 = vpop.f32.mrf.mxu0
        %v544 = vadd.f32 0.0, %v543
        %v545 = vpop.f32.mrf.mxu0
        %v546 = vadd.f32 0.0, %v545
        %v547 = vpop.f32.mrf.mxu0
        %v548 = vadd.f32 0.0, %v547
        %v549 = vpop.f32.mrf.mxu0
        %v550 = vadd.f32 0.0, %v549
        %551 = vmatprep.mubr.bf16.mxu0 0
        %552 = vmatmul.mubr.bf16.gmra.mxu0 %v319
        %v553 = vpop.f32.mrf.mxu0
        %v554 = vadd.f32 0.0, %v553
        %v555 = vpop.f32.mrf.mxu0
        %v556 = vadd.f32 0.0, %v555
        %v557 = vpop.f32.mrf.mxu0
        %v558 = vadd.f32 0.0, %v557
        %v559 = vpop.f32.mrf.mxu0
        %v560 = vadd.f32 0.0, %v559
        %561 = vmatprep.mubr.bf16.mxu0 0
        %562 = vmatmul.mubr.bf16.gmra.mxu0 %v320
        %v563 = vpop.f32.mrf.mxu0
        %v564 = vadd.f32 0.0, %v563
        %v565 = vpop.f32.mrf.mxu0
        %v566 = vadd.f32 0.0, %v565
        %v567 = vpop.f32.mrf.mxu0
        %v568 = vadd.f32 0.0, %v567
        %v569 = vpop.f32.mrf.mxu0
        %v570 = vadd.f32 0.0, %v569
        %571 = vmatprep.mubr.bf16.mxu0 0
        %572 = vmatmul.mubr.bf16.gmra.mxu0 %v321
        %v573 = vpop.f32.mrf.mxu0
        %v574 = vadd.f32 0.0, %v573
        %v575 = vpop.f32.mrf.mxu0
        %v576 = vadd.f32 0.0, %v575
        %v577 = vpop.f32.mrf.mxu0
        %v578 = vadd.f32 0.0, %v577
        %v579 = vpop.f32.mrf.mxu0
        %v580 = vadd.f32 0.0, %v579
        %581 = vmatprep.mubr.bf16.mxu0 0
        %582 = vmatmul.mubr.bf16.gmra.mxu0 %v322
        %v583 = vpop.f32.mrf.mxu0
        %v584 = vadd.f32 0.0, %v583
        %v585 = vpop.f32.mrf.mxu0
        %v586 = vadd.f32 0.0, %v585
        %v587 = vpop.f32.mrf.mxu0
        %v588 = vadd.f32 0.0, %v587
        %v589 = vpop.f32.mrf.mxu0
        %v590 = vadd.f32 0.0, %v589
        %591 = vmatprep.mubr.bf16.mxu0 0
        %592 = vmatmul.mubr.bf16.gmra.mxu0 %v323
        %v593 = vpop.f32.mrf.mxu0
        %v594 = vadd.f32 0.0, %v593
        %v595 = vpop.f32.mrf.mxu0
        %v596 = vadd.f32 0.0, %v595
        %v597 = vpop.f32.mrf.mxu0
        %v598 = vadd.f32 0.0, %v597
        %v599 = vpop.f32.mrf.mxu0
        %v600 = vadd.f32 0.0, %v599
        %601 = vmatprep.mubr.bf16.mxu0 0
        %602 = vmatmul.mubr.bf16.gmra.mxu0 %v324
        %v603 = vpop.f32.mrf.mxu0
        %v604 = vadd.f32 0.0, %v603
        %v605 = vpop.f32.mrf.mxu0
        %v606 = vadd.f32 0.0, %v605
        %v607 = vpop.f32.mrf.mxu0
        %v608 = vadd.f32 0.0, %v607
        %v609 = vpop.f32.mrf.mxu0
        %v610 = vadd.f32 0.0, %v609
        %611 = vmatprep.mubr.bf16.mxu0 0
        %612 = vmatmul.mubr.bf16.gmra.mxu0 %v325
        %v613 = vpop.f32.mrf.mxu0
        %v614 = vadd.f32 0.0, %v613
        %v615 = vpop.f32.mrf.mxu0
        %v616 = vadd.f32 0.0, %v615
        %v617 = vpop.f32.mrf.mxu0
        %v618 = vadd.f32 0.0, %v617
        %v619 = vpop.f32.mrf.mxu0
        %v620 = vadd.f32 0.0, %v619
        %621 = vmatprep.mubr.bf16.mxu0 0
        %622 = vmatmul.mubr.bf16.gmra.mxu0 %v326
        %v623 = vpop.f32.mrf.mxu0
        %v624 = vadd.f32 0.0, %v623
        %v625 = vpop.f32.mrf.mxu0
        %v626 = vadd.f32 0.0, %v625
        %v627 = vpop.f32.mrf.mxu0
        %v628 = vadd.f32 0.0, %v627
        %v629 = vpop.f32.mrf.mxu0
        %v630 = vadd.f32 0.0, %v629
        %631 = vdwg.mxu0
        %v632 = vxor.u32 %v474, 2147483648
        %v633 = vxor.u32 %v476, 2147483648
        %v634 = vxor.u32 %v478, 2147483648
        %v635 = vxor.u32 %v480, 2147483648
        %v636 = vxor.u32 %v484, 2147483648
        %v637 = vxor.u32 %v486, 2147483648
        %v638 = vxor.u32 %v488, 2147483648
        %v639 = vxor.u32 %v490, 2147483648
        %v640 = vxor.u32 %v494, 2147483648
        %v641 = vxor.u32 %v496, 2147483648
        %v642 = vxor.u32 %v498, 2147483648
        %v643 = vxor.u32 %v500, 2147483648
        %v644 = vxor.u32 %v504, 2147483648
        %v645 = vxor.u32 %v506, 2147483648
        %v646 = vxor.u32 %v508, 2147483648
        %v647 = vxor.u32 %v510, 2147483648
        %v648 = vxor.u32 %v514, 2147483648
        %v649 = vxor.u32 %v516, 2147483648
        %v650 = vxor.u32 %v518, 2147483648
        %v651 = vxor.u32 %v520, 2147483648
        %v652 = vxor.u32 %v524, 2147483648
        %v653 = vxor.u32 %v526, 2147483648
        %v654 = vxor.u32 %v528, 2147483648
        %v655 = vxor.u32 %v530, 2147483648
        %v656 = vxor.u32 %v534, 2147483648
        %v657 = vxor.u32 %v536, 2147483648
        %v658 = vxor.u32 %v538, 2147483648
        %v659 = vxor.u32 %v540, 2147483648
        %v660 = vxor.u32 %v544, 2147483648
        %v661 = vxor.u32 %v546, 2147483648
        %v662 = vxor.u32 %v548, 2147483648
        %v663 = vxor.u32 %v550, 2147483648
        %v664 = vxor.u32 %v554, 2147483648
        %v665 = vxor.u32 %v556, 2147483648
        %v666 = vxor.u32 %v558, 2147483648
        %v667 = vxor.u32 %v560, 2147483648
        %v668 = vxor.u32 %v564, 2147483648
        %v669 = vxor.u32 %v566, 2147483648
        %v670 = vxor.u32 %v568, 2147483648
        %v671 = vxor.u32 %v570, 2147483648
        %v672 = vxor.u32 %v574, 2147483648
        %v673 = vxor.u32 %v576, 2147483648
        %v674 = vxor.u32 %v578, 2147483648
        %v675 = vxor.u32 %v580, 2147483648
        %v676 = vxor.u32 %v584, 2147483648
        %v677 = vxor.u32 %v586, 2147483648
        %v678 = vxor.u32 %v588, 2147483648
        %v679 = vxor.u32 %v590, 2147483648
        %v680 = vxor.u32 %v594, 2147483648
        %v681 = vxor.u32 %v596, 2147483648
        %v682 = vxor.u32 %v598, 2147483648
        %v683 = vxor.u32 %v600, 2147483648
        %v684 = vxor.u32 %v604, 2147483648
        %v685 = vxor.u32 %v606, 2147483648
        %v686 = vxor.u32 %v608, 2147483648
        %v687 = vxor.u32 %v610, 2147483648
        %v688 = vxor.u32 %v614, 2147483648
        %v689 = vxor.u32 %v616, 2147483648
        %v690 = vxor.u32 %v618, 2147483648
        %v691 = vxor.u32 %v620, 2147483648
        %v692 = vxor.u32 %v624, 2147483648
        %v693 = vxor.u32 %v626, 2147483648
        %v694 = vxor.u32 %v628, 2147483648
        %v695 = vxor.u32 %v630, 2147483648
        %v696 = vmul.f32 %v632, 1.442695
        %v697 = vpow.pop %v696
        %v698 = vmul.f32 %v633, 1.442695
        %v699 = vpow.pop %v698
        %v700 = vmul.f32 %v634, 1.442695
        %v701 = vpow.pop %v700
        %v702 = vmul.f32 %v635, 1.442695
        %v703 = vpow.pop %v702
        %v704 = vmul.f32 %v636, 1.442695
        %v705 = vpow.pop %v704
        %v706 = vmul.f32 %v637, 1.442695
        %v707 = vpow.pop %v706
        %v708 = vmul.f32 %v638, 1.442695
        %v709 = vpow.pop %v708
        %v710 = vmul.f32 %v639, 1.442695
        %v711 = vpow.pop %v710
        %v712 = vmul.f32 %v640, 1.442695
        %v713 = vpow.pop %v712
        %v714 = vmul.f32 %v641, 1.442695
        %v715 = vpow.pop %v714
        %v716 = vmul.f32 %v642, 1.442695
        %v717 = vpow.pop %v716
        %v718 = vmul.f32 %v643, 1.442695
        %v719 = vpow.pop %v718
        %v720 = vmul.f32 %v644, 1.442695
        %v721 = vpow.pop %v720
        %v722 = vmul.f32 %v645, 1.442695
        %v723 = vpow.pop %v722
        %v724 = vmul.f32 %v646, 1.442695
        %v725 = vpow.pop %v724
        %v726 = vmul.f32 %v647, 1.442695
        %v727 = vpow.pop %v726
        %v728 = vmul.f32 %v648, 1.442695
        %v729 = vpow.pop %v728
        %v730 = vmul.f32 %v649, 1.442695
        %v731 = vpow.pop %v730
        %v732 = vmul.f32 %v650, 1.442695
        %v733 = vpow.pop %v732
        %v734 = vmul.f32 %v651, 1.442695
        %v735 = vpow.pop %v734
        %v736 = vmul.f32 %v652, 1.442695
        %v737 = vpow.pop %v736
        %v738 = vmul.f32 %v653, 1.442695
        %v739 = vpow.pop %v738
        %v740 = vmul.f32 %v654, 1.442695
        %v741 = vpow.pop %v740
        %v742 = vmul.f32 %v655, 1.442695
        %v743 = vpow.pop %v742
        %v744 = vmul.f32 %v656, 1.442695
        %v745 = vpow.pop %v744
        %v746 = vmul.f32 %v657, 1.442695
        %v747 = vpow.pop %v746
        %v748 = vmul.f32 %v658, 1.442695
        %v749 = vpow.pop %v748
        %v750 = vmul.f32 %v659, 1.442695
        %v751 = vpow.pop %v750
        %v752 = vmul.f32 %v660, 1.442695
        %v753 = vpow.pop %v752
        %v754 = vmul.f32 %v661, 1.442695
        %v755 = vpow.pop %v754
        %v756 = vmul.f32 %v662, 1.442695
        %v757 = vpow.pop %v756
        %v758 = vmul.f32 %v663, 1.442695
        %v759 = vpow.pop %v758
        %v760 = vmul.f32 %v664, 1.442695
        %v761 = vpow.pop %v760
        %v762 = vmul.f32 %v665, 1.442695
        %v763 = vpow.pop %v762
        %v764 = vmul.f32 %v666, 1.442695
        %v765 = vpow.pop %v764
        %v766 = vmul.f32 %v667, 1.442695
        %v767 = vpow.pop %v766
        %v768 = vmul.f32 %v668, 1.442695
        %v769 = vpow.pop %v768
        %v770 = vmul.f32 %v669, 1.442695
        %v771 = vpow.pop %v770
        %v772 = vmul.f32 %v670, 1.442695
        %v773 = vpow.pop %v772
        %v774 = vmul.f32 %v671, 1.442695
        %v775 = vpow.pop %v774
        %v776 = vmul.f32 %v672, 1.442695
        %v777 = vpow.pop %v776
        %v778 = vmul.f32 %v673, 1.442695
        %v779 = vpow.pop %v778
        %v780 = vmul.f32 %v674, 1.442695
        %v781 = vpow.pop %v780
        %v782 = vmul.f32 %v675, 1.442695
        %v783 = vpow.pop %v782
        %v784 = vmul.f32 %v676, 1.442695
        %v785 = vpow.pop %v784
        %v786 = vmul.f32 %v677, 1.442695
        %v787 = vpow.pop %v786
        %v788 = vmul.f32 %v678, 1.442695
        %v789 = vpow.pop %v788
        %v790 = vmul.f32 %v679, 1.442695
        %v791 = vpow.pop %v790
        %v792 = vmul.f32 %v680, 1.442695
        %v793 = vpow.pop %v792
        %v794 = vmul.f32 %v681, 1.442695
        %v795 = vpow.pop %v794
        %v796 = vmul.f32 %v682, 1.442695
        %v797 = vpow.pop %v796
        %v798 = vmul.f32 %v683, 1.442695
        %v799 = vpow.pop %v798
        %v800 = vmul.f32 %v684, 1.442695
        %v801 = vpow.pop %v800
        %v802 = vmul.f32 %v685, 1.442695
        %v803 = vpow.pop %v802
        %v804 = vmul.f32 %v686, 1.442695
        %v805 = vpow.pop %v804
        %v806 = vmul.f32 %v687, 1.442695
        %v807 = vpow.pop %v806
        %v808 = vmul.f32 %v688, 1.442695
        %v809 = vpow.pop %v808
        %v810 = vmul.f32 %v689, 1.442695
        %v811 = vpow.pop %v810
        %v812 = vmul.f32 %v690, 1.442695
        %v813 = vpow.pop %v812
        %v814 = vmul.f32 %v691, 1.442695
        %v815 = vpow.pop %v814
        %v816 = vmul.f32 %v692, 1.442695
        %v817 = vpow.pop %v816
        %v818 = vmul.f32 %v693, 1.442695
        %v819 = vpow.pop %v818
        %v820 = vmul.f32 %v694, 1.442695
        %v821 = vpow.pop %v820
        %v822 = vmul.f32 %v695, 1.442695
        %v823 = vpow.pop %v822
        %v824 = vadd.f32 %v697, 1.0
        %v825 = vadd.f32 %v699, 1.0
        %v826 = vadd.f32 %v701, 1.0
        %v827 = vadd.f32 %v703, 1.0
        %v828 = vadd.f32 %v705, 1.0
        %v829 = vadd.f32 %v707, 1.0
        %v830 = vadd.f32 %v709, 1.0
        %v831 = vadd.f32 %v711, 1.0
        %v832 = vadd.f32 %v713, 1.0
        %v833 = vadd.f32 %v715, 1.0
        %v834 = vadd.f32 %v717, 1.0
        %v835 = vadd.f32 %v719, 1.0
        %v836 = vadd.f32 %v721, 1.0
        %v837 = vadd.f32 %v723, 1.0
        %v838 = vadd.f32 %v725, 1.0
        %v839 = vadd.f32 %v727, 1.0
        %v840 = vadd.f32 %v729, 1.0
        %v841 = vadd.f32 %v731, 1.0
        %v842 = vadd.f32 %v733, 1.0
        %v843 = vadd.f32 %v735, 1.0
        %v844 = vadd.f32 %v737, 1.0
        %v845 = vadd.f32 %v739, 1.0
        %v846 = vadd.f32 %v741, 1.0
        %v847 = vadd.f32 %v743, 1.0
        %v848 = vadd.f32 %v745, 1.0
        %v849 = vadd.f32 %v747, 1.0
        %v850 = vadd.f32 %v749, 1.0
        %v851 = vadd.f32 %v751, 1.0
        %v852 = vadd.f32 %v753, 1.0
        %v853 = vadd.f32 %v755, 1.0
        %v854 = vadd.f32 %v757, 1.0
        %v855 = vadd.f32 %v759, 1.0
        %v856 = vadd.f32 %v761, 1.0
        %v857 = vadd.f32 %v763, 1.0
        %v858 = vadd.f32 %v765, 1.0
        %v859 = vadd.f32 %v767, 1.0
        %v860 = vadd.f32 %v769, 1.0
        %v861 = vadd.f32 %v771, 1.0
        %v862 = vadd.f32 %v773, 1.0
        %v863 = vadd.f32 %v775, 1.0
        %v864 = vadd.f32 %v777, 1.0
        %v865 = vadd.f32 %v779, 1.0
        %v866 = vadd.f32 %v781, 1.0
        %v867 = vadd.f32 %v783, 1.0
        %v868 = vadd.f32 %v785, 1.0
        %v869 = vadd.f32 %v787, 1.0
        %v870 = vadd.f32 %v789, 1.0
        %v871 = vadd.f32 %v791, 1.0
        %v872 = vadd.f32 %v793, 1.0
        %v873 = vadd.f32 %v795, 1.0
        %v874 = vadd.f32 %v797, 1.0
        %v875 = vadd.f32 %v799, 1.0
        %v876 = vadd.f32 %v801, 1.0
        %v877 = vadd.f32 %v803, 1.0
        %v878 = vadd.f32 %v805, 1.0
        %v879 = vadd.f32 %v807, 1.0
        %v880 = vadd.f32 %v809, 1.0
        %v881 = vadd.f32 %v811, 1.0
        %v882 = vadd.f32 %v813, 1.0
        %v883 = vadd.f32 %v815, 1.0
        %v884 = vadd.f32 %v817, 1.0
        %v885 = vadd.f32 %v819, 1.0
        %v886 = vadd.f32 %v821, 1.0
        %v887 = vadd.f32 %v823, 1.0
        %v888 = vrcp.pop %v824
        %v889 = vmul.f32 1.0, %v888
        %v890 = vrcp.pop %v825
        %v891 = vmul.f32 1.0, %v890
        %v892 = vrcp.pop %v826
        %v893 = vmul.f32 1.0, %v892
        %v894 = vrcp.pop %v827
        %v895 = vmul.f32 1.0, %v894
        %v896 = vrcp.pop %v828
        %v897 = vmul.f32 1.0, %v896
        %v898 = vrcp.pop %v829
        %v899 = vmul.f32 1.0, %v898
        %v900 = vrcp.pop %v830
        %v901 = vmul.f32 1.0, %v900
        %v902 = vrcp.pop %v831
        %v903 = vmul.f32 1.0, %v902
        %v904 = vrcp.pop %v832
        %v905 = vmul.f32 1.0, %v904
        %v906 = vrcp.pop %v833
        %v907 = vmul.f32 1.0, %v906
        %v908 = vrcp.pop %v834
        %v909 = vmul.f32 1.0, %v908
        %v910 = vrcp.pop %v835
        %v911 = vmul.f32 1.0, %v910
        %v912 = vrcp.pop %v836
        %v913 = vmul.f32 1.0, %v912
        %v914 = vrcp.pop %v837
        %v915 = vmul.f32 1.0, %v914
        %v916 = vrcp.pop %v838
        %v917 = vmul.f32 1.0, %v916
        %v918 = vrcp.pop %v839
        %v919 = vmul.f32 1.0, %v918
        %v920 = vrcp.pop %v840
        %v921 = vmul.f32 1.0, %v920
        %v922 = vrcp.pop %v841
        %v923 = vmul.f32 1.0, %v922
        %v924 = vrcp.pop %v842
        %v925 = vmul.f32 1.0, %v924
        %v926 = vrcp.pop %v843
        %v927 = vmul.f32 1.0, %v926
        %v928 = vrcp.pop %v844
        %v929 = vmul.f32 1.0, %v928
        %v930 = vrcp.pop %v845
        %v931 = vmul.f32 1.0, %v930
        %v932 = vrcp.pop %v846
        %v933 = vmul.f32 1.0, %v932
        %v934 = vrcp.pop %v847
        %v935 = vmul.f32 1.0, %v934
        %v936 = vrcp.pop %v848
        %v937 = vmul.f32 1.0, %v936
        %v938 = vrcp.pop %v849
        %v939 = vmul.f32 1.0, %v938
        %v940 = vrcp.pop %v850
        %v941 = vmul.f32 1.0, %v940
        %v942 = vrcp.pop %v851
        %v943 = vmul.f32 1.0, %v942
        %v944 = vrcp.pop %v852
        %v945 = vmul.f32 1.0, %v944
        %v946 = vrcp.pop %v853
        %v947 = vmul.f32 1.0, %v946
        %v948 = vrcp.pop %v854
        %v949 = vmul.f32 1.0, %v948
        %v950 = vrcp.pop %v855
        %v951 = vmul.f32 1.0, %v950
        %v952 = vrcp.pop %v856
        %v953 = vmul.f32 1.0, %v952
        %v954 = vrcp.pop %v857
        %v955 = vmul.f32 1.0, %v954
        %v956 = vrcp.pop %v858
        %v957 = vmul.f32 1.0, %v956
        %v958 = vrcp.pop %v859
        %v959 = vmul.f32 1.0, %v958
        %v960 = vrcp.pop %v860
        %v961 = vmul.f32 1.0, %v960
        %v962 = vrcp.pop %v861
        %v963 = vmul.f32 1.0, %v962
        %v964 = vrcp.pop %v862
        %v965 = vmul.f32 1.0, %v964
        %v966 = vrcp.pop %v863
        %v967 = vmul.f32 1.0, %v966
        %v968 = vrcp.pop %v864
        %v969 = vmul.f32 1.0, %v968
        %v970 = vrcp.pop %v865
        %v971 = vmul.f32 1.0, %v970
        %v972 = vrcp.pop %v866
        %v973 = vmul.f32 1.0, %v972
        %v974 = vrcp.pop %v867
        %v975 = vmul.f32 1.0, %v974
        %v976 = vrcp.pop %v868
        %v977 = vmul.f32 1.0, %v976
        %v978 = vrcp.pop %v869
        %v979 = vmul.f32 1.0, %v978
        %v980 = vrcp.pop %v870
        %v981 = vmul.f32 1.0, %v980
        %v982 = vrcp.pop %v871
        %v983 = vmul.f32 1.0, %v982
        %v984 = vrcp.pop %v872
        %v985 = vmul.f32 1.0, %v984
        %v986 = vrcp.pop %v873
        %v987 = vmul.f32 1.0, %v986
        %v988 = vrcp.pop %v874
        %v989 = vmul.f32 1.0, %v988
        %v990 = vrcp.pop %v875
        %v991 = vmul.f32 1.0, %v990
        %v992 = vrcp.pop %v876
        %v993 = vmul.f32 1.0, %v992
        %v994 = vrcp.pop %v877
        %v995 = vmul.f32 1.0, %v994
        %v996 = vrcp.pop %v878
        %v997 = vmul.f32 1.0, %v996
        %v998 = vrcp.pop %v879
        %v999 = vmul.f32 1.0, %v998
        %v1000 = vrcp.pop %v880
        %v1001 = vmul.f32 1.0, %v1000
        %v1002 = vrcp.pop %v881
        %v1003 = vmul.f32 1.0, %v1002
        %v1004 = vrcp.pop %v882
        %v1005 = vmul.f32 1.0, %v1004
        %v1006 = vrcp.pop %v883
        %v1007 = vmul.f32 1.0, %v1006
        %v1008 = vrcp.pop %v884
        %v1009 = vmul.f32 1.0, %v1008
        %v1010 = vrcp.pop %v885
        %v1011 = vmul.f32 1.0, %v1010
        %v1012 = vrcp.pop %v886
        %v1013 = vmul.f32 1.0, %v1012
        %v1014 = vrcp.pop %v887
        %v1015 = vmul.f32 1.0, %v1014
        %1016 = vst [vmem:[%s167] sm:$0xff] %v889
        %1017 = vst [vmem:[%s167 + $0x8] sm:$0xff] %v891
        %1018 = vst [vmem:[%s167 + $0x10] sm:$0xff] %v893
        %1019 = vst [vmem:[%s167 + $0x18] sm:$0xff] %v895
        %1020 = vst [vmem:[%s167 + $0x20] sm:$0xff] %v897
        %1021 = vst [vmem:[%s167 + $0x28] sm:$0xff] %v899
        %1022 = vst [vmem:[%s167 + $0x30] sm:$0xff] %v901
        %1023 = vst [vmem:[%s167 + $0x38] sm:$0xff] %v903
        %1024 = vst [vmem:[%s167 + $0x40] sm:$0xff] %v905
        %1025 = vst [vmem:[%s167 + $0x48] sm:$0xff] %v907
        %1026 = vst [vmem:[%s167 + $0x50] sm:$0xff] %v909
        %1027 = vst [vmem:[%s167 + $0x58] sm:$0xff] %v911
        %1028 = vst [vmem:[%s167 + $0x60] sm:$0xff] %v913
        %1029 = vst [vmem:[%s167 + $0x68] sm:$0xff] %v915
        %1030 = vst [vmem:[%s167 + $0x70] sm:$0xff] %v917
        %1031 = vst [vmem:[%s167 + $0x78] sm:$0xff] %v919
        %1032 = vst [vmem:[%s167 + $0x80] sm:$0xff] %v921
        %1033 = vst [vmem:[%s167 + $0x88] sm:$0xff] %v923
        %1034 = vst [vmem:[%s167 + $0x90] sm:$0xff] %v925
        %1035 = vst [vmem:[%s167 + $0x98] sm:$0xff] %v927
        %1036 = vst [vmem:[%s167 + $0xa0] sm:$0xff] %v929
        %1037 = vst [vmem:[%s167 + $0xa8] sm:$0xff] %v931
        %1038 = vst [vmem:[%s167 + $0xb0] sm:$0xff] %v933
        %1039 = vst [vmem:[%s167 + $0xb8] sm:$0xff] %v935
        %1040 = vst [vmem:[%s167 + $0xc0] sm:$0xff] %v937
        %1041 = vst [vmem:[%s167 + $0xc8] sm:$0xff] %v939
        %1042 = vst [vmem:[%s167 + $0xd0] sm:$0xff] %v941
        %1043 = vst [vmem:[%s167 + $0xd8] sm:$0xff] %v943
        %1044 = vst [vmem:[%s167 + $0xe0] sm:$0xff] %v945
        %1045 = vst [vmem:[%s167 + $0xe8] sm:$0xff] %v947
        %1046 = vst [vmem:[%s167 + $0xf0] sm:$0xff] %v949
        %1047 = vst [vmem:[%s167 + $0xf8] sm:$0xff] %v951
        %1048 = vst [vmem:[%s167 + $0x100] sm:$0xff] %v953
        %1049 = vst [vmem:[%s167 + $0x108] sm:$0xff] %v955
        %1050 = vst [vmem:[%s167 + $0x110] sm:$0xff] %v957
        %1051 = vst [vmem:[%s167 + $0x118] sm:$0xff] %v959
        %1052 = vst [vmem:[%s167 + $0x120] sm:$0xff] %v961
        %1053 = vst [vmem:[%s167 + $0x128] sm:$0xff] %v963
        %1054 = vst [vmem:[%s167 + $0x130] sm:$0xff] %v965
        %1055 = vst [vmem:[%s167 + $0x138] sm:$0xff] %v967
        %1056 = vst [vmem:[%s167 + $0x140] sm:$0xff] %v969
        %1057 = vst [vmem:[%s167 + $0x148] sm:$0xff] %v971
        %1058 = vst [vmem:[%s167 + $0x150] sm:$0xff] %v973
        %1059 = vst [vmem:[%s167 + $0x158] sm:$0xff] %v975
        %1060 = vst [vmem:[%s167 + $0x160] sm:$0xff] %v977
        %1061 = vst [vmem:[%s167 + $0x168] sm:$0xff] %v979
        %1062 = vst [vmem:[%s167 + $0x170] sm:$0xff] %v981
        %1063 = vst [vmem:[%s167 + $0x178] sm:$0xff] %v983
        %1064 = vst [vmem:[%s167 + $0x180] sm:$0xff] %v985
        %1065 = vst [vmem:[%s167 + $0x188] sm:$0xff] %v987
        %1066 = vst [vmem:[%s167 + $0x190] sm:$0xff] %v989
        %1067 = vst [vmem:[%s167 + $0x198] sm:$0xff] %v991
        %1068 = vst [vmem:[%s167 + $0x1a0] sm:$0xff] %v993
        %1069 = vst [vmem:[%s167 + $0x1a8] sm:$0xff] %v995
        %1070 = vst [vmem:[%s167 + $0x1b0] sm:$0xff] %v997
        %1071 = vst [vmem:[%s167 + $0x1b8] sm:$0xff] %v999
        %1072 = vst [vmem:[%s167 + $0x1c0] sm:$0xff] %v1001
        %1073 = vst [vmem:[%s167 + $0x1c8] sm:$0xff] %v1003
        %1074 = vst [vmem:[%s167 + $0x1d0] sm:$0xff] %v1005
        %1075 = vst [vmem:[%s167 + $0x1d8] sm:$0xff] %v1007
        %1076 = vst [vmem:[%s167 + $0x1e0] sm:$0xff] %v1009
        %1077 = vst [vmem:[%s167 + $0x1e8] sm:$0xff] %v1011
        %1078 = vst [vmem:[%s167 + $0x1f0] sm:$0xff] %v1013
        %1079 = vst [vmem:[%s167 + $0x1f8] sm:$0xff] %v1015
        %s1080 = sand.u32 %s90, 1
        %s1081 = scalar_lea.sflag [#allocation3], %s1080
        %s1082 = sand.u32 %s90, 1
        %s1083 = smul.addr %s1082, 512
        %s1084 = scalar_lea.vmem [#allocation2], %s1083
        // Predicated region
        $region29: #{attention_digae_forward.5} parent=27 // pred_check
          %p1085 = pneg %p100
        $region30: #{attention_digae_forward.5} parent=27 // pred_check_branch
          %1087 = sbr.rel (%p1085) target = $region32
        $region31: #{attention_digae_forward.5} parent=27 // pred_region
          %s1088 = smul.u32 32, %s20
          %s1089 = smul.u32 2, %s21
          %s1091 = ssub.s32 8192, 8192
          %1092 = vsyncadd %s1081, %s1091
          %s1093 = smul.addr %s1088, 4
          %s1094 = sadd.s32 %s1089, %s1093
          %s1095 = smul.addr %s1094, 128
          %s1096 = scalar_lea.hbm %s2, %s1095
          %s1097 = sshll.u32 %s1084, 4
          %s1098 = int_to_ptr.vmem [resolvable:$true] %s1097
          %1103 = dma.vmem_to_hbm [thread:$0]  %s1098, 8192, %s1096, %s1081, 256, 512, 16
        $region32: #{attention_digae_forward.5} parent=27 // pred_fallthru
          _
      $region28: #{attention_digae_forward.5} parent=5 // pred_fallthru
        _
      %p1104 = scmp.le.s32.totalorder 2, %s11
      // Predicated region
      $region33: #{attention_digae_forward.5} parent=5 // pred_check
        %p1105 = pneg %p1104
      $region34: #{attention_digae_forward.5} parent=5 // pred_check_branch
        %1107 = sbr.rel (%p1105) target = $region36
      $region35: #{attention_digae_forward.5} parent=5 // pred_region
        %s1108 = ssub.s32 %s11, 2
        // Predicated region
        $region37: #{attention_digae_forward.5} parent=35 // pred_check
          %p1109 = pneg %p106
        $region38: #{attention_digae_forward.5} parent=35 // pred_check_branch
          %1111 = sbr.rel (%p1109) target = $region40
        $region39: #{attention_digae_forward.5} parent=35 // pred_region
          %s1112 = sand.u32 %s91, 1
          %s1113 = scalar_lea.sflag [#allocation3], %s1112
          %s1114 = sand.u32 %s91, 1
          %s1115 = smul.addr %s1114, 512
          %s1116 = scalar_lea.vmem [#allocation2], %s1115
          %1117 = dma.done %s1113, 8192
        $region40: #{attention_digae_forward.5} parent=35 // pred_fallthru
          _
      $region36: #{attention_digae_forward.5} parent=5 // pred_fallthru
        _
    $region6: #{attention_digae_forward.5} parent=1 // loop_footer
      %s15 = sadd.s32 1, %s11
    $region7: #{attention_digae_forward.5} parent=1 // loop_footer_branch
      %10 = sbr.rel target = $region3
    $region8: #{attention_digae_forward.5} parent=1 // loop_exit
      _
    %1118 = vsyncpa [#allocation3], 1
    %s1119 = scalar_lea.sflag [#allocation3], 1
    %1120 = vsyncpa %s1119, 1

// kernel: attention_digae_forward.4
$region0: #{attention_digae_forward.4}
  #allocation0 [shape = 'u32[]', space=smem, size = 0x4, offset = 0x4, fixed_abs, tag = 'smem constant byte address 0x4 - core index']
  #allocation1 [shape = 'u32[144,128]{1,0:T(1,128)}', space=vmem, size = 0x12000, scoped, tag = 'internal scratch']
  #allocation2 [shape = 'f32[256,1]{1,0:T(8,128)}', space=vmem, size = 0x20000, scoped, tag = 'scratch operand']
  #allocation3 [shape = 'f32[256,1]{1,0:T(8,128)}', space=vmem, size = 0x20000, scoped, tag = 'scratch operand']
  #allocation4 [shape = 'f32[256,128]{1,0:T(8,128)}', space=vmem, size = 0x20000, scoped, tag = 'scratch operand']
  #allocation5 [shape = 'f32[256,1]{1,0:T(8,128)}', space=vmem, size = 0x20000, scoped, tag = 'scratch operand']
  #allocation6 [shape = 'f32[256,1]{1,0:T(8,128)}', space=vmem, size = 0x20000, scoped, tag = 'scratch operand']
  #allocation7 [shape = 'f32[256,128]{1,0:T(8,128)}', space=vmem, size = 0x20000, scoped, tag = 'scratch operand']
  %s0 = inlined_call_operand.vmem [shape: bf16[512,256], index: 0, kind: input, shape index: {}]
  %s1 = inlined_call_operand.vmem [shape: f32[512,128], index: 1, kind: input, shape index: {}]
  %s2 = inlined_call_operand.vmem [shape: f32[8,512], index: 2, kind: input, shape index: {}]
  %s3 = inlined_call_operand.vmem [shape: s8[512,512], index: 3, kind: input, shape index: {}]
  %s4 = inlined_call_operand.vmem [shape: bf16[512,128], index: 4, kind: output, shape index: {0}]
  %s5 = inlined_call_operand.vmem [shape: bf16[512,128], index: 5, kind: output, shape index: {1}]
  %6 = xla_tuple %s4, %s5
  %s7 = sld [smem:[#allocation0]]
  $region88: #{attention_digae_forward.4} parent=0
    _
  %s9 = ssub.s32 1, %s7
  %s10 = scalar_select 0, %s9, %s7
  $region1: #{attention_digae_forward.4} parent=0
    #allocation8 [shape = 'u8[131072]{0}', space=vmem, size = 0x20000, scoped, tag = 'input window, operand 3']
    loop: start=0, step=1, limit=6
    $region2: #{attention_digae_forward.4} parent=1 // loop_pre_header
      _
    $region3: #{attention_digae_forward.4} parent=1 // loop_header
      %s12 = sphi 0, %s16
      %p13 = scmp.ge.s32.totalorder %s12, 6
      %s19 = sphi 0, %s31
      %s20 = sphi 0, %s27
      %s21 = sphi 0, %s19
      %s22 = sphi 0, %s20
      %s23 = sphi 0, %s21
      %s24 = sphi 0, %s22
      %s34 = sphi 0, %s36
      %s37 = sphi 0, %s34
      %s38 = sphi 0, %s37
      %s54 = sphi 0, %s38
      %s60 = sphi 0, %s62
      %s63 = sphi 0, %s60
      %s64 = sphi 0, %s63
      %s80 = sphi 0, %s64
      %s86 = sphi 0, %s88
      %s89 = sphi 0, %s86
      %s90 = sphi 0, %s89
      %s106 = sphi 0, %s90
      %s114 = sphi 0, %s116
      %s117 = sphi 0, %s114
      %s118 = sphi 0, %s117
      %s134 = sphi 0, %s118
      %s140 = sphi 0, %s142
      %s143 = sphi 0, %s140
      %s144 = sphi 0, %s143
      %s160 = sphi 0, %s144
      %s166 = sphi 0, %s168
      %s169 = sphi 0, %s166
      %s170 = sphi 0, %s169
      %s186 = sphi 0, %s170
    $region4: #{attention_digae_forward.4} parent=1 // loop_header_branch
      %15 = sbr.rel (%p13) target = $region8
    $region5: #{attention_digae_forward.4} parent=1 // loop_body
      %s17 = ssub.s32 %s12, 1
      %s18 = ssub.s32 %s12, 2
      %s25 = sadd.s32 1, %s20
      %p26 = scmp.ge.s32.totalorder %s25, 2
      %s27 = scalar_select %p26, 0, %s25
      %s28 = sadd.s32 1, %s19
      %s29 = scalar_select %p26, %s28, %s19
      %p30 = scmp.ge.s32.totalorder %s29, 2
      %s31 = scalar_select %p30, 0, %s29
      %s32 = ssub.s32 %s20, %s27
      %p33 = scmp.eq.s32.totalorder %s32, 0
      %s35 = sadd.s32 %s34, 1
      %s36 = scalar_select %p33, %s34, %s35
      %p39 = pneg %p33
      %p40 = scmp.eq.s32.totalorder %s12, 3
      %p41 = por %p39, %p40
      %p42 = scmp.ne.s32.totalorder %s34, %s37
      %p43 = scmp.eq.s32.totalorder %s12, 0
      %p44 = por %p42, %p43
      %p45 = scmp.ne.s32.totalorder %s34, %s37
      %p46 = scmp.eq.s32.totalorder %s17, 3
      %p47 = por %p45, %p46
      %p48 = scmp.ne.s32.totalorder %s37, %s38
      %p49 = scmp.eq.s32.totalorder %s17, 0
      %p50 = por %p48, %p49
      %p51 = scmp.ne.s32.totalorder %s37, %s38
      %p52 = scmp.eq.s32.totalorder %s18, 3
      %p53 = por %p51, %p52
      %p55 = scmp.ne.s32.totalorder %s38, %s54
      %p56 = scmp.eq.s32.totalorder %s18, 0
      %p57 = por %p55, %p56
      %s58 = ssub.s32 %s19, %s31
      %p59 = scmp.eq.s32.totalorder %s58, 0
      %s61 = sadd.s32 %s60, 1
      %s62 = scalar_select %p59, %s60, %s61
      %p65 = pneg %p59
      %p66 = scmp.eq.s32.totalorder %s12, 3
      %p67 = por %p65, %p66
      %p68 = scmp.ne.s32.totalorder %s60, %s63
      %p69 = scmp.eq.s32.totalorder %s12, 0
      %p70 = por %p68, %p69
      %p71 = scmp.ne.s32.totalorder %s60, %s63
      %p72 = scmp.eq.s32.totalorder %s17, 3
      %p73 = por %p71, %p72
      %p74 = scmp.ne.s32.totalorder %s63, %s64
      %p75 = scmp.eq.s32.totalorder %s17, 0
      %p76 = por %p74, %p75
      %p77 = scmp.ne.s32.totalorder %s63, %s64
      %p78 = scmp.eq.s32.totalorder %s18, 3
      %p79 = por %p77, %p78
      %p81 = scmp.ne.s32.totalorder %s64, %s80
      %p82 = scmp.eq.s32.totalorder %s18, 0
      %p83 = por %p81, %p82
      %s84 = ssub.s32 %s20, %s27
      %p85 = scmp.eq.s32.totalorder %s84, 0
      %s87 = sadd.s32 %s86, 1
      %s88 = scalar_select %p85, %s86, %s87
      %p91 = pneg %p85
      %p92 = scmp.eq.s32.totalorder %s12, 3
      %p93 = por %p91, %p92
      %p94 = scmp.ne.s32.totalorder %s86, %s89
      %p95 = scmp.eq.s32.totalorder %s12, 0
      %p96 = por %p94, %p95
      %p97 = scmp.ne.s32.totalorder %s86, %s89
      %p98 = scmp.eq.s32.totalorder %s17, 3
      %p99 = por %p97, %p98
      %p100 = scmp.ne.s32.totalorder %s89, %s90
      %p101 = scmp.eq.s32.totalorder %s17, 0
      %p102 = por %p100, %p101
      %p103 = scmp.ne.s32.totalorder %s89, %s90
      %p104 = scmp.eq.s32.totalorder %s18, 3
      %p105 = por %p103, %p104
      %p107 = scmp.ne.s32.totalorder %s90, %s106
      %p108 = scmp.eq.s32.totalorder %s18, 0
      %p109 = por %p107, %p108
      %s110 = ssub.s32 %s19, %s31
      %s111 = ssub.s32 %s20, %s27
      %s112 = sor.u32 %s110, %s111
      %p113 = scmp.eq.s32.totalorder %s112, 0
      %s115 = sadd.s32 %s114, 1
      %s116 = scalar_select %p113, %s114, %s115
      %p119 = pneg %p113
      %p120 = scmp.eq.s32.totalorder %s12, 3
      %p121 = por %p119, %p120
      %p122 = scmp.ne.s32.totalorder %s114, %s117
      %p123 = scmp.eq.s32.totalorder %s12, 0
      %p124 = por %p122, %p123
      %p125 = scmp.ne.s32.totalorder %s114, %s117
      %p126 = scmp.eq.s32.totalorder %s17, 3
      %p127 = por %p125, %p126
      %p128 = scmp.ne.s32.totalorder %s117, %s118
      %p129 = scmp.eq.s32.totalorder %s17, 0
      %p130 = por %p128, %p129
      %p131 = scmp.ne.s32.totalorder %s117, %s118
      %p132 = scmp.eq.s32.totalorder %s18, 3
      %p133 = por %p131, %p132
      %p135 = scmp.ne.s32.totalorder %s118, %s134
      %p136 = scmp.eq.s32.totalorder %s18, 0
      %p137 = por %p135, %p136
      %s138 = ssub.s32 %s19, %s31
      %p139 = scmp.eq.s32.totalorder %s138, 0
      %s141 = sadd.s32 %s140, 1
      %s142 = scalar_select %p139, %s140, %s141
      %p145 = pneg %p139
      %p146 = scmp.eq.s32.totalorder %s12, 3
      %p147 = por %p145, %p146
      %p148 = scmp.ne.s32.totalorder %s140, %s143
      %p149 = scmp.eq.s32.totalorder %s12, 0
      %p150 = por %p148, %p149
      %p151 = scmp.ne.s32.totalorder %s140, %s143
      %p152 = scmp.eq.s32.totalorder %s17, 3
      %p153 = por %p151, %p152
      %p154 = scmp.ne.s32.totalorder %s143, %s144
      %p155 = scmp.eq.s32.totalorder %s17, 0
      %p156 = por %p154, %p155
      %p157 = scmp.ne.s32.totalorder %s143, %s144
      %p158 = scmp.eq.s32.totalorder %s18, 3
      %p159 = por %p157, %p158
      %p161 = scmp.ne.s32.totalorder %s144, %s160
      %p162 = scmp.eq.s32.totalorder %s18, 0
      %p163 = por %p161, %p162
      %s164 = ssub.s32 %s19, %s31
      %p165 = scmp.eq.s32.totalorder %s164, 0
      %s167 = sadd.s32 %s166, 1
      %s168 = scalar_select %p165, %s166, %s167
      %p171 = pneg %p165
      %p172 = scmp.eq.s32.totalorder %s12, 3
      %p173 = por %p171, %p172
      %p174 = scmp.ne.s32.totalorder %s166, %s169
      %p175 = scmp.eq.s32.totalorder %s12, 0
      %p176 = por %p174, %p175
      %p177 = scmp.ne.s32.totalorder %s166, %s169
      %p178 = scmp.eq.s32.totalorder %s17, 3
      %p179 = por %p177, %p178
      %p180 = scmp.ne.s32.totalorder %s169, %s170
      %p181 = scmp.eq.s32.totalorder %s17, 0
      %p182 = por %p180, %p181
      %p183 = scmp.ne.s32.totalorder %s169, %s170
      %p184 = scmp.eq.s32.totalorder %s18, 3
      %p185 = por %p183, %p184
      %p187 = scmp.ne.s32.totalorder %s170, %s186
      %p188 = scmp.eq.s32.totalorder %s18, 0
      %p189 = por %p187, %p188
      %p190 = scmp.le.s32.totalorder 1, %s12
      %p191 = scmp.lt.s32.totalorder %s12, 5
      %p192 = pnand %p190, %p191
      %p193 = pneg %p192
      // Predicated region
      $region9: #{attention_digae_forward.4} parent=5 // pred_check
        _
      $region10: #{attention_digae_forward.4} parent=5 // pred_check_branch
        %195 = sbr.rel (%p192) target = $region12
      $region11: #{attention_digae_forward.4} parent=5 // pred_region
        %s196 = ssub.s32 %s12, 1
      $region12: #{attention_digae_forward.4} parent=5 // pred_fallthru
        _
      %p197 = scmp.lt.s32.totalorder %s12, 4
      // Predicated region
      $region13: #{attention_digae_forward.4} parent=5 // pred_check
        %p198 = pneg %p197
      $region14: #{attention_digae_forward.4} parent=5 // pred_check_branch
        %200 = sbr.rel (%p198) target = $region16
      $region15: #{attention_digae_forward.4} parent=5 // pred_region
        // Predicated region
        $region17: #{attention_digae_forward.4} parent=15 // pred_check
          %p201 = pneg %p44
        $region18: #{attention_digae_forward.4} parent=15 // pred_check_branch
          %203 = sbr.rel (%p201) target = $region20
        $region19: #{attention_digae_forward.4} parent=15 // pred_region
          %s204 = smul.u32 32, %s20
          %p205 = scmp.lt.s32.totalorder %s204, 63
          %s206 = scalar_select %p205, %s204, 63
          %s207 = smul.addr %s206, 2
          %s208 = smul.addr %s207, 4
          %s209 = scalar_lea.vmem %s0, %s208
          %s210 = smul.u32 32, %s20
        $region20: #{attention_digae_forward.4} parent=15 // pred_fallthru
          _
        // Predicated region
        $region21: #{attention_digae_forward.4} parent=15 // pred_check
          %p211 = pneg %p70
        $region22: #{attention_digae_forward.4} parent=15 // pred_check_branch
          %213 = sbr.rel (%p211) target = $region24
        $region23: #{attention_digae_forward.4} parent=15 // pred_region
          %s214 = smul.u32 32, %s19
          %p215 = scmp.lt.s32.totalorder %s214, 63
          %s216 = scalar_select %p215, %s214, 63
          %s217 = smul.addr %s216, 8
          %s218 = scalar_lea.vmem %s1, %s217
          %s219 = smul.u32 32, %s19
        $region24: #{attention_digae_forward.4} parent=15 // pred_fallthru
          _
        // Predicated region
        $region25: #{attention_digae_forward.4} parent=15 // pred_check
          %p220 = pneg %p96
        $region26: #{attention_digae_forward.4} parent=15 // pred_check_branch
          %222 = sbr.rel (%p220) target = $region28
        $region27: #{attention_digae_forward.4} parent=15 // pred_region
          %s223 = smul.u32 2, %s20
          %p224 = scmp.lt.s32.totalorder %s223, 3
          %s225 = scalar_select %p224, %s223, 3
          %s226 = smul.addr %s225, 8
          %s227 = scalar_lea.vmem %s2, %s226
          %s228 = smul.u32 2, %s20
        $region28: #{attention_digae_forward.4} parent=15 // pred_fallthru
          _
        // Predicated region
        $region29: #{attention_digae_forward.4} parent=15 // pred_check
          %p229 = pneg %p124
        $region30: #{attention_digae_forward.4} parent=15 // pred_check_branch
          %231 = sbr.rel (%p229) target = $region32
        $region31: #{attention_digae_forward.4} parent=15 // pred_region
          %s232 = sand.u32 %s114, 1
          %s233 = sand.u32 %s114, 1
          %s234 = smul.addr %s233, 128
          %s235 = scalar_lea.vmem [#allocation8], %s234
          %s236 = smul.u32 8, %s19
          %s237 = smul.u32 2, %s20
          %s238 = smul.addr %s236, 4
          %s239 = sadd.s32 %s237, %s238
          %s240 = smul.addr %s239, 8
          %s241 = scalar_lea.vmem %s3, %s240
          // Predicated region
          $region33: #{attention_digae_forward.4} parent=31 // pred_check
            _
          $region34: #{attention_digae_forward.4} parent=31 // pred_check_branch
            %243 = sbr.rel (0) target = $region36
          $region35: #{attention_digae_forward.4} parent=31 // pred_region
            // Predicated region
            $region37: #{attention_digae_forward.4} parent=35 // pred_check
              _
            $region38: #{attention_digae_forward.4} parent=35 // pred_check_branch
              %245 = sbr.rel (0) target = $region40
            $region39: #{attention_digae_forward.4} parent=35 // pred_region
              loop: start=0, step=1, limit=1
              $region41: #{attention_digae_forward.4} parent=39 // loop_pre_header
                _
              $region42: #{attention_digae_forward.4} parent=39 // loop_header
                %s247 = sphi 0, %s251
                %p248 = scmp.ge.s32.totalorder %s247, 1
                %s252 = sphi %s241, %s241
                %s253 = sphi %s235, %s235
              $region43: #{attention_digae_forward.4} parent=39 // loop_header_branch
                %250 = sbr.rel (%p248) target = $region47
              $region44: #{attention_digae_forward.4} parent=39 // loop_body
                %v254 = vld [vmem:[%s252] sm:$0xff]
                %255 = vst [vmem:[%s253] sm:$0xff] %v254
                %v256 = vld [vmem:[%s252 + $0x8] sm:$0xff]
                %257 = vst [vmem:[%s253 + $0x8] sm:$0xff] %v256
                %v258 = vld [vmem:[%s252 + $0x20] sm:$0xff]
                %259 = vst [vmem:[%s253 + $0x10] sm:$0xff] %v258
                %v260 = vld [vmem:[%s252 + $0x28] sm:$0xff]
                %261 = vst [vmem:[%s253 + $0x18] sm:$0xff] %v260
                %v262 = vld [vmem:[%s252 + $0x40] sm:$0xff]
                %263 = vst [vmem:[%s253 + $0x20] sm:$0xff] %v262
                %v264 = vld [vmem:[%s252 + $0x48] sm:$0xff]
                %265 = vst [vmem:[%s253 + $0x28] sm:$0xff] %v264
                %v266 = vld [vmem:[%s252 + $0x60] sm:$0xff]
                %267 = vst [vmem:[%s253 + $0x30] sm:$0xff] %v266
                %v268 = vld [vmem:[%s252 + $0x68] sm:$0xff]
                %269 = vst [vmem:[%s253 + $0x38] sm:$0xff] %v268
                %v270 = vld [vmem:[%s252 + $0x80] sm:$0xff]
                %271 = vst [vmem:[%s253 + $0x40] sm:$0xff] %v270
                %v272 = vld [vmem:[%s252 + $0x88] sm:$0xff]
                %273 = vst [vmem:[%s253 + $0x48] sm:$0xff] %v272
                %v274 = vld [vmem:[%s252 + $0xa0] sm:$0xff]
                %275 = vst [vmem:[%s253 + $0x50] sm:$0xff] %v274
                %v276 = vld [vmem:[%s252 + $0xa8] sm:$0xff]
                %277 = vst [vmem:[%s253 + $0x58] sm:$0xff] %v276
                %v278 = vld [vmem:[%s252 + $0xc0] sm:$0xff]
                %279 = vst [vmem:[%s253 + $0x60] sm:$0xff] %v278
                %v280 = vld [vmem:[%s252 + $0xc8] sm:$0xff]
                %281 = vst [vmem:[%s253 + $0x68] sm:$0xff] %v280
                %v282 = vld [vmem:[%s252 + $0xe0] sm:$0xff]
                %283 = vst [vmem:[%s253 + $0x70] sm:$0xff] %v282
                %v284 = vld [vmem:[%s252 + $0xe8] sm:$0xff]
                %285 = vst [vmem:[%s253 + $0x78] sm:$0xff] %v284
              $region45: #{attention_digae_forward.4} parent=39 // loop_footer
                %s251 = sadd.s32 1, %s247
              $region46: #{attention_digae_forward.4} parent=39 // loop_footer_branch
                %246 = sbr.rel target = $region42
              $region47: #{attention_digae_forward.4} parent=39 // loop_exit
                _
            $region40: #{attention_digae_forward.4} parent=35 // pred_fallthru
              _
            // Predicated region
            $region48: #{attention_digae_forward.4} parent=35 // pred_check
              _
            $region49: #{attention_digae_forward.4} parent=35 // pred_check_branch
              %287 = sbr.rel target = $region51
            $region50: #{attention_digae_forward.4} parent=35 // pred_region
              _
            $region51: #{attention_digae_forward.4} parent=35 // pred_fallthru
              _
          $region36: #{attention_digae_forward.4} parent=31 // pred_fallthru
            _
          %288 = vnop
        $region32: #{attention_digae_forward.4} parent=15 // pred_fallthru
          _
      $region16: #{attention_digae_forward.4} parent=5 // pred_fallthru
        _
      %p289 = scmp.le.s32.totalorder 1, %s12
      %p290 = scmp.lt.s32.totalorder %s12, 5
      %p291 = pnand %p289, %p290
      %p292 = pneg %p291
      // Predicated region
      $region52: #{attention_digae_forward.4} parent=5 // pred_check
        _
      $region53: #{attention_digae_forward.4} parent=5 // pred_check_branch
        %294 = sbr.rel (%p291) target = $region55
      $region54: #{attention_digae_forward.4} parent=5 // pred_region
        %s295 = ssub.s32 %s12, 1
        %s296 = sand.u32 %s117, 1
        %s297 = sand.u32 %s117, 1
        %s298 = smul.addr %s297, 128
        %s299 = scalar_lea.vmem [#allocation8], %s298
        // Predicated region
        $region56: #{attention_digae_forward.4} parent=54 // pred_check
          %p300 = pneg %p130
        $region57: #{attention_digae_forward.4} parent=54 // pred_check_branch
          %302 = sbr.rel (%p300) target = $region59
        $region58: #{attention_digae_forward.4} parent=54 // pred_region
          _
        $region59: #{attention_digae_forward.4} parent=54 // pred_fallthru
          _
        %s303 = smul.u32 32, %s22
        %p304 = scmp.lt.s32.totalorder %s303, 63
        %s305 = scalar_select %p304, %s303, 63
        %s306 = smul.addr %s305, 2
        %s307 = smul.addr %s306, 4
        %s308 = scalar_lea.vmem %s0, %s307
        %p309 = pneg %p50
        %p310 = pneg %p47
        %s311 = smul.u32 32, %s21
        %p312 = scmp.lt.s32.totalorder %s311, 63
        %s313 = scalar_select %p312, %s311, 63
        %s314 = smul.addr %s313, 8
        %s315 = scalar_lea.vmem %s1, %s314
        %p316 = pneg %p76
        %p317 = pneg %p73
        %s318 = smul.u32 2, %s22
        %p319 = scmp.lt.s32.totalorder %s318, 3
        %s320 = scalar_select %p319, %s318, 3
        %s321 = smul.addr %s320, 8
        %s322 = scalar_lea.vmem %s2, %s321
        %p323 = pneg %p102
        %p324 = pneg %p99
        %s325 = sand.u32 %s117, 1
        %s326 = sand.u32 %s117, 1
        %s327 = smul.addr %s326, 128
        %s328 = scalar_lea.vmem [#allocation8], %s327
        %p329 = pneg %p130
        %p330 = pneg %p127
        %p331 = pneg %p156
        %p332 = pneg %p153
        %s333 = smul.u32 32, %s21
        %p334 = scmp.lt.s32.totalorder %s333, 63
        %s335 = scalar_select %p334, %s333, 63
        %s336 = smul.addr %s335, 4
        %s337 = scalar_lea.vmem %s4, %s336
        %p338 = pneg %p182
        %p339 = pneg %p179
        %s340 = smul.u32 32, %s21
        %p341 = scmp.lt.s32.totalorder %s340, 63
        %s342 = scalar_select %p341, %s340, 63
        %s343 = smul.addr %s342, 4
        %s344 = scalar_lea.vmem %s5, %s343
        %s345 = smul.u32 32, %s22
        %p346 = scmp.lt.s32.totalorder %s345, 63
        %s347 = scalar_select %p346, %s345, 63
        %s348 = smul.addr %s347, 2
        %s349 = smul.addr %s348, 4
        %s350 = scalar_lea.vmem %s0, %s349
        %s351 = smul.u32 32, %s22
        %s352 = smul.u32 32, %s21
        %p353 = scmp.lt.s32.totalorder %s352, 63
        %s354 = scalar_select %p353, %s352, 63
        %s355 = smul.addr %s354, 8
        %s356 = scalar_lea.vmem %s1, %s355
        %s357 = smul.u32 32, %s21
        %s358 = smul.u32 2, %s22
        %p359 = scmp.lt.s32.totalorder %s358, 3
        %s360 = scalar_select %p359, %s358, 3
        %s361 = smul.addr %s360, 8
        %s362 = scalar_lea.vmem %s2, %s361
        %s363 = smul.u32 2, %s22
        %s364 = smul.u32 8, %s21
        %s365 = smul.u32 2, %s22
        %s366 = smul.u32 32, %s21
        %p367 = scmp.lt.s32.totalorder %s366, 63
        %s368 = scalar_select %p367, %s366, 63
        %s369 = smul.addr %s368, 4
        %s370 = scalar_lea.vmem %s4, %s369
        %s371 = smul.u32 32, %s21
        %s372 = smul.u32 32, %s21
        %p373 = scmp.lt.s32.totalorder %s372, 63
        %s374 = scalar_select %p373, %s372, 63
        %s375 = smul.addr %s374, 4
        %s376 = scalar_lea.vmem %s5, %s375
        %s377 = smul.u32 32, %s21
        %p379 = scmp.eq.s32.totalorder %s22, 0
        // Predicated region
        $region60: #{attention_digae_forward.4} parent=54 // pred_check
          %p380 = pneg %p379
        $region61: #{attention_digae_forward.4} parent=54 // pred_check_branch
          %382 = sbr.rel (%p380) target = $region63
        $region62: #{attention_digae_forward.4} parent=54 // pred_region
          %vm383 = vcmask 7168
          %384 = vst.msk [vmem:[#allocation2] sm:$0xff] %vm383, -inf
          %385 = vst.msk [vmem:[#allocation2 + $0x8] sm:$0xff] %vm383, -inf
          %386 = vst.msk [vmem:[#allocation2 + $0x10] sm:$0xff] %vm383, -inf
          %387 = vst.msk [vmem:[#allocation2 + $0x18] sm:$0xff] %vm383, -inf
          %388 = vst.msk [vmem:[#allocation2 + $0x20] sm:$0xff] %vm383, -inf
          %389 = vst.msk [vmem:[#allocation2 + $0x28] sm:$0xff] %vm383, -inf
          %390 = vst.msk [vmem:[#allocation2 + $0x30] sm:$0xff] %vm383, -inf
          %391 = vst.msk [vmem:[#allocation2 + $0x38] sm:$0xff] %vm383, -inf
          %392 = vst.msk [vmem:[#allocation2 + $0x40] sm:$0xff] %vm383, -inf
          %393 = vst.msk [vmem:[#allocation2 + $0x48] sm:$0xff] %vm383, -inf
          %394 = vst.msk [vmem:[#allocation2 + $0x50] sm:$0xff] %vm383, -inf
          %395 = vst.msk [vmem:[#allocation2 + $0x58] sm:$0xff] %vm383, -inf
          %396 = vst.msk [vmem:[#allocation2 + $0x60] sm:$0xff] %vm383, -inf
          %397 = vst.msk [vmem:[#allocation2 + $0x68] sm:$0xff] %vm383, -inf
          %398 = vst.msk [vmem:[#allocation2 + $0x70] sm:$0xff] %vm383, -inf
          %399 = vst.msk [vmem:[#allocation2 + $0x78] sm:$0xff] %vm383, -inf
          %400 = vst.msk [vmem:[#allocation2 + $0x80] sm:$0xff] %vm383, -inf
          %401 = vst.msk [vmem:[#allocation2 + $0x88] sm:$0xff] %vm383, -inf
          %402 = vst.msk [vmem:[#allocation2 + $0x90] sm:$0xff] %vm383, -inf
          %403 = vst.msk [vmem:[#allocation2 + $0x98] sm:$0xff] %vm383, -inf
          %404 = vst.msk [vmem:[#allocation2 + $0xa0] sm:$0xff] %vm383, -inf
          %405 = vst.msk [vmem:[#allocation2 + $0xa8] sm:$0xff] %vm383, -inf
          %406 = vst.msk [vmem:[#allocation2 + $0xb0] sm:$0xff] %vm383, -inf
          %407 = vst.msk [vmem:[#allocation2 + $0xb8] sm:$0xff] %vm383, -inf
          %408 = vst.msk [vmem:[#allocation2 + $0xc0] sm:$0xff] %vm383, -inf
          %409 = vst.msk [vmem:[#allocation2 + $0xc8] sm:$0xff] %vm383, -inf
          %410 = vst.msk [vmem:[#allocation2 + $0xd0] sm:$0xff] %vm383, -inf
          %411 = vst.msk [vmem:[#allocation2 + $0xd8] sm:$0xff] %vm383, -inf
          %412 = vst.msk [vmem:[#allocation2 + $0xe0] sm:$0xff] %vm383, -inf
          %413 = vst.msk [vmem:[#allocation2 + $0xe8] sm:$0xff] %vm383, -inf
          %414 = vst.msk [vmem:[#allocation2 + $0xf0] sm:$0xff] %vm383, -inf
          %415 = vst.msk [vmem:[#allocation2 + $0xf8] sm:$0xff] %vm383, -inf
          %416 = vst.msk [vmem:[#allocation5] sm:$0xff] %vm383, -inf
          %417 = vst.msk [vmem:[#allocation5 + $0x8] sm:$0xff] %vm383, -inf
          %418 = vst.msk [vmem:[#allocation5 + $0x10] sm:$0xff] %vm383, -inf
          %419 = vst.msk [vmem:[#allocation5 + $0x18] sm:$0xff] %vm383, -inf
          %420 = vst.msk [vmem:[#allocation5 + $0x20] sm:$0xff] %vm383, -inf
          %421 = vst.msk [vmem:[#allocation5 + $0x28] sm:$0xff] %vm383, -inf
          %422 = vst.msk [vmem:[#allocation5 + $0x30] sm:$0xff] %vm383, -inf
          %423 = vst.msk [vmem:[#allocation5 + $0x38] sm:$0xff] %vm383, -inf
          %424 = vst.msk [vmem:[#allocation5 + $0x40] sm:$0xff] %vm383, -inf
          %425 = vst.msk [vmem:[#allocation5 + $0x48] sm:$0xff] %vm383, -inf
          %426 = vst.msk [vmem:[#allocation5 + $0x50] sm:$0xff] %vm383, -inf
          %427 = vst.msk [vmem:[#allocation5 + $0x58] sm:$0xff] %vm383, -inf
          %428 = vst.msk [vmem:[#allocation5 + $0x60] sm:$0xff] %vm383, -inf
          %429 = vst.msk [vmem:[#allocation5 + $0x68] sm:$0xff] %vm383, -inf
          %430 = vst.msk [vmem:[#allocation5 + $0x70] sm:$0xff] %vm383, -inf
          %431 = vst.msk [vmem:[#allocation5 + $0x78] sm:$0xff] %vm383, -inf
          %432 = vst.msk [vmem:[#allocation5 + $0x80] sm:$0xff] %vm383, -inf
          %433 = vst.msk [vmem:[#allocation5 + $0x88] sm:$0xff] %vm383, -inf
          %434 = vst.msk [vmem:[#allocation5 + $0x90] sm:$0xff] %vm383, -inf
          %435 = vst.msk [vmem:[#allocation5 + $0x98] sm:$0xff] %vm383, -inf
          %436 = vst.msk [vmem:[#allocation5 + $0xa0] sm:$0xff] %vm383, -inf
          %437 = vst.msk [vmem:[#allocation5 + $0xa8] sm:$0xff] %vm383, -inf
          %438 = vst.msk [vmem:[#allocation5 + $0xb0] sm:$0xff] %vm383, -inf
          %439 = vst.msk [vmem:[#allocation5 + $0xb8] sm:$0xff] %vm383, -inf
          %440 = vst.msk [vmem:[#allocation5 + $0xc0] sm:$0xff] %vm383, -inf
          %441 = vst.msk [vmem:[#allocation5 + $0xc8] sm:$0xff] %vm383, -inf
          %442 = vst.msk [vmem:[#allocation5 + $0xd0] sm:$0xff] %vm383, -inf
          %443 = vst.msk [vmem:[#allocation5 + $0xd8] sm:$0xff] %vm383, -inf
          %444 = vst.msk [vmem:[#allocation5 + $0xe0] sm:$0xff] %vm383, -inf
          %445 = vst.msk [vmem:[#allocation5 + $0xe8] sm:$0xff] %vm383, -inf
          %446 = vst.msk [vmem:[#allocation5 + $0xf0] sm:$0xff] %vm383, -inf
          %447 = vst.msk [vmem:[#allocation5 + $0xf8] sm:$0xff] %vm383, -inf
          %448 = vst.msk [vmem:[#allocation3] sm:$0xff] %vm383, 0.0
          %449 = vst.msk [vmem:[#allocation3 + $0x8] sm:$0xff] %vm383, 0.0
          %450 = vst.msk [vmem:[#allocation3 + $0x10] sm:$0xff] %vm383, 0.0
          %451 = vst.msk [vmem:[#allocation3 + $0x18] sm:$0xff] %vm383, 0.0
          %452 = vst.msk [vmem:[#allocation3 + $0x20] sm:$0xff] %vm383, 0.0
          %453 = vst.msk [vmem:[#allocation3 + $0x28] sm:$0xff] %vm383, 0.0
          %454 = vst.msk [vmem:[#allocation3 + $0x30] sm:$0xff] %vm383, 0.0
          %455 = vst.msk [vmem:[#allocation3 + $0x38] sm:$0xff] %vm383, 0.0
          %456 = vst.msk [vmem:[#allocation3 + $0x40] sm:$0xff] %vm383, 0.0
          %457 = vst.msk [vmem:[#allocation3 + $0x48] sm:$0xff] %vm383, 0.0
          %458 = vst.msk [vmem:[#allocation3 + $0x50] sm:$0xff] %vm383, 0.0
          %459 = vst.msk [vmem:[#allocation3 + $0x58] sm:$0xff] %vm383, 0.0
          %460 = vst.msk [vmem:[#allocation3 + $0x60] sm:$0xff] %vm383, 0.0
          %461 = vst.msk [vmem:[#allocation3 + $0x68] sm:$0xff] %vm383, 0.0
          %462 = vst.msk [vmem:[#allocation3 + $0x70] sm:$0xff] %vm383, 0.0
          %463 = vst.msk [vmem:[#allocation3 + $0x78] sm:$0xff] %vm383, 0.0
          %464 = vst.msk [vmem:[#allocation3 + $0x80] sm:$0xff] %vm383, 0.0
          %465 = vst.msk [vmem:[#allocation3 + $0x88] sm:$0xff] %vm383, 0.0
          %466 = vst.msk [vmem:[#allocation3 + $0x90] sm:$0xff] %vm383, 0.0
          %467 = vst.msk [vmem:[#allocation3 + $0x98] sm:$0xff] %vm383, 0.0
          %468 = vst.msk [vmem:[#allocation3 + $0xa0] sm:$0xff] %vm383, 0.0
          %469 = vst.msk [vmem:[#allocation3 + $0xa8] sm:$0xff] %vm383, 0.0
          %470 = vst.msk [vmem:[#allocation3 + $0xb0] sm:$0xff] %vm383, 0.0
          %471 = vst.msk [vmem:[#allocation3 + $0xb8] sm:$0xff] %vm383, 0.0
          %472 = vst.msk [vmem:[#allocation3 + $0xc0] sm:$0xff] %vm383, 0.0
          %473 = vst.msk [vmem:[#allocation3 + $0xc8] sm:$0xff] %vm383, 0.0
          %474 = vst.msk [vmem:[#allocation3 + $0xd0] sm:$0xff] %vm383, 0.0
          %475 = vst.msk [vmem:[#allocation3 + $0xd8] sm:$0xff] %vm383, 0.0
          %476 = vst.msk [vmem:[#allocation3 + $0xe0] sm:$0xff] %vm383, 0.0
          %477 = vst.msk [vmem:[#allocation3 + $0xe8] sm:$0xff] %vm383, 0.0
          %478 = vst.msk [vmem:[#allocation3 + $0xf0] sm:$0xff] %vm383, 0.0
          %479 = vst.msk [vmem:[#allocation3 + $0xf8] sm:$0xff] %vm383, 0.0
          %480 = vst.msk [vmem:[#allocation6] sm:$0xff] %vm383, 0.0
          %481 = vst.msk [vmem:[#allocation6 + $0x8] sm:$0xff] %vm383, 0.0
          %482 = vst.msk [vmem:[#allocation6 + $0x10] sm:$0xff] %vm383, 0.0
          %483 = vst.msk [vmem:[#allocation6 + $0x18] sm:$0xff] %vm383, 0.0
          %484 = vst.msk [vmem:[#allocation6 + $0x20] sm:$0xff] %vm383, 0.0
          %485 = vst.msk [vmem:[#allocation6 + $0x28] sm:$0xff] %vm383, 0.0
          %486 = vst.msk [vmem:[#allocation6 + $0x30] sm:$0xff] %vm383, 0.0
          %487 = vst.msk [vmem:[#allocation6 + $0x38] sm:$0xff] %vm383, 0.0
          %488 = vst.msk [vmem:[#allocation6 + $0x40] sm:$0xff] %vm383, 0.0
          %489 = vst.msk [vmem:[#allocation6 + $0x48] sm:$0xff] %vm383, 0.0
          %490 = vst.msk [vmem:[#allocation6 + $0x50] sm:$0xff] %vm383, 0.0
          %491 = vst.msk [vmem:[#allocation6 + $0x58] sm:$0xff] %vm383, 0.0
          %492 = vst.msk [vmem:[#allocation6 + $0x60] sm:$0xff] %vm383, 0.0
          %493 = vst.msk [vmem:[#allocation6 + $0x68] sm:$0xff] %vm383, 0.0
          %494 = vst.msk [vmem:[#allocation6 + $0x70] sm:$0xff] %vm383, 0.0
          %495 = vst.msk [vmem:[#allocation6 + $0x78] sm:$0xff] %vm383, 0.0
          %496 = vst.msk [vmem:[#allocation6 + $0x80] sm:$0xff] %vm383, 0.0
          %497 = vst.msk [vmem:[#allocation6 + $0x88] sm:$0xff] %vm383, 0.0
          %498 = vst.msk [vmem:[#allocation6 + $0x90] sm:$0xff] %vm383, 0.0
          %499 = vst.msk [vmem:[#allocation6 + $0x98] sm:$0xff] %vm383, 0.0
          %500 = vst.msk [vmem:[#allocation6 + $0xa0] sm:$0xff] %vm383, 0.0
          %501 = vst.msk [vmem:[#allocation6 + $0xa8] sm:$0xff] %vm383, 0.0
          %502 = vst.msk [vmem:[#allocation6 + $0xb0] sm:$0xff] %vm383, 0.0
          %503 = vst.msk [vmem:[#allocation6 + $0xb8] sm:$0xff] %vm383, 0.0
          %504 = vst.msk [vmem:[#allocation6 + $0xc0] sm:$0xff] %vm383, 0.0
          %505 = vst.msk [vmem:[#allocation6 + $0xc8] sm:$0xff] %vm383, 0.0
          %506 = vst.msk [vmem:[#allocation6 + $0xd0] sm:$0xff] %vm383, 0.0
          %507 = vst.msk [vmem:[#allocation6 + $0xd8] sm:$0xff] %vm383, 0.0
          %508 = vst.msk [vmem:[#allocation6 + $0xe0] sm:$0xff] %vm383, 0.0
          %509 = vst.msk [vmem:[#allocation6 + $0xe8] sm:$0xff] %vm383, 0.0
          %510 = vst.msk [vmem:[#allocation6 + $0xf0] sm:$0xff] %vm383, 0.0
          %511 = vst.msk [vmem:[#allocation6 + $0xf8] sm:$0xff] %vm383, 0.0
          %512 = vst [vmem:[#allocation4] sm:$0xff] 0.0
          %513 = vst [vmem:[#allocation4 + $0x8] sm:$0xff] 0.0
          %514 = vst [vmem:[#allocation4 + $0x10] sm:$0xff] 0.0
          %515 = vst [vmem:[#allocation4 + $0x18] sm:$0xff] 0.0
          %516 = vst [vmem:[#allocation4 + $0x20] sm:$0xff] 0.0
          %517 = vst [vmem:[#allocation4 + $0x28] sm:$0xff] 0.0
          %518 = vst [vmem:[#allocation4 + $0x30] sm:$0xff] 0.0
          %519 = vst [vmem:[#allocation4 + $0x38] sm:$0xff] 0.0
          %520 = vst [vmem:[#allocation4 + $0x40] sm:$0xff] 0.0
          %521 = vst [vmem:[#allocation4 + $0x48] sm:$0xff] 0.0
          %522 = vst [vmem:[#allocation4 + $0x50] sm:$0xff] 0.0
          %523 = vst [vmem:[#allocation4 + $0x58] sm:$0xff] 0.0
          %524 = vst [vmem:[#allocation4 + $0x60] sm:$0xff] 0.0
          %525 = vst [vmem:[#allocation4 + $0x68] sm:$0xff] 0.0
          %526 = vst [vmem:[#allocation4 + $0x70] sm:$0xff] 0.0
          %527 = vst [vmem:[#allocation4 + $0x78] sm:$0xff] 0.0
          %528 = vst [vmem:[#allocation4 + $0x80] sm:$0xff] 0.0
          %529 = vst [vmem:[#allocation4 + $0x88] sm:$0xff] 0.0
          %530 = vst [vmem:[#allocation4 + $0x90] sm:$0xff] 0.0
          %531 = vst [vmem:[#allocation4 + $0x98] sm:$0xff] 0.0
          %532 = vst [vmem:[#allocation4 + $0xa0] sm:$0xff] 0.0
          %533 = vst [vmem:[#allocation4 + $0xa8] sm:$0xff] 0.0
          %534 = vst [vmem:[#allocation4 + $0xb0] sm:$0xff] 0.0
          %535 = vst [vmem:[#allocation4 + $0xb8] sm:$0xff] 0.0
          %536 = vst [vmem:[#allocation4 + $0xc0] sm:$0xff] 0.0
          %537 = vst [vmem:[#allocation4 + $0xc8] sm:$0xff] 0.0
          %538 = vst [vmem:[#allocation4 + $0xd0] sm:$0xff] 0.0
          %539 = vst [vmem:[#allocation4 + $0xd8] sm:$0xff] 0.0
          %540 = vst [vmem:[#allocation4 + $0xe0] sm:$0xff] 0.0
          %541 = vst [vmem:[#allocation4 + $0xe8] sm:$0xff] 0.0
          %542 = vst [vmem:[#allocation4 + $0xf0] sm:$0xff] 0.0
          %543 = vst [vmem:[#allocation4 + $0xf8] sm:$0xff] 0.0
          %544 = vst [vmem:[#allocation7] sm:$0xff] 0.0
          %545 = vst [vmem:[#allocation7 + $0x8] sm:$0xff] 0.0
          %546 = vst [vmem:[#allocation7 + $0x10] sm:$0xff] 0.0
          %547 = vst [vmem:[#allocation7 + $0x18] sm:$0xff] 0.0
          %548 = vst [vmem:[#allocation7 + $0x20] sm:$0xff] 0.0
          %549 = vst [vmem:[#allocation7 + $0x28] sm:$0xff] 0.0
          %550 = vst [vmem:[#allocation7 + $0x30] sm:$0xff] 0.0
          %551 = vst [vmem:[#allocation7 + $0x38] sm:$0xff] 0.0
          %552 = vst [vmem:[#allocation7 + $0x40] sm:$0xff] 0.0
          %553 = vst [vmem:[#allocation7 + $0x48] sm:$0xff] 0.0
          %554 = vst [vmem:[#allocation7 + $0x50] sm:$0xff] 0.0
          %555 = vst [vmem:[#allocation7 + $0x58] sm:$0xff] 0.0
          %556 = vst [vmem:[#allocation7 + $0x60] sm:$0xff] 0.0
          %557 = vst [vmem:[#allocation7 + $0x68] sm:$0xff] 0.0
          %558 = vst [vmem:[#allocation7 + $0x70] sm:$0xff] 0.0
          %559 = vst [vmem:[#allocation7 + $0x78] sm:$0xff] 0.0
          %560 = vst [vmem:[#allocation7 + $0x80] sm:$0xff] 0.0
          %561 = vst [vmem:[#allocation7 + $0x88] sm:$0xff] 0.0
          %562 = vst [vmem:[#allocation7 + $0x90] sm:$0xff] 0.0
          %563 = vst [vmem:[#allocation7 + $0x98] sm:$0xff] 0.0
          %564 = vst [vmem:[#allocation7 + $0xa0] sm:$0xff] 0.0
          %565 = vst [vmem:[#allocation7 + $0xa8] sm:$0xff] 0.0
          %566 = vst [vmem:[#allocation7 + $0xb0] sm:$0xff] 0.0
          %567 = vst [vmem:[#allocation7 + $0xb8] sm:$0xff] 0.0
          %568 = vst [vmem:[#allocation7 + $0xc0] sm:$0xff] 0.0
          %569 = vst [vmem:[#allocation7 + $0xc8] sm:$0xff] 0.0
          %570 = vst [vmem:[#allocation7 + $0xd0] sm:$0xff] 0.0
          %571 = vst [vmem:[#allocation7 + $0xd8] sm:$0xff] 0.0
          %572 = vst [vmem:[#allocation7 + $0xe0] sm:$0xff] 0.0
          %573 = vst [vmem:[#allocation7 + $0xe8] sm:$0xff] 0.0
          %574 = vst [vmem:[#allocation7 + $0xf0] sm:$0xff] 0.0
          %575 = vst [vmem:[#allocation7 + $0xf8] sm:$0xff] 0.0
        $region63: #{attention_digae_forward.4} parent=54 // pred_fallthru
          _
        %v576 = vld [vmem:[%s350] sm:$0xff]
        %v577 = vld [vmem:[%s350 + $0x8] sm:$0xff]
        %v578 = vld [vmem:[%s350 + $0x10] sm:$0xff]
        %v579 = vld [vmem:[%s350 + $0x18] sm:$0xff]
        %v580 = vld [vmem:[%s350 + $0x20] sm:$0xff]
        %v581 = vld [vmem:[%s350 + $0x28] sm:$0xff]
        %v582 = vld [vmem:[%s350 + $0x30] sm:$0xff]
        %v583 = vld [vmem:[%s350 + $0x38] sm:$0xff]
        %v584 = vld [vmem:[%s350 + $0x40] sm:$0xff]
        %v585 = vld [vmem:[%s350 + $0x48] sm:$0xff]
        %v586 = vld [vmem:[%s350 + $0x50] sm:$0xff]
        %v587 = vld [vmem:[%s350 + $0x58] sm:$0xff]
        %v588 = vld [vmem:[%s350 + $0x60] sm:$0xff]
        %v589 = vld [vmem:[%s350 + $0x68] sm:$0xff]
        %v590 = vld [vmem:[%s350 + $0x70] sm:$0xff]
        %v591 = vld [vmem:[%s350 + $0x78] sm:$0xff]
        %v592 = vld [vmem:[%s350 + $0x80] sm:$0xff]
        %v593 = vld [vmem:[%s350 + $0x88] sm:$0xff]
        %v594 = vld [vmem:[%s350 + $0x90] sm:$0xff]
        %v595 = vld [vmem:[%s350 + $0x98] sm:$0xff]
        %v596 = vld [vmem:[%s350 + $0xa0] sm:$0xff]
        %v597 = vld [vmem:[%s350 + $0xa8] sm:$0xff]
        %v598 = vld [vmem:[%s350 + $0xb0] sm:$0xff]
        %v599 = vld [vmem:[%s350 + $0xb8] sm:$0xff]
        %v600 = vld [vmem:[%s350 + $0xc0] sm:$0xff]
        %v601 = vld [vmem:[%s350 + $0xc8] sm:$0xff]
        %v602 = vld [vmem:[%s350 + $0xd0] sm:$0xff]
        %v603 = vld [vmem:[%s350 + $0xd8] sm:$0xff]
        %v604 = vld [vmem:[%s350 + $0xe0] sm:$0xff]
        %v605 = vld [vmem:[%s350 + $0xe8] sm:$0xff]
        %v606 = vld [vmem:[%s350 + $0xf0] sm:$0xff]
        %v607 = vld [vmem:[%s350 + $0xf8] sm:$0xff]
        %v608 = vld [vmem:[%s356] sm:$0xff]
        %v609 = vld [vmem:[%s356 + $0x8] sm:$0xff]
        %v610 = vld [vmem:[%s356 + $0x10] sm:$0xff]
        %v611 = vld [vmem:[%s356 + $0x18] sm:$0xff]
        %v612 = vld [vmem:[%s356 + $0x20] sm:$0xff]
        %v613 = vld [vmem:[%s356 + $0x28] sm:$0xff]
        %v614 = vld [vmem:[%s356 + $0x30] sm:$0xff]
        %v615 = vld [vmem:[%s356 + $0x38] sm:$0xff]
        %v616 = vld [vmem:[%s356 + $0x40] sm:$0xff]
        %v617 = vld [vmem:[%s356 + $0x48] sm:$0xff]
        %v618 = vld [vmem:[%s356 + $0x50] sm:$0xff]
        %v619 = vld [vmem:[%s356 + $0x58] sm:$0xff]
        %v620 = vld [vmem:[%s356 + $0x60] sm:$0xff]
        %v621 = vld [vmem:[%s356 + $0x68] sm:$0xff]
        %v622 = vld [vmem:[%s356 + $0x70] sm:$0xff]
        %v623 = vld [vmem:[%s356 + $0x78] sm:$0xff]
        %v624 = vld [vmem:[%s356 + $0x80] sm:$0xff]
        %v625 = vld [vmem:[%s356 + $0x88] sm:$0xff]
        %v626 = vld [vmem:[%s356 + $0x90] sm:$0xff]
        %v627 = vld [vmem:[%s356 + $0x98] sm:$0xff]
        %v628 = vld [vmem:[%s356 + $0xa0] sm:$0xff]
        %v629 = vld [vmem:[%s356 + $0xa8] sm:$0xff]
        %v630 = vld [vmem:[%s356 + $0xb0] sm:$0xff]
        %v631 = vld [vmem:[%s356 + $0xb8] sm:$0xff]
        %v632 = vld [vmem:[%s356 + $0xc0] sm:$0xff]
        %v633 = vld [vmem:[%s356 + $0xc8] sm:$0xff]
        %v634 = vld [vmem:[%s356 + $0xd0] sm:$0xff]
        %v635 = vld [vmem:[%s356 + $0xd8] sm:$0xff]
        %v636 = vld [vmem:[%s356 + $0xe0] sm:$0xff]
        %v637 = vld [vmem:[%s356 + $0xe8] sm:$0xff]
        %v638 = vld [vmem:[%s356 + $0xf0] sm:$0xff]
        %v639 = vld [vmem:[%s356 + $0xf8] sm:$0xff]
        %v640 = vld [vmem:[%s362] sm:$0xff]
        %v641 = vld [vmem:[%s362 + $0x8] sm:$0xff]
        %v642 = vld [vmem:[%s299] sm:$0xff]
        %v643 = vld [vmem:[%s299 + $0x8] sm:$0xff]
        %v644 = vld [vmem:[%s299 + $0x10] sm:$0xff]
        %v645 = vld [vmem:[%s299 + $0x18] sm:$0xff]
        %v646 = vld [vmem:[%s299 + $0x20] sm:$0xff]
        %v647 = vld [vmem:[%s299 + $0x28] sm:$0xff]
        %v648 = vld [vmem:[%s299 + $0x30] sm:$0xff]
        %v649 = vld [vmem:[%s299 + $0x38] sm:$0xff]
        %v650 = vld [vmem:[%s299 + $0x40] sm:$0xff]
        %v651 = vld [vmem:[%s299 + $0x48] sm:$0xff]
        %v652 = vld [vmem:[%s299 + $0x50] sm:$0xff]
        %v653 = vld [vmem:[%s299 + $0x58] sm:$0xff]
        %v654 = vld [vmem:[%s299 + $0x60] sm:$0xff]
        %v655 = vld [vmem:[%s299 + $0x68] sm:$0xff]
        %v656 = vld [vmem:[%s299 + $0x70] sm:$0xff]
        %v657 = vld [vmem:[%s299 + $0x78] sm:$0xff]
        %v658 = vunpack.c.0.s8 %v642
        %v659 = vunpack.c.0.s8 %v643
        %v660 = vunpack.c.1.s8 %v642
        %v661 = vunpack.c.1.s8 %v643
        %v662 = vunpack.c.2.s8 %v642
        %v663 = vunpack.c.2.s8 %v643
        %v664 = vunpack.c.3.s8 %v642
        %v665 = vunpack.c.3.s8 %v643
        %v666 = vunpack.c.0.s8 %v644
        %v667 = vunpack.c.0.s8 %v645
        %v668 = vunpack.c.1.s8 %v644
        %v669 = vunpack.c.1.s8 %v645
        %v670 = vunpack.c.2.s8 %v644
        %v671 = vunpack.c.2.s8 %v645
        %v672 = vunpack.c.3.s8 %v644
        %v673 = vunpack.c.3.s8 %v645
        %v674 = vunpack.c.0.s8 %v646
        %v675 = vunpack.c.0.s8 %v647
        %v676 = vunpack.c.1.s8 %v646
        %v677 = vunpack.c.1.s8 %v647
        %v678 = vunpack.c.2.s8 %v646
        %v679 = vunpack.c.2.s8 %v647
        %v680 = vunpack.c.3.s8 %v646
        %v681 = vunpack.c.3.s8 %v647
        %v682 = vunpack.c.0.s8 %v648
        %v683 = vunpack.c.0.s8 %v649
        %v684 = vunpack.c.1.s8 %v648
        %v685 = vunpack.c.1.s8 %v649
        %v686 = vunpack.c.2.s8 %v648
        %v687 = vunpack.c.2.s8 %v649
        %v688 = vunpack.c.3.s8 %v648
        %v689 = vunpack.c.3.s8 %v649
        %v690 = vunpack.c.0.s8 %v650
        %v691 = vunpack.c.0.s8 %v651
        %v692 = vunpack.c.1.s8 %v650
        %v693 = vunpack.c.1.s8 %v651
        %v694 = vunpack.c.2.s8 %v650
        %v695 = vunpack.c.2.s8 %v651
        %v696 = vunpack.c.3.s8 %v650
        %v697 = vunpack.c.3.s8 %v651
        %v698 = vunpack.c.0.s8 %v652
        %v699 = vunpack.c.0.s8 %v653
        %v700 = vunpack.c.1.s8 %v652
        %v701 = vunpack.c.1.s8 %v653
        %v702 = vunpack.c.2.s8 %v652
        %v703 = vunpack.c.2.s8 %v653
        %v704 = vunpack.c.3.s8 %v652
        %v705 = vunpack.c.3.s8 %v653
        %v706 = vunpack.c.0.s8 %v654
        %v707 = vunpack.c.0.s8 %v655
        %v708 = vunpack.c.1.s8 %v654
        %v709 = vunpack.c.1.s8 %v655
        %v710 = vunpack.c.2.s8 %v654
        %v711 = vunpack.c.2.s8 %v655
        %v712 = vunpack.c.3.s8 %v654
        %v713 = vunpack.c.3.s8 %v655
        %v714 = vunpack.c.0.s8 %v656
        %v715 = vunpack.c.0.s8 %v657
        %v716 = vunpack.c.1.s8 %v656
        %v717 = vunpack.c.1.s8 %v657
        %v718 = vunpack.c.2.s8 %v656
        %v719 = vunpack.c.2.s8 %v657
        %v720 = vunpack.c.3.s8 %v656
        %v721 = vunpack.c.3.s8 %v657
        %v722 = vand.u32 %v658, 1
        %v723 = vand.u32 %v659, 1
        %v724 = vand.u32 %v660, 1
        %v725 = vand.u32 %v661, 1
        %v726 = vand.u32 %v662, 1
        %v727 = vand.u32 %v663, 1
        %v728 = vand.u32 %v664, 1
        %v729 = vand.u32 %v665, 1
        %v730 = vand.u32 %v666, 1
        %v731 = vand.u32 %v667, 1
        %v732 = vand.u32 %v668, 1
        %v733 = vand.u32 %v669, 1
        %v734 = vand.u32 %v670, 1
        %v735 = vand.u32 %v671, 1
        %v736 = vand.u32 %v672, 1
        %v737 = vand.u32 %v673, 1
        %v738 = vand.u32 %v674, 1
        %v739 = vand.u32 %v675, 1
        %v740 = vand.u32 %v676, 1
        %v741 = vand.u32 %v677, 1
        %v742 = vand.u32 %v678, 1
        %v743 = vand.u32 %v679, 1
        %v744 = vand.u32 %v680, 1
        %v745 = vand.u32 %v681, 1
        %v746 = vand.u32 %v682, 1
        %v747 = vand.u32 %v683, 1
        %v748 = vand.u32 %v684, 1
        %v749 = vand.u32 %v685, 1
        %v750 = vand.u32 %v686, 1
        %v751 = vand.u32 %v687, 1
        %v752 = vand.u32 %v688, 1
        %v753 = vand.u32 %v689, 1
        %v754 = vand.u32 %v690, 1
        %v755 = vand.u32 %v691, 1
        %v756 = vand.u32 %v692, 1
        %v757 = vand.u32 %v693, 1
        %v758 = vand.u32 %v694, 1
        %v759 = vand.u32 %v695, 1
        %v760 = vand.u32 %v696, 1
        %v761 = vand.u32 %v697, 1
        %v762 = vand.u32 %v698, 1
        %v763 = vand.u32 %v699, 1
        %v764 = vand.u32 %v700, 1
        %v765 = vand.u32 %v701, 1
        %v766 = vand.u32 %v702, 1
        %v767 = vand.u32 %v703, 1
        %v768 = vand.u32 %v704, 1
        %v769 = vand.u32 %v705, 1
        %v770 = vand.u32 %v706, 1
        %v771 = vand.u32 %v707, 1
        %v772 = vand.u32 %v708, 1
        %v773 = vand.u32 %v709, 1
        %v774 = vand.u32 %v710, 1
        %v775 = vand.u32 %v711, 1
        %v776 = vand.u32 %v712, 1
        %v777 = vand.u32 %v713, 1
        %v778 = vand.u32 %v714, 1
        %v779 = vand.u32 %v715, 1
        %v780 = vand.u32 %v716, 1
        %v781 = vand.u32 %v717, 1
        %v782 = vand.u32 %v718, 1
        %v783 = vand.u32 %v719, 1
        %v784 = vand.u32 %v720, 1
        %v785 = vand.u32 %v721, 1
        %vm786 = vcmp.gt.s32.totalorder %v722, 0
        %vm787 = vcmp.gt.s32.totalorder %v723, 0
        %vm788 = vcmp.gt.s32.totalorder %v724, 0
        %vm789 = vcmp.gt.s32.totalorder %v725, 0
        %vm790 = vcmp.gt.s32.totalorder %v726, 0
        %vm791 = vcmp.gt.s32.totalorder %v727, 0
        %vm792 = vcmp.gt.s32.totalorder %v728, 0
        %vm793 = vcmp.gt.s32.totalorder %v729, 0
        %vm794 = vcmp.gt.s32.totalorder %v730, 0
        %vm795 = vcmp.gt.s32.totalorder %v731, 0
        %vm796 = vcmp.gt.s32.totalorder %v732, 0
        %vm797 = vcmp.gt.s32.totalorder %v733, 0
        %vm798 = vcmp.gt.s32.totalorder %v734, 0
        %vm799 = vcmp.gt.s32.totalorder %v735, 0
        %vm800 = vcmp.gt.s32.totalorder %v736, 0
        %vm801 = vcmp.gt.s32.totalorder %v737, 0
        %vm802 = vcmp.gt.s32.totalorder %v738, 0
        %vm803 = vcmp.gt.s32.totalorder %v739, 0
        %vm804 = vcmp.gt.s32.totalorder %v740, 0
        %vm805 = vcmp.gt.s32.totalorder %v741, 0
        %vm806 = vcmp.gt.s32.totalorder %v742, 0
        %vm807 = vcmp.gt.s32.totalorder %v743, 0
        %vm808 = vcmp.gt.s32.totalorder %v744, 0
        %vm809 = vcmp.gt.s32.totalorder %v745, 0
        %vm810 = vcmp.gt.s32.totalorder %v746, 0
        %vm811 = vcmp.gt.s32.totalorder %v747, 0
        %vm812 = vcmp.gt.s32.totalorder %v748, 0
        %vm813 = vcmp.gt.s32.totalorder %v749, 0
        %vm814 = vcmp.gt.s32.totalorder %v750, 0
        %vm815 = vcmp.gt.s32.totalorder %v751, 0
        %vm816 = vcmp.gt.s32.totalorder %v752, 0
        %vm817 = vcmp.gt.s32.totalorder %v753, 0
        %vm818 = vcmp.gt.s32.totalorder %v754, 0
        %vm819 = vcmp.gt.s32.totalorder %v755, 0
        %vm820 = vcmp.gt.s32.totalorder %v756, 0
        %vm821 = vcmp.gt.s32.totalorder %v757, 0
        %vm822 = vcmp.gt.s32.totalorder %v758, 0
        %vm823 = vcmp.gt.s32.totalorder %v759, 0
        %vm824 = vcmp.gt.s32.totalorder %v760, 0
        %vm825 = vcmp.gt.s32.totalorder %v761, 0
        %vm826 = vcmp.gt.s32.totalorder %v762, 0
        %vm827 = vcmp.gt.s32.totalorder %v763, 0
        %vm828 = vcmp.gt.s32.totalorder %v764, 0
        %vm829 = vcmp.gt.s32.totalorder %v765, 0
        %vm830 = vcmp.gt.s32.totalorder %v766, 0
        %vm831 = vcmp.gt.s32.totalorder %v767, 0
        %vm832 = vcmp.gt.s32.totalorder %v768, 0
        %vm833 = vcmp.gt.s32.totalorder %v769, 0
        %vm834 = vcmp.gt.s32.totalorder %v770, 0
        %vm835 = vcmp.gt.s32.totalorder %v771, 0
        %vm836 = vcmp.gt.s32.totalorder %v772, 0
        %vm837 = vcmp.gt.s32.totalorder %v773, 0
        %vm838 = vcmp.gt.s32.totalorder %v774, 0
        %vm839 = vcmp.gt.s32.totalorder %v775, 0
        %vm840 = vcmp.gt.s32.totalorder %v776, 0
        %vm841 = vcmp.gt.s32.totalorder %v777, 0
        %vm842 = vcmp.gt.s32.totalorder %v778, 0
        %vm843 = vcmp.gt.s32.totalorder %v779, 0
        %vm844 = vcmp.gt.s32.totalorder %v780, 0
        %vm845 = vcmp.gt.s32.totalorder %v781, 0
        %vm846 = vcmp.gt.s32.totalorder %v782, 0
        %vm847 = vcmp.gt.s32.totalorder %v783, 0
        %vm848 = vcmp.gt.s32.totalorder %v784, 0
        %vm849 = vcmp.gt.s32.totalorder %v785, 0
        %v850 = vsel %vm786, 1, 0
        %v851 = vsel %vm787, 1, 0
        %v852 = vsel %vm788, 1, 0
        %v853 = vsel %vm789, 1, 0
        %v854 = vsel %vm790, 1, 0
        %v855 = vsel %vm791, 1, 0
        %v856 = vsel %vm792, 1, 0
        %v857 = vsel %vm793, 1, 0
        %v858 = vsel %vm794, 1, 0
        %v859 = vsel %vm795, 1, 0
        %v860 = vsel %vm796, 1, 0
        %v861 = vsel %vm797, 1, 0
        %v862 = vsel %vm798, 1, 0
        %v863 = vsel %vm799, 1, 0
        %v864 = vsel %vm800, 1, 0
        %v865 = vsel %vm801, 1, 0
        %v866 = vsel %vm802, 1, 0
        %v867 = vsel %vm803, 1, 0
        %v868 = vsel %vm804, 1, 0
        %v869 = vsel %vm805, 1, 0
        %v870 = vsel %vm806, 1, 0
        %v871 = vsel %vm807, 1, 0
        %v872 = vsel %vm808, 1, 0
        %v873 = vsel %vm809, 1, 0
        %v874 = vsel %vm810, 1, 0
        %v875 = vsel %vm811, 1, 0
        %v876 = vsel %vm812, 1, 0
        %v877 = vsel %vm813, 1, 0
        %v878 = vsel %vm814, 1, 0
        %v879 = vsel %vm815, 1, 0
        %v880 = vsel %vm816, 1, 0
        %v881 = vsel %vm817, 1, 0
        %v882 = vsel %vm818, 1, 0
        %v883 = vsel %vm819, 1, 0
        %v884 = vsel %vm820, 1, 0
        %v885 = vsel %vm821, 1, 0
        %v886 = vsel %vm822, 1, 0
        %v887 = vsel %vm823, 1, 0
        %v888 = vsel %vm824, 1, 0
        %v889 = vsel %vm825, 1, 0
        %v890 = vsel %vm826, 1, 0
        %v891 = vsel %vm827, 1, 0
        %v892 = vsel %vm828, 1, 0
        %v893 = vsel %vm829, 1, 0
        %v894 = vsel %vm830, 1, 0
        %v895 = vsel %vm831, 1, 0
        %v896 = vsel %vm832, 1, 0
        %v897 = vsel %vm833, 1, 0
        %v898 = vsel %vm834, 1, 0
        %v899 = vsel %vm835, 1, 0
        %v900 = vsel %vm836, 1, 0
        %v901 = vsel %vm837, 1, 0
        %v902 = vsel %vm838, 1, 0
        %v903 = vsel %vm839, 1, 0
        %v904 = vsel %vm840, 1, 0
        %v905 = vsel %vm841, 1, 0
        %v906 = vsel %vm842, 1, 0
        %v907 = vsel %vm843, 1, 0
        %v908 = vsel %vm844, 1, 0
        %v909 = vsel %vm845, 1, 0
        %v910 = vsel %vm846, 1, 0
        %v911 = vsel %vm847, 1, 0
        %v912 = vsel %vm848, 1, 0
        %v913 = vsel %vm849, 1, 0
        %v914 = vcvt.s32.f32 %v850
        %v915 = vcvt.s32.f32 %v851
        %v916 = vcvt.s32.f32 %v852
        %v917 = vcvt.s32.f32 %v853
        %v918 = vcvt.s32.f32 %v854
        %v919 = vcvt.s32.f32 %v855
        %v920 = vcvt.s32.f32 %v856
        %v921 = vcvt.s32.f32 %v857
        %v922 = vcvt.s32.f32 %v858
        %v923 = vcvt.s32.f32 %v859
        %v924 = vcvt.s32.f32 %v860
        %v925 = vcvt.s32.f32 %v861
        %v926 = vcvt.s32.f32 %v862
        %v927 = vcvt.s32.f32 %v863
        %v928 = vcvt.s32.f32 %v864
        %v929 = vcvt.s32.f32 %v865
        %v930 = vcvt.s32.f32 %v866
        %v931 = vcvt.s32.f32 %v867
        %v932 = vcvt.s32.f32 %v868
        %v933 = vcvt.s32.f32 %v869
        %v934 = vcvt.s32.f32 %v870
        %v935 = vcvt.s32.f32 %v871
        %v936 = vcvt.s32.f32 %v872
        %v937 = vcvt.s32.f32 %v873
        %v938 = vcvt.s32.f32 %v874
        %v939 = vcvt.s32.f32 %v875
        %v940 = vcvt.s32.f32 %v876
        %v941 = vcvt.s32.f32 %v877
        %v942 = vcvt.s32.f32 %v878
        %v943 = vcvt.s32.f32 %v879
        %v944 = vcvt.s32.f32 %v880
        %v945 = vcvt.s32.f32 %v881
        %v946 = vcvt.s32.f32 %v882
        %v947 = vcvt.s32.f32 %v883
        %v948 = vcvt.s32.f32 %v884
        %v949 = vcvt.s32.f32 %v885
        %v950 = vcvt.s32.f32 %v886
        %v951 = vcvt.s32.f32 %v887
        %v952 = vcvt.s32.f32 %v888
        %v953 = vcvt.s32.f32 %v889
        %v954 = vcvt.s32.f32 %v890
        %v955 = vcvt.s32.f32 %v891
        %v956 = vcvt.s32.f32 %v892
        %v957 = vcvt.s32.f32 %v893
        %v958 = vcvt.s32.f32 %v894
        %v959 = vcvt.s32.f32 %v895
        %v960 = vcvt.s32.f32 %v896
        %v961 = vcvt.s32.f32 %v897
        %v962 = vcvt.s32.f32 %v898
        %v963 = vcvt.s32.f32 %v899
        %v964 = vcvt.s32.f32 %v900
        %v965 = vcvt.s32.f32 %v901
        %v966 = vcvt.s32.f32 %v902
        %v967 = vcvt.s32.f32 %v903
        %v968 = vcvt.s32.f32 %v904
        %v969 = vcvt.s32.f32 %v905
        %v970 = vcvt.s32.f32 %v906
        %v971 = vcvt.s32.f32 %v907
        %v972 = vcvt.s32.f32 %v908
        %v973 = vcvt.s32.f32 %v909
        %v974 = vcvt.s32.f32 %v910
        %v975 = vcvt.s32.f32 %v911
        %v976 = vcvt.s32.f32 %v912
        %v977 = vcvt.s32.f32 %v913
        %979 = vset.pattern.permute.xlu0 0
        %980 = vperm.xlu0 %979, %v608
        %v981 = vpop.permute.xlu0 %980
        %984 = vset.pattern.permute.xlu0 0
        %985 = vperm.xlu0 %984, %v609
        %v986 = vpop.permute.xlu0 %985
        %989 = vset.pattern.permute.xlu0 0
        %990 = vperm.xlu0 %989, %v610
        %v991 = vpop.permute.xlu0 %990
        %994 = vset.pattern.permute.xlu0 0
        %995 = vperm.xlu0 %994, %v611
        %v996 = vpop.permute.xlu0 %995
        %999 = vset.pattern.permute.xlu0 0
        %1000 = vperm.xlu0 %999, %v612
        %v1001 = vpop.permute.xlu0 %1000
        %1004 = vset.pattern.permute.xlu0 0
        %1005 = vperm.xlu0 %1004, %v613
        %v1006 = vpop.permute.xlu0 %1005
        %1009 = vset.pattern.permute.xlu0 0
        %1010 = vperm.xlu0 %1009, %v614
        %v1011 = vpop.permute.xlu0 %1010
        %1014 = vset.pattern.permute.xlu0 0
        %1015 = vperm.xlu0 %1014, %v615
        %v1016 = vpop.permute.xlu0 %1015
        %1019 = vset.pattern.permute.xlu0 0
        %1020 = vperm.xlu0 %1019, %v616
        %v1021 = vpop.permute.xlu0 %1020
        %1024 = vset.pattern.permute.xlu0 0
        %1025 = vperm.xlu0 %1024, %v617
        %v1026 = vpop.permute.xlu0 %1025
        %1029 = vset.pattern.permute.xlu0 0
        %1030 = vperm.xlu0 %1029, %v618
        %v1031 = vpop.permute.xlu0 %1030
        %1034 = vset.pattern.permute.xlu0 0
        %1035 = vperm.xlu0 %1034, %v619
        %v1036 = vpop.permute.xlu0 %1035
        %1039 = vset.pattern.permute.xlu0 0
        %1040 = vperm.xlu0 %1039, %v620
        %v1041 = vpop.permute.xlu0 %1040
        %1044 = vset.pattern.permute.xlu0 0
        %1045 = vperm.xlu0 %1044, %v621
        %v1046 = vpop.permute.xlu0 %1045
        %1049 = vset.pattern.permute.xlu0 0
        %1050 = vperm.xlu0 %1049, %v622
        %v1051 = vpop.permute.xlu0 %1050
        %1054 = vset.pattern.permute.xlu0 0
        %1055 = vperm.xlu0 %1054, %v623
        %v1056 = vpop.permute.xlu0 %1055
        %1059 = vset.pattern.permute.xlu0 0
        %1060 = vperm.xlu0 %1059, %v624
        %v1061 = vpop.permute.xlu0 %1060
        %1064 = vset.pattern.permute.xlu0 0
        %1065 = vperm.xlu0 %1064, %v625
        %v1066 = vpop.permute.xlu0 %1065
        %1069 = vset.pattern.permute.xlu0 0
        %1070 = vperm.xlu0 %1069, %v626
        %v1071 = vpop.permute.xlu0 %1070
        %1074 = vset.pattern.permute.xlu0 0
        %1075 = vperm.xlu0 %1074, %v627
        %v1076 = vpop.permute.xlu0 %1075
        %1079 = vset.pattern.permute.xlu0 0
        %1080 = vperm.xlu0 %1079, %v628
        %v1081 = vpop.permute.xlu0 %1080
        %1084 = vset.pattern.permute.xlu0 0
        %1085 = vperm.xlu0 %1084, %v629
        %v1086 = vpop.permute.xlu0 %1085
        %1089 = vset.pattern.permute.xlu0 0
        %1090 = vperm.xlu0 %1089, %v630
        %v1091 = vpop.permute.xlu0 %1090
        %1094 = vset.pattern.permute.xlu0 0
        %1095 = vperm.xlu0 %1094, %v631
        %v1096 = vpop.permute.xlu0 %1095
        %1099 = vset.pattern.permute.xlu0 0
        %1100 = vperm.xlu0 %1099, %v632
        %v1101 = vpop.permute.xlu0 %1100
        %1104 = vset.pattern.permute.xlu0 0
        %1105 = vperm.xlu0 %1104, %v633
        %v1106 = vpop.permute.xlu0 %1105
        %1109 = vset.pattern.permute.xlu0 0
        %1110 = vperm.xlu0 %1109, %v634
        %v1111 = vpop.permute.xlu0 %1110
        %1114 = vset.pattern.permute.xlu0 0
        %1115 = vperm.xlu0 %1114, %v635
        %v1116 = vpop.permute.xlu0 %1115
        %1119 = vset.pattern.permute.xlu0 0
        %1120 = vperm.xlu0 %1119, %v636
        %v1121 = vpop.permute.xlu0 %1120
        %1124 = vset.pattern.permute.xlu0 0
        %1125 = vperm.xlu0 %1124, %v637
        %v1126 = vpop.permute.xlu0 %1125
        %1129 = vset.pattern.permute.xlu0 0
        %1130 = vperm.xlu0 %1129, %v638
        %v1131 = vpop.permute.xlu0 %1130
        %1134 = vset.pattern.permute.xlu0 0
        %1135 = vperm.xlu0 %1134, %v639
        %v1136 = vpop.permute.xlu0 %1135
        %v1138 = vlaneseq
        %v1139 = vshrl.u32 %v1138, 7
        %v1140 = vsub.s32 0, %v1139
        %v1141 = vrot.slane %v640, %v1140
        %v1142 = vlaneseq
        %v1143 = vshrl.u32 %v1142, 7
        %v1144 = vsub.s32 0, %v1143
        %v1145 = vrot.slane %v641, %v1144
        %v1146 = vadd.f32 %v981, %v1141
        %v1147 = vadd.f32 %v981, %v1145
        %v1148 = vadd.f32 %v986, %v1141
        %v1149 = vadd.f32 %v986, %v1145
        %v1150 = vadd.f32 %v991, %v1141
        %v1151 = vadd.f32 %v991, %v1145
        %v1152 = vadd.f32 %v996, %v1141
        %v1153 = vadd.f32 %v996, %v1145
        %v1154 = vadd.f32 %v1001, %v1141
        %v1155 = vadd.f32 %v1001, %v1145
        %v1156 = vadd.f32 %v1006, %v1141
        %v1157 = vadd.f32 %v1006, %v1145
        %v1158 = vadd.f32 %v1011, %v1141
        %v1159 = vadd.f32 %v1011, %v1145
        %v1160 = vadd.f32 %v1016, %v1141
        %v1161 = vadd.f32 %v1016, %v1145
        %v1162 = vadd.f32 %v1021, %v1141
        %v1163 = vadd.f32 %v1021, %v1145
        %v1164 = vadd.f32 %v1026, %v1141
        %v1165 = vadd.f32 %v1026, %v1145
        %v1166 = vadd.f32 %v1031, %v1141
        %v1167 = vadd.f32 %v1031, %v1145
        %v1168 = vadd.f32 %v1036, %v1141
        %v1169 = vadd.f32 %v1036, %v1145
        %v1170 = vadd.f32 %v1041, %v1141
        %v1171 = vadd.f32 %v1041, %v1145
        %v1172 = vadd.f32 %v1046, %v1141
        %v1173 = vadd.f32 %v1046, %v1145
        %v1174 = vadd.f32 %v1051, %v1141
        %v1175 = vadd.f32 %v1051, %v1145
        %v1176 = vadd.f32 %v1056, %v1141
        %v1177 = vadd.f32 %v1056, %v1145
        %v1178 = vadd.f32 %v1061, %v1141
        %v1179 = vadd.f32 %v1061, %v1145
        %v1180 = vadd.f32 %v1066, %v1141
        %v1181 = vadd.f32 %v1066, %v1145
        %v1182 = vadd.f32 %v1071, %v1141
        %v1183 = vadd.f32 %v1071, %v1145
        %v1184 = vadd.f32 %v1076, %v1141
        %v1185 = vadd.f32 %v1076, %v1145
        %v1186 = vadd.f32 %v1081, %v1141
        %v1187 = vadd.f32 %v1081, %v1145
        %v1188 = vadd.f32 %v1086, %v1141
        %v1189 = vadd.f32 %v1086, %v1145
        %v1190 = vadd.f32 %v1091, %v1141
        %v1191 = vadd.f32 %v1091, %v1145
        %v1192 = vadd.f32 %v1096, %v1141
        %v1193 = vadd.f32 %v1096, %v1145
        %v1194 = vadd.f32 %v1101, %v1141
        %v1195 = vadd.f32 %v1101, %v1145
        %v1196 = vadd.f32 %v1106, %v1141
        %v1197 = vadd.f32 %v1106, %v1145
        %v1198 = vadd.f32 %v1111, %v1141
        %v1199 = vadd.f32 %v1111, %v1145
        %v1200 = vadd.f32 %v1116, %v1141
        %v1201 = vadd.f32 %v1116, %v1145
        %v1202 = vadd.f32 %v1121, %v1141
        %v1203 = vadd.f32 %v1121, %v1145
        %v1204 = vadd.f32 %v1126, %v1141
        %v1205 = vadd.f32 %v1126, %v1145
        %v1206 = vadd.f32 %v1131, %v1141
        %v1207 = vadd.f32 %v1131, %v1145
        %v1208 = vadd.f32 %v1136, %v1141
        %v1209 = vadd.f32 %v1136, %v1145
        %v1210 = vmul.f32 %v1146, 0.2
        %v1211 = vmul.f32 %v1147, 0.2
        %v1212 = vmul.f32 %v1148, 0.2
        %v1213 = vmul.f32 %v1149, 0.2
        %v1214 = vmul.f32 %v1150, 0.2
        %v1215 = vmul.f32 %v1151, 0.2
        %v1216 = vmul.f32 %v1152, 0.2
        %v1217 = vmul.f32 %v1153, 0.2
        %v1218 = vmul.f32 %v1154, 0.2
        %v1219 = vmul.f32 %v1155, 0.2
        %v1220 = vmul.f32 %v1156, 0.2
        %v1221 = vmul.f32 %v1157, 0.2
        %v1222 = vmul.f32 %v1158, 0.2
        %v1223 = vmul.f32 %v1159, 0.2
        %v1224 = vmul.f32 %v1160, 0.2
        %v1225 = vmul.f32 %v1161, 0.2
        %v1226 = vmul.f32 %v1162, 0.2
        %v1227 = vmul.f32 %v1163, 0.2
        %v1228 = vmul.f32 %v1164, 0.2
        %v1229 = vmul.f32 %v1165, 0.2
        %v1230 = vmul.f32 %v1166, 0.2
        %v1231 = vmul.f32 %v1167, 0.2
        %v1232 = vmul.f32 %v1168, 0.2
        %v1233 = vmul.f32 %v1169, 0.2
        %v1234 = vmul.f32 %v1170, 0.2
        %v1235 = vmul.f32 %v1171, 0.2
        %v1236 = vmul.f32 %v1172, 0.2
        %v1237 = vmul.f32 %v1173, 0.2
        %v1238 = vmul.f32 %v1174, 0.2
        %v1239 = vmul.f32 %v1175, 0.2
        %v1240 = vmul.f32 %v1176, 0.2
        %v1241 = vmul.f32 %v1177, 0.2
        %v1242 = vmul.f32 %v1178, 0.2
        %v1243 = vmul.f32 %v1179, 0.2
        %v1244 = vmul.f32 %v1180, 0.2
        %v1245 = vmul.f32 %v1181, 0.2
        %v1246 = vmul.f32 %v1182, 0.2
        %v1247 = vmul.f32 %v1183, 0.2
        %v1248 = vmul.f32 %v1184, 0.2
        %v1249 = vmul.f32 %v1185, 0.2
        %v1250 = vmul.f32 %v1186, 0.2
        %v1251 = vmul.f32 %v1187, 0.2
        %v1252 = vmul.f32 %v1188, 0.2
        %v1253 = vmul.f32 %v1189, 0.2
        %v1254 = vmul.f32 %v1190, 0.2
        %v1255 = vmul.f32 %v1191, 0.2
        %v1256 = vmul.f32 %v1192, 0.2
        %v1257 = vmul.f32 %v1193, 0.2
        %v1258 = vmul.f32 %v1194, 0.2
        %v1259 = vmul.f32 %v1195, 0.2
        %v1260 = vmul.f32 %v1196, 0.2
        %v1261 = vmul.f32 %v1197, 0.2
        %v1262 = vmul.f32 %v1198, 0.2
        %v1263 = vmul.f32 %v1199, 0.2
        %v1264 = vmul.f32 %v1200, 0.2
        %v1265 = vmul.f32 %v1201, 0.2
        %v1266 = vmul.f32 %v1202, 0.2
        %v1267 = vmul.f32 %v1203, 0.2
        %v1268 = vmul.f32 %v1204, 0.2
        %v1269 = vmul.f32 %v1205, 0.2
        %v1270 = vmul.f32 %v1206, 0.2
        %v1271 = vmul.f32 %v1207, 0.2
        %v1272 = vmul.f32 %v1208, 0.2
        %v1273 = vmul.f32 %v1209, 0.2
        %v1274 = vmax.f32 %v1146, %v1210
        %v1275 = vmax.f32 %v1147, %v1211
        %v1276 = vmax.f32 %v1148, %v1212
        %v1277 = vmax.f32 %v1149, %v1213
        %v1278 = vmax.f32 %v1150, %v1214
        %v1279 = vmax.f32 %v1151, %v1215
        %v1280 = vmax.f32 %v1152, %v1216
        %v1281 = vmax.f32 %v1153, %v1217
        %v1282 = vmax.f32 %v1154, %v1218
        %v1283 = vmax.f32 %v1155, %v1219
        %v1284 = vmax.f32 %v1156, %v1220
        %v1285 = vmax.f32 %v1157, %v1221
        %v1286 = vmax.f32 %v1158, %v1222
        %v1287 = vmax.f32 %v1159, %v1223
        %v1288 = vmax.f32 %v1160, %v1224
        %v1289 = vmax.f32 %v1161, %v1225
        %v1290 = vmax.f32 %v1162, %v1226
        %v1291 = vmax.f32 %v1163, %v1227
        %v1292 = vmax.f32 %v1164, %v1228
        %v1293 = vmax.f32 %v1165, %v1229
        %v1294 = vmax.f32 %v1166, %v1230
        %v1295 = vmax.f32 %v1167, %v1231
        %v1296 = vmax.f32 %v1168, %v1232
        %v1297 = vmax.f32 %v1169, %v1233
        %v1298 = vmax.f32 %v1170, %v1234
        %v1299 = vmax.f32 %v1171, %v1235
        %v1300 = vmax.f32 %v1172, %v1236
        %v1301 = vmax.f32 %v1173, %v1237
        %v1302 = vmax.f32 %v1174, %v1238
        %v1303 = vmax.f32 %v1175, %v1239
        %v1304 = vmax.f32 %v1176, %v1240
        %v1305 = vmax.f32 %v1177, %v1241
        %v1306 = vmax.f32 %v1178, %v1242
        %v1307 = vmax.f32 %v1179, %v1243
        %v1308 = vmax.f32 %v1180, %v1244
        %v1309 = vmax.f32 %v1181, %v1245
        %v1310 = vmax.f32 %v1182, %v1246
        %v1311 = vmax.f32 %v1183, %v1247
        %v1312 = vmax.f32 %v1184, %v1248
        %v1313 = vmax.f32 %v1185, %v1249
        %v1314 = vmax.f32 %v1186, %v1250
        %v1315 = vmax.f32 %v1187, %v1251
        %v1316 = vmax.f32 %v1188, %v1252
        %v1317 = vmax.f32 %v1189, %v1253
        %v1318 = vmax.f32 %v1190, %v1254
        %v1319 = vmax.f32 %v1191, %v1255
        %v1320 = vmax.f32 %v1192, %v1256
        %v1321 = vmax.f32 %v1193, %v1257
        %v1322 = vmax.f32 %v1194, %v1258
        %v1323 = vmax.f32 %v1195, %v1259
        %v1324 = vmax.f32 %v1196, %v1260
        %v1325 = vmax.f32 %v1197, %v1261
        %v1326 = vmax.f32 %v1198, %v1262
        %v1327 = vmax.f32 %v1199, %v1263
        %v1328 = vmax.f32 %v1200, %v1264
        %v1329 = vmax.f32 %v1201, %v1265
        %v1330 = vmax.f32 %v1202, %v1266
        %v1331 = vmax.f32 %v1203, %v1267
        %v1332 = vmax.f32 %v1204, %v1268
        %v1333 = vmax.f32 %v1205, %v1269
        %v1334 = vmax.f32 %v1206, %v1270
        %v1335 = vmax.f32 %v1207, %v1271
        %v1336 = vmax.f32 %v1208, %v1272
        %v1337 = vmax.f32 %v1209, %v1273
        %v1338 = vsel %vm786, %v1274, -1e+09
        %v1339 = vsel %vm787, %v1275, -1e+09
        %v1340 = vsel %vm788, %v1276, -1e+09
        %v1341 = vsel %vm789, %v1277, -1e+09
        %v1342 = vsel %vm790, %v1278, -1e+09
        %v1343 = vsel %vm791, %v1279, -1e+09
        %v1344 = vsel %vm792, %v1280, -1e+09
        %v1345 = vsel %vm793, %v1281, -1e+09
        %v1346 = vsel %vm794, %v1282, -1e+09
        %v1347 = vsel %vm795, %v1283, -1e+09
        %v1348 = vsel %vm796, %v1284, -1e+09
        %v1349 = vsel %vm797, %v1285, -1e+09
        %v1350 = vsel %vm798, %v1286, -1e+09
        %v1351 = vsel %vm799, %v1287, -1e+09
        %v1352 = vsel %vm800, %v1288, -1e+09
        %v1353 = vsel %vm801, %v1289, -1e+09
        %v1354 = vsel %vm802, %v1290, -1e+09
        %v1355 = vsel %vm803, %v1291, -1e+09
        %v1356 = vsel %vm804, %v1292, -1e+09
        %v1357 = vsel %vm805, %v1293, -1e+09
        %v1358 = vsel %vm806, %v1294, -1e+09
        %v1359 = vsel %vm807, %v1295, -1e+09
        %v1360 = vsel %vm808, %v1296, -1e+09
        %v1361 = vsel %vm809, %v1297, -1e+09
        %v1362 = vsel %vm810, %v1298, -1e+09
        %v1363 = vsel %vm811, %v1299, -1e+09
        %v1364 = vsel %vm812, %v1300, -1e+09
        %v1365 = vsel %vm813, %v1301, -1e+09
        %v1366 = vsel %vm814, %v1302, -1e+09
        %v1367 = vsel %vm815, %v1303, -1e+09
        %v1368 = vsel %vm816, %v1304, -1e+09
        %v1369 = vsel %vm817, %v1305, -1e+09
        %v1370 = vsel %vm818, %v1306, -1e+09
        %v1371 = vsel %vm819, %v1307, -1e+09
        %v1372 = vsel %vm820, %v1308, -1e+09
        %v1373 = vsel %vm821, %v1309, -1e+09
        %v1374 = vsel %vm822, %v1310, -1e+09
        %v1375 = vsel %vm823, %v1311, -1e+09
        %v1376 = vsel %vm824, %v1312, -1e+09
        %v1377 = vsel %vm825, %v1313, -1e+09
        %v1378 = vsel %vm826, %v1314, -1e+09
        %v1379 = vsel %vm827, %v1315, -1e+09
        %v1380 = vsel %vm828, %v1316, -1e+09
        %v1381 = vsel %vm829, %v1317, -1e+09
        %v1382 = vsel %vm830, %v1318, -1e+09
        %v1383 = vsel %vm831, %v1319, -1e+09
        %v1384 = vsel %vm832, %v1320, -1e+09
        %v1385 = vsel %vm833, %v1321, -1e+09
        %v1386 = vsel %vm834, %v1322, -1e+09
        %v1387 = vsel %vm835, %v1323, -1e+09
        %v1388 = vsel %vm836, %v1324, -1e+09
        %v1389 = vsel %vm837, %v1325, -1e+09
        %v1390 = vsel %vm838, %v1326, -1e+09
        %v1391 = vsel %vm839, %v1327, -1e+09
        %v1392 = vsel %vm840, %v1328, -1e+09
        %v1393 = vsel %vm841, %v1329, -1e+09
        %v1394 = vsel %vm842, %v1330, -1e+09
        %v1395 = vsel %vm843, %v1331, -1e+09
        %v1396 = vsel %vm844, %v1332, -1e+09
        %v1397 = vsel %vm845, %v1333, -1e+09
        %v1398 = vsel %vm846, %v1334, -1e+09
        %v1399 = vsel %vm847, %v1335, -1e+09
        %v1400 = vsel %vm848, %v1336, -1e+09
        %v1401 = vsel %vm849, %v1337, -1e+09
        %v1402 = vld [vmem:[#allocation2] sm:$0xff]
        %v1403 = vld [vmem:[#allocation2 + $0x8] sm:$0xff]
        %v1404 = vld [vmem:[#allocation2 + $0x10] sm:$0xff]
        %v1405 = vld [vmem:[#allocation2 + $0x18] sm:$0xff]
        %v1406 = vld [vmem:[#allocation2 + $0x20] sm:$0xff]
        %v1407 = vld [vmem:[#allocation2 + $0x28] sm:$0xff]
        %v1408 = vld [vmem:[#allocation2 + $0x30] sm:$0xff]
        %v1409 = vld [vmem:[#allocation2 + $0x38] sm:$0xff]
        %v1410 = vld [vmem:[#allocation2 + $0x40] sm:$0xff]
        %v1411 = vld [vmem:[#allocation2 + $0x48] sm:$0xff]
        %v1412 = vld [vmem:[#allocation2 + $0x50] sm:$0xff]
        %v1413 = vld [vmem:[#allocation2 + $0x58] sm:$0xff]
        %v1414 = vld [vmem:[#allocation2 + $0x60] sm:$0xff]
        %v1415 = vld [vmem:[#allocation2 + $0x68] sm:$0xff]
        %v1416 = vld [vmem:[#allocation2 + $0x70] sm:$0xff]
        %v1417 = vld [vmem:[#allocation2 + $0x78] sm:$0xff]
        %v1418 = vld [vmem:[#allocation2 + $0x80] sm:$0xff]
        %v1419 = vld [vmem:[#allocation2 + $0x88] sm:$0xff]
        %v1420 = vld [vmem:[#allocation2 + $0x90] sm:$0xff]
        %v1421 = vld [vmem:[#allocation2 + $0x98] sm:$0xff]
        %v1422 = vld [vmem:[#allocation2 + $0xa0] sm:$0xff]
        %v1423 = vld [vmem:[#allocation2 + $0xa8] sm:$0xff]
        %v1424 = vld [vmem:[#allocation2 + $0xb0] sm:$0xff]
        %v1425 = vld [vmem:[#allocation2 + $0xb8] sm:$0xff]
        %v1426 = vld [vmem:[#allocation2 + $0xc0] sm:$0xff]
        %v1427 = vld [vmem:[#allocation2 + $0xc8] sm:$0xff]
        %v1428 = vld [vmem:[#allocation2 + $0xd0] sm:$0xff]
        %v1429 = vld [vmem:[#allocation2 + $0xd8] sm:$0xff]
        %v1430 = vld [vmem:[#allocation2 + $0xe0] sm:$0xff]
        %v1431 = vld [vmem:[#allocation2 + $0xe8] sm:$0xff]
        %v1432 = vld [vmem:[#allocation2 + $0xf0] sm:$0xff]
        %v1433 = vld [vmem:[#allocation2 + $0xf8] sm:$0xff]
        %v1434 = vmax.f32 %v1338, %v1339
        %1435 = vmax.xlane.f32.xlu0 %v1434
        %v1436 = vpop.xlane.xlu0 %1435
        %v1437 = vmax.f32 %v1340, %v1341
        %1438 = vmax.xlane.f32.xlu0 %v1437
        %v1439 = vpop.xlane.xlu0 %1438
        %v1440 = vmax.f32 %v1342, %v1343
        %1441 = vmax.xlane.f32.xlu0 %v1440
        %v1442 = vpop.xlane.xlu0 %1441
        %v1443 = vmax.f32 %v1344, %v1345
        %1444 = vmax.xlane.f32.xlu0 %v1443
        %v1445 = vpop.xlane.xlu0 %1444
        %v1446 = vmax.f32 %v1346, %v1347
        %1447 = vmax.xlane.f32.xlu0 %v1446
        %v1448 = vpop.xlane.xlu0 %1447
        %v1449 = vmax.f32 %v1348, %v1349
        %1450 = vmax.xlane.f32.xlu0 %v1449
        %v1451 = vpop.xlane.xlu0 %1450
        %v1452 = vmax.f32 %v1350, %v1351
        %1453 = vmax.xlane.f32.xlu0 %v1452
        %v1454 = vpop.xlane.xlu0 %1453
        %v1455 = vmax.f32 %v1352, %v1353
        %1456 = vmax.xlane.f32.xlu0 %v1455
        %v1457 = vpop.xlane.xlu0 %1456
        %v1458 = vmax.f32 %v1354, %v1355
        %1459 = vmax.xlane.f32.xlu0 %v1458
        %v1460 = vpop.xlane.xlu0 %1459
        %v1461 = vmax.f32 %v1356, %v1357
        %1462 = vmax.xlane.f32.xlu0 %v1461
        %v1463 = vpop.xlane.xlu0 %1462
        %v1464 = vmax.f32 %v1358, %v1359
        %1465 = vmax.xlane.f32.xlu0 %v1464
        %v1466 = vpop.xlane.xlu0 %1465
        %v1467 = vmax.f32 %v1360, %v1361
        %1468 = vmax.xlane.f32.xlu0 %v1467
        %v1469 = vpop.xlane.xlu0 %1468
        %v1470 = vmax.f32 %v1362, %v1363
        %1471 = vmax.xlane.f32.xlu0 %v1470
        %v1472 = vpop.xlane.xlu0 %1471
        %v1473 = vmax.f32 %v1364, %v1365
        %1474 = vmax.xlane.f32.xlu0 %v1473
        %v1475 = vpop.xlane.xlu0 %1474
        %v1476 = vmax.f32 %v1366, %v1367
        %1477 = vmax.xlane.f32.xlu0 %v1476
        %v1478 = vpop.xlane.xlu0 %1477
        %v1479 = vmax.f32 %v1368, %v1369
        %1480 = vmax.xlane.f32.xlu0 %v1479
        %v1481 = vpop.xlane.xlu0 %1480
        %v1482 = vmax.f32 %v1370, %v1371
        %1483 = vmax.xlane.f32.xlu0 %v1482
        %v1484 = vpop.xlane.xlu0 %1483
        %v1485 = vmax.f32 %v1372, %v1373
        %1486 = vmax.xlane.f32.xlu0 %v1485
        %v1487 = vpop.xlane.xlu0 %1486
        %v1488 = vmax.f32 %v1374, %v1375
        %1489 = vmax.xlane.f32.xlu0 %v1488
        %v1490 = vpop.xlane.xlu0 %1489
        %v1491 = vmax.f32 %v1376, %v1377
        %1492 = vmax.xlane.f32.xlu0 %v1491
        %v1493 = vpop.xlane.xlu0 %1492
        %v1494 = vmax.f32 %v1378, %v1379
        %1495 = vmax.xlane.f32.xlu0 %v1494
        %v1496 = vpop.xlane.xlu0 %1495
        %v1497 = vmax.f32 %v1380, %v1381
        %1498 = vmax.xlane.f32.xlu0 %v1497
        %v1499 = vpop.xlane.xlu0 %1498
        %v1500 = vmax.f32 %v1382, %v1383
        %1501 = vmax.xlane.f32.xlu0 %v1500
        %v1502 = vpop.xlane.xlu0 %1501
        %v1503 = vmax.f32 %v1384, %v1385
        %1504 = vmax.xlane.f32.xlu0 %v1503
        %v1505 = vpop.xlane.xlu0 %1504
        %v1506 = vmax.f32 %v1386, %v1387
        %1507 = vmax.xlane.f32.xlu0 %v1506
        %v1508 = vpop.xlane.xlu0 %1507
        %v1509 = vmax.f32 %v1388, %v1389
        %1510 = vmax.xlane.f32.xlu0 %v1509
        %v1511 = vpop.xlane.xlu0 %1510
        %v1512 = vmax.f32 %v1390, %v1391
        %1513 = vmax.xlane.f32.xlu0 %v1512
        %v1514 = vpop.xlane.xlu0 %1513
        %v1515 = vmax.f32 %v1392, %v1393
        %1516 = vmax.xlane.f32.xlu0 %v1515
        %v1517 = vpop.xlane.xlu0 %1516
        %v1518 = vmax.f32 %v1394, %v1395
        %1519 = vmax.xlane.f32.xlu0 %v1518
        %v1520 = vpop.xlane.xlu0 %1519
        %v1521 = vmax.f32 %v1396, %v1397
        %1522 = vmax.xlane.f32.xlu0 %v1521
        %v1523 = vpop.xlane.xlu0 %1522
        %v1524 = vmax.f32 %v1398, %v1399
        %1525 = vmax.xlane.f32.xlu0 %v1524
        %v1526 = vpop.xlane.xlu0 %1525
        %v1527 = vmax.f32 %v1400, %v1401
        %1528 = vmax.xlane.f32.xlu0 %v1527
        %v1529 = vpop.xlane.xlu0 %1528
        %v1530 = vmax.f32 %v1402, %v1436
        %v1531 = vmax.f32 %v1403, %v1439
        %v1532 = vmax.f32 %v1404, %v1442
        %v1533 = vmax.f32 %v1405, %v1445
        %v1534 = vmax.f32 %v1406, %v1448
        %v1535 = vmax.f32 %v1407, %v1451
        %v1536 = vmax.f32 %v1408, %v1454
        %v1537 = vmax.f32 %v1409, %v1457
        %v1538 = vmax.f32 %v1410, %v1460
        %v1539 = vmax.f32 %v1411, %v1463
        %v1540 = vmax.f32 %v1412, %v1466
        %v1541 = vmax.f32 %v1413, %v1469
        %v1542 = vmax.f32 %v1414, %v1472
        %v1543 = vmax.f32 %v1415, %v1475
        %v1544 = vmax.f32 %v1416, %v1478
        %v1545 = vmax.f32 %v1417, %v1481
        %v1546 = vmax.f32 %v1418, %v1484
        %v1547 = vmax.f32 %v1419, %v1487
        %v1548 = vmax.f32 %v1420, %v1490
        %v1549 = vmax.f32 %v1421, %v1493
        %v1550 = vmax.f32 %v1422, %v1496
        %v1551 = vmax.f32 %v1423, %v1499
        %v1552 = vmax.f32 %v1424, %v1502
        %v1553 = vmax.f32 %v1425, %v1505
        %v1554 = vmax.f32 %v1426, %v1508
        %v1555 = vmax.f32 %v1427, %v1511
        %v1556 = vmax.f32 %v1428, %v1514
        %v1557 = vmax.f32 %v1429, %v1517
        %v1558 = vmax.f32 %v1430, %v1520
        %v1559 = vmax.f32 %v1431, %v1523
        %v1560 = vmax.f32 %v1432, %v1526
        %v1561 = vmax.f32 %v1433, %v1529
        %v1562 = vsub.f32 %v1402, %v1530
        %v1563 = vsub.f32 %v1403, %v1531
        %v1564 = vsub.f32 %v1404, %v1532
        %v1565 = vsub.f32 %v1405, %v1533
        %v1566 = vsub.f32 %v1406, %v1534
        %v1567 = vsub.f32 %v1407, %v1535
        %v1568 = vsub.f32 %v1408, %v1536
        %v1569 = vsub.f32 %v1409, %v1537
        %v1570 = vsub.f32 %v1410, %v1538
        %v1571 = vsub.f32 %v1411, %v1539
        %v1572 = vsub.f32 %v1412, %v1540
        %v1573 = vsub.f32 %v1413, %v1541
        %v1574 = vsub.f32 %v1414, %v1542
        %v1575 = vsub.f32 %v1415, %v1543
        %v1576 = vsub.f32 %v1416, %v1544
        %v1577 = vsub.f32 %v1417, %v1545
        %v1578 = vsub.f32 %v1418, %v1546
        %v1579 = vsub.f32 %v1419, %v1547
        %v1580 = vsub.f32 %v1420, %v1548
        %v1581 = vsub.f32 %v1421, %v1549
        %v1582 = vsub.f32 %v1422, %v1550
        %v1583 = vsub.f32 %v1423, %v1551
        %v1584 = vsub.f32 %v1424, %v1552
        %v1585 = vsub.f32 %v1425, %v1553
        %v1586 = vsub.f32 %v1426, %v1554
        %v1587 = vsub.f32 %v1427, %v1555
        %v1588 = vsub.f32 %v1428, %v1556
        %v1589 = vsub.f32 %v1429, %v1557
        %v1590 = vsub.f32 %v1430, %v1558
        %v1591 = vsub.f32 %v1431, %v1559
        %v1592 = vsub.f32 %v1432, %v1560
        %v1593 = vsub.f32 %v1433, %v1561
        %v1594 = vmul.f32 %v1562, 1.442695
        %v1595 = vpow.pop %v1594
        %v1596 = vmul.f32 %v1563, 1.442695
        %v1597 = vpow.pop %v1596
        %v1598 = vmul.f32 %v1564, 1.442695
        %v1599 = vpow.pop %v1598
        %v1600 = vmul.f32 %v1565, 1.442695
        %v1601 = vpow.pop %v1600
        %v1602 = vmul.f32 %v1566, 1.442695
        %v1603 = vpow.pop %v1602
        %v1604 = vmul.f32 %v1567, 1.442695
        %v1605 = vpow.pop %v1604
        %v1606 = vmul.f32 %v1568, 1.442695
        %v1607 = vpow.pop %v1606
        %v1608 = vmul.f32 %v1569, 1.442695
        %v1609 = vpow.pop %v1608
        %v1610 = vmul.f32 %v1570, 1.442695
        %v1611 = vpow.pop %v1610
        %v1612 = vmul.f32 %v1571, 1.442695
        %v1613 = vpow.pop %v1612
        %v1614 = vmul.f32 %v1572, 1.442695
        %v1615 = vpow.pop %v1614
        %v1616 = vmul.f32 %v1573, 1.442695
        %v1617 = vpow.pop %v1616
        %v1618 = vmul.f32 %v1574, 1.442695
        %v1619 = vpow.pop %v1618
        %v1620 = vmul.f32 %v1575, 1.442695
        %v1621 = vpow.pop %v1620
        %v1622 = vmul.f32 %v1576, 1.442695
        %v1623 = vpow.pop %v1622
        %v1624 = vmul.f32 %v1577, 1.442695
        %v1625 = vpow.pop %v1624
        %v1626 = vmul.f32 %v1578, 1.442695
        %v1627 = vpow.pop %v1626
        %v1628 = vmul.f32 %v1579, 1.442695
        %v1629 = vpow.pop %v1628
        %v1630 = vmul.f32 %v1580, 1.442695
        %v1631 = vpow.pop %v1630
        %v1632 = vmul.f32 %v1581, 1.442695
        %v1633 = vpow.pop %v1632
        %v1634 = vmul.f32 %v1582, 1.442695
        %v1635 = vpow.pop %v1634
        %v1636 = vmul.f32 %v1583, 1.442695
        %v1637 = vpow.pop %v1636
        %v1638 = vmul.f32 %v1584, 1.442695
        %v1639 = vpow.pop %v1638
        %v1640 = vmul.f32 %v1585, 1.442695
        %v1641 = vpow.pop %v1640
        %v1642 = vmul.f32 %v1586, 1.442695
        %v1643 = vpow.pop %v1642
        %v1644 = vmul.f32 %v1587, 1.442695
        %v1645 = vpow.pop %v1644
        %v1646 = vmul.f32 %v1588, 1.442695
        %v1647 = vpow.pop %v1646
        %v1648 = vmul.f32 %v1589, 1.442695
        %v1649 = vpow.pop %v1648
        %v1650 = vmul.f32 %v1590, 1.442695
        %v1651 = vpow.pop %v1650
        %v1652 = vmul.f32 %v1591, 1.442695
        %v1653 = vpow.pop %v1652
        %v1654 = vmul.f32 %v1592, 1.442695
        %v1655 = vpow.pop %v1654
        %v1656 = vmul.f32 %v1593, 1.442695
        %v1657 = vpow.pop %v1656
        %1659 = vset.pattern.permute.xlu0 0
        %1660 = vperm.xlu0 %1659, %v1530
        %v1661 = vpop.permute.xlu0 %1660
        %1664 = vset.pattern.permute.xlu0 0
        %1665 = vperm.xlu0 %1664, %v1531
        %v1666 = vpop.permute.xlu0 %1665
        %1669 = vset.pattern.permute.xlu0 0
        %1670 = vperm.xlu0 %1669, %v1532
        %v1671 = vpop.permute.xlu0 %1670
        %1674 = vset.pattern.permute.xlu0 0
        %1675 = vperm.xlu0 %1674, %v1533
        %v1676 = vpop.permute.xlu0 %1675
        %1679 = vset.pattern.permute.xlu0 0
        %1680 = vperm.xlu0 %1679, %v1534
        %v1681 = vpop.permute.xlu0 %1680
        %1684 = vset.pattern.permute.xlu0 0
        %1685 = vperm.xlu0 %1684, %v1535
        %v1686 = vpop.permute.xlu0 %1685
        %1689 = vset.pattern.permute.xlu0 0
        %1690 = vperm.xlu0 %1689, %v1536
        %v1691 = vpop.permute.xlu0 %1690
        %1694 = vset.pattern.permute.xlu0 0
        %1695 = vperm.xlu0 %1694, %v1537
        %v1696 = vpop.permute.xlu0 %1695
        %1699 = vset.pattern.permute.xlu0 0
        %1700 = vperm.xlu0 %1699, %v1538
        %v1701 = vpop.permute.xlu0 %1700
        %1704 = vset.pattern.permute.xlu0 0
        %1705 = vperm.xlu0 %1704, %v1539
        %v1706 = vpop.permute.xlu0 %1705
        %1709 = vset.pattern.permute.xlu0 0
        %1710 = vperm.xlu0 %1709, %v1540
        %v1711 = vpop.permute.xlu0 %1710
        %1714 = vset.pattern.permute.xlu0 0
        %1715 = vperm.xlu0 %1714, %v1541
        %v1716 = vpop.permute.xlu0 %1715
        %1719 = vset.pattern.permute.xlu0 0
        %1720 = vperm.xlu0 %1719, %v1542
        %v1721 = vpop.permute.xlu0 %1720
        %1724 = vset.pattern.permute.xlu0 0
        %1725 = vperm.xlu0 %1724, %v1543
        %v1726 = vpop.permute.xlu0 %1725
        %1729 = vset.pattern.permute.xlu0 0
        %1730 = vperm.xlu0 %1729, %v1544
        %v1731 = vpop.permute.xlu0 %1730
        %1734 = vset.pattern.permute.xlu0 0
        %1735 = vperm.xlu0 %1734, %v1545
        %v1736 = vpop.permute.xlu0 %1735
        %1739 = vset.pattern.permute.xlu0 0
        %1740 = vperm.xlu0 %1739, %v1546
        %v1741 = vpop.permute.xlu0 %1740
        %1744 = vset.pattern.permute.xlu0 0
        %1745 = vperm.xlu0 %1744, %v1547
        %v1746 = vpop.permute.xlu0 %1745
        %1749 = vset.pattern.permute.xlu0 0
        %1750 = vperm.xlu0 %1749, %v1548
        %v1751 = vpop.permute.xlu0 %1750
        %1754 = vset.pattern.permute.xlu0 0
        %1755 = vperm.xlu0 %1754, %v1549
        %v1756 = vpop.permute.xlu0 %1755
        %1759 = vset.pattern.permute.xlu0 0
        %1760 = vperm.xlu0 %1759, %v1550
        %v1761 = vpop.permute.xlu0 %1760
        %1764 = vset.pattern.permute.xlu0 0
        %1765 = vperm.xlu0 %1764, %v1551
        %v1766 = vpop.permute.xlu0 %1765
        %1769 = vset.pattern.permute.xlu0 0
        %1770 = vperm.xlu0 %1769, %v1552
        %v1771 = vpop.permute.xlu0 %1770
        %1774 = vset.pattern.permute.xlu0 0
        %1775 = vperm.xlu0 %1774, %v1553
        %v1776 = vpop.permute.xlu0 %1775
        %1779 = vset.pattern.permute.xlu0 0
        %1780 = vperm.xlu0 %1779, %v1554
        %v1781 = vpop.permute.xlu0 %1780
        %1784 = vset.pattern.permute.xlu0 0
        %1785 = vperm.xlu0 %1784, %v1555
        %v1786 = vpop.permute.xlu0 %1785
        %1789 = vset.pattern.permute.xlu0 0
        %1790 = vperm.xlu0 %1789, %v1556
        %v1791 = vpop.permute.xlu0 %1790
        %1794 = vset.pattern.permute.xlu0 0
        %1795 = vperm.xlu0 %1794, %v1557
        %v1796 = vpop.permute.xlu0 %1795
        %1799 = vset.pattern.permute.xlu0 0
        %1800 = vperm.xlu0 %1799, %v1558
        %v1801 = vpop.permute.xlu0 %1800
        %1804 = vset.pattern.permute.xlu0 0
        %1805 = vperm.xlu0 %1804, %v1559
        %v1806 = vpop.permute.xlu0 %1805
        %1809 = vset.pattern.permute.xlu0 0
        %1810 = vperm.xlu0 %1809, %v1560
        %v1811 = vpop.permute.xlu0 %1810
        %1814 = vset.pattern.permute.xlu0 0
        %1815 = vperm.xlu0 %1814, %v1561
        %v1816 = vpop.permute.xlu0 %1815
        %v1818 = vsub.f32 %v1338, %v1661
        %v1819 = vsub.f32 %v1339, %v1661
        %v1820 = vsub.f32 %v1340, %v1666
        %v1821 = vsub.f32 %v1341, %v1666
        %v1822 = vsub.f32 %v1342, %v1671
        %v1823 = vsub.f32 %v1343, %v1671
        %v1824 = vsub.f32 %v1344, %v1676
        %v1825 = vsub.f32 %v1345, %v1676
        %v1826 = vsub.f32 %v1346, %v1681
        %v1827 = vsub.f32 %v1347, %v1681
        %v1828 = vsub.f32 %v1348, %v1686
        %v1829 = vsub.f32 %v1349, %v1686
        %v1830 = vsub.f32 %v1350, %v1691
        %v1831 = vsub.f32 %v1351, %v1691
        %v1832 = vsub.f32 %v1352, %v1696
        %v1833 = vsub.f32 %v1353, %v1696
        %v1834 = vsub.f32 %v1354, %v1701
        %v1835 = vsub.f32 %v1355, %v1701
        %v1836 = vsub.f32 %v1356, %v1706
        %v1837 = vsub.f32 %v1357, %v1706
        %v1838 = vsub.f32 %v1358, %v1711
        %v1839 = vsub.f32 %v1359, %v1711
        %v1840 = vsub.f32 %v1360, %v1716
        %v1841 = vsub.f32 %v1361, %v1716
        %v1842 = vsub.f32 %v1362, %v1721
        %v1843 = vsub.f32 %v1363, %v1721
        %v1844 = vsub.f32 %v1364, %v1726
        %v1845 = vsub.f32 %v1365, %v1726
        %v1846 = vsub.f32 %v1366, %v1731
        %v1847 = vsub.f32 %v1367, %v1731
        %v1848 = vsub.f32 %v1368, %v1736
        %v1849 = vsub.f32 %v1369, %v1736
        %v1850 = vsub.f32 %v1370, %v1741
        %v1851 = vsub.f32 %v1371, %v1741
        %v1852 = vsub.f32 %v1372, %v1746
        %v1853 = vsub.f32 %v1373, %v1746
        %v1854 = vsub.f32 %v1374, %v1751
        %v1855 = vsub.f32 %v1375, %v1751
        %v1856 = vsub.f32 %v1376, %v1756
        %v1857 = vsub.f32 %v1377, %v1756
        %v1858 = vsub.f32 %v1378, %v1761
        %v1859 = vsub.f32 %v1379, %v1761
        %v1860 = vsub.f32 %v1380, %v1766
        %v1861 = vsub.f32 %v1381, %v1766
        %v1862 = vsub.f32 %v1382, %v1771
        %v1863 = vsub.f32 %v1383, %v1771
        %v1864 = vsub.f32 %v1384, %v1776
        %v1865 = vsub.f32 %v1385, %v1776
        %v1866 = vsub.f32 %v1386, %v1781
        %v1867 = vsub.f32 %v1387, %v1781
        %v1868 = vsub.f32 %v1388, %v1786
        %v1869 = vsub.f32 %v1389, %v1786
        %v1870 = vsub.f32 %v1390, %v1791
        %v1871 = vsub.f32 %v1391, %v1791
        %v1872 = vsub.f32 %v1392, %v1796
        %v1873 = vsub.f32 %v1393, %v1796
        %v1874 = vsub.f32 %v1394, %v1801
        %v1875 = vsub.f32 %v1395, %v1801
        %v1876 = vsub.f32 %v1396, %v1806
        %v1877 = vsub.f32 %v1397, %v1806
        %v1878 = vsub.f32 %v1398, %v1811
        %v1879 = vsub.f32 %v1399, %v1811
        %v1880 = vsub.f32 %v1400, %v1816
        %v1881 = vsub.f32 %v1401, %v1816
        %v1882 = vmul.f32 %v1818, 1.442695
        %v1883 = vpow.pop %v1882
        %v1884 = vmul.f32 %v1819, 1.442695
        %v1885 = vpow.pop %v1884
        %v1886 = vmul.f32 %v1820, 1.442695
        %v1887 = vpow.pop %v1886
        %v1888 = vmul.f32 %v1821, 1.442695
        %v1889 = vpow.pop %v1888
        %v1890 = vmul.f32 %v1822, 1.442695
        %v1891 = vpow.pop %v1890
        %v1892 = vmul.f32 %v1823, 1.442695
        %v1893 = vpow.pop %v1892
        %v1894 = vmul.f32 %v1824, 1.442695
        %v1895 = vpow.pop %v1894
        %v1896 = vmul.f32 %v1825, 1.442695
        %v1897 = vpow.pop %v1896
        %v1898 = vmul.f32 %v1826, 1.442695
        %v1899 = vpow.pop %v1898
        %v1900 = vmul.f32 %v1827, 1.442695
        %v1901 = vpow.pop %v1900
        %v1902 = vmul.f32 %v1828, 1.442695
        %v1903 = vpow.pop %v1902
        %v1904 = vmul.f32 %v1829, 1.442695
        %v1905 = vpow.pop %v1904
        %v1906 = vmul.f32 %v1830, 1.442695
        %v1907 = vpow.pop %v1906
        %v1908 = vmul.f32 %v1831, 1.442695
        %v1909 = vpow.pop %v1908
        %v1910 = vmul.f32 %v1832, 1.442695
        %v1911 = vpow.pop %v1910
        %v1912 = vmul.f32 %v1833, 1.442695
        %v1913 = vpow.pop %v1912
        %v1914 = vmul.f32 %v1834, 1.442695
        %v1915 = vpow.pop %v1914
        %v1916 = vmul.f32 %v1835, 1.442695
        %v1917 = vpow.pop %v1916
        %v1918 = vmul.f32 %v1836, 1.442695
        %v1919 = vpow.pop %v1918
        %v1920 = vmul.f32 %v1837, 1.442695
        %v1921 = vpow.pop %v1920
        %v1922 = vmul.f32 %v1838, 1.442695
        %v1923 = vpow.pop %v1922
        %v1924 = vmul.f32 %v1839, 1.442695
        %v1925 = vpow.pop %v1924
        %v1926 = vmul.f32 %v1840, 1.442695
        %v1927 = vpow.pop %v1926
        %v1928 = vmul.f32 %v1841, 1.442695
        %v1929 = vpow.pop %v1928
        %v1930 = vmul.f32 %v1842, 1.442695
        %v1931 = vpow.pop %v1930
        %v1932 = vmul.f32 %v1843, 1.442695
        %v1933 = vpow.pop %v1932
        %v1934 = vmul.f32 %v1844, 1.442695
        %v1935 = vpow.pop %v1934
        %v1936 = vmul.f32 %v1845, 1.442695
        %v1937 = vpow.pop %v1936
        %v1938 = vmul.f32 %v1846, 1.442695
        %v1939 = vpow.pop %v1938
        %v1940 = vmul.f32 %v1847, 1.442695
        %v1941 = vpow.pop %v1940
        %v1942 = vmul.f32 %v1848, 1.442695
        %v1943 = vpow.pop %v1942
        %v1944 = vmul.f32 %v1849, 1.442695
        %v1945 = vpow.pop %v1944
        %v1946 = vmul.f32 %v1850, 1.442695
        %v1947 = vpow.pop %v1946
        %v1948 = vmul.f32 %v1851, 1.442695
        %v1949 = vpow.pop %v1948
        %v1950 = vmul.f32 %v1852, 1.442695
        %v1951 = vpow.pop %v1950
        %v1952 = vmul.f32 %v1853, 1.442695
        %v1953 = vpow.pop %v1952
        %v1954 = vmul.f32 %v1854, 1.442695
        %v1955 = vpow.pop %v1954
        %v1956 = vmul.f32 %v1855, 1.442695
        %v1957 = vpow.pop %v1956
        %v1958 = vmul.f32 %v1856, 1.442695
        %v1959 = vpow.pop %v1958
        %v1960 = vmul.f32 %v1857, 1.442695
        %v1961 = vpow.pop %v1960
        %v1962 = vmul.f32 %v1858, 1.442695
        %v1963 = vpow.pop %v1962
        %v1964 = vmul.f32 %v1859, 1.442695
        %v1965 = vpow.pop %v1964
        %v1966 = vmul.f32 %v1860, 1.442695
        %v1967 = vpow.pop %v1966
        %v1968 = vmul.f32 %v1861, 1.442695
        %v1969 = vpow.pop %v1968
        %v1970 = vmul.f32 %v1862, 1.442695
        %v1971 = vpow.pop %v1970
        %v1972 = vmul.f32 %v1863, 1.442695
        %v1973 = vpow.pop %v1972
        %v1974 = vmul.f32 %v1864, 1.442695
        %v1975 = vpow.pop %v1974
        %v1976 = vmul.f32 %v1865, 1.442695
        %v1977 = vpow.pop %v1976
        %v1978 = vmul.f32 %v1866, 1.442695
        %v1979 = vpow.pop %v1978
        %v1980 = vmul.f32 %v1867, 1.442695
        %v1981 = vpow.pop %v1980
        %v1982 = vmul.f32 %v1868, 1.442695
        %v1983 = vpow.pop %v1982
        %v1984 = vmul.f32 %v1869, 1.442695
        %v1985 = vpow.pop %v1984
        %v1986 = vmul.f32 %v1870, 1.442695
        %v1987 = vpow.pop %v1986
        %v1988 = vmul.f32 %v1871, 1.442695
        %v1989 = vpow.pop %v1988
        %v1990 = vmul.f32 %v1872, 1.442695
        %v1991 = vpow.pop %v1990
        %v1992 = vmul.f32 %v1873, 1.442695
        %v1993 = vpow.pop %v1992
        %v1994 = vmul.f32 %v1874, 1.442695
        %v1995 = vpow.pop %v1994
        %v1996 = vmul.f32 %v1875, 1.442695
        %v1997 = vpow.pop %v1996
        %v1998 = vmul.f32 %v1876, 1.442695
        %v1999 = vpow.pop %v1998
        %v2000 = vmul.f32 %v1877, 1.442695
        %v2001 = vpow.pop %v2000
        %v2002 = vmul.f32 %v1878, 1.442695
        %v2003 = vpow.pop %v2002
        %v2004 = vmul.f32 %v1879, 1.442695
        %v2005 = vpow.pop %v2004
        %v2006 = vmul.f32 %v1880, 1.442695
        %v2007 = vpow.pop %v2006
        %v2008 = vmul.f32 %v1881, 1.442695
        %v2009 = vpow.pop %v2008
        %v2010 = vmul.f32 %v1883, %v914
        %v2011 = vmul.f32 %v1885, %v915
        %v2012 = vmul.f32 %v1887, %v916
        %v2013 = vmul.f32 %v1889, %v917
        %v2014 = vmul.f32 %v1891, %v918
        %v2015 = vmul.f32 %v1893, %v919
        %v2016 = vmul.f32 %v1895, %v920
        %v2017 = vmul.f32 %v1897, %v921
        %v2018 = vmul.f32 %v1899, %v922
        %v2019 = vmul.f32 %v1901, %v923
        %v2020 = vmul.f32 %v1903, %v924
        %v2021 = vmul.f32 %v1905, %v925
        %v2022 = vmul.f32 %v1907, %v926
        %v2023 = vmul.f32 %v1909, %v927
        %v2024 = vmul.f32 %v1911, %v928
        %v2025 = vmul.f32 %v1913, %v929
        %v2026 = vmul.f32 %v1915, %v930
        %v2027 = vmul.f32 %v1917, %v931
        %v2028 = vmul.f32 %v1919, %v932
        %v2029 = vmul.f32 %v1921, %v933
        %v2030 = vmul.f32 %v1923, %v934
        %v2031 = vmul.f32 %v1925, %v935
        %v2032 = vmul.f32 %v1927, %v936
        %v2033 = vmul.f32 %v1929, %v937
        %v2034 = vmul.f32 %v1931, %v938
        %v2035 = vmul.f32 %v1933, %v939
        %v2036 = vmul.f32 %v1935, %v940
        %v2037 = vmul.f32 %v1937, %v941
        %v2038 = vmul.f32 %v1939, %v942
        %v2039 = vmul.f32 %v1941, %v943
        %v2040 = vmul.f32 %v1943, %v944
        %v2041 = vmul.f32 %v1945, %v945
        %v2042 = vmul.f32 %v1947, %v946
        %v2043 = vmul.f32 %v1949, %v947
        %v2044 = vmul.f32 %v1951, %v948
        %v2045 = vmul.f32 %v1953, %v949
        %v2046 = vmul.f32 %v1955, %v950
        %v2047 = vmul.f32 %v1957, %v951
        %v2048 = vmul.f32 %v1959, %v952
        %v2049 = vmul.f32 %v1961, %v953
        %v2050 = vmul.f32 %v1963, %v954
        %v2051 = vmul.f32 %v1965, %v955
        %v2052 = vmul.f32 %v1967, %v956
        %v2053 = vmul.f32 %v1969, %v957
        %v2054 = vmul.f32 %v1971, %v958
        %v2055 = vmul.f32 %v1973, %v959
        %v2056 = vmul.f32 %v1975, %v960
        %v2057 = vmul.f32 %v1977, %v961
        %v2058 = vmul.f32 %v1979, %v962
        %v2059 = vmul.f32 %v1981, %v963
        %v2060 = vmul.f32 %v1983, %v964
        %v2061 = vmul.f32 %v1985, %v965
        %v2062 = vmul.f32 %v1987, %v966
        %v2063 = vmul.f32 %v1989, %v967
        %v2064 = vmul.f32 %v1991, %v968
        %v2065 = vmul.f32 %v1993, %v969
        %v2066 = vmul.f32 %v1995, %v970
        %v2067 = vmul.f32 %v1997, %v971
        %v2068 = vmul.f32 %v1999, %v972
        %v2069 = vmul.f32 %v2001, %v973
        %v2070 = vmul.f32 %v2003, %v974
        %v2071 = vmul.f32 %v2005, %v975
        %v2072 = vmul.f32 %v2007, %v976
        %v2073 = vmul.f32 %v2009, %v977
        %v2074 = vld [vmem:[#allocation3] sm:$0xff]
        %v2075 = vld [vmem:[#allocation3 + $0x8] sm:$0xff]
        %v2076 = vld [vmem:[#allocation3 + $0x10] sm:$0xff]
        %v2077 = vld [vmem:[#allocation3 + $0x18] sm:$0xff]
        %v2078 = vld [vmem:[#allocation3 + $0x20] sm:$0xff]
        %v2079 = vld [vmem:[#allocation3 + $0x28] sm:$0xff]
        %v2080 = vld [vmem:[#allocation3 + $0x30] sm:$0xff]
        %v2081 = vld [vmem:[#allocation3 + $0x38] sm:$0xff]
        %v2082 = vld [vmem:[#allocation3 + $0x40] sm:$0xff]
        %v2083 = vld [vmem:[#allocation3 + $0x48] sm:$0xff]
        %v2084 = vld [vmem:[#allocation3 + $0x50] sm:$0xff]
        %v2085 = vld [vmem:[#allocation3 + $0x58] sm:$0xff]
        %v2086 = vld [vmem:[#allocation3 + $0x60] sm:$0xff]
        %v2087 = vld [vmem:[#allocation3 + $0x68] sm:$0xff]
        %v2088 = vld [vmem:[#allocation3 + $0x70] sm:$0xff]
        %v2089 = vld [vmem:[#allocation3 + $0x78] sm:$0xff]
        %v2090 = vld [vmem:[#allocation3 + $0x80] sm:$0xff]
        %v2091 = vld [vmem:[#allocation3 + $0x88] sm:$0xff]
        %v2092 = vld [vmem:[#allocation3 + $0x90] sm:$0xff]
        %v2093 = vld [vmem:[#allocation3 + $0x98] sm:$0xff]
        %v2094 = vld [vmem:[#allocation3 + $0xa0] sm:$0xff]
        %v2095 = vld [vmem:[#allocation3 + $0xa8] sm:$0xff]
        %v2096 = vld [vmem:[#allocation3 + $0xb0] sm:$0xff]
        %v2097 = vld [vmem:[#allocation3 + $0xb8] sm:$0xff]
        %v2098 = vld [vmem:[#allocation3 + $0xc0] sm:$0xff]
        %v2099 = vld [vmem:[#allocation3 + $0xc8] sm:$0xff]
        %v2100 = vld [vmem:[#allocation3 + $0xd0] sm:$0xff]
        %v2101 = vld [vmem:[#allocation3 + $0xd8] sm:$0xff]
        %v2102 = vld [vmem:[#allocation3 + $0xe0] sm:$0xff]
        %v2103 = vld [vmem:[#allocation3 + $0xe8] sm:$0xff]
        %v2104 = vld [vmem:[#allocation3 + $0xf0] sm:$0xff]
        %v2105 = vld [vmem:[#allocation3 + $0xf8] sm:$0xff]
        %v2106 = vmul.f32 %v1595, %v2074
        %v2107 = vmul.f32 %v1597, %v2075
        %v2108 = vmul.f32 %v1599, %v2076
        %v2109 = vmul.f32 %v1601, %v2077
        %v2110 = vmul.f32 %v1603, %v2078
        %v2111 = vmul.f32 %v1605, %v2079
        %v2112 = vmul.f32 %v1607, %v2080
        %v2113 = vmul.f32 %v1609, %v2081
        %v2114 = vmul.f32 %v1611, %v2082
        %v2115 = vmul.f32 %v1613, %v2083
        %v2116 = vmul.f32 %v1615, %v2084
        %v2117 = vmul.f32 %v1617, %v2085
        %v2118 = vmul.f32 %v1619, %v2086
        %v2119 = vmul.f32 %v1621, %v2087
        %v2120 = vmul.f32 %v1623, %v2088
        %v2121 = vmul.f32 %v1625, %v2089
        %v2122 = vmul.f32 %v1627, %v2090
        %v2123 = vmul.f32 %v1629, %v2091
        %v2124 = vmul.f32 %v1631, %v2092
        %v2125 = vmul.f32 %v1633, %v2093
        %v2126 = vmul.f32 %v1635, %v2094
        %v2127 = vmul.f32 %v1637, %v2095
        %v2128 = vmul.f32 %v1639, %v2096
        %v2129 = vmul.f32 %v1641, %v2097
        %v2130 = vmul.f32 %v1643, %v2098
        %v2131 = vmul.f32 %v1645, %v2099
        %v2132 = vmul.f32 %v1647, %v2100
        %v2133 = vmul.f32 %v1649, %v2101
        %v2134 = vmul.f32 %v1651, %v2102
        %v2135 = vmul.f32 %v1653, %v2103
        %v2136 = vmul.f32 %v1655, %v2104
        %v2137 = vmul.f32 %v1657, %v2105
        %v2138 = vadd.f32 %v2010, %v2011
        %2139 = vadd.xlane.f32.xlu0 %v2138
        %v2140 = vpop.xlane.xlu0 %2139
        %v2141 = vadd.f32 %v2012, %v2013
        %2142 = vadd.xlane.f32.xlu0 %v2141
        %v2143 = vpop.xlane.xlu0 %2142
        %v2144 = vadd.f32 %v2014, %v2015
        %2145 = vadd.xlane.f32.xlu0 %v2144
        %v2146 = vpop.xlane.xlu0 %2145
        %v2147 = vadd.f32 %v2016, %v2017
        %2148 = vadd.xlane.f32.xlu0 %v2147
        %v2149 = vpop.xlane.xlu0 %2148
        %v2150 = vadd.f32 %v2018, %v2019
        %2151 = vadd.xlane.f32.xlu0 %v2150
        %v2152 = vpop.xlane.xlu0 %2151
        %v2153 = vadd.f32 %v2020, %v2021
        %2154 = vadd.xlane.f32.xlu0 %v2153
        %v2155 = vpop.xlane.xlu0 %2154
        %v2156 = vadd.f32 %v2022, %v2023
        %2157 = vadd.xlane.f32.xlu0 %v2156
        %v2158 = vpop.xlane.xlu0 %2157
        %v2159 = vadd.f32 %v2024, %v2025
        %2160 = vadd.xlane.f32.xlu0 %v2159
        %v2161 = vpop.xlane.xlu0 %2160
        %v2162 = vadd.f32 %v2026, %v2027
        %2163 = vadd.xlane.f32.xlu0 %v2162
        %v2164 = vpop.xlane.xlu0 %2163
        %v2165 = vadd.f32 %v2028, %v2029
        %2166 = vadd.xlane.f32.xlu0 %v2165
        %v2167 = vpop.xlane.xlu0 %2166
        %v2168 = vadd.f32 %v2030, %v2031
        %2169 = vadd.xlane.f32.xlu0 %v2168
        %v2170 = vpop.xlane.xlu0 %2169
        %v2171 = vadd.f32 %v2032, %v2033
        %2172 = vadd.xlane.f32.xlu0 %v2171
        %v2173 = vpop.xlane.xlu0 %2172
        %v2174 = vadd.f32 %v2034, %v2035
        %2175 = vadd.xlane.f32.xlu0 %v2174
        %v2176 = vpop.xlane.xlu0 %2175
        %v2177 = vadd.f32 %v2036, %v2037
        %2178 = vadd.xlane.f32.xlu0 %v2177
        %v2179 = vpop.xlane.xlu0 %2178
        %v2180 = vadd.f32 %v2038, %v2039
        %2181 = vadd.xlane.f32.xlu0 %v2180
        %v2182 = vpop.xlane.xlu0 %2181
        %v2183 = vadd.f32 %v2040, %v2041
        %2184 = vadd.xlane.f32.xlu0 %v2183
        %v2185 = vpop.xlane.xlu0 %2184
        %v2186 = vadd.f32 %v2042, %v2043
        %2187 = vadd.xlane.f32.xlu0 %v2186
        %v2188 = vpop.xlane.xlu0 %2187
        %v2189 = vadd.f32 %v2044, %v2045
        %2190 = vadd.xlane.f32.xlu0 %v2189
        %v2191 = vpop.xlane.xlu0 %2190
        %v2192 = vadd.f32 %v2046, %v2047
        %2193 = vadd.xlane.f32.xlu0 %v2192
        %v2194 = vpop.xlane.xlu0 %2193
        %v2195 = vadd.f32 %v2048, %v2049
        %2196 = vadd.xlane.f32.xlu0 %v2195
        %v2197 = vpop.xlane.xlu0 %2196
        %v2198 = vadd.f32 %v2050, %v2051
        %2199 = vadd.xlane.f32.xlu0 %v2198
        %v2200 = vpop.xlane.xlu0 %2199
        %v2201 = vadd.f32 %v2052, %v2053
        %2202 = vadd.xlane.f32.xlu0 %v2201
        %v2203 = vpop.xlane.xlu0 %2202
        %v2204 = vadd.f32 %v2054, %v2055
        %2205 = vadd.xlane.f32.xlu0 %v2204
        %v2206 = vpop.xlane.xlu0 %2205
        %v2207 = vadd.f32 %v2056, %v2057
        %2208 = vadd.xlane.f32.xlu0 %v2207
        %v2209 = vpop.xlane.xlu0 %2208
        %v2210 = vadd.f32 %v2058, %v2059
        %2211 = vadd.xlane.f32.xlu0 %v2210
        %v2212 = vpop.xlane.xlu0 %2211
        %v2213 = vadd.f32 %v2060, %v2061
        %2214 = vadd.xlane.f32.xlu0 %v2213
        %v2215 = vpop.xlane.xlu0 %2214
        %v2216 = vadd.f32 %v2062, %v2063
        %2217 = vadd.xlane.f32.xlu0 %v2216
        %v2218 = vpop.xlane.xlu0 %2217
        %v2219 = vadd.f32 %v2064, %v2065
        %2220 = vadd.xlane.f32.xlu0 %v2219
        %v2221 = vpop.xlane.xlu0 %2220
        %v2222 = vadd.f32 %v2066, %v2067
        %2223 = vadd.xlane.f32.xlu0 %v2222
        %v2224 = vpop.xlane.xlu0 %2223
        %v2225 = vadd.f32 %v2068, %v2069
        %2226 = vadd.xlane.f32.xlu0 %v2225
        %v2227 = vpop.xlane.xlu0 %2226
        %v2228 = vadd.f32 %v2070, %v2071
        %2229 = vadd.xlane.f32.xlu0 %v2228
        %v2230 = vpop.xlane.xlu0 %2229
        %v2231 = vadd.f32 %v2072, %v2073
        %2232 = vadd.xlane.f32.xlu0 %v2231
        %v2233 = vpop.xlane.xlu0 %2232
        %v2234 = vadd.f32 %v2106, %v2140
        %v2235 = vadd.f32 %v2107, %v2143
        %v2236 = vadd.f32 %v2108, %v2146
        %v2237 = vadd.f32 %v2109, %v2149
        %v2238 = vadd.f32 %v2110, %v2152
        %v2239 = vadd.f32 %v2111, %v2155
        %v2240 = vadd.f32 %v2112, %v2158
        %v2241 = vadd.f32 %v2113, %v2161
        %v2242 = vadd.f32 %v2114, %v2164
        %v2243 = vadd.f32 %v2115, %v2167
        %v2244 = vadd.f32 %v2116, %v2170
        %v2245 = vadd.f32 %v2117, %v2173
        %v2246 = vadd.f32 %v2118, %v2176
        %v2247 = vadd.f32 %v2119, %v2179
        %v2248 = vadd.f32 %v2120, %v2182
        %v2249 = vadd.f32 %v2121, %v2185
        %v2250 = vadd.f32 %v2122, %v2188
        %v2251 = vadd.f32 %v2123, %v2191
        %v2252 = vadd.f32 %v2124, %v2194
        %v2253 = vadd.f32 %v2125, %v2197
        %v2254 = vadd.f32 %v2126, %v2200
        %v2255 = vadd.f32 %v2127, %v2203
        %v2256 = vadd.f32 %v2128, %v2206
        %v2257 = vadd.f32 %v2129, %v2209
        %v2258 = vadd.f32 %v2130, %v2212
        %v2259 = vadd.f32 %v2131, %v2215
        %v2260 = vadd.f32 %v2132, %v2218
        %v2261 = vadd.f32 %v2133, %v2221
        %v2262 = vadd.f32 %v2134, %v2224
        %v2263 = vadd.f32 %v2135, %v2227
        %v2264 = vadd.f32 %v2136, %v2230
        %v2265 = vadd.f32 %v2137, %v2233
        %vm2266 = vcmask 7168
        %2267 = vst.msk [vmem:[#allocation3] sm:$0xff] %vm2266, %v2234
        %2268 = vst.msk [vmem:[#allocation3 + $0x8] sm:$0xff] %vm2266, %v2235
        %2269 = vst.msk [vmem:[#allocation3 + $0x10] sm:$0xff] %vm2266, %v2236
        %2270 = vst.msk [vmem:[#allocation3 + $0x18] sm:$0xff] %vm2266, %v2237
        %2271 = vst.msk [vmem:[#allocation3 + $0x20] sm:$0xff] %vm2266, %v2238
        %2272 = vst.msk [vmem:[#allocation3 + $0x28] sm:$0xff] %vm2266, %v2239
        %2273 = vst.msk [vmem:[#allocation3 + $0x30] sm:$0xff] %vm2266, %v2240
        %2274 = vst.msk [vmem:[#allocation3 + $0x38] sm:$0xff] %vm2266, %v2241
        %2275 = vst.msk [vmem:[#allocation3 + $0x40] sm:$0xff] %vm2266, %v2242
        %2276 = vst.msk [vmem:[#allocation3 + $0x48] sm:$0xff] %vm2266, %v2243
        %2277 = vst.msk [vmem:[#allocation3 + $0x50] sm:$0xff] %vm2266, %v2244
        %2278 = vst.msk [vmem:[#allocation3 + $0x58] sm:$0xff] %vm2266, %v2245
        %2279 = vst.msk [vmem:[#allocation3 + $0x60] sm:$0xff] %vm2266, %v2246
        %2280 = vst.msk [vmem:[#allocation3 + $0x68] sm:$0xff] %vm2266, %v2247
        %2281 = vst.msk [vmem:[#allocation3 + $0x70] sm:$0xff] %vm2266, %v2248
        %2282 = vst.msk [vmem:[#allocation3 + $0x78] sm:$0xff] %vm2266, %v2249
        %2283 = vst.msk [vmem:[#allocation3 + $0x80] sm:$0xff] %vm2266, %v2250
        %2284 = vst.msk [vmem:[#allocation3 + $0x88] sm:$0xff] %vm2266, %v2251
        %2285 = vst.msk [vmem:[#allocation3 + $0x90] sm:$0xff] %vm2266, %v2252
        %2286 = vst.msk [vmem:[#allocation3 + $0x98] sm:$0xff] %vm2266, %v2253
        %2287 = vst.msk [vmem:[#allocation3 + $0xa0] sm:$0xff] %vm2266, %v2254
        %2288 = vst.msk [vmem:[#allocation3 + $0xa8] sm:$0xff] %vm2266, %v2255
        %2289 = vst.msk [vmem:[#allocation3 + $0xb0] sm:$0xff] %vm2266, %v2256
        %2290 = vst.msk [vmem:[#allocation3 + $0xb8] sm:$0xff] %vm2266, %v2257
        %2291 = vst.msk [vmem:[#allocation3 + $0xc0] sm:$0xff] %vm2266, %v2258
        %2292 = vst.msk [vmem:[#allocation3 + $0xc8] sm:$0xff] %vm2266, %v2259
        %2293 = vst.msk [vmem:[#allocation3 + $0xd0] sm:$0xff] %vm2266, %v2260
        %2294 = vst.msk [vmem:[#allocation3 + $0xd8] sm:$0xff] %vm2266, %v2261
        %2295 = vst.msk [vmem:[#allocation3 + $0xe0] sm:$0xff] %vm2266, %v2262
        %2296 = vst.msk [vmem:[#allocation3 + $0xe8] sm:$0xff] %vm2266, %v2263
        %2297 = vst.msk [vmem:[#allocation3 + $0xf0] sm:$0xff] %vm2266, %v2264
        %2298 = vst.msk [vmem:[#allocation3 + $0xf8] sm:$0xff] %vm2266, %v2265
        %v2299 = vld [vmem:[#allocation4] sm:$0xff]
        %v2300 = vld [vmem:[#allocation4 + $0x8] sm:$0xff]
        %v2301 = vld [vmem:[#allocation4 + $0x10] sm:$0xff]
        %v2302 = vld [vmem:[#allocation4 + $0x18] sm:$0xff]
        %v2303 = vld [vmem:[#allocation4 + $0x20] sm:$0xff]
        %v2304 = vld [vmem:[#allocation4 + $0x28] sm:$0xff]
        %v2305 = vld [vmem:[#allocation4 + $0x30] sm:$0xff]
        %v2306 = vld [vmem:[#allocation4 + $0x38] sm:$0xff]
        %v2307 = vld [vmem:[#allocation4 + $0x40] sm:$0xff]
        %v2308 = vld [vmem:[#allocation4 + $0x48] sm:$0xff]
        %v2309 = vld [vmem:[#allocation4 + $0x50] sm:$0xff]
        %v2310 = vld [vmem:[#allocation4 + $0x58] sm:$0xff]
        %v2311 = vld [vmem:[#allocation4 + $0x60] sm:$0xff]
        %v2312 = vld [vmem:[#allocation4 + $0x68] sm:$0xff]
        %v2313 = vld [vmem:[#allocation4 + $0x70] sm:$0xff]
        %v2314 = vld [vmem:[#allocation4 + $0x78] sm:$0xff]
        %v2315 = vld [vmem:[#allocation4 + $0x80] sm:$0xff]
        %v2316 = vld [vmem:[#allocation4 + $0x88] sm:$0xff]
        %v2317 = vld [vmem:[#allocation4 + $0x90] sm:$0xff]
        %v2318 = vld [vmem:[#allocation4 + $0x98] sm:$0xff]
        %v2319 = vld [vmem:[#allocation4 + $0xa0] sm:$0xff]
        %v2320 = vld [vmem:[#allocation4 + $0xa8] sm:$0xff]
        %v2321 = vld [vmem:[#allocation4 + $0xb0] sm:$0xff]
        %v2322 = vld [vmem:[#allocation4 + $0xb8] sm:$0xff]
        %v2323 = vld [vmem:[#allocation4 + $0xc0] sm:$0xff]
        %v2324 = vld [vmem:[#allocation4 + $0xc8] sm:$0xff]
        %v2325 = vld [vmem:[#allocation4 + $0xd0] sm:$0xff]
        %v2326 = vld [vmem:[#allocation4 + $0xd8] sm:$0xff]
        %v2327 = vld [vmem:[#allocation4 + $0xe0] sm:$0xff]
        %v2328 = vld [vmem:[#allocation4 + $0xe8] sm:$0xff]
        %v2329 = vld [vmem:[#allocation4 + $0xf0] sm:$0xff]
        %v2330 = vld [vmem:[#allocation4 + $0xf8] sm:$0xff]
        %2332 = vset.pattern.permute.xlu0 0
        %2333 = vperm.xlu0 %2332, %v1595
        %v2334 = vpop.permute.xlu0 %2333
        %2337 = vset.pattern.permute.xlu0 0
        %2338 = vperm.xlu0 %2337, %v1597
        %v2339 = vpop.permute.xlu0 %2338
        %2342 = vset.pattern.permute.xlu0 0
        %2343 = vperm.xlu0 %2342, %v1599
        %v2344 = vpop.permute.xlu0 %2343
        %2347 = vset.pattern.permute.xlu0 0
        %2348 = vperm.xlu0 %2347, %v1601
        %v2349 = vpop.permute.xlu0 %2348
        %2352 = vset.pattern.permute.xlu0 0
        %2353 = vperm.xlu0 %2352, %v1603
        %v2354 = vpop.permute.xlu0 %2353
        %2357 = vset.pattern.permute.xlu0 0
        %2358 = vperm.xlu0 %2357, %v1605
        %v2359 = vpop.permute.xlu0 %2358
        %2362 = vset.pattern.permute.xlu0 0
        %2363 = vperm.xlu0 %2362, %v1607
        %v2364 = vpop.permute.xlu0 %2363
        %2367 = vset.pattern.permute.xlu0 0
        %2368 = vperm.xlu0 %2367, %v1609
        %v2369 = vpop.permute.xlu0 %2368
        %2372 = vset.pattern.permute.xlu0 0
        %2373 = vperm.xlu0 %2372, %v1611
        %v2374 = vpop.permute.xlu0 %2373
        %2377 = vset.pattern.permute.xlu0 0
        %2378 = vperm.xlu0 %2377, %v1613
        %v2379 = vpop.permute.xlu0 %2378
        %2382 = vset.pattern.permute.xlu0 0
        %2383 = vperm.xlu0 %2382, %v1615
        %v2384 = vpop.permute.xlu0 %2383
        %2387 = vset.pattern.permute.xlu0 0
        %2388 = vperm.xlu0 %2387, %v1617
        %v2389 = vpop.permute.xlu0 %2388
        %2392 = vset.pattern.permute.xlu0 0
        %2393 = vperm.xlu0 %2392, %v1619
        %v2394 = vpop.permute.xlu0 %2393
        %2397 = vset.pattern.permute.xlu0 0
        %2398 = vperm.xlu0 %2397, %v1621
        %v2399 = vpop.permute.xlu0 %2398
        %2402 = vset.pattern.permute.xlu0 0
        %2403 = vperm.xlu0 %2402, %v1623
        %v2404 = vpop.permute.xlu0 %2403
        %2407 = vset.pattern.permute.xlu0 0
        %2408 = vperm.xlu0 %2407, %v1625
        %v2409 = vpop.permute.xlu0 %2408
        %2412 = vset.pattern.permute.xlu0 0
        %2413 = vperm.xlu0 %2412, %v1627
        %v2414 = vpop.permute.xlu0 %2413
        %2417 = vset.pattern.permute.xlu0 0
        %2418 = vperm.xlu0 %2417, %v1629
        %v2419 = vpop.permute.xlu0 %2418
        %2422 = vset.pattern.permute.xlu0 0
        %2423 = vperm.xlu0 %2422, %v1631
        %v2424 = vpop.permute.xlu0 %2423
        %2427 = vset.pattern.permute.xlu0 0
        %2428 = vperm.xlu0 %2427, %v1633
        %v2429 = vpop.permute.xlu0 %2428
        %2432 = vset.pattern.permute.xlu0 0
        %2433 = vperm.xlu0 %2432, %v1635
        %v2434 = vpop.permute.xlu0 %2433
        %2437 = vset.pattern.permute.xlu0 0
        %2438 = vperm.xlu0 %2437, %v1637
        %v2439 = vpop.permute.xlu0 %2438
        %2442 = vset.pattern.permute.xlu0 0
        %2443 = vperm.xlu0 %2442, %v1639
        %v2444 = vpop.permute.xlu0 %2443
        %2447 = vset.pattern.permute.xlu0 0
        %2448 = vperm.xlu0 %2447, %v1641
        %v2449 = vpop.permute.xlu0 %2448
        %2452 = vset.pattern.permute.xlu0 0
        %2453 = vperm.xlu0 %2452, %v1643
        %v2454 = vpop.permute.xlu0 %2453
        %2457 = vset.pattern.permute.xlu0 0
        %2458 = vperm.xlu0 %2457, %v1645
        %v2459 = vpop.permute.xlu0 %2458
        %2462 = vset.pattern.permute.xlu0 0
        %2463 = vperm.xlu0 %2462, %v1647
        %v2464 = vpop.permute.xlu0 %2463
        %2467 = vset.pattern.permute.xlu0 0
        %2468 = vperm.xlu0 %2467, %v1649
        %v2469 = vpop.permute.xlu0 %2468
        %2472 = vset.pattern.permute.xlu0 0
        %2473 = vperm.xlu0 %2472, %v1651
        %v2474 = vpop.permute.xlu0 %2473
        %2477 = vset.pattern.permute.xlu0 0
        %2478 = vperm.xlu0 %2477, %v1653
        %v2479 = vpop.permute.xlu0 %2478
        %2482 = vset.pattern.permute.xlu0 0
        %2483 = vperm.xlu0 %2482, %v1655
        %v2484 = vpop.permute.xlu0 %2483
        %2487 = vset.pattern.permute.xlu0 0
        %2488 = vperm.xlu0 %2487, %v1657
        %v2489 = vpop.permute.xlu0 %2488
        %v2491 = vmul.f32 %v2334, %v2299
        %v2492 = vmul.f32 %v2339, %v2300
        %v2493 = vmul.f32 %v2344, %v2301
        %v2494 = vmul.f32 %v2349, %v2302
        %v2495 = vmul.f32 %v2354, %v2303
        %v2496 = vmul.f32 %v2359, %v2304
        %v2497 = vmul.f32 %v2364, %v2305
        %v2498 = vmul.f32 %v2369, %v2306
        %v2499 = vmul.f32 %v2374, %v2307
        %v2500 = vmul.f32 %v2379, %v2308
        %v2501 = vmul.f32 %v2384, %v2309
        %v2502 = vmul.f32 %v2389, %v2310
        %v2503 = vmul.f32 %v2394, %v2311
        %v2504 = vmul.f32 %v2399, %v2312
        %v2505 = vmul.f32 %v2404, %v2313
        %v2506 = vmul.f32 %v2409, %v2314
        %v2507 = vmul.f32 %v2414, %v2315
        %v2508 = vmul.f32 %v2419, %v2316
        %v2509 = vmul.f32 %v2424, %v2317
        %v2510 = vmul.f32 %v2429, %v2318
        %v2511 = vmul.f32 %v2434, %v2319
        %v2512 = vmul.f32 %v2439, %v2320
        %v2513 = vmul.f32 %v2444, %v2321
        %v2514 = vmul.f32 %v2449, %v2322
        %v2515 = vmul.f32 %v2454, %v2323
        %v2516 = vmul.f32 %v2459, %v2324
        %v2517 = vmul.f32 %v2464, %v2325
        %v2518 = vmul.f32 %v2469, %v2326
        %v2519 = vmul.f32 %v2474, %v2327
        %v2520 = vmul.f32 %v2479, %v2328
        %v2521 = vmul.f32 %v2484, %v2329
        %v2522 = vmul.f32 %v2489, %v2330
        %v2523 = vpack.c.bf16 %v2012, %v2010
        %v2524 = vpack.c.bf16 %v2013, %v2011
        %v2525 = vpack.c.bf16 %v2016, %v2014
        %v2526 = vpack.c.bf16 %v2017, %v2015
        %v2527 = vpack.c.bf16 %v2020, %v2018
        %v2528 = vpack.c.bf16 %v2021, %v2019
        %v2529 = vpack.c.bf16 %v2024, %v2022
        %v2530 = vpack.c.bf16 %v2025, %v2023
        %v2531 = vpack.c.bf16 %v2028, %v2026
        %v2532 = vpack.c.bf16 %v2029, %v2027
        %v2533 = vpack.c.bf16 %v2032, %v2030
        %v2534 = vpack.c.bf16 %v2033, %v2031
        %v2535 = vpack.c.bf16 %v2036, %v2034
        %v2536 = vpack.c.bf16 %v2037, %v2035
        %v2537 = vpack.c.bf16 %v2040, %v2038
        %v2538 = vpack.c.bf16 %v2041, %v2039
        %v2539 = vpack.c.bf16 %v2044, %v2042
        %v2540 = vpack.c.bf16 %v2045, %v2043
        %v2541 = vpack.c.bf16 %v2048, %v2046
        %v2542 = vpack.c.bf16 %v2049, %v2047
        %v2543 = vpack.c.bf16 %v2052, %v2050
        %v2544 = vpack.c.bf16 %v2053, %v2051
        %v2545 = vpack.c.bf16 %v2056, %v2054
        %v2546 = vpack.c.bf16 %v2057, %v2055
        %v2547 = vpack.c.bf16 %v2060, %v2058
        %v2548 = vpack.c.bf16 %v2061, %v2059
        %v2549 = vpack.c.bf16 %v2064, %v2062
        %v2550 = vpack.c.bf16 %v2065, %v2063
        %v2551 = vpack.c.bf16 %v2068, %v2066
        %v2552 = vpack.c.bf16 %v2069, %v2067
        %v2553 = vpack.c.bf16 %v2072, %v2070
        %v2554 = vpack.c.bf16 %v2073, %v2071
        %v2587 = vunpack.c.l.b16 %v576
        %v2588 = vunpack.c.l.b16 %v577
        %v2589 = vunpack.c.l.b16 %v578
        %v2590 = vunpack.c.l.b16 %v579
        %v2591 = vunpack.c.l.b16 %v580
        %v2592 = vunpack.c.l.b16 %v581
        %v2593 = vunpack.c.l.b16 %v582
        %v2594 = vunpack.c.l.b16 %v583
        %v2595 = vunpack.c.l.b16 %v584
        %v2596 = vunpack.c.l.b16 %v585
        %v2597 = vunpack.c.l.b16 %v586
        %v2598 = vunpack.c.l.b16 %v587
        %v2599 = vunpack.c.l.b16 %v588
        %v2600 = vunpack.c.l.b16 %v589
        %v2601 = vunpack.c.l.b16 %v590
        %v2602 = vunpack.c.l.b16 %v591
        %v2603 = vunpack.c.l.b16 %v592
        %v2604 = vunpack.c.l.b16 %v593
        %v2605 = vunpack.c.l.b16 %v594
        %v2606 = vunpack.c.l.b16 %v595
        %v2607 = vunpack.c.l.b16 %v596
        %v2608 = vunpack.c.l.b16 %v597
        %v2609 = vunpack.c.l.b16 %v598
        %v2610 = vunpack.c.l.b16 %v599
        %v2611 = vunpack.c.l.b16 %v600
        %v2612 = vunpack.c.l.b16 %v601
        %v2613 = vunpack.c.l.b16 %v602
        %v2614 = vunpack.c.l.b16 %v603
        %v2615 = vunpack.c.l.b16 %v604
        %v2616 = vunpack.c.l.b16 %v605
        %v2617 = vunpack.c.l.b16 %v606
        %v2618 = vunpack.c.l.b16 %v607
        %v2619 = vpack.c.b16 %v2588, %v2587
        %v2620 = vpack.c.b16 %v2590, %v2589
        %v2621 = vpack.c.b16 %v2592, %v2591
        %v2622 = vpack.c.b16 %v2594, %v2593
        %v2623 = vpack.c.b16 %v2596, %v2595
        %v2624 = vpack.c.b16 %v2598, %v2597
        %v2625 = vpack.c.b16 %v2600, %v2599
        %v2626 = vpack.c.b16 %v2602, %v2601
        %v2627 = vpack.c.b16 %v2604, %v2603
        %v2628 = vpack.c.b16 %v2606, %v2605
        %v2629 = vpack.c.b16 %v2608, %v2607
        %v2630 = vpack.c.b16 %v2610, %v2609
        %v2631 = vpack.c.b16 %v2612, %v2611
        %v2632 = vpack.c.b16 %v2614, %v2613
        %v2633 = vpack.c.b16 %v2616, %v2615
        %v2634 = vpack.c.b16 %v2618, %v2617
        %2651 = vmatprep.subr.bf16.mxu0 0
        %2652 = vmatpush1.bf16.msra.mxu0 %v2626
        %2653 = vmatprep.subr.bf16.mxu0 0
        %2654 = vmatpush1.bf16.msra.mxu0 %v2625
        %2655 = vmatprep.subr.bf16.mxu0 0
        %2656 = vmatpush1.bf16.msra.mxu0 %v2624
        %2657 = vmatprep.subr.bf16.mxu0 0
        %2658 = vmatpush1.bf16.msra.mxu0 %v2623
        %2659 = vmatprep.subr.bf16.mxu0 0
        %2660 = vmatpush1.bf16.msra.mxu0 %v2622
        %2661 = vmatprep.subr.bf16.mxu0 0
        %2662 = vmatpush1.bf16.msra.mxu0 %v2621
        %2663 = vmatprep.subr.bf16.mxu0 0
        %2664 = vmatpush1.bf16.msra.mxu0 %v2620
        %2665 = vmatprep.subr.bf16.mxu0 0
        %2666 = vmatpush1.bf16.msra.mxu0 %v2619
        %2667 = vmatprep.subr.bf16.mxu0 0
        %2668 = vmatpush2.bf16.msra.mxu0 %v2634
        %2669 = vmatprep.subr.bf16.mxu0 0
        %2670 = vmatpush2.bf16.msra.mxu0 %v2633
        %2671 = vmatprep.subr.bf16.mxu0 0
        %2672 = vmatpush2.bf16.msra.mxu0 %v2632
        %2673 = vmatprep.subr.bf16.mxu0 0
        %2674 = vmatpush2.bf16.msra.mxu0 %v2631
        %2675 = vmatprep.subr.bf16.mxu0 0
        %2676 = vmatpush2.bf16.msra.mxu0 %v2630
        %2677 = vmatprep.subr.bf16.mxu0 0
        %2678 = vmatpush2.bf16.msra.mxu0 %v2629
        %2679 = vmatprep.subr.bf16.mxu0 0
        %2680 = vmatpush2.bf16.msra.mxu0 %v2628
        %2681 = vmatprep.subr.bf16.mxu0 0
        %2682 = vmatpush2.bf16.msra.mxu0 %v2627
        %2683 = vmatprep.mubr.bf16.mxu0 %v2524
        %2684 = vmatmul.mubr.bf16.gmra.mxu0 %v2523
        %v2685 = vpop.f32.mrf.mxu0
        %v2686 = vadd.f32 0.0, %v2685
        %v2687 = vpop.f32.mrf.mxu0
        %v2688 = vpop.f32.mrf.mxu0
        %v2689 = vadd.f32 0.0, %v2688
        %v2690 = vpop.f32.mrf.mxu0
        %2691 = vmatprep.mubr.bf16.mxu0 %v2526
        %2692 = vmatmul.mubr.bf16.gmra.mxu0 %v2525
        %v2693 = vpop.f32.mrf.mxu0
        %v2694 = vadd.f32 0.0, %v2693
        %v2695 = vpop.f32.mrf.mxu0
        %v2696 = vpop.f32.mrf.mxu0
        %v2697 = vadd.f32 0.0, %v2696
        %v2698 = vpop.f32.mrf.mxu0
        %2699 = vmatprep.mubr.bf16.mxu0 %v2528
        %2700 = vmatmul.mubr.bf16.gmra.mxu0 %v2527
        %v2701 = vpop.f32.mrf.mxu0
        %v2702 = vadd.f32 0.0, %v2701
        %v2703 = vpop.f32.mrf.mxu0
        %v2704 = vpop.f32.mrf.mxu0
        %v2705 = vadd.f32 0.0, %v2704
        %v2706 = vpop.f32.mrf.mxu0
        %2707 = vmatprep.mubr.bf16.mxu0 %v2530
        %2708 = vmatmul.mubr.bf16.gmra.mxu0 %v2529
        %v2709 = vpop.f32.mrf.mxu0
        %v2710 = vadd.f32 0.0, %v2709
        %v2711 = vpop.f32.mrf.mxu0
        %v2712 = vpop.f32.mrf.mxu0
        %v2713 = vadd.f32 0.0, %v2712
        %v2714 = vpop.f32.mrf.mxu0
        %2715 = vmatprep.mubr.bf16.mxu0 %v2532
        %2716 = vmatmul.mubr.bf16.gmra.mxu0 %v2531
        %v2717 = vpop.f32.mrf.mxu0
        %v2718 = vadd.f32 0.0, %v2717
        %v2719 = vpop.f32.mrf.mxu0
        %v2720 = vpop.f32.mrf.mxu0
        %v2721 = vadd.f32 0.0, %v2720
        %v2722 = vpop.f32.mrf.mxu0
        %2723 = vmatprep.mubr.bf16.mxu0 %v2534
        %2724 = vmatmul.mubr.bf16.gmra.mxu0 %v2533
        %v2725 = vpop.f32.mrf.mxu0
        %v2726 = vadd.f32 0.0, %v2725
        %v2727 = vpop.f32.mrf.mxu0
        %v2728 = vpop.f32.mrf.mxu0
        %v2729 = vadd.f32 0.0, %v2728
        %v2730 = vpop.f32.mrf.mxu0
        %2731 = vmatprep.mubr.bf16.mxu0 %v2536
        %2732 = vmatmul.mubr.bf16.gmra.mxu0 %v2535
        %v2733 = vpop.f32.mrf.mxu0
        %v2734 = vadd.f32 0.0, %v2733
        %v2735 = vpop.f32.mrf.mxu0
        %v2736 = vpop.f32.mrf.mxu0
        %v2737 = vadd.f32 0.0, %v2736
        %v2738 = vpop.f32.mrf.mxu0
        %2739 = vmatprep.mubr.bf16.mxu0 %v2538
        %2740 = vmatmul.mubr.bf16.gmra.mxu0 %v2537
        %v2741 = vpop.f32.mrf.mxu0
        %v2742 = vadd.f32 0.0, %v2741
        %v2743 = vpop.f32.mrf.mxu0
        %v2744 = vpop.f32.mrf.mxu0
        %v2745 = vadd.f32 0.0, %v2744
        %v2746 = vpop.f32.mrf.mxu0
        %2747 = vmatprep.mubr.bf16.mxu0 %v2540
        %2748 = vmatmul.mubr.bf16.gmra.mxu0 %v2539
        %v2749 = vpop.f32.mrf.mxu0
        %v2750 = vadd.f32 0.0, %v2749
        %v2751 = vpop.f32.mrf.mxu0
        %v2752 = vpop.f32.mrf.mxu0
        %v2753 = vadd.f32 0.0, %v2752
        %v2754 = vpop.f32.mrf.mxu0
        %2755 = vmatprep.mubr.bf16.mxu0 %v2542
        %2756 = vmatmul.mubr.bf16.gmra.mxu0 %v2541
        %v2757 = vpop.f32.mrf.mxu0
        %v2758 = vadd.f32 0.0, %v2757
        %v2759 = vpop.f32.mrf.mxu0
        %v2760 = vpop.f32.mrf.mxu0
        %v2761 = vadd.f32 0.0, %v2760
        %v2762 = vpop.f32.mrf.mxu0
        %2763 = vmatprep.mubr.bf16.mxu0 %v2544
        %2764 = vmatmul.mubr.bf16.gmra.mxu0 %v2543
        %v2765 = vpop.f32.mrf.mxu0
        %v2766 = vadd.f32 0.0, %v2765
        %v2767 = vpop.f32.mrf.mxu0
        %v2768 = vpop.f32.mrf.mxu0
        %v2769 = vadd.f32 0.0, %v2768
        %v2770 = vpop.f32.mrf.mxu0
        %2771 = vmatprep.mubr.bf16.mxu0 %v2546
        %2772 = vmatmul.mubr.bf16.gmra.mxu0 %v2545
        %v2773 = vpop.f32.mrf.mxu0
        %v2774 = vadd.f32 0.0, %v2773
        %v2775 = vpop.f32.mrf.mxu0
        %v2776 = vpop.f32.mrf.mxu0
        %v2777 = vadd.f32 0.0, %v2776
        %v2778 = vpop.f32.mrf.mxu0
        %2779 = vmatprep.mubr.bf16.mxu0 %v2548
        %2780 = vmatmul.mubr.bf16.gmra.mxu0 %v2547
        %v2781 = vpop.f32.mrf.mxu0
        %v2782 = vadd.f32 0.0, %v2781
        %v2783 = vpop.f32.mrf.mxu0
        %v2784 = vpop.f32.mrf.mxu0
        %v2785 = vadd.f32 0.0, %v2784
        %v2786 = vpop.f32.mrf.mxu0
        %2787 = vmatprep.mubr.bf16.mxu0 %v2550
        %2788 = vmatmul.mubr.bf16.gmra.mxu0 %v2549
        %v2789 = vpop.f32.mrf.mxu0
        %v2790 = vadd.f32 0.0, %v2789
        %v2791 = vpop.f32.mrf.mxu0
        %v2792 = vpop.f32.mrf.mxu0
        %v2793 = vadd.f32 0.0, %v2792
        %v2794 = vpop.f32.mrf.mxu0
        %2795 = vmatprep.mubr.bf16.mxu0 %v2552
        %2796 = vmatmul.mubr.bf16.gmra.mxu0 %v2551
        %v2797 = vpop.f32.mrf.mxu0
        %v2798 = vadd.f32 0.0, %v2797
        %v2799 = vpop.f32.mrf.mxu0
        %v2800 = vpop.f32.mrf.mxu0
        %v2801 = vadd.f32 0.0, %v2800
        %v2802 = vpop.f32.mrf.mxu0
        %2803 = vmatprep.mubr.bf16.mxu0 %v2554
        %2804 = vmatmul.mubr.bf16.gmra.mxu0 %v2553
        %v2805 = vpop.f32.mrf.mxu0
        %v2806 = vadd.f32 0.0, %v2805
        %v2807 = vpop.f32.mrf.mxu0
        %v2808 = vpop.f32.mrf.mxu0
        %v2809 = vadd.f32 0.0, %v2808
        %v2810 = vpop.f32.mrf.mxu0
        %2811 = vdwg.mxu0
        %v2812 = vadd.f32 %v2491, %v2686
        %v2813 = vadd.f32 %v2492, %v2689
        %v2814 = vadd.f32 %v2493, %v2694
        %v2815 = vadd.f32 %v2494, %v2697
        %v2816 = vadd.f32 %v2495, %v2702
        %v2817 = vadd.f32 %v2496, %v2705
        %v2818 = vadd.f32 %v2497, %v2710
        %v2819 = vadd.f32 %v2498, %v2713
        %v2820 = vadd.f32 %v2499, %v2718
        %v2821 = vadd.f32 %v2500, %v2721
        %v2822 = vadd.f32 %v2501, %v2726
        %v2823 = vadd.f32 %v2502, %v2729
        %v2824 = vadd.f32 %v2503, %v2734
        %v2825 = vadd.f32 %v2504, %v2737
        %v2826 = vadd.f32 %v2505, %v2742
        %v2827 = vadd.f32 %v2506, %v2745
        %v2828 = vadd.f32 %v2507, %v2750
        %v2829 = vadd.f32 %v2508, %v2753
        %v2830 = vadd.f32 %v2509, %v2758
        %v2831 = vadd.f32 %v2510, %v2761
        %v2832 = vadd.f32 %v2511, %v2766
        %v2833 = vadd.f32 %v2512, %v2769
        %v2834 = vadd.f32 %v2513, %v2774
        %v2835 = vadd.f32 %v2514, %v2777
        %v2836 = vadd.f32 %v2515, %v2782
        %v2837 = vadd.f32 %v2516, %v2785
        %v2838 = vadd.f32 %v2517, %v2790
        %v2839 = vadd.f32 %v2518, %v2793
        %v2840 = vadd.f32 %v2519, %v2798
        %v2841 = vadd.f32 %v2520, %v2801
        %v2842 = vadd.f32 %v2521, %v2806
        %v2843 = vadd.f32 %v2522, %v2809
        %2844 = vst [vmem:[#allocation4] sm:$0xff] %v2812
        %2845 = vst [vmem:[#allocation4 + $0x8] sm:$0xff] %v2813
        %2846 = vst [vmem:[#allocation4 + $0x10] sm:$0xff] %v2814
        %2847 = vst [vmem:[#allocation4 + $0x18] sm:$0xff] %v2815
        %2848 = vst [vmem:[#allocation4 + $0x20] sm:$0xff] %v2816
        %2849 = vst [vmem:[#allocation4 + $0x28] sm:$0xff] %v2817
        %2850 = vst [vmem:[#allocation4 + $0x30] sm:$0xff] %v2818
        %2851 = vst [vmem:[#allocation4 + $0x38] sm:$0xff] %v2819
        %2852 = vst [vmem:[#allocation4 + $0x40] sm:$0xff] %v2820
        %2853 = vst [vmem:[#allocation4 + $0x48] sm:$0xff] %v2821
        %2854 = vst [vmem:[#allocation4 + $0x50] sm:$0xff] %v2822
        %2855 = vst [vmem:[#allocation4 + $0x58] sm:$0xff] %v2823
        %2856 = vst [vmem:[#allocation4 + $0x60] sm:$0xff] %v2824
        %2857 = vst [vmem:[#allocation4 + $0x68] sm:$0xff] %v2825
        %2858 = vst [vmem:[#allocation4 + $0x70] sm:$0xff] %v2826
        %2859 = vst [vmem:[#allocation4 + $0x78] sm:$0xff] %v2827
        %2860 = vst [vmem:[#allocation4 + $0x80] sm:$0xff] %v2828
        %2861 = vst [vmem:[#allocation4 + $0x88] sm:$0xff] %v2829
        %2862 = vst [vmem:[#allocation4 + $0x90] sm:$0xff] %v2830
        %2863 = vst [vmem:[#allocation4 + $0x98] sm:$0xff] %v2831
        %2864 = vst [vmem:[#allocation4 + $0xa0] sm:$0xff] %v2832
        %2865 = vst [vmem:[#allocation4 + $0xa8] sm:$0xff] %v2833
        %2866 = vst [vmem:[#allocation4 + $0xb0] sm:$0xff] %v2834
        %2867 = vst [vmem:[#allocation4 + $0xb8] sm:$0xff] %v2835
        %2868 = vst [vmem:[#allocation4 + $0xc0] sm:$0xff] %v2836
        %2869 = vst [vmem:[#allocation4 + $0xc8] sm:$0xff] %v2837
        %2870 = vst [vmem:[#allocation4 + $0xd0] sm:$0xff] %v2838
        %2871 = vst [vmem:[#allocation4 + $0xd8] sm:$0xff] %v2839
        %2872 = vst [vmem:[#allocation4 + $0xe0] sm:$0xff] %v2840
        %2873 = vst [vmem:[#allocation4 + $0xe8] sm:$0xff] %v2841
        %2874 = vst [vmem:[#allocation4 + $0xf0] sm:$0xff] %v2842
        %2875 = vst [vmem:[#allocation4 + $0xf8] sm:$0xff] %v2843
        %2876 = vst.msk [vmem:[#allocation2] sm:$0xff] %vm2266, %v1530
        %2877 = vst.msk [vmem:[#allocation2 + $0x8] sm:$0xff] %vm2266, %v1531
        %2878 = vst.msk [vmem:[#allocation2 + $0x10] sm:$0xff] %vm2266, %v1532
        %2879 = vst.msk [vmem:[#allocation2 + $0x18] sm:$0xff] %vm2266, %v1533
        %2880 = vst.msk [vmem:[#allocation2 + $0x20] sm:$0xff] %vm2266, %v1534
        %2881 = vst.msk [vmem:[#allocation2 + $0x28] sm:$0xff] %vm2266, %v1535
        %2882 = vst.msk [vmem:[#allocation2 + $0x30] sm:$0xff] %vm2266, %v1536
        %2883 = vst.msk [vmem:[#allocation2 + $0x38] sm:$0xff] %vm2266, %v1537
        %2884 = vst.msk [vmem:[#allocation2 + $0x40] sm:$0xff] %vm2266, %v1538
        %2885 = vst.msk [vmem:[#allocation2 + $0x48] sm:$0xff] %vm2266, %v1539
        %2886 = vst.msk [vmem:[#allocation2 + $0x50] sm:$0xff] %vm2266, %v1540
        %2887 = vst.msk [vmem:[#allocation2 + $0x58] sm:$0xff] %vm2266, %v1541
        %2888 = vst.msk [vmem:[#allocation2 + $0x60] sm:$0xff] %vm2266, %v1542
        %2889 = vst.msk [vmem:[#allocation2 + $0x68] sm:$0xff] %vm2266, %v1543
        %2890 = vst.msk [vmem:[#allocation2 + $0x70] sm:$0xff] %vm2266, %v1544
        %2891 = vst.msk [vmem:[#allocation2 + $0x78] sm:$0xff] %vm2266, %v1545
        %2892 = vst.msk [vmem:[#allocation2 + $0x80] sm:$0xff] %vm2266, %v1546
        %2893 = vst.msk [vmem:[#allocation2 + $0x88] sm:$0xff] %vm2266, %v1547
        %2894 = vst.msk [vmem:[#allocation2 + $0x90] sm:$0xff] %vm2266, %v1548
        %2895 = vst.msk [vmem:[#allocation2 + $0x98] sm:$0xff] %vm2266, %v1549
        %2896 = vst.msk [vmem:[#allocation2 + $0xa0] sm:$0xff] %vm2266, %v1550
        %2897 = vst.msk [vmem:[#allocation2 + $0xa8] sm:$0xff] %vm2266, %v1551
        %2898 = vst.msk [vmem:[#allocation2 + $0xb0] sm:$0xff] %vm2266, %v1552
        %2899 = vst.msk [vmem:[#allocation2 + $0xb8] sm:$0xff] %vm2266, %v1553
        %2900 = vst.msk [vmem:[#allocation2 + $0xc0] sm:$0xff] %vm2266, %v1554
        %2901 = vst.msk [vmem:[#allocation2 + $0xc8] sm:$0xff] %vm2266, %v1555
        %2902 = vst.msk [vmem:[#allocation2 + $0xd0] sm:$0xff] %vm2266, %v1556
        %2903 = vst.msk [vmem:[#allocation2 + $0xd8] sm:$0xff] %vm2266, %v1557
        %2904 = vst.msk [vmem:[#allocation2 + $0xe0] sm:$0xff] %vm2266, %v1558
        %2905 = vst.msk [vmem:[#allocation2 + $0xe8] sm:$0xff] %vm2266, %v1559
        %2906 = vst.msk [vmem:[#allocation2 + $0xf0] sm:$0xff] %vm2266, %v1560
        %2907 = vst.msk [vmem:[#allocation2 + $0xf8] sm:$0xff] %vm2266, %v1561
        %v2908 = vand.u32 %v658, 2
        %v2909 = vand.u32 %v659, 2
        %v2910 = vand.u32 %v660, 2
        %v2911 = vand.u32 %v661, 2
        %v2912 = vand.u32 %v662, 2
        %v2913 = vand.u32 %v663, 2
        %v2914 = vand.u32 %v664, 2
        %v2915 = vand.u32 %v665, 2
        %v2916 = vand.u32 %v666, 2
        %v2917 = vand.u32 %v667, 2
        %v2918 = vand.u32 %v668, 2
        %v2919 = vand.u32 %v669, 2
        %v2920 = vand.u32 %v670, 2
        %v2921 = vand.u32 %v671, 2
        %v2922 = vand.u32 %v672, 2
        %v2923 = vand.u32 %v673, 2
        %v2924 = vand.u32 %v674, 2
        %v2925 = vand.u32 %v675, 2
        %v2926 = vand.u32 %v676, 2
        %v2927 = vand.u32 %v677, 2
        %v2928 = vand.u32 %v678, 2
        %v2929 = vand.u32 %v679, 2
        %v2930 = vand.u32 %v680, 2
        %v2931 = vand.u32 %v681, 2
        %v2932 = vand.u32 %v682, 2
        %v2933 = vand.u32 %v683, 2
        %v2934 = vand.u32 %v684, 2
        %v2935 = vand.u32 %v685, 2
        %v2936 = vand.u32 %v686, 2
        %v2937 = vand.u32 %v687, 2
        %v2938 = vand.u32 %v688, 2
        %v2939 = vand.u32 %v689, 2
        %v2940 = vand.u32 %v690, 2
        %v2941 = vand.u32 %v691, 2
        %v2942 = vand.u32 %v692, 2
        %v2943 = vand.u32 %v693, 2
        %v2944 = vand.u32 %v694, 2
        %v2945 = vand.u32 %v695, 2
        %v2946 = vand.u32 %v696, 2
        %v2947 = vand.u32 %v697, 2
        %v2948 = vand.u32 %v698, 2
        %v2949 = vand.u32 %v699, 2
        %v2950 = vand.u32 %v700, 2
        %v2951 = vand.u32 %v701, 2
        %v2952 = vand.u32 %v702, 2
        %v2953 = vand.u32 %v703, 2
        %v2954 = vand.u32 %v704, 2
        %v2955 = vand.u32 %v705, 2
        %v2956 = vand.u32 %v706, 2
        %v2957 = vand.u32 %v707, 2
        %v2958 = vand.u32 %v708, 2
        %v2959 = vand.u32 %v709, 2
        %v2960 = vand.u32 %v710, 2
        %v2961 = vand.u32 %v711, 2
        %v2962 = vand.u32 %v712, 2
        %v2963 = vand.u32 %v713, 2
        %v2964 = vand.u32 %v714, 2
        %v2965 = vand.u32 %v715, 2
        %v2966 = vand.u32 %v716, 2
        %v2967 = vand.u32 %v717, 2
        %v2968 = vand.u32 %v718, 2
        %v2969 = vand.u32 %v719, 2
        %v2970 = vand.u32 %v720, 2
        %v2971 = vand.u32 %v721, 2
        %vm2972 = vcmp.gt.s32.totalorder %v2908, 0
        %vm2973 = vcmp.gt.s32.totalorder %v2909, 0
        %vm2974 = vcmp.gt.s32.totalorder %v2910, 0
        %vm2975 = vcmp.gt.s32.totalorder %v2911, 0
        %vm2976 = vcmp.gt.s32.totalorder %v2912, 0
        %vm2977 = vcmp.gt.s32.totalorder %v2913, 0
        %vm2978 = vcmp.gt.s32.totalorder %v2914, 0
        %vm2979 = vcmp.gt.s32.totalorder %v2915, 0
        %vm2980 = vcmp.gt.s32.totalorder %v2916, 0
        %vm2981 = vcmp.gt.s32.totalorder %v2917, 0
        %vm2982 = vcmp.gt.s32.totalorder %v2918, 0
        %vm2983 = vcmp.gt.s32.totalorder %v2919, 0
        %vm2984 = vcmp.gt.s32.totalorder %v2920, 0
        %vm2985 = vcmp.gt.s32.totalorder %v2921, 0
        %vm2986 = vcmp.gt.s32.totalorder %v2922, 0
        %vm2987 = vcmp.gt.s32.totalorder %v2923, 0
        %vm2988 = vcmp.gt.s32.totalorder %v2924, 0
        %vm2989 = vcmp.gt.s32.totalorder %v2925, 0
        %vm2990 = vcmp.gt.s32.totalorder %v2926, 0
        %vm2991 = vcmp.gt.s32.totalorder %v2927, 0
        %vm2992 = vcmp.gt.s32.totalorder %v2928, 0
        %vm2993 = vcmp.gt.s32.totalorder %v2929, 0
        %vm2994 = vcmp.gt.s32.totalorder %v2930, 0
        %vm2995 = vcmp.gt.s32.totalorder %v2931, 0
        %vm2996 = vcmp.gt.s32.totalorder %v2932, 0
        %vm2997 = vcmp.gt.s32.totalorder %v2933, 0
        %vm2998 = vcmp.gt.s32.totalorder %v2934, 0
        %vm2999 = vcmp.gt.s32.totalorder %v2935, 0
        %vm3000 = vcmp.gt.s32.totalorder %v2936, 0
        %vm3001 = vcmp.gt.s32.totalorder %v2937, 0
        %vm3002 = vcmp.gt.s32.totalorder %v2938, 0
        %vm3003 = vcmp.gt.s32.totalorder %v2939, 0
        %vm3004 = vcmp.gt.s32.totalorder %v2940, 0
        %vm3005 = vcmp.gt.s32.totalorder %v2941, 0
        %vm3006 = vcmp.gt.s32.totalorder %v2942, 0
        %vm3007 = vcmp.gt.s32.totalorder %v2943, 0
        %vm3008 = vcmp.gt.s32.totalorder %v2944, 0
        %vm3009 = vcmp.gt.s32.totalorder %v2945, 0
        %vm3010 = vcmp.gt.s32.totalorder %v2946, 0
        %vm3011 = vcmp.gt.s32.totalorder %v2947, 0
        %vm3012 = vcmp.gt.s32.totalorder %v2948, 0
        %vm3013 = vcmp.gt.s32.totalorder %v2949, 0
        %vm3014 = vcmp.gt.s32.totalorder %v2950, 0
        %vm3015 = vcmp.gt.s32.totalorder %v2951, 0
        %vm3016 = vcmp.gt.s32.totalorder %v2952, 0
        %vm3017 = vcmp.gt.s32.totalorder %v2953, 0
        %vm3018 = vcmp.gt.s32.totalorder %v2954, 0
        %vm3019 = vcmp.gt.s32.totalorder %v2955, 0
        %vm3020 = vcmp.gt.s32.totalorder %v2956, 0
        %vm3021 = vcmp.gt.s32.totalorder %v2957, 0
        %vm3022 = vcmp.gt.s32.totalorder %v2958, 0
        %vm3023 = vcmp.gt.s32.totalorder %v2959, 0
        %vm3024 = vcmp.gt.s32.totalorder %v2960, 0
        %vm3025 = vcmp.gt.s32.totalorder %v2961, 0
        %vm3026 = vcmp.gt.s32.totalorder %v2962, 0
        %vm3027 = vcmp.gt.s32.totalorder %v2963, 0
        %vm3028 = vcmp.gt.s32.totalorder %v2964, 0
        %vm3029 = vcmp.gt.s32.totalorder %v2965, 0
        %vm3030 = vcmp.gt.s32.totalorder %v2966, 0
        %vm3031 = vcmp.gt.s32.totalorder %v2967, 0
        %vm3032 = vcmp.gt.s32.totalorder %v2968, 0
        %vm3033 = vcmp.gt.s32.totalorder %v2969, 0
        %vm3034 = vcmp.gt.s32.totalorder %v2970, 0
        %vm3035 = vcmp.gt.s32.totalorder %v2971, 0
        %v3036 = vsel %vm2972, 1, 0
        %v3037 = vsel %vm2973, 1, 0
        %v3038 = vsel %vm2974, 1, 0
        %v3039 = vsel %vm2975, 1, 0
        %v3040 = vsel %vm2976, 1, 0
        %v3041 = vsel %vm2977, 1, 0
        %v3042 = vsel %vm2978, 1, 0
        %v3043 = vsel %vm2979, 1, 0
        %v3044 = vsel %vm2980, 1, 0
        %v3045 = vsel %vm2981, 1, 0
        %v3046 = vsel %vm2982, 1, 0
        %v3047 = vsel %vm2983, 1, 0
        %v3048 = vsel %vm2984, 1, 0
        %v3049 = vsel %vm2985, 1, 0
        %v3050 = vsel %vm2986, 1, 0
        %v3051 = vsel %vm2987, 1, 0
        %v3052 = vsel %vm2988, 1, 0
        %v3053 = vsel %vm2989, 1, 0
        %v3054 = vsel %vm2990, 1, 0
        %v3055 = vsel %vm2991, 1, 0
        %v3056 = vsel %vm2992, 1, 0
        %v3057 = vsel %vm2993, 1, 0
        %v3058 = vsel %vm2994, 1, 0
        %v3059 = vsel %vm2995, 1, 0
        %v3060 = vsel %vm2996, 1, 0
        %v3061 = vsel %vm2997, 1, 0
        %v3062 = vsel %vm2998, 1, 0
        %v3063 = vsel %vm2999, 1, 0
        %v3064 = vsel %vm3000, 1, 0
        %v3065 = vsel %vm3001, 1, 0
        %v3066 = vsel %vm3002, 1, 0
        %v3067 = vsel %vm3003, 1, 0
        %v3068 = vsel %vm3004, 1, 0
        %v3069 = vsel %vm3005, 1, 0
        %v3070 = vsel %vm3006, 1, 0
        %v3071 = vsel %vm3007, 1, 0
        %v3072 = vsel %vm3008, 1, 0
        %v3073 = vsel %vm3009, 1, 0
        %v3074 = vsel %vm3010, 1, 0
        %v3075 = vsel %vm3011, 1, 0
        %v3076 = vsel %vm3012, 1, 0
        %v3077 = vsel %vm3013, 1, 0
        %v3078 = vsel %vm3014, 1, 0
        %v3079 = vsel %vm3015, 1, 0
        %v3080 = vsel %vm3016, 1, 0
        %v3081 = vsel %vm3017, 1, 0
        %v3082 = vsel %vm3018, 1, 0
        %v3083 = vsel %vm3019, 1, 0
        %v3084 = vsel %vm3020, 1, 0
        %v3085 = vsel %vm3021, 1, 0
        %v3086 = vsel %vm3022, 1, 0
        %v3087 = vsel %vm3023, 1, 0
        %v3088 = vsel %vm3024, 1, 0
        %v3089 = vsel %vm3025, 1, 0
        %v3090 = vsel %vm3026, 1, 0
        %v3091 = vsel %vm3027, 1, 0
        %v3092 = vsel %vm3028, 1, 0
        %v3093 = vsel %vm3029, 1, 0
        %v3094 = vsel %vm3030, 1, 0
        %v3095 = vsel %vm3031, 1, 0
        %v3096 = vsel %vm3032, 1, 0
        %v3097 = vsel %vm3033, 1, 0
        %v3098 = vsel %vm3034, 1, 0
        %v3099 = vsel %vm3035, 1, 0
        %v3100 = vcvt.s32.f32 %v3036
        %v3101 = vcvt.s32.f32 %v3037
        %v3102 = vcvt.s32.f32 %v3038
        %v3103 = vcvt.s32.f32 %v3039
        %v3104 = vcvt.s32.f32 %v3040
        %v3105 = vcvt.s32.f32 %v3041
        %v3106 = vcvt.s32.f32 %v3042
        %v3107 = vcvt.s32.f32 %v3043
        %v3108 = vcvt.s32.f32 %v3044
        %v3109 = vcvt.s32.f32 %v3045
        %v3110 = vcvt.s32.f32 %v3046
        %v3111 = vcvt.s32.f32 %v3047
        %v3112 = vcvt.s32.f32 %v3048
        %v3113 = vcvt.s32.f32 %v3049
        %v3114 = vcvt.s32.f32 %v3050
        %v3115 = vcvt.s32.f32 %v3051
        %v3116 = vcvt.s32.f32 %v3052
        %v3117 = vcvt.s32.f32 %v3053
        %v3118 = vcvt.s32.f32 %v3054
        %v3119 = vcvt.s32.f32 %v3055
        %v3120 = vcvt.s32.f32 %v3056
        %v3121 = vcvt.s32.f32 %v3057
        %v3122 = vcvt.s32.f32 %v3058
        %v3123 = vcvt.s32.f32 %v3059
        %v3124 = vcvt.s32.f32 %v3060
        %v3125 = vcvt.s32.f32 %v3061
        %v3126 = vcvt.s32.f32 %v3062
        %v3127 = vcvt.s32.f32 %v3063
        %v3128 = vcvt.s32.f32 %v3064
        %v3129 = vcvt.s32.f32 %v3065
        %v3130 = vcvt.s32.f32 %v3066
        %v3131 = vcvt.s32.f32 %v3067
        %v3132 = vcvt.s32.f32 %v3068
        %v3133 = vcvt.s32.f32 %v3069
        %v3134 = vcvt.s32.f32 %v3070
        %v3135 = vcvt.s32.f32 %v3071
        %v3136 = vcvt.s32.f32 %v3072
        %v3137 = vcvt.s32.f32 %v3073
        %v3138 = vcvt.s32.f32 %v3074
        %v3139 = vcvt.s32.f32 %v3075
        %v3140 = vcvt.s32.f32 %v3076
        %v3141 = vcvt.s32.f32 %v3077
        %v3142 = vcvt.s32.f32 %v3078
        %v3143 = vcvt.s32.f32 %v3079
        %v3144 = vcvt.s32.f32 %v3080
        %v3145 = vcvt.s32.f32 %v3081
        %v3146 = vcvt.s32.f32 %v3082
        %v3147 = vcvt.s32.f32 %v3083
        %v3148 = vcvt.s32.f32 %v3084
        %v3149 = vcvt.s32.f32 %v3085
        %v3150 = vcvt.s32.f32 %v3086
        %v3151 = vcvt.s32.f32 %v3087
        %v3152 = vcvt.s32.f32 %v3088
        %v3153 = vcvt.s32.f32 %v3089
        %v3154 = vcvt.s32.f32 %v3090
        %v3155 = vcvt.s32.f32 %v3091
        %v3156 = vcvt.s32.f32 %v3092
        %v3157 = vcvt.s32.f32 %v3093
        %v3158 = vcvt.s32.f32 %v3094
        %v3159 = vcvt.s32.f32 %v3095
        %v3160 = vcvt.s32.f32 %v3096
        %v3161 = vcvt.s32.f32 %v3097
        %v3162 = vcvt.s32.f32 %v3098
        %v3163 = vcvt.s32.f32 %v3099
        %3164 = vset.pattern.permute.xlu0 1
        %3165 = vperm.xlu0 %3164, %v608
        %v3166 = vpop.permute.xlu0 %3165
        %3168 = vset.pattern.permute.xlu0 1
        %3169 = vperm.xlu0 %3168, %v609
        %v3170 = vpop.permute.xlu0 %3169
        %3172 = vset.pattern.permute.xlu0 1
        %3173 = vperm.xlu0 %3172, %v610
        %v3174 = vpop.permute.xlu0 %3173
        %3176 = vset.pattern.permute.xlu0 1
        %3177 = vperm.xlu0 %3176, %v611
        %v3178 = vpop.permute.xlu0 %3177
        %3180 = vset.pattern.permute.xlu0 1
        %3181 = vperm.xlu0 %3180, %v612
        %v3182 = vpop.permute.xlu0 %3181
        %3184 = vset.pattern.permute.xlu0 1
        %3185 = vperm.xlu0 %3184, %v613
        %v3186 = vpop.permute.xlu0 %3185
        %3188 = vset.pattern.permute.xlu0 1
        %3189 = vperm.xlu0 %3188, %v614
        %v3190 = vpop.permute.xlu0 %3189
        %3192 = vset.pattern.permute.xlu0 1
        %3193 = vperm.xlu0 %3192, %v615
        %v3194 = vpop.permute.xlu0 %3193
        %3196 = vset.pattern.permute.xlu0 1
        %3197 = vperm.xlu0 %3196, %v616
        %v3198 = vpop.permute.xlu0 %3197
        %3200 = vset.pattern.permute.xlu0 1
        %3201 = vperm.xlu0 %3200, %v617
        %v3202 = vpop.permute.xlu0 %3201
        %3204 = vset.pattern.permute.xlu0 1
        %3205 = vperm.xlu0 %3204, %v618
        %v3206 = vpop.permute.xlu0 %3205
        %3208 = vset.pattern.permute.xlu0 1
        %3209 = vperm.xlu0 %3208, %v619
        %v3210 = vpop.permute.xlu0 %3209
        %3212 = vset.pattern.permute.xlu0 1
        %3213 = vperm.xlu0 %3212, %v620
        %v3214 = vpop.permute.xlu0 %3213
        %3216 = vset.pattern.permute.xlu0 1
        %3217 = vperm.xlu0 %3216, %v621
        %v3218 = vpop.permute.xlu0 %3217
        %3220 = vset.pattern.permute.xlu0 1
        %3221 = vperm.xlu0 %3220, %v622
        %v3222 = vpop.permute.xlu0 %3221
        %3224 = vset.pattern.permute.xlu0 1
        %3225 = vperm.xlu0 %3224, %v623
        %v3226 = vpop.permute.xlu0 %3225
        %3228 = vset.pattern.permute.xlu0 1
        %3229 = vperm.xlu0 %3228, %v624
        %v3230 = vpop.permute.xlu0 %3229
        %3232 = vset.pattern.permute.xlu0 1
        %3233 = vperm.xlu0 %3232, %v625
        %v3234 = vpop.permute.xlu0 %3233
        %3236 = vset.pattern.permute.xlu0 1
        %3237 = vperm.xlu0 %3236, %v626
        %v3238 = vpop.permute.xlu0 %3237
        %3240 = vset.pattern.permute.xlu0 1
        %3241 = vperm.xlu0 %3240, %v627
        %v3242 = vpop.permute.xlu0 %3241
        %3244 = vset.pattern.permute.xlu0 1
        %3245 = vperm.xlu0 %3244, %v628
        %v3246 = vpop.permute.xlu0 %3245
        %3248 = vset.pattern.permute.xlu0 1
        %3249 = vperm.xlu0 %3248, %v629
        %v3250 = vpop.permute.xlu0 %3249
        %3252 = vset.pattern.permute.xlu0 1
        %3253 = vperm.xlu0 %3252, %v630
        %v3254 = vpop.permute.xlu0 %3253
        %3256 = vset.pattern.permute.xlu0 1
        %3257 = vperm.xlu0 %3256, %v631
        %v3258 = vpop.permute.xlu0 %3257
        %3260 = vset.pattern.permute.xlu0 1
        %3261 = vperm.xlu0 %3260, %v632
        %v3262 = vpop.permute.xlu0 %3261
        %3264 = vset.pattern.permute.xlu0 1
        %3265 = vperm.xlu0 %3264, %v633
        %v3266 = vpop.permute.xlu0 %3265
        %3268 = vset.pattern.permute.xlu0 1
        %3269 = vperm.xlu0 %3268, %v634
        %v3270 = vpop.permute.xlu0 %3269
        %3272 = vset.pattern.permute.xlu0 1
        %3273 = vperm.xlu0 %3272, %v635
        %v3274 = vpop.permute.xlu0 %3273
        %3276 = vset.pattern.permute.xlu0 1
        %3277 = vperm.xlu0 %3276, %v636
        %v3278 = vpop.permute.xlu0 %3277
        %3280 = vset.pattern.permute.xlu0 1
        %3281 = vperm.xlu0 %3280, %v637
        %v3282 = vpop.permute.xlu0 %3281
        %3284 = vset.pattern.permute.xlu0 1
        %3285 = vperm.xlu0 %3284, %v638
        %v3286 = vpop.permute.xlu0 %3285
        %3288 = vset.pattern.permute.xlu0 1
        %3289 = vperm.xlu0 %3288, %v639
        %v3290 = vpop.permute.xlu0 %3289
        %v3292 = vlaneseq
        %v3293 = vshrl.u32 %v3292, 7
        %v3294 = vsub.s32 1, %v3293
        %v3295 = vrot.slane %v640, %v3294
        %v3296 = vlaneseq
        %v3297 = vshrl.u32 %v3296, 7
        %v3298 = vsub.s32 1, %v3297
        %v3299 = vrot.slane %v641, %v3298
        %v3300 = vadd.f32 %v3166, %v3295
        %v3301 = vadd.f32 %v3166, %v3299
        %v3302 = vadd.f32 %v3170, %v3295
        %v3303 = vadd.f32 %v3170, %v3299
        %v3304 = vadd.f32 %v3174, %v3295
        %v3305 = vadd.f32 %v3174, %v3299
        %v3306 = vadd.f32 %v3178, %v3295
        %v3307 = vadd.f32 %v3178, %v3299
        %v3308 = vadd.f32 %v3182, %v3295
        %v3309 = vadd.f32 %v3182, %v3299
        %v3310 = vadd.f32 %v3186, %v3295
        %v3311 = vadd.f32 %v3186, %v3299
        %v3312 = vadd.f32 %v3190, %v3295
        %v3313 = vadd.f32 %v3190, %v3299
        %v3314 = vadd.f32 %v3194, %v3295
        %v3315 = vadd.f32 %v3194, %v3299
        %v3316 = vadd.f32 %v3198, %v3295
        %v3317 = vadd.f32 %v3198, %v3299
        %v3318 = vadd.f32 %v3202, %v3295
        %v3319 = vadd.f32 %v3202, %v3299
        %v3320 = vadd.f32 %v3206, %v3295
        %v3321 = vadd.f32 %v3206, %v3299
        %v3322 = vadd.f32 %v3210, %v3295
        %v3323 = vadd.f32 %v3210, %v3299
        %v3324 = vadd.f32 %v3214, %v3295
        %v3325 = vadd.f32 %v3214, %v3299
        %v3326 = vadd.f32 %v3218, %v3295
        %v3327 = vadd.f32 %v3218, %v3299
        %v3328 = vadd.f32 %v3222, %v3295
        %v3329 = vadd.f32 %v3222, %v3299
        %v3330 = vadd.f32 %v3226, %v3295
        %v3331 = vadd.f32 %v3226, %v3299
        %v3332 = vadd.f32 %v3230, %v3295
        %v3333 = vadd.f32 %v3230, %v3299
        %v3334 = vadd.f32 %v3234, %v3295
        %v3335 = vadd.f32 %v3234, %v3299
        %v3336 = vadd.f32 %v3238, %v3295
        %v3337 = vadd.f32 %v3238, %v3299
        %v3338 = vadd.f32 %v3242, %v3295
        %v3339 = vadd.f32 %v3242, %v3299
        %v3340 = vadd.f32 %v3246, %v3295
        %v3341 = vadd.f32 %v3246, %v3299
        %v3342 = vadd.f32 %v3250, %v3295
        %v3343 = vadd.f32 %v3250, %v3299
        %v3344 = vadd.f32 %v3254, %v3295
        %v3345 = vadd.f32 %v3254, %v3299
        %v3346 = vadd.f32 %v3258, %v3295
        %v3347 = vadd.f32 %v3258, %v3299
        %v3348 = vadd.f32 %v3262, %v3295
        %v3349 = vadd.f32 %v3262, %v3299
        %v3350 = vadd.f32 %v3266, %v3295
        %v3351 = vadd.f32 %v3266, %v3299
        %v3352 = vadd.f32 %v3270, %v3295
        %v3353 = vadd.f32 %v3270, %v3299
        %v3354 = vadd.f32 %v3274, %v3295
        %v3355 = vadd.f32 %v3274, %v3299
        %v3356 = vadd.f32 %v3278, %v3295
        %v3357 = vadd.f32 %v3278, %v3299
        %v3358 = vadd.f32 %v3282, %v3295
        %v3359 = vadd.f32 %v3282, %v3299
        %v3360 = vadd.f32 %v3286, %v3295
        %v3361 = vadd.f32 %v3286, %v3299
        %v3362 = vadd.f32 %v3290, %v3295
        %v3363 = vadd.f32 %v3290, %v3299
        %v3364 = vmul.f32 %v3300, 0.2
        %v3365 = vmul.f32 %v3301, 0.2
        %v3366 = vmul.f32 %v3302, 0.2
        %v3367 = vmul.f32 %v3303, 0.2
        %v3368 = vmul.f32 %v3304, 0.2
        %v3369 = vmul.f32 %v3305, 0.2
        %v3370 = vmul.f32 %v3306, 0.2
        %v3371 = vmul.f32 %v3307, 0.2
        %v3372 = vmul.f32 %v3308, 0.2
        %v3373 = vmul.f32 %v3309, 0.2
        %v3374 = vmul.f32 %v3310, 0.2
        %v3375 = vmul.f32 %v3311, 0.2
        %v3376 = vmul.f32 %v3312, 0.2
        %v3377 = vmul.f32 %v3313, 0.2
        %v3378 = vmul.f32 %v3314, 0.2
        %v3379 = vmul.f32 %v3315, 0.2
        %v3380 = vmul.f32 %v3316, 0.2
        %v3381 = vmul.f32 %v3317, 0.2
        %v3382 = vmul.f32 %v3318, 0.2
        %v3383 = vmul.f32 %v3319, 0.2
        %v3384 = vmul.f32 %v3320, 0.2
        %v3385 = vmul.f32 %v3321, 0.2
        %v3386 = vmul.f32 %v3322, 0.2
        %v3387 = vmul.f32 %v3323, 0.2
        %v3388 = vmul.f32 %v3324, 0.2
        %v3389 = vmul.f32 %v3325, 0.2
        %v3390 = vmul.f32 %v3326, 0.2
        %v3391 = vmul.f32 %v3327, 0.2
        %v3392 = vmul.f32 %v3328, 0.2
        %v3393 = vmul.f32 %v3329, 0.2
        %v3394 = vmul.f32 %v3330, 0.2
        %v3395 = vmul.f32 %v3331, 0.2
        %v3396 = vmul.f32 %v3332, 0.2
        %v3397 = vmul.f32 %v3333, 0.2
        %v3398 = vmul.f32 %v3334, 0.2
        %v3399 = vmul.f32 %v3335, 0.2
        %v3400 = vmul.f32 %v3336, 0.2
        %v3401 = vmul.f32 %v3337, 0.2
        %v3402 = vmul.f32 %v3338, 0.2
        %v3403 = vmul.f32 %v3339, 0.2
        %v3404 = vmul.f32 %v3340, 0.2
        %v3405 = vmul.f32 %v3341, 0.2
        %v3406 = vmul.f32 %v3342, 0.2
        %v3407 = vmul.f32 %v3343, 0.2
        %v3408 = vmul.f32 %v3344, 0.2
        %v3409 = vmul.f32 %v3345, 0.2
        %v3410 = vmul.f32 %v3346, 0.2
        %v3411 = vmul.f32 %v3347, 0.2
        %v3412 = vmul.f32 %v3348, 0.2
        %v3413 = vmul.f32 %v3349, 0.2
        %v3414 = vmul.f32 %v3350, 0.2
        %v3415 = vmul.f32 %v3351, 0.2
        %v3416 = vmul.f32 %v3352, 0.2
        %v3417 = vmul.f32 %v3353, 0.2
        %v3418 = vmul.f32 %v3354, 0.2
        %v3419 = vmul.f32 %v3355, 0.2
        %v3420 = vmul.f32 %v3356, 0.2
        %v3421 = vmul.f32 %v3357, 0.2
        %v3422 = vmul.f32 %v3358, 0.2
        %v3423 = vmul.f32 %v3359, 0.2
        %v3424 = vmul.f32 %v3360, 0.2
        %v3425 = vmul.f32 %v3361, 0.2
        %v3426 = vmul.f32 %v3362, 0.2
        %v3427 = vmul.f32 %v3363, 0.2
        %v3428 = vmax.f32 %v3300, %v3364
        %v3429 = vmax.f32 %v3301, %v3365
        %v3430 = vmax.f32 %v3302, %v3366
        %v3431 = vmax.f32 %v3303, %v3367
        %v3432 = vmax.f32 %v3304, %v3368
        %v3433 = vmax.f32 %v3305, %v3369
        %v3434 = vmax.f32 %v3306, %v3370
        %v3435 = vmax.f32 %v3307, %v3371
        %v3436 = vmax.f32 %v3308, %v3372
        %v3437 = vmax.f32 %v3309, %v3373
        %v3438 = vmax.f32 %v3310, %v3374
        %v3439 = vmax.f32 %v3311, %v3375
        %v3440 = vmax.f32 %v3312, %v3376
        %v3441 = vmax.f32 %v3313, %v3377
        %v3442 = vmax.f32 %v3314, %v3378
        %v3443 = vmax.f32 %v3315, %v3379
        %v3444 = vmax.f32 %v3316, %v3380
        %v3445 = vmax.f32 %v3317, %v3381
        %v3446 = vmax.f32 %v3318, %v3382
        %v3447 = vmax.f32 %v3319, %v3383
        %v3448 = vmax.f32 %v3320, %v3384
        %v3449 = vmax.f32 %v3321, %v3385
        %v3450 = vmax.f32 %v3322, %v3386
        %v3451 = vmax.f32 %v3323, %v3387
        %v3452 = vmax.f32 %v3324, %v3388
        %v3453 = vmax.f32 %v3325, %v3389
        %v3454 = vmax.f32 %v3326, %v3390
        %v3455 = vmax.f32 %v3327, %v3391
        %v3456 = vmax.f32 %v3328, %v3392
        %v3457 = vmax.f32 %v3329, %v3393
        %v3458 = vmax.f32 %v3330, %v3394
        %v3459 = vmax.f32 %v3331, %v3395
        %v3460 = vmax.f32 %v3332, %v3396
        %v3461 = vmax.f32 %v3333, %v3397
        %v3462 = vmax.f32 %v3334, %v3398
        %v3463 = vmax.f32 %v3335, %v3399
        %v3464 = vmax.f32 %v3336, %v3400
        %v3465 = vmax.f32 %v3337, %v3401
        %v3466 = vmax.f32 %v3338, %v3402
        %v3467 = vmax.f32 %v3339, %v3403
        %v3468 = vmax.f32 %v3340, %v3404
        %v3469 = vmax.f32 %v3341, %v3405
        %v3470 = vmax.f32 %v3342, %v3406
        %v3471 = vmax.f32 %v3343, %v3407
        %v3472 = vmax.f32 %v3344, %v3408
        %v3473 = vmax.f32 %v3345, %v3409
        %v3474 = vmax.f32 %v3346, %v3410
        %v3475 = vmax.f32 %v3347, %v3411
        %v3476 = vmax.f32 %v3348, %v3412
        %v3477 = vmax.f32 %v3349, %v3413
        %v3478 = vmax.f32 %v3350, %v3414
        %v3479 = vmax.f32 %v3351, %v3415
        %v3480 = vmax.f32 %v3352, %v3416
        %v3481 = vmax.f32 %v3353, %v3417
        %v3482 = vmax.f32 %v3354, %v3418
        %v3483 = vmax.f32 %v3355, %v3419
        %v3484 = vmax.f32 %v3356, %v3420
        %v3485 = vmax.f32 %v3357, %v3421
        %v3486 = vmax.f32 %v3358, %v3422
        %v3487 = vmax.f32 %v3359, %v3423
        %v3488 = vmax.f32 %v3360, %v3424
        %v3489 = vmax.f32 %v3361, %v3425
        %v3490 = vmax.f32 %v3362, %v3426
        %v3491 = vmax.f32 %v3363, %v3427
        %v3492 = vsel %vm2972, %v3428, -1e+09
        %v3493 = vsel %vm2973, %v3429, -1e+09
        %v3494 = vsel %vm2974, %v3430, -1e+09
        %v3495 = vsel %vm2975, %v3431, -1e+09
        %v3496 = vsel %vm2976, %v3432, -1e+09
        %v3497 = vsel %vm2977, %v3433, -1e+09
        %v3498 = vsel %vm2978, %v3434, -1e+09
        %v3499 = vsel %vm2979, %v3435, -1e+09
        %v3500 = vsel %vm2980, %v3436, -1e+09
        %v3501 = vsel %vm2981, %v3437, -1e+09
        %v3502 = vsel %vm2982, %v3438, -1e+09
        %v3503 = vsel %vm2983, %v3439, -1e+09
        %v3504 = vsel %vm2984, %v3440, -1e+09
        %v3505 = vsel %vm2985, %v3441, -1e+09
        %v3506 = vsel %vm2986, %v3442, -1e+09
        %v3507 = vsel %vm2987, %v3443, -1e+09
        %v3508 = vsel %vm2988, %v3444, -1e+09
        %v3509 = vsel %vm2989, %v3445, -1e+09
        %v3510 = vsel %vm2990, %v3446, -1e+09
        %v3511 = vsel %vm2991, %v3447, -1e+09
        %v3512 = vsel %vm2992, %v3448, -1e+09
        %v3513 = vsel %vm2993, %v3449, -1e+09
        %v3514 = vsel %vm2994, %v3450, -1e+09
        %v3515 = vsel %vm2995, %v3451, -1e+09
        %v3516 = vsel %vm2996, %v3452, -1e+09
        %v3517 = vsel %vm2997, %v3453, -1e+09
        %v3518 = vsel %vm2998, %v3454, -1e+09
        %v3519 = vsel %vm2999, %v3455, -1e+09
        %v3520 = vsel %vm3000, %v3456, -1e+09
        %v3521 = vsel %vm3001, %v3457, -1e+09
        %v3522 = vsel %vm3002, %v3458, -1e+09
        %v3523 = vsel %vm3003, %v3459, -1e+09
        %v3524 = vsel %vm3004, %v3460, -1e+09
        %v3525 = vsel %vm3005, %v3461, -1e+09
        %v3526 = vsel %vm3006, %v3462, -1e+09
        %v3527 = vsel %vm3007, %v3463, -1e+09
        %v3528 = vsel %vm3008, %v3464, -1e+09
        %v3529 = vsel %vm3009, %v3465, -1e+09
        %v3530 = vsel %vm3010, %v3466, -1e+09
        %v3531 = vsel %vm3011, %v3467, -1e+09
        %v3532 = vsel %vm3012, %v3468, -1e+09
        %v3533 = vsel %vm3013, %v3469, -1e+09
        %v3534 = vsel %vm3014, %v3470, -1e+09
        %v3535 = vsel %vm3015, %v3471, -1e+09
        %v3536 = vsel %vm3016, %v3472, -1e+09
        %v3537 = vsel %vm3017, %v3473, -1e+09
        %v3538 = vsel %vm3018, %v3474, -1e+09
        %v3539 = vsel %vm3019, %v3475, -1e+09
        %v3540 = vsel %vm3020, %v3476, -1e+09
        %v3541 = vsel %vm3021, %v3477, -1e+09
        %v3542 = vsel %vm3022, %v3478, -1e+09
        %v3543 = vsel %vm3023, %v3479, -1e+09
        %v3544 = vsel %vm3024, %v3480, -1e+09
        %v3545 = vsel %vm3025, %v3481, -1e+09
        %v3546 = vsel %vm3026, %v3482, -1e+09
        %v3547 = vsel %vm3027, %v3483, -1e+09
        %v3548 = vsel %vm3028, %v3484, -1e+09
        %v3549 = vsel %vm3029, %v3485, -1e+09
        %v3550 = vsel %vm3030, %v3486, -1e+09
        %v3551 = vsel %vm3031, %v3487, -1e+09
        %v3552 = vsel %vm3032, %v3488, -1e+09
        %v3553 = vsel %vm3033, %v3489, -1e+09
        %v3554 = vsel %vm3034, %v3490, -1e+09
        %v3555 = vsel %vm3035, %v3491, -1e+09
        %v3556 = vld [vmem:[#allocation5] sm:$0xff]
        %v3557 = vld [vmem:[#allocation5 + $0x8] sm:$0xff]
        %v3558 = vld [vmem:[#allocation5 + $0x10] sm:$0xff]
        %v3559 = vld [vmem:[#allocation5 + $0x18] sm:$0xff]
        %v3560 = vld [vmem:[#allocation5 + $0x20] sm:$0xff]
        %v3561 = vld [vmem:[#allocation5 + $0x28] sm:$0xff]
        %v3562 = vld [vmem:[#allocation5 + $0x30] sm:$0xff]
        %v3563 = vld [vmem:[#allocation5 + $0x38] sm:$0xff]
        %v3564 = vld [vmem:[#allocation5 + $0x40] sm:$0xff]
        %v3565 = vld [vmem:[#allocation5 + $0x48] sm:$0xff]
        %v3566 = vld [vmem:[#allocation5 + $0x50] sm:$0xff]
        %v3567 = vld [vmem:[#allocation5 + $0x58] sm:$0xff]
        %v3568 = vld [vmem:[#allocation5 + $0x60] sm:$0xff]
        %v3569 = vld [vmem:[#allocation5 + $0x68] sm:$0xff]
        %v3570 = vld [vmem:[#allocation5 + $0x70] sm:$0xff]
        %v3571 = vld [vmem:[#allocation5 + $0x78] sm:$0xff]
        %v3572 = vld [vmem:[#allocation5 + $0x80] sm:$0xff]
        %v3573 = vld [vmem:[#allocation5 + $0x88] sm:$0xff]
        %v3574 = vld [vmem:[#allocation5 + $0x90] sm:$0xff]
        %v3575 = vld [vmem:[#allocation5 + $0x98] sm:$0xff]
        %v3576 = vld [vmem:[#allocation5 + $0xa0] sm:$0xff]
        %v3577 = vld [vmem:[#allocation5 + $0xa8] sm:$0xff]
        %v3578 = vld [vmem:[#allocation5 + $0xb0] sm:$0xff]
        %v3579 = vld [vmem:[#allocation5 + $0xb8] sm:$0xff]
        %v3580 = vld [vmem:[#allocation5 + $0xc0] sm:$0xff]
        %v3581 = vld [vmem:[#allocation5 + $0xc8] sm:$0xff]
        %v3582 = vld [vmem:[#allocation5 + $0xd0] sm:$0xff]
        %v3583 = vld [vmem:[#allocation5 + $0xd8] sm:$0xff]
        %v3584 = vld [vmem:[#allocation5 + $0xe0] sm:$0xff]
        %v3585 = vld [vmem:[#allocation5 + $0xe8] sm:$0xff]
        %v3586 = vld [vmem:[#allocation5 + $0xf0] sm:$0xff]
        %v3587 = vld [vmem:[#allocation5 + $0xf8] sm:$0xff]
        %v3588 = vmax.f32 %v3492, %v3493
        %3589 = vmax.xlane.f32.xlu0 %v3588
        %v3590 = vpop.xlane.xlu0 %3589
        %v3591 = vmax.f32 %v3494, %v3495
        %3592 = vmax.xlane.f32.xlu0 %v3591
        %v3593 = vpop.xlane.xlu0 %3592
        %v3594 = vmax.f32 %v3496, %v3497
        %3595 = vmax.xlane.f32.xlu0 %v3594
        %v3596 = vpop.xlane.xlu0 %3595
        %v3597 = vmax.f32 %v3498, %v3499
        %3598 = vmax.xlane.f32.xlu0 %v3597
        %v3599 = vpop.xlane.xlu0 %3598
        %v3600 = vmax.f32 %v3500, %v3501
        %3601 = vmax.xlane.f32.xlu0 %v3600
        %v3602 = vpop.xlane.xlu0 %3601
        %v3603 = vmax.f32 %v3502, %v3503
        %3604 = vmax.xlane.f32.xlu0 %v3603
        %v3605 = vpop.xlane.xlu0 %3604
        %v3606 = vmax.f32 %v3504, %v3505
        %3607 = vmax.xlane.f32.xlu0 %v3606
        %v3608 = vpop.xlane.xlu0 %3607
        %v3609 = vmax.f32 %v3506, %v3507
        %3610 = vmax.xlane.f32.xlu0 %v3609
        %v3611 = vpop.xlane.xlu0 %3610
        %v3612 = vmax.f32 %v3508, %v3509
        %3613 = vmax.xlane.f32.xlu0 %v3612
        %v3614 = vpop.xlane.xlu0 %3613
        %v3615 = vmax.f32 %v3510, %v3511
        %3616 = vmax.xlane.f32.xlu0 %v3615
        %v3617 = vpop.xlane.xlu0 %3616
        %v3618 = vmax.f32 %v3512, %v3513
        %3619 = vmax.xlane.f32.xlu0 %v3618
        %v3620 = vpop.xlane.xlu0 %3619
        %v3621 = vmax.f32 %v3514, %v3515
        %3622 = vmax.xlane.f32.xlu0 %v3621
        %v3623 = vpop.xlane.xlu0 %3622
        %v3624 = vmax.f32 %v3516, %v3517
        %3625 = vmax.xlane.f32.xlu0 %v3624
        %v3626 = vpop.xlane.xlu0 %3625
        %v3627 = vmax.f32 %v3518, %v3519
        %3628 = vmax.xlane.f32.xlu0 %v3627
        %v3629 = vpop.xlane.xlu0 %3628
        %v3630 = vmax.f32 %v3520, %v3521
        %3631 = vmax.xlane.f32.xlu0 %v3630
        %v3632 = vpop.xlane.xlu0 %3631
        %v3633 = vmax.f32 %v3522, %v3523
        %3634 = vmax.xlane.f32.xlu0 %v3633
        %v3635 = vpop.xlane.xlu0 %3634
        %v3636 = vmax.f32 %v3524, %v3525
        %3637 = vmax.xlane.f32.xlu0 %v3636
        %v3638 = vpop.xlane.xlu0 %3637
        %v3639 = vmax.f32 %v3526, %v3527
        %3640 = vmax.xlane.f32.xlu0 %v3639
        %v3641 = vpop.xlane.xlu0 %3640
        %v3642 = vmax.f32 %v3528, %v3529
        %3643 = vmax.xlane.f32.xlu0 %v3642
        %v3644 = vpop.xlane.xlu0 %3643
        %v3645 = vmax.f32 %v3530, %v3531
        %3646 = vmax.xlane.f32.xlu0 %v3645
        %v3647 = vpop.xlane.xlu0 %3646
        %v3648 = vmax.f32 %v3532, %v3533
        %3649 = vmax.xlane.f32.xlu0 %v3648
        %v3650 = vpop.xlane.xlu0 %3649
        %v3651 = vmax.f32 %v3534, %v3535
        %3652 = vmax.xlane.f32.xlu0 %v3651
        %v3653 = vpop.xlane.xlu0 %3652
        %v3654 = vmax.f32 %v3536, %v3537
        %3655 = vmax.xlane.f32.xlu0 %v3654
        %v3656 = vpop.xlane.xlu0 %3655
        %v3657 = vmax.f32 %v3538, %v3539
        %3658 = vmax.xlane.f32.xlu0 %v3657
        %v3659 = vpop.xlane.xlu0 %3658
        %v3660 = vmax.f32 %v3540, %v3541
        %3661 = vmax.xlane.f32.xlu0 %v3660
        %v3662 = vpop.xlane.xlu0 %3661
        %v3663 = vmax.f32 %v3542, %v3543
        %3664 = vmax.xlane.f32.xlu0 %v3663
        %v3665 = vpop.xlane.xlu0 %3664
        %v3666 = vmax.f32 %v3544, %v3545
        %3667 = vmax.xlane.f32.xlu0 %v3666
        %v3668 = vpop.xlane.xlu0 %3667
        %v3669 = vmax.f32 %v3546, %v3547
        %3670 = vmax.xlane.f32.xlu0 %v3669
        %v3671 = vpop.xlane.xlu0 %3670
        %v3672 = vmax.f32 %v3548, %v3549
        %3673 = vmax.xlane.f32.xlu0 %v3672
        %v3674 = vpop.xlane.xlu0 %3673
        %v3675 = vmax.f32 %v3550, %v3551
        %3676 = vmax.xlane.f32.xlu0 %v3675
        %v3677 = vpop.xlane.xlu0 %3676
        %v3678 = vmax.f32 %v3552, %v3553
        %3679 = vmax.xlane.f32.xlu0 %v3678
        %v3680 = vpop.xlane.xlu0 %3679
        %v3681 = vmax.f32 %v3554, %v3555
        %3682 = vmax.xlane.f32.xlu0 %v3681
        %v3683 = vpop.xlane.xlu0 %3682
        %v3684 = vmax.f32 %v3556, %v3590
        %v3685 = vmax.f32 %v3557, %v3593
        %v3686 = vmax.f32 %v3558, %v3596
        %v3687 = vmax.f32 %v3559, %v3599
        %v3688 = vmax.f32 %v3560, %v3602
        %v3689 = vmax.f32 %v3561, %v3605
        %v3690 = vmax.f32 %v3562, %v3608
        %v3691 = vmax.f32 %v3563, %v3611
        %v3692 = vmax.f32 %v3564, %v3614
        %v3693 = vmax.f32 %v3565, %v3617
        %v3694 = vmax.f32 %v3566, %v3620
        %v3695 = vmax.f32 %v3567, %v3623
        %v3696 = vmax.f32 %v3568, %v3626
        %v3697 = vmax.f32 %v3569, %v3629
        %v3698 = vmax.f32 %v3570, %v3632
        %v3699 = vmax.f32 %v3571, %v3635
        %v3700 = vmax.f32 %v3572, %v3638
        %v3701 = vmax.f32 %v3573, %v3641
        %v3702 = vmax.f32 %v3574, %v3644
        %v3703 = vmax.f32 %v3575, %v3647
        %v3704 = vmax.f32 %v3576, %v3650
        %v3705 = vmax.f32 %v3577, %v3653
        %v3706 = vmax.f32 %v3578, %v3656
        %v3707 = vmax.f32 %v3579, %v3659
        %v3708 = vmax.f32 %v3580, %v3662
        %v3709 = vmax.f32 %v3581, %v3665
        %v3710 = vmax.f32 %v3582, %v3668
        %v3711 = vmax.f32 %v3583, %v3671
        %v3712 = vmax.f32 %v3584, %v3674
        %v3713 = vmax.f32 %v3585, %v3677
        %v3714 = vmax.f32 %v3586, %v3680
        %v3715 = vmax.f32 %v3587, %v3683
        %v3716 = vsub.f32 %v3556, %v3684
        %v3717 = vsub.f32 %v3557, %v3685
        %v3718 = vsub.f32 %v3558, %v3686
        %v3719 = vsub.f32 %v3559, %v3687
        %v3720 = vsub.f32 %v3560, %v3688
        %v3721 = vsub.f32 %v3561, %v3689
        %v3722 = vsub.f32 %v3562, %v3690
        %v3723 = vsub.f32 %v3563, %v3691
        %v3724 = vsub.f32 %v3564, %v3692
        %v3725 = vsub.f32 %v3565, %v3693
        %v3726 = vsub.f32 %v3566, %v3694
        %v3727 = vsub.f32 %v3567, %v3695
        %v3728 = vsub.f32 %v3568, %v3696
        %v3729 = vsub.f32 %v3569, %v3697
        %v3730 = vsub.f32 %v3570, %v3698
        %v3731 = vsub.f32 %v3571, %v3699
        %v3732 = vsub.f32 %v3572, %v3700
        %v3733 = vsub.f32 %v3573, %v3701
        %v3734 = vsub.f32 %v3574, %v3702
        %v3735 = vsub.f32 %v3575, %v3703
        %v3736 = vsub.f32 %v3576, %v3704
        %v3737 = vsub.f32 %v3577, %v3705
        %v3738 = vsub.f32 %v3578, %v3706
        %v3739 = vsub.f32 %v3579, %v3707
        %v3740 = vsub.f32 %v3580, %v3708
        %v3741 = vsub.f32 %v3581, %v3709
        %v3742 = vsub.f32 %v3582, %v3710
        %v3743 = vsub.f32 %v3583, %v3711
        %v3744 = vsub.f32 %v3584, %v3712
        %v3745 = vsub.f32 %v3585, %v3713
        %v3746 = vsub.f32 %v3586, %v3714
        %v3747 = vsub.f32 %v3587, %v3715
        %v3748 = vmul.f32 %v3716, 1.442695
        %v3749 = vpow.pop %v3748
        %v3750 = vmul.f32 %v3717, 1.442695
        %v3751 = vpow.pop %v3750
        %v3752 = vmul.f32 %v3718, 1.442695
        %v3753 = vpow.pop %v3752
        %v3754 = vmul.f32 %v3719, 1.442695
        %v3755 = vpow.pop %v3754
        %v3756 = vmul.f32 %v3720, 1.442695
        %v3757 = vpow.pop %v3756
        %v3758 = vmul.f32 %v3721, 1.442695
        %v3759 = vpow.pop %v3758
        %v3760 = vmul.f32 %v3722, 1.442695
        %v3761 = vpow.pop %v3760
        %v3762 = vmul.f32 %v3723, 1.442695
        %v3763 = vpow.pop %v3762
        %v3764 = vmul.f32 %v3724, 1.442695
        %v3765 = vpow.pop %v3764
        %v3766 = vmul.f32 %v3725, 1.442695
        %v3767 = vpow.pop %v3766
        %v3768 = vmul.f32 %v3726, 1.442695
        %v3769 = vpow.pop %v3768
        %v3770 = vmul.f32 %v3727, 1.442695
        %v3771 = vpow.pop %v3770
        %v3772 = vmul.f32 %v3728, 1.442695
        %v3773 = vpow.pop %v3772
        %v3774 = vmul.f32 %v3729, 1.442695
        %v3775 = vpow.pop %v3774
        %v3776 = vmul.f32 %v3730, 1.442695
        %v3777 = vpow.pop %v3776
        %v3778 = vmul.f32 %v3731, 1.442695
        %v3779 = vpow.pop %v3778
        %v3780 = vmul.f32 %v3732, 1.442695
        %v3781 = vpow.pop %v3780
        %v3782 = vmul.f32 %v3733, 1.442695
        %v3783 = vpow.pop %v3782
        %v3784 = vmul.f32 %v3734, 1.442695
        %v3785 = vpow.pop %v3784
        %v3786 = vmul.f32 %v3735, 1.442695
        %v3787 = vpow.pop %v3786
        %v3788 = vmul.f32 %v3736, 1.442695
        %v3789 = vpow.pop %v3788
        %v3790 = vmul.f32 %v3737, 1.442695
        %v3791 = vpow.pop %v3790
        %v3792 = vmul.f32 %v3738, 1.442695
        %v3793 = vpow.pop %v3792
        %v3794 = vmul.f32 %v3739, 1.442695
        %v3795 = vpow.pop %v3794
        %v3796 = vmul.f32 %v3740, 1.442695
        %v3797 = vpow.pop %v3796
        %v3798 = vmul.f32 %v3741, 1.442695
        %v3799 = vpow.pop %v3798
        %v3800 = vmul.f32 %v3742, 1.442695
        %v3801 = vpow.pop %v3800
        %v3802 = vmul.f32 %v3743, 1.442695
        %v3803 = vpow.pop %v3802
        %v3804 = vmul.f32 %v3744, 1.442695
        %v3805 = vpow.pop %v3804
        %v3806 = vmul.f32 %v3745, 1.442695
        %v3807 = vpow.pop %v3806
        %v3808 = vmul.f32 %v3746, 1.442695
        %v3809 = vpow.pop %v3808
        %v3810 = vmul.f32 %v3747, 1.442695
        %v3811 = vpow.pop %v3810
        %3813 = vset.pattern.permute.xlu0 0
        %3814 = vperm.xlu0 %3813, %v3684
        %v3815 = vpop.permute.xlu0 %3814
        %3818 = vset.pattern.permute.xlu0 0
        %3819 = vperm.xlu0 %3818, %v3685
        %v3820 = vpop.permute.xlu0 %3819
        %3823 = vset.pattern.permute.xlu0 0
        %3824 = vperm.xlu0 %3823, %v3686
        %v3825 = vpop.permute.xlu0 %3824
        %3828 = vset.pattern.permute.xlu0 0
        %3829 = vperm.xlu0 %3828, %v3687
        %v3830 = vpop.permute.xlu0 %3829
        %3833 = vset.pattern.permute.xlu0 0
        %3834 = vperm.xlu0 %3833, %v3688
        %v3835 = vpop.permute.xlu0 %3834
        %3838 = vset.pattern.permute.xlu0 0
        %3839 = vperm.xlu0 %3838, %v3689
        %v3840 = vpop.permute.xlu0 %3839
        %3843 = vset.pattern.permute.xlu0 0
        %3844 = vperm.xlu0 %3843, %v3690
        %v3845 = vpop.permute.xlu0 %3844
        %3848 = vset.pattern.permute.xlu0 0
        %3849 = vperm.xlu0 %3848, %v3691
        %v3850 = vpop.permute.xlu0 %3849
        %3853 = vset.pattern.permute.xlu0 0
        %3854 = vperm.xlu0 %3853, %v3692
        %v3855 = vpop.permute.xlu0 %3854
        %3858 = vset.pattern.permute.xlu0 0
        %3859 = vperm.xlu0 %3858, %v3693
        %v3860 = vpop.permute.xlu0 %3859
        %3863 = vset.pattern.permute.xlu0 0
        %3864 = vperm.xlu0 %3863, %v3694
        %v3865 = vpop.permute.xlu0 %3864
        %3868 = vset.pattern.permute.xlu0 0
        %3869 = vperm.xlu0 %3868, %v3695
        %v3870 = vpop.permute.xlu0 %3869
        %3873 = vset.pattern.permute.xlu0 0
        %3874 = vperm.xlu0 %3873, %v3696
        %v3875 = vpop.permute.xlu0 %3874
        %3878 = vset.pattern.permute.xlu0 0
        %3879 = vperm.xlu0 %3878, %v3697
        %v3880 = vpop.permute.xlu0 %3879
        %3883 = vset.pattern.permute.xlu0 0
        %3884 = vperm.xlu0 %3883, %v3698
        %v3885 = vpop.permute.xlu0 %3884
        %3888 = vset.pattern.permute.xlu0 0
        %3889 = vperm.xlu0 %3888, %v3699
        %v3890 = vpop.permute.xlu0 %3889
        %3893 = vset.pattern.permute.xlu0 0
        %3894 = vperm.xlu0 %3893, %v3700
        %v3895 = vpop.permute.xlu0 %3894
        %3898 = vset.pattern.permute.xlu0 0
        %3899 = vperm.xlu0 %3898, %v3701
        %v3900 = vpop.permute.xlu0 %3899
        %3903 = vset.pattern.permute.xlu0 0
        %3904 = vperm.xlu0 %3903, %v3702
        %v3905 = vpop.permute.xlu0 %3904
        %3908 = vset.pattern.permute.xlu0 0
        %3909 = vperm.xlu0 %3908, %v3703
        %v3910 = vpop.permute.xlu0 %3909
        %3913 = vset.pattern.permute.xlu0 0
        %3914 = vperm.xlu0 %3913, %v3704
        %v3915 = vpop.permute.xlu0 %3914
        %3918 = vset.pattern.permute.xlu0 0
        %3919 = vperm.xlu0 %3918, %v3705
        %v3920 = vpop.permute.xlu0 %3919
        %3923 = vset.pattern.permute.xlu0 0
        %3924 = vperm.xlu0 %3923, %v3706
        %v3925 = vpop.permute.xlu0 %3924
        %3928 = vset.pattern.permute.xlu0 0
        %3929 = vperm.xlu0 %3928, %v3707
        %v3930 = vpop.permute.xlu0 %3929
        %3933 = vset.pattern.permute.xlu0 0
        %3934 = vperm.xlu0 %3933, %v3708
        %v3935 = vpop.permute.xlu0 %3934
        %3938 = vset.pattern.permute.xlu0 0
        %3939 = vperm.xlu0 %3938, %v3709
        %v3940 = vpop.permute.xlu0 %3939
        %3943 = vset.pattern.permute.xlu0 0
        %3944 = vperm.xlu0 %3943, %v3710
        %v3945 = vpop.permute.xlu0 %3944
        %3948 = vset.pattern.permute.xlu0 0
        %3949 = vperm.xlu0 %3948, %v3711
        %v3950 = vpop.permute.xlu0 %3949
        %3953 = vset.pattern.permute.xlu0 0
        %3954 = vperm.xlu0 %3953, %v3712
        %v3955 = vpop.permute.xlu0 %3954
        %3958 = vset.pattern.permute.xlu0 0
        %3959 = vperm.xlu0 %3958, %v3713
        %v3960 = vpop.permute.xlu0 %3959
        %3963 = vset.pattern.permute.xlu0 0
        %3964 = vperm.xlu0 %3963, %v3714
        %v3965 = vpop.permute.xlu0 %3964
        %3968 = vset.pattern.permute.xlu0 0
        %3969 = vperm.xlu0 %3968, %v3715
        %v3970 = vpop.permute.xlu0 %3969
        %v3972 = vsub.f32 %v3492, %v3815
        %v3973 = vsub.f32 %v3493, %v3815
        %v3974 = vsub.f32 %v3494, %v3820
        %v3975 = vsub.f32 %v3495, %v3820
        %v3976 = vsub.f32 %v3496, %v3825
        %v3977 = vsub.f32 %v3497, %v3825
        %v3978 = vsub.f32 %v3498, %v3830
        %v3979 = vsub.f32 %v3499, %v3830
        %v3980 = vsub.f32 %v3500, %v3835
        %v3981 = vsub.f32 %v3501, %v3835
        %v3982 = vsub.f32 %v3502, %v3840
        %v3983 = vsub.f32 %v3503, %v3840
        %v3984 = vsub.f32 %v3504, %v3845
        %v3985 = vsub.f32 %v3505, %v3845
        %v3986 = vsub.f32 %v3506, %v3850
        %v3987 = vsub.f32 %v3507, %v3850
        %v3988 = vsub.f32 %v3508, %v3855
        %v3989 = vsub.f32 %v3509, %v3855
        %v3990 = vsub.f32 %v3510, %v3860
        %v3991 = vsub.f32 %v3511, %v3860
        %v3992 = vsub.f32 %v3512, %v3865
        %v3993 = vsub.f32 %v3513, %v3865
        %v3994 = vsub.f32 %v3514, %v3870
        %v3995 = vsub.f32 %v3515, %v3870
        %v3996 = vsub.f32 %v3516, %v3875
        %v3997 = vsub.f32 %v3517, %v3875
        %v3998 = vsub.f32 %v3518, %v3880
        %v3999 = vsub.f32 %v3519, %v3880
        %v4000 = vsub.f32 %v3520, %v3885
        %v4001 = vsub.f32 %v3521, %v3885
        %v4002 = vsub.f32 %v3522, %v3890
        %v4003 = vsub.f32 %v3523, %v3890
        %v4004 = vsub.f32 %v3524, %v3895
        %v4005 = vsub.f32 %v3525, %v3895
        %v4006 = vsub.f32 %v3526, %v3900
        %v4007 = vsub.f32 %v3527, %v3900
        %v4008 = vsub.f32 %v3528, %v3905
        %v4009 = vsub.f32 %v3529, %v3905
        %v4010 = vsub.f32 %v3530, %v3910
        %v4011 = vsub.f32 %v3531, %v3910
        %v4012 = vsub.f32 %v3532, %v3915
        %v4013 = vsub.f32 %v3533, %v3915
        %v4014 = vsub.f32 %v3534, %v3920
        %v4015 = vsub.f32 %v3535, %v3920
        %v4016 = vsub.f32 %v3536, %v3925
        %v4017 = vsub.f32 %v3537, %v3925
        %v4018 = vsub.f32 %v3538, %v3930
        %v4019 = vsub.f32 %v3539, %v3930
        %v4020 = vsub.f32 %v3540, %v3935
        %v4021 = vsub.f32 %v3541, %v3935
        %v4022 = vsub.f32 %v3542, %v3940
        %v4023 = vsub.f32 %v3543, %v3940
        %v4024 = vsub.f32 %v3544, %v3945
        %v4025 = vsub.f32 %v3545, %v3945
        %v4026 = vsub.f32 %v3546, %v3950
        %v4027 = vsub.f32 %v3547, %v3950
        %v4028 = vsub.f32 %v3548, %v3955
        %v4029 = vsub.f32 %v3549, %v3955
        %v4030 = vsub.f32 %v3550, %v3960
        %v4031 = vsub.f32 %v3551, %v3960
        %v4032 = vsub.f32 %v3552, %v3965
        %v4033 = vsub.f32 %v3553, %v3965
        %v4034 = vsub.f32 %v3554, %v3970
        %v4035 = vsub.f32 %v3555, %v3970
        %v4036 = vmul.f32 %v3972, 1.442695
        %v4037 = vpow.pop %v4036
        %v4038 = vmul.f32 %v3973, 1.442695
        %v4039 = vpow.pop %v4038
        %v4040 = vmul.f32 %v3974, 1.442695
        %v4041 = vpow.pop %v4040
        %v4042 = vmul.f32 %v3975, 1.442695
        %v4043 = vpow.pop %v4042
        %v4044 = vmul.f32 %v3976, 1.442695
        %v4045 = vpow.pop %v4044
        %v4046 = vmul.f32 %v3977, 1.442695
        %v4047 = vpow.pop %v4046
        %v4048 = vmul.f32 %v3978, 1.442695
        %v4049 = vpow.pop %v4048
        %v4050 = vmul.f32 %v3979, 1.442695
        %v4051 = vpow.pop %v4050
        %v4052 = vmul.f32 %v3980, 1.442695
        %v4053 = vpow.pop %v4052
        %v4054 = vmul.f32 %v3981, 1.442695
        %v4055 = vpow.pop %v4054
        %v4056 = vmul.f32 %v3982, 1.442695
        %v4057 = vpow.pop %v4056
        %v4058 = vmul.f32 %v3983, 1.442695
        %v4059 = vpow.pop %v4058
        %v4060 = vmul.f32 %v3984, 1.442695
        %v4061 = vpow.pop %v4060
        %v4062 = vmul.f32 %v3985, 1.442695
        %v4063 = vpow.pop %v4062
        %v4064 = vmul.f32 %v3986, 1.442695
        %v4065 = vpow.pop %v4064
        %v4066 = vmul.f32 %v3987, 1.442695
        %v4067 = vpow.pop %v4066
        %v4068 = vmul.f32 %v3988, 1.442695
        %v4069 = vpow.pop %v4068
        %v4070 = vmul.f32 %v3989, 1.442695
        %v4071 = vpow.pop %v4070
        %v4072 = vmul.f32 %v3990, 1.442695
        %v4073 = vpow.pop %v4072
        %v4074 = vmul.f32 %v3991, 1.442695
        %v4075 = vpow.pop %v4074
        %v4076 = vmul.f32 %v3992, 1.442695
        %v4077 = vpow.pop %v4076
        %v4078 = vmul.f32 %v3993, 1.442695
        %v4079 = vpow.pop %v4078
        %v4080 = vmul.f32 %v3994, 1.442695
        %v4081 = vpow.pop %v4080
        %v4082 = vmul.f32 %v3995, 1.442695
        %v4083 = vpow.pop %v4082
        %v4084 = vmul.f32 %v3996, 1.442695
        %v4085 = vpow.pop %v4084
        %v4086 = vmul.f32 %v3997, 1.442695
        %v4087 = vpow.pop %v4086
        %v4088 = vmul.f32 %v3998, 1.442695
        %v4089 = vpow.pop %v4088
        %v4090 = vmul.f32 %v3999, 1.442695
        %v4091 = vpow.pop %v4090
        %v4092 = vmul.f32 %v4000, 1.442695
        %v4093 = vpow.pop %v4092
        %v4094 = vmul.f32 %v4001, 1.442695
        %v4095 = vpow.pop %v4094
        %v4096 = vmul.f32 %v4002, 1.442695
        %v4097 = vpow.pop %v4096
        %v4098 = vmul.f32 %v4003, 1.442695
        %v4099 = vpow.pop %v4098
        %v4100 = vmul.f32 %v4004, 1.442695
        %v4101 = vpow.pop %v4100
        %v4102 = vmul.f32 %v4005, 1.442695
        %v4103 = vpow.pop %v4102
        %v4104 = vmul.f32 %v4006, 1.442695
        %v4105 = vpow.pop %v4104
        %v4106 = vmul.f32 %v4007, 1.442695
        %v4107 = vpow.pop %v4106
        %v4108 = vmul.f32 %v4008, 1.442695
        %v4109 = vpow.pop %v4108
        %v4110 = vmul.f32 %v4009, 1.442695
        %v4111 = vpow.pop %v4110
        %v4112 = vmul.f32 %v4010, 1.442695
        %v4113 = vpow.pop %v4112
        %v4114 = vmul.f32 %v4011, 1.442695
        %v4115 = vpow.pop %v4114
        %v4116 = vmul.f32 %v4012, 1.442695
        %v4117 = vpow.pop %v4116
        %v4118 = vmul.f32 %v4013, 1.442695
        %v4119 = vpow.pop %v4118
        %v4120 = vmul.f32 %v4014, 1.442695
        %v4121 = vpow.pop %v4120
        %v4122 = vmul.f32 %v4015, 1.442695
        %v4123 = vpow.pop %v4122
        %v4124 = vmul.f32 %v4016, 1.442695
        %v4125 = vpow.pop %v4124
        %v4126 = vmul.f32 %v4017, 1.442695
        %v4127 = vpow.pop %v4126
        %v4128 = vmul.f32 %v4018, 1.442695
        %v4129 = vpow.pop %v4128
        %v4130 = vmul.f32 %v4019, 1.442695
        %v4131 = vpow.pop %v4130
        %v4132 = vmul.f32 %v4020, 1.442695
        %v4133 = vpow.pop %v4132
        %v4134 = vmul.f32 %v4021, 1.442695
        %v4135 = vpow.pop %v4134
        %v4136 = vmul.f32 %v4022, 1.442695
        %v4137 = vpow.pop %v4136
        %v4138 = vmul.f32 %v4023, 1.442695
        %v4139 = vpow.pop %v4138
        %v4140 = vmul.f32 %v4024, 1.442695
        %v4141 = vpow.pop %v4140
        %v4142 = vmul.f32 %v4025, 1.442695
        %v4143 = vpow.pop %v4142
        %v4144 = vmul.f32 %v4026, 1.442695
        %v4145 = vpow.pop %v4144
        %v4146 = vmul.f32 %v4027, 1.442695
        %v4147 = vpow.pop %v4146
        %v4148 = vmul.f32 %v4028, 1.442695
        %v4149 = vpow.pop %v4148
        %v4150 = vmul.f32 %v4029, 1.442695
        %v4151 = vpow.pop %v4150
        %v4152 = vmul.f32 %v4030, 1.442695
        %v4153 = vpow.pop %v4152
        %v4154 = vmul.f32 %v4031, 1.442695
        %v4155 = vpow.pop %v4154
        %v4156 = vmul.f32 %v4032, 1.442695
        %v4157 = vpow.pop %v4156
        %v4158 = vmul.f32 %v4033, 1.442695
        %v4159 = vpow.pop %v4158
        %v4160 = vmul.f32 %v4034, 1.442695
        %v4161 = vpow.pop %v4160
        %v4162 = vmul.f32 %v4035, 1.442695
        %v4163 = vpow.pop %v4162
        %v4164 = vmul.f32 %v4037, %v3100
        %v4165 = vmul.f32 %v4039, %v3101
        %v4166 = vmul.f32 %v4041, %v3102
        %v4167 = vmul.f32 %v4043, %v3103
        %v4168 = vmul.f32 %v4045, %v3104
        %v4169 = vmul.f32 %v4047, %v3105
        %v4170 = vmul.f32 %v4049, %v3106
        %v4171 = vmul.f32 %v4051, %v3107
        %v4172 = vmul.f32 %v4053, %v3108
        %v4173 = vmul.f32 %v4055, %v3109
        %v4174 = vmul.f32 %v4057, %v3110
        %v4175 = vmul.f32 %v4059, %v3111
        %v4176 = vmul.f32 %v4061, %v3112
        %v4177 = vmul.f32 %v4063, %v3113
        %v4178 = vmul.f32 %v4065, %v3114
        %v4179 = vmul.f32 %v4067, %v3115
        %v4180 = vmul.f32 %v4069, %v3116
        %v4181 = vmul.f32 %v4071, %v3117
        %v4182 = vmul.f32 %v4073, %v3118
        %v4183 = vmul.f32 %v4075, %v3119
        %v4184 = vmul.f32 %v4077, %v3120
        %v4185 = vmul.f32 %v4079, %v3121
        %v4186 = vmul.f32 %v4081, %v3122
        %v4187 = vmul.f32 %v4083, %v3123
        %v4188 = vmul.f32 %v4085, %v3124
        %v4189 = vmul.f32 %v4087, %v3125
        %v4190 = vmul.f32 %v4089, %v3126
        %v4191 = vmul.f32 %v4091, %v3127
        %v4192 = vmul.f32 %v4093, %v3128
        %v4193 = vmul.f32 %v4095, %v3129
        %v4194 = vmul.f32 %v4097, %v3130
        %v4195 = vmul.f32 %v4099, %v3131
        %v4196 = vmul.f32 %v4101, %v3132
        %v4197 = vmul.f32 %v4103, %v3133
        %v4198 = vmul.f32 %v4105, %v3134
        %v4199 = vmul.f32 %v4107, %v3135
        %v4200 = vmul.f32 %v4109, %v3136
        %v4201 = vmul.f32 %v4111, %v3137
        %v4202 = vmul.f32 %v4113, %v3138
        %v4203 = vmul.f32 %v4115, %v3139
        %v4204 = vmul.f32 %v4117, %v3140
        %v4205 = vmul.f32 %v4119, %v3141
        %v4206 = vmul.f32 %v4121, %v3142
        %v4207 = vmul.f32 %v4123, %v3143
        %v4208 = vmul.f32 %v4125, %v3144
        %v4209 = vmul.f32 %v4127, %v3145
        %v4210 = vmul.f32 %v4129, %v3146
        %v4211 = vmul.f32 %v4131, %v3147
        %v4212 = vmul.f32 %v4133, %v3148
        %v4213 = vmul.f32 %v4135, %v3149
        %v4214 = vmul.f32 %v4137, %v3150
        %v4215 = vmul.f32 %v4139, %v3151
        %v4216 = vmul.f32 %v4141, %v3152
        %v4217 = vmul.f32 %v4143, %v3153
        %v4218 = vmul.f32 %v4145, %v3154
        %v4219 = vmul.f32 %v4147, %v3155
        %v4220 = vmul.f32 %v4149, %v3156
        %v4221 = vmul.f32 %v4151, %v3157
        %v4222 = vmul.f32 %v4153, %v3158
        %v4223 = vmul.f32 %v4155, %v3159
        %v4224 = vmul.f32 %v4157, %v3160
        %v4225 = vmul.f32 %v4159, %v3161
        %v4226 = vmul.f32 %v4161, %v3162
        %v4227 = vmul.f32 %v4163, %v3163
        %v4228 = vld [vmem:[#allocation6] sm:$0xff]
        %v4229 = vld [vmem:[#allocation6 + $0x8] sm:$0xff]
        %v4230 = vld [vmem:[#allocation6 + $0x10] sm:$0xff]
        %v4231 = vld [vmem:[#allocation6 + $0x18] sm:$0xff]
        %v4232 = vld [vmem:[#allocation6 + $0x20] sm:$0xff]
        %v4233 = vld [vmem:[#allocation6 + $0x28] sm:$0xff]
        %v4234 = vld [vmem:[#allocation6 + $0x30] sm:$0xff]
        %v4235 = vld [vmem:[#allocation6 + $0x38] sm:$0xff]
        %v4236 = vld [vmem:[#allocation6 + $0x40] sm:$0xff]
        %v4237 = vld [vmem:[#allocation6 + $0x48] sm:$0xff]
        %v4238 = vld [vmem:[#allocation6 + $0x50] sm:$0xff]
        %v4239 = vld [vmem:[#allocation6 + $0x58] sm:$0xff]
        %v4240 = vld [vmem:[#allocation6 + $0x60] sm:$0xff]
        %v4241 = vld [vmem:[#allocation6 + $0x68] sm:$0xff]
        %v4242 = vld [vmem:[#allocation6 + $0x70] sm:$0xff]
        %v4243 = vld [vmem:[#allocation6 + $0x78] sm:$0xff]
        %v4244 = vld [vmem:[#allocation6 + $0x80] sm:$0xff]
        %v4245 = vld [vmem:[#allocation6 + $0x88] sm:$0xff]
        %v4246 = vld [vmem:[#allocation6 + $0x90] sm:$0xff]
        %v4247 = vld [vmem:[#allocation6 + $0x98] sm:$0xff]
        %v4248 = vld [vmem:[#allocation6 + $0xa0] sm:$0xff]
        %v4249 = vld [vmem:[#allocation6 + $0xa8] sm:$0xff]
        %v4250 = vld [vmem:[#allocation6 + $0xb0] sm:$0xff]
        %v4251 = vld [vmem:[#allocation6 + $0xb8] sm:$0xff]
        %v4252 = vld [vmem:[#allocation6 + $0xc0] sm:$0xff]
        %v4253 = vld [vmem:[#allocation6 + $0xc8] sm:$0xff]
        %v4254 = vld [vmem:[#allocation6 + $0xd0] sm:$0xff]
        %v4255 = vld [vmem:[#allocation6 + $0xd8] sm:$0xff]
        %v4256 = vld [vmem:[#allocation6 + $0xe0] sm:$0xff]
        %v4257 = vld [vmem:[#allocation6 + $0xe8] sm:$0xff]
        %v4258 = vld [vmem:[#allocation6 + $0xf0] sm:$0xff]
        %v4259 = vld [vmem:[#allocation6 + $0xf8] sm:$0xff]
        %v4260 = vmul.f32 %v3749, %v4228
        %v4261 = vmul.f32 %v3751, %v4229
        %v4262 = vmul.f32 %v3753, %v4230
        %v4263 = vmul.f32 %v3755, %v4231
        %v4264 = vmul.f32 %v3757, %v4232
        %v4265 = vmul.f32 %v3759, %v4233
        %v4266 = vmul.f32 %v3761, %v4234
        %v4267 = vmul.f32 %v3763, %v4235
        %v4268 = vmul.f32 %v3765, %v4236
        %v4269 = vmul.f32 %v3767, %v4237
        %v4270 = vmul.f32 %v3769, %v4238
        %v4271 = vmul.f32 %v3771, %v4239
        %v4272 = vmul.f32 %v3773, %v4240
        %v4273 = vmul.f32 %v3775, %v4241
        %v4274 = vmul.f32 %v3777, %v4242
        %v4275 = vmul.f32 %v3779, %v4243
        %v4276 = vmul.f32 %v3781, %v4244
        %v4277 = vmul.f32 %v3783, %v4245
        %v4278 = vmul.f32 %v3785, %v4246
        %v4279 = vmul.f32 %v3787, %v4247
        %v4280 = vmul.f32 %v3789, %v4248
        %v4281 = vmul.f32 %v3791, %v4249
        %v4282 = vmul.f32 %v3793, %v4250
        %v4283 = vmul.f32 %v3795, %v4251
        %v4284 = vmul.f32 %v3797, %v4252
        %v4285 = vmul.f32 %v3799, %v4253
        %v4286 = vmul.f32 %v3801, %v4254
        %v4287 = vmul.f32 %v3803, %v4255
        %v4288 = vmul.f32 %v3805, %v4256
        %v4289 = vmul.f32 %v3807, %v4257
        %v4290 = vmul.f32 %v3809, %v4258
        %v4291 = vmul.f32 %v3811, %v4259
        %v4292 = vadd.f32 %v4164, %v4165
        %4293 = vadd.xlane.f32.xlu0 %v4292
        %v4294 = vpop.xlane.xlu0 %4293
        %v4295 = vadd.f32 %v4166, %v4167
        %4296 = vadd.xlane.f32.xlu0 %v4295
        %v4297 = vpop.xlane.xlu0 %4296
        %v4298 = vadd.f32 %v4168, %v4169
        %4299 = vadd.xlane.f32.xlu0 %v4298
        %v4300 = vpop.xlane.xlu0 %4299
        %v4301 = vadd.f32 %v4170, %v4171
        %4302 = vadd.xlane.f32.xlu0 %v4301
        %v4303 = vpop.xlane.xlu0 %4302
        %v4304 = vadd.f32 %v4172, %v4173
        %4305 = vadd.xlane.f32.xlu0 %v4304
        %v4306 = vpop.xlane.xlu0 %4305
        %v4307 = vadd.f32 %v4174, %v4175
        %4308 = vadd.xlane.f32.xlu0 %v4307
        %v4309 = vpop.xlane.xlu0 %4308
        %v4310 = vadd.f32 %v4176, %v4177
        %4311 = vadd.xlane.f32.xlu0 %v4310
        %v4312 = vpop.xlane.xlu0 %4311
        %v4313 = vadd.f32 %v4178, %v4179
        %4314 = vadd.xlane.f32.xlu0 %v4313
        %v4315 = vpop.xlane.xlu0 %4314
        %v4316 = vadd.f32 %v4180, %v4181
        %4317 = vadd.xlane.f32.xlu0 %v4316
        %v4318 = vpop.xlane.xlu0 %4317
        %v4319 = vadd.f32 %v4182, %v4183
        %4320 = vadd.xlane.f32.xlu0 %v4319
        %v4321 = vpop.xlane.xlu0 %4320
        %v4322 = vadd.f32 %v4184, %v4185
        %4323 = vadd.xlane.f32.xlu0 %v4322
        %v4324 = vpop.xlane.xlu0 %4323
        %v4325 = vadd.f32 %v4186, %v4187
        %4326 = vadd.xlane.f32.xlu0 %v4325
        %v4327 = vpop.xlane.xlu0 %4326
        %v4328 = vadd.f32 %v4188, %v4189
        %4329 = vadd.xlane.f32.xlu0 %v4328
        %v4330 = vpop.xlane.xlu0 %4329
        %v4331 = vadd.f32 %v4190, %v4191
        %4332 = vadd.xlane.f32.xlu0 %v4331
        %v4333 = vpop.xlane.xlu0 %4332
        %v4334 = vadd.f32 %v4192, %v4193
        %4335 = vadd.xlane.f32.xlu0 %v4334
        %v4336 = vpop.xlane.xlu0 %4335
        %v4337 = vadd.f32 %v4194, %v4195
        %4338 = vadd.xlane.f32.xlu0 %v4337
        %v4339 = vpop.xlane.xlu0 %4338
        %v4340 = vadd.f32 %v4196, %v4197
        %4341 = vadd.xlane.f32.xlu0 %v4340
        %v4342 = vpop.xlane.xlu0 %4341
        %v4343 = vadd.f32 %v4198, %v4199
        %4344 = vadd.xlane.f32.xlu0 %v4343
        %v4345 = vpop.xlane.xlu0 %4344
        %v4346 = vadd.f32 %v4200, %v4201
        %4347 = vadd.xlane.f32.xlu0 %v4346
        %v4348 = vpop.xlane.xlu0 %4347
        %v4349 = vadd.f32 %v4202, %v4203
        %4350 = vadd.xlane.f32.xlu0 %v4349
        %v4351 = vpop.xlane.xlu0 %4350
        %v4352 = vadd.f32 %v4204, %v4205
        %4353 = vadd.xlane.f32.xlu0 %v4352
        %v4354 = vpop.xlane.xlu0 %4353
        %v4355 = vadd.f32 %v4206, %v4207
        %4356 = vadd.xlane.f32.xlu0 %v4355
        %v4357 = vpop.xlane.xlu0 %4356
        %v4358 = vadd.f32 %v4208, %v4209
        %4359 = vadd.xlane.f32.xlu0 %v4358
        %v4360 = vpop.xlane.xlu0 %4359
        %v4361 = vadd.f32 %v4210, %v4211
        %4362 = vadd.xlane.f32.xlu0 %v4361
        %v4363 = vpop.xlane.xlu0 %4362
        %v4364 = vadd.f32 %v4212, %v4213
        %4365 = vadd.xlane.f32.xlu0 %v4364
        %v4366 = vpop.xlane.xlu0 %4365
        %v4367 = vadd.f32 %v4214, %v4215
        %4368 = vadd.xlane.f32.xlu0 %v4367
        %v4369 = vpop.xlane.xlu0 %4368
        %v4370 = vadd.f32 %v4216, %v4217
        %4371 = vadd.xlane.f32.xlu0 %v4370
        %v4372 = vpop.xlane.xlu0 %4371
        %v4373 = vadd.f32 %v4218, %v4219
        %4374 = vadd.xlane.f32.xlu0 %v4373
        %v4375 = vpop.xlane.xlu0 %4374
        %v4376 = vadd.f32 %v4220, %v4221
        %4377 = vadd.xlane.f32.xlu0 %v4376
        %v4378 = vpop.xlane.xlu0 %4377
        %v4379 = vadd.f32 %v4222, %v4223
        %4380 = vadd.xlane.f32.xlu0 %v4379
        %v4381 = vpop.xlane.xlu0 %4380
        %v4382 = vadd.f32 %v4224, %v4225
        %4383 = vadd.xlane.f32.xlu0 %v4382
        %v4384 = vpop.xlane.xlu0 %4383
        %v4385 = vadd.f32 %v4226, %v4227
        %4386 = vadd.xlane.f32.xlu0 %v4385
        %v4387 = vpop.xlane.xlu0 %4386
        %v4388 = vadd.f32 %v4260, %v4294
        %v4389 = vadd.f32 %v4261, %v4297
        %v4390 = vadd.f32 %v4262, %v4300
        %v4391 = vadd.f32 %v4263, %v4303
        %v4392 = vadd.f32 %v4264, %v4306
        %v4393 = vadd.f32 %v4265, %v4309
        %v4394 = vadd.f32 %v4266, %v4312
        %v4395 = vadd.f32 %v4267, %v4315
        %v4396 = vadd.f32 %v4268, %v4318
        %v4397 = vadd.f32 %v4269, %v4321
        %v4398 = vadd.f32 %v4270, %v4324
        %v4399 = vadd.f32 %v4271, %v4327
        %v4400 = vadd.f32 %v4272, %v4330
        %v4401 = vadd.f32 %v4273, %v4333
        %v4402 = vadd.f32 %v4274, %v4336
        %v4403 = vadd.f32 %v4275, %v4339
        %v4404 = vadd.f32 %v4276, %v4342
        %v4405 = vadd.f32 %v4277, %v4345
        %v4406 = vadd.f32 %v4278, %v4348
        %v4407 = vadd.f32 %v4279, %v4351
        %v4408 = vadd.f32 %v4280, %v4354
        %v4409 = vadd.f32 %v4281, %v4357
        %v4410 = vadd.f32 %v4282, %v4360
        %v4411 = vadd.f32 %v4283, %v4363
        %v4412 = vadd.f32 %v4284, %v4366
        %v4413 = vadd.f32 %v4285, %v4369
        %v4414 = vadd.f32 %v4286, %v4372
        %v4415 = vadd.f32 %v4287, %v4375
        %v4416 = vadd.f32 %v4288, %v4378
        %v4417 = vadd.f32 %v4289, %v4381
        %v4418 = vadd.f32 %v4290, %v4384
        %v4419 = vadd.f32 %v4291, %v4387
        %4420 = vst.msk [vmem:[#allocation6] sm:$0xff] %vm2266, %v4388
        %4421 = vst.msk [vmem:[#allocation6 + $0x8] sm:$0xff] %vm2266, %v4389
        %4422 = vst.msk [vmem:[#allocation6 + $0x10] sm:$0xff] %vm2266, %v4390
        %4423 = vst.msk [vmem:[#allocation6 + $0x18] sm:$0xff] %vm2266, %v4391
        %4424 = vst.msk [vmem:[#allocation6 + $0x20] sm:$0xff] %vm2266, %v4392
        %4425 = vst.msk [vmem:[#allocation6 + $0x28] sm:$0xff] %vm2266, %v4393
        %4426 = vst.msk [vmem:[#allocation6 + $0x30] sm:$0xff] %vm2266, %v4394
        %4427 = vst.msk [vmem:[#allocation6 + $0x38] sm:$0xff] %vm2266, %v4395
        %4428 = vst.msk [vmem:[#allocation6 + $0x40] sm:$0xff] %vm2266, %v4396
        %4429 = vst.msk [vmem:[#allocation6 + $0x48] sm:$0xff] %vm2266, %v4397
        %4430 = vst.msk [vmem:[#allocation6 + $0x50] sm:$0xff] %vm2266, %v4398
        %4431 = vst.msk [vmem:[#allocation6 + $0x58] sm:$0xff] %vm2266, %v4399
        %4432 = vst.msk [vmem:[#allocation6 + $0x60] sm:$0xff] %vm2266, %v4400
        %4433 = vst.msk [vmem:[#allocation6 + $0x68] sm:$0xff] %vm2266, %v4401
        %4434 = vst.msk [vmem:[#allocation6 + $0x70] sm:$0xff] %vm2266, %v4402
        %4435 = vst.msk [vmem:[#allocation6 + $0x78] sm:$0xff] %vm2266, %v4403
        %4436 = vst.msk [vmem:[#allocation6 + $0x80] sm:$0xff] %vm2266, %v4404
        %4437 = vst.msk [vmem:[#allocation6 + $0x88] sm:$0xff] %vm2266, %v4405
        %4438 = vst.msk [vmem:[#allocation6 + $0x90] sm:$0xff] %vm2266, %v4406
        %4439 = vst.msk [vmem:[#allocation6 + $0x98] sm:$0xff] %vm2266, %v4407
        %4440 = vst.msk [vmem:[#allocation6 + $0xa0] sm:$0xff] %vm2266, %v4408
        %4441 = vst.msk [vmem:[#allocation6 + $0xa8] sm:$0xff] %vm2266, %v4409
        %4442 = vst.msk [vmem:[#allocation6 + $0xb0] sm:$0xff] %vm2266, %v4410
        %4443 = vst.msk [vmem:[#allocation6 + $0xb8] sm:$0xff] %vm2266, %v4411
        %4444 = vst.msk [vmem:[#allocation6 + $0xc0] sm:$0xff] %vm2266, %v4412
        %4445 = vst.msk [vmem:[#allocation6 + $0xc8] sm:$0xff] %vm2266, %v4413
        %4446 = vst.msk [vmem:[#allocation6 + $0xd0] sm:$0xff] %vm2266, %v4414
        %4447 = vst.msk [vmem:[#allocation6 + $0xd8] sm:$0xff] %vm2266, %v4415
        %4448 = vst.msk [vmem:[#allocation6 + $0xe0] sm:$0xff] %vm2266, %v4416
        %4449 = vst.msk [vmem:[#allocation6 + $0xe8] sm:$0xff] %vm2266, %v4417
        %4450 = vst.msk [vmem:[#allocation6 + $0xf0] sm:$0xff] %vm2266, %v4418
        %4451 = vst.msk [vmem:[#allocation6 + $0xf8] sm:$0xff] %vm2266, %v4419
        %v4452 = vld [vmem:[#allocation7] sm:$0xff]
        %v4453 = vld [vmem:[#allocation7 + $0x8] sm:$0xff]
        %v4454 = vld [vmem:[#allocation7 + $0x10] sm:$0xff]
        %v4455 = vld [vmem:[#allocation7 + $0x18] sm:$0xff]
        %v4456 = vld [vmem:[#allocation7 + $0x20] sm:$0xff]
        %v4457 = vld [vmem:[#allocation7 + $0x28] sm:$0xff]
        %v4458 = vld [vmem:[#allocation7 + $0x30] sm:$0xff]
        %v4459 = vld [vmem:[#allocation7 + $0x38] sm:$0xff]
        %v4460 = vld [vmem:[#allocation7 + $0x40] sm:$0xff]
        %v4461 = vld [vmem:[#allocation7 + $0x48] sm:$0xff]
        %v4462 = vld [vmem:[#allocation7 + $0x50] sm:$0xff]
        %v4463 = vld [vmem:[#allocation7 + $0x58] sm:$0xff]
        %v4464 = vld [vmem:[#allocation7 + $0x60] sm:$0xff]
        %v4465 = vld [vmem:[#allocation7 + $0x68] sm:$0xff]
        %v4466 = vld [vmem:[#allocation7 + $0x70] sm:$0xff]
        %v4467 = vld [vmem:[#allocation7 + $0x78] sm:$0xff]
        %v4468 = vld [vmem:[#allocation7 + $0x80] sm:$0xff]
        %v4469 = vld [vmem:[#allocation7 + $0x88] sm:$0xff]
        %v4470 = vld [vmem:[#allocation7 + $0x90] sm:$0xff]
        %v4471 = vld [vmem:[#allocation7 + $0x98] sm:$0xff]
        %v4472 = vld [vmem:[#allocation7 + $0xa0] sm:$0xff]
        %v4473 = vld [vmem:[#allocation7 + $0xa8] sm:$0xff]
        %v4474 = vld [vmem:[#allocation7 + $0xb0] sm:$0xff]
        %v4475 = vld [vmem:[#allocation7 + $0xb8] sm:$0xff]
        %v4476 = vld [vmem:[#allocation7 + $0xc0] sm:$0xff]
        %v4477 = vld [vmem:[#allocation7 + $0xc8] sm:$0xff]
        %v4478 = vld [vmem:[#allocation7 + $0xd0] sm:$0xff]
        %v4479 = vld [vmem:[#allocation7 + $0xd8] sm:$0xff]
        %v4480 = vld [vmem:[#allocation7 + $0xe0] sm:$0xff]
        %v4481 = vld [vmem:[#allocation7 + $0xe8] sm:$0xff]
        %v4482 = vld [vmem:[#allocation7 + $0xf0] sm:$0xff]
        %v4483 = vld [vmem:[#allocation7 + $0xf8] sm:$0xff]
        %4485 = vset.pattern.permute.xlu0 0
        %4486 = vperm.xlu0 %4485, %v3749
        %v4487 = vpop.permute.xlu0 %4486
        %4490 = vset.pattern.permute.xlu0 0
        %4491 = vperm.xlu0 %4490, %v3751
        %v4492 = vpop.permute.xlu0 %4491
        %4495 = vset.pattern.permute.xlu0 0
        %4496 = vperm.xlu0 %4495, %v3753
        %v4497 = vpop.permute.xlu0 %4496
        %4500 = vset.pattern.permute.xlu0 0
        %4501 = vperm.xlu0 %4500, %v3755
        %v4502 = vpop.permute.xlu0 %4501
        %4505 = vset.pattern.permute.xlu0 0
        %4506 = vperm.xlu0 %4505, %v3757
        %v4507 = vpop.permute.xlu0 %4506
        %4510 = vset.pattern.permute.xlu0 0
        %4511 = vperm.xlu0 %4510, %v3759
        %v4512 = vpop.permute.xlu0 %4511
        %4515 = vset.pattern.permute.xlu0 0
        %4516 = vperm.xlu0 %4515, %v3761
        %v4517 = vpop.permute.xlu0 %4516
        %4520 = vset.pattern.permute.xlu0 0
        %4521 = vperm.xlu0 %4520, %v3763
        %v4522 = vpop.permute.xlu0 %4521
        %4525 = vset.pattern.permute.xlu0 0
        %4526 = vperm.xlu0 %4525, %v3765
        %v4527 = vpop.permute.xlu0 %4526
        %4530 = vset.pattern.permute.xlu0 0
        %4531 = vperm.xlu0 %4530, %v3767
        %v4532 = vpop.permute.xlu0 %4531
        %4535 = vset.pattern.permute.xlu0 0
        %4536 = vperm.xlu0 %4535, %v3769
        %v4537 = vpop.permute.xlu0 %4536
        %4540 = vset.pattern.permute.xlu0 0
        %4541 = vperm.xlu0 %4540, %v3771
        %v4542 = vpop.permute.xlu0 %4541
        %4545 = vset.pattern.permute.xlu0 0
        %4546 = vperm.xlu0 %4545, %v3773
        %v4547 = vpop.permute.xlu0 %4546
        %4550 = vset.pattern.permute.xlu0 0
        %4551 = vperm.xlu0 %4550, %v3775
        %v4552 = vpop.permute.xlu0 %4551
        %4555 = vset.pattern.permute.xlu0 0
        %4556 = vperm.xlu0 %4555, %v3777
        %v4557 = vpop.permute.xlu0 %4556
        %4560 = vset.pattern.permute.xlu0 0
        %4561 = vperm.xlu0 %4560, %v3779
        %v4562 = vpop.permute.xlu0 %4561
        %4565 = vset.pattern.permute.xlu0 0
        %4566 = vperm.xlu0 %4565, %v3781
        %v4567 = vpop.permute.xlu0 %4566
        %4570 = vset.pattern.permute.xlu0 0
        %4571 = vperm.xlu0 %4570, %v3783
        %v4572 = vpop.permute.xlu0 %4571
        %4575 = vset.pattern.permute.xlu0 0
        %4576 = vperm.xlu0 %4575, %v3785
        %v4577 = vpop.permute.xlu0 %4576
        %4580 = vset.pattern.permute.xlu0 0
        %4581 = vperm.xlu0 %4580, %v3787
        %v4582 = vpop.permute.xlu0 %4581
        %4585 = vset.pattern.permute.xlu0 0
        %4586 = vperm.xlu0 %4585, %v3789
        %v4587 = vpop.permute.xlu0 %4586
        %4590 = vset.pattern.permute.xlu0 0
        %4591 = vperm.xlu0 %4590, %v3791
        %v4592 = vpop.permute.xlu0 %4591
        %4595 = vset.pattern.permute.xlu0 0
        %4596 = vperm.xlu0 %4595, %v3793
        %v4597 = vpop.permute.xlu0 %4596
        %4600 = vset.pattern.permute.xlu0 0
        %4601 = vperm.xlu0 %4600, %v3795
        %v4602 = vpop.permute.xlu0 %4601
        %4605 = vset.pattern.permute.xlu0 0
        %4606 = vperm.xlu0 %4605, %v3797
        %v4607 = vpop.permute.xlu0 %4606
        %4610 = vset.pattern.permute.xlu0 0
        %4611 = vperm.xlu0 %4610, %v3799
        %v4612 = vpop.permute.xlu0 %4611
        %4615 = vset.pattern.permute.xlu0 0
        %4616 = vperm.xlu0 %4615, %v3801
        %v4617 = vpop.permute.xlu0 %4616
        %4620 = vset.pattern.permute.xlu0 0
        %4621 = vperm.xlu0 %4620, %v3803
        %v4622 = vpop.permute.xlu0 %4621
        %4625 = vset.pattern.permute.xlu0 0
        %4626 = vperm.xlu0 %4625, %v3805
        %v4627 = vpop.permute.xlu0 %4626
        %4630 = vset.pattern.permute.xlu0 0
        %4631 = vperm.xlu0 %4630, %v3807
        %v4632 = vpop.permute.xlu0 %4631
        %4635 = vset.pattern.permute.xlu0 0
        %4636 = vperm.xlu0 %4635, %v3809
        %v4637 = vpop.permute.xlu0 %4636
        %4640 = vset.pattern.permute.xlu0 0
        %4641 = vperm.xlu0 %4640, %v3811
        %v4642 = vpop.permute.xlu0 %4641
        %v4644 = vmul.f32 %v4487, %v4452
        %v4645 = vmul.f32 %v4492, %v4453
        %v4646 = vmul.f32 %v4497, %v4454
        %v4647 = vmul.f32 %v4502, %v4455
        %v4648 = vmul.f32 %v4507, %v4456
        %v4649 = vmul.f32 %v4512, %v4457
        %v4650 = vmul.f32 %v4517, %v4458
        %v4651 = vmul.f32 %v4522, %v4459
        %v4652 = vmul.f32 %v4527, %v4460
        %v4653 = vmul.f32 %v4532, %v4461
        %v4654 = vmul.f32 %v4537, %v4462
        %v4655 = vmul.f32 %v4542, %v4463
        %v4656 = vmul.f32 %v4547, %v4464
        %v4657 = vmul.f32 %v4552, %v4465
        %v4658 = vmul.f32 %v4557, %v4466
        %v4659 = vmul.f32 %v4562, %v4467
        %v4660 = vmul.f32 %v4567, %v4468
        %v4661 = vmul.f32 %v4572, %v4469
        %v4662 = vmul.f32 %v4577, %v4470
        %v4663 = vmul.f32 %v4582, %v4471
        %v4664 = vmul.f32 %v4587, %v4472
        %v4665 = vmul.f32 %v4592, %v4473
        %v4666 = vmul.f32 %v4597, %v4474
        %v4667 = vmul.f32 %v4602, %v4475
        %v4668 = vmul.f32 %v4607, %v4476
        %v4669 = vmul.f32 %v4612, %v4477
        %v4670 = vmul.f32 %v4617, %v4478
        %v4671 = vmul.f32 %v4622, %v4479
        %v4672 = vmul.f32 %v4627, %v4480
        %v4673 = vmul.f32 %v4632, %v4481
        %v4674 = vmul.f32 %v4637, %v4482
        %v4675 = vmul.f32 %v4642, %v4483
        %v4676 = vpack.c.bf16 %v4166, %v4164
        %v4677 = vpack.c.bf16 %v4167, %v4165
        %v4678 = vpack.c.bf16 %v4170, %v4168
        %v4679 = vpack.c.bf16 %v4171, %v4169
        %v4680 = vpack.c.bf16 %v4174, %v4172
        %v4681 = vpack.c.bf16 %v4175, %v4173
        %v4682 = vpack.c.bf16 %v4178, %v4176
        %v4683 = vpack.c.bf16 %v4179, %v4177
        %v4684 = vpack.c.bf16 %v4182, %v4180
        %v4685 = vpack.c.bf16 %v4183, %v4181
        %v4686 = vpack.c.bf16 %v4186, %v4184
        %v4687 = vpack.c.bf16 %v4187, %v4185
        %v4688 = vpack.c.bf16 %v4190, %v4188
        %v4689 = vpack.c.bf16 %v4191, %v4189
        %v4690 = vpack.c.bf16 %v4194, %v4192
        %v4691 = vpack.c.bf16 %v4195, %v4193
        %v4692 = vpack.c.bf16 %v4198, %v4196
        %v4693 = vpack.c.bf16 %v4199, %v4197
        %v4694 = vpack.c.bf16 %v4202, %v4200
        %v4695 = vpack.c.bf16 %v4203, %v4201
        %v4696 = vpack.c.bf16 %v4206, %v4204
        %v4697 = vpack.c.bf16 %v4207, %v4205
        %v4698 = vpack.c.bf16 %v4210, %v4208
        %v4699 = vpack.c.bf16 %v4211, %v4209
        %v4700 = vpack.c.bf16 %v4214, %v4212
        %v4701 = vpack.c.bf16 %v4215, %v4213
        %v4702 = vpack.c.bf16 %v4218, %v4216
        %v4703 = vpack.c.bf16 %v4219, %v4217
        %v4704 = vpack.c.bf16 %v4222, %v4220
        %v4705 = vpack.c.bf16 %v4223, %v4221
        %v4706 = vpack.c.bf16 %v4226, %v4224
        %v4707 = vpack.c.bf16 %v4227, %v4225
        %v4708 = vunpack.c.h.b16 %v576
        %v4709 = vunpack.c.h.b16 %v577
        %v4710 = vunpack.c.h.b16 %v578
        %v4711 = vunpack.c.h.b16 %v579
        %v4712 = vunpack.c.h.b16 %v580
        %v4713 = vunpack.c.h.b16 %v581
        %v4714 = vunpack.c.h.b16 %v582
        %v4715 = vunpack.c.h.b16 %v583
        %v4716 = vunpack.c.h.b16 %v584
        %v4717 = vunpack.c.h.b16 %v585
        %v4718 = vunpack.c.h.b16 %v586
        %v4719 = vunpack.c.h.b16 %v587
        %v4720 = vunpack.c.h.b16 %v588
        %v4721 = vunpack.c.h.b16 %v589
        %v4722 = vunpack.c.h.b16 %v590
        %v4723 = vunpack.c.h.b16 %v591
        %v4724 = vunpack.c.h.b16 %v592
        %v4725 = vunpack.c.h.b16 %v593
        %v4726 = vunpack.c.h.b16 %v594
        %v4727 = vunpack.c.h.b16 %v595
        %v4728 = vunpack.c.h.b16 %v596
        %v4729 = vunpack.c.h.b16 %v597
        %v4730 = vunpack.c.h.b16 %v598
        %v4731 = vunpack.c.h.b16 %v599
        %v4732 = vunpack.c.h.b16 %v600
        %v4733 = vunpack.c.h.b16 %v601
        %v4734 = vunpack.c.h.b16 %v602
        %v4735 = vunpack.c.h.b16 %v603
        %v4736 = vunpack.c.h.b16 %v604
        %v4737 = vunpack.c.h.b16 %v605
        %v4738 = vunpack.c.h.b16 %v606
        %v4739 = vunpack.c.h.b16 %v607
        %v4740 = vpack.c.b16 %v4709, %v4708
        %v4741 = vpack.c.b16 %v4711, %v4710
        %v4742 = vpack.c.b16 %v4713, %v4712
        %v4743 = vpack.c.b16 %v4715, %v4714
        %v4744 = vpack.c.b16 %v4717, %v4716
        %v4745 = vpack.c.b16 %v4719, %v4718
        %v4746 = vpack.c.b16 %v4721, %v4720
        %v4747 = vpack.c.b16 %v4723, %v4722
        %v4748 = vpack.c.b16 %v4725, %v4724
        %v4749 = vpack.c.b16 %v4727, %v4726
        %v4750 = vpack.c.b16 %v4729, %v4728
        %v4751 = vpack.c.b16 %v4731, %v4730
        %v4752 = vpack.c.b16 %v4733, %v4732
        %v4753 = vpack.c.b16 %v4735, %v4734
        %v4754 = vpack.c.b16 %v4737, %v4736
        %v4755 = vpack.c.b16 %v4739, %v4738
        %4772 = vmatprep.subr.bf16.mxu0 0
        %4773 = vmatpush1.bf16.msra.mxu0 %v4747
        %4774 = vmatprep.subr.bf16.mxu0 0
        %4775 = vmatpush1.bf16.msra.mxu0 %v4746
        %4776 = vmatprep.subr.bf16.mxu0 0
        %4777 = vmatpush1.bf16.msra.mxu0 %v4745
        %4778 = vmatprep.subr.bf16.mxu0 0
        %4779 = vmatpush1.bf16.msra.mxu0 %v4744
        %4780 = vmatprep.subr.bf16.mxu0 0
        %4781 = vmatpush1.bf16.msra.mxu0 %v4743
        %4782 = vmatprep.subr.bf16.mxu0 0
        %4783 = vmatpush1.bf16.msra.mxu0 %v4742
        %4784 = vmatprep.subr.bf16.mxu0 0
        %4785 = vmatpush1.bf16.msra.mxu0 %v4741
        %4786 = vmatprep.subr.bf16.mxu0 0
        %4787 = vmatpush1.bf16.msra.mxu0 %v4740
        %4788 = vmatprep.subr.bf16.mxu0 0
        %4789 = vmatpush2.bf16.msra.mxu0 %v4755
        %4790 = vmatprep.subr.bf16.mxu0 0
        %4791 = vmatpush2.bf16.msra.mxu0 %v4754
        %4792 = vmatprep.subr.bf16.mxu0 0
        %4793 = vmatpush2.bf16.msra.mxu0 %v4753
        %4794 = vmatprep.subr.bf16.mxu0 0
        %4795 = vmatpush2.bf16.msra.mxu0 %v4752
        %4796 = vmatprep.subr.bf16.mxu0 0
        %4797 = vmatpush2.bf16.msra.mxu0 %v4751
        %4798 = vmatprep.subr.bf16.mxu0 0
        %4799 = vmatpush2.bf16.msra.mxu0 %v4750
        %4800 = vmatprep.subr.bf16.mxu0 0
        %4801 = vmatpush2.bf16.msra.mxu0 %v4749
        %4802 = vmatprep.subr.bf16.mxu0 0
        %4803 = vmatpush2.bf16.msra.mxu0 %v4748
        %4804 = vmatprep.mubr.bf16.mxu0 %v4677
        %4805 = vmatmul.mubr.bf16.gmra.mxu0 %v4676
        %v4806 = vpop.f32.mrf.mxu0
        %v4807 = vadd.f32 0.0, %v4806
        %v4808 = vpop.f32.mrf.mxu0
        %v4809 = vpop.f32.mrf.mxu0
        %v4810 = vadd.f32 0.0, %v4809
        %v4811 = vpop.f32.mrf.mxu0
        %4812 = vmatprep.mubr.bf16.mxu0 %v4679
        %4813 = vmatmul.mubr.bf16.gmra.mxu0 %v4678
        %v4814 = vpop.f32.mrf.mxu0
        %v4815 = vadd.f32 0.0, %v4814
        %v4816 = vpop.f32.mrf.mxu0
        %v4817 = vpop.f32.mrf.mxu0
        %v4818 = vadd.f32 0.0, %v4817
        %v4819 = vpop.f32.mrf.mxu0
        %4820 = vmatprep.mubr.bf16.mxu0 %v4681
        %4821 = vmatmul.mubr.bf16.gmra.mxu0 %v4680
        %v4822 = vpop.f32.mrf.mxu0
        %v4823 = vadd.f32 0.0, %v4822
        %v4824 = vpop.f32.mrf.mxu0
        %v4825 = vpop.f32.mrf.mxu0
        %v4826 = vadd.f32 0.0, %v4825
        %v4827 = vpop.f32.mrf.mxu0
        %4828 = vmatprep.mubr.bf16.mxu0 %v4683
        %4829 = vmatmul.mubr.bf16.gmra.mxu0 %v4682
        %v4830 = vpop.f32.mrf.mxu0
        %v4831 = vadd.f32 0.0, %v4830
        %v4832 = vpop.f32.mrf.mxu0
        %v4833 = vpop.f32.mrf.mxu0
        %v4834 = vadd.f32 0.0, %v4833
        %v4835 = vpop.f32.mrf.mxu0
        %4836 = vmatprep.mubr.bf16.mxu0 %v4685
        %4837 = vmatmul.mubr.bf16.gmra.mxu0 %v4684
        %v4838 = vpop.f32.mrf.mxu0
        %v4839 = vadd.f32 0.0, %v4838
        %v4840 = vpop.f32.mrf.mxu0
        %v4841 = vpop.f32.mrf.mxu0
        %v4842 = vadd.f32 0.0, %v4841
        %v4843 = vpop.f32.mrf.mxu0
        %4844 = vmatprep.mubr.bf16.mxu0 %v4687
        %4845 = vmatmul.mubr.bf16.gmra.mxu0 %v4686
        %v4846 = vpop.f32.mrf.mxu0
        %v4847 = vadd.f32 0.0, %v4846
        %v4848 = vpop.f32.mrf.mxu0
        %v4849 = vpop.f32.mrf.mxu0
        %v4850 = vadd.f32 0.0, %v4849
        %v4851 = vpop.f32.mrf.mxu0
        %4852 = vmatprep.mubr.bf16.mxu0 %v4689
        %4853 = vmatmul.mubr.bf16.gmra.mxu0 %v4688
        %v4854 = vpop.f32.mrf.mxu0
        %v4855 = vadd.f32 0.0, %v4854
        %v4856 = vpop.f32.mrf.mxu0
        %v4857 = vpop.f32.mrf.mxu0
        %v4858 = vadd.f32 0.0, %v4857
        %v4859 = vpop.f32.mrf.mxu0
        %4860 = vmatprep.mubr.bf16.mxu0 %v4691
        %4861 = vmatmul.mubr.bf16.gmra.mxu0 %v4690
        %v4862 = vpop.f32.mrf.mxu0
        %v4863 = vadd.f32 0.0, %v4862
        %v4864 = vpop.f32.mrf.mxu0
        %v4865 = vpop.f32.mrf.mxu0
        %v4866 = vadd.f32 0.0, %v4865
        %v4867 = vpop.f32.mrf.mxu0
        %4868 = vmatprep.mubr.bf16.mxu0 %v4693
        %4869 = vmatmul.mubr.bf16.gmra.mxu0 %v4692
        %v4870 = vpop.f32.mrf.mxu0
        %v4871 = vadd.f32 0.0, %v4870
        %v4872 = vpop.f32.mrf.mxu0
        %v4873 = vpop.f32.mrf.mxu0
        %v4874 = vadd.f32 0.0, %v4873
        %v4875 = vpop.f32.mrf.mxu0
        %4876 = vmatprep.mubr.bf16.mxu0 %v4695
        %4877 = vmatmul.mubr.bf16.gmra.mxu0 %v4694
        %v4878 = vpop.f32.mrf.mxu0
        %v4879 = vadd.f32 0.0, %v4878
        %v4880 = vpop.f32.mrf.mxu0
        %v4881 = vpop.f32.mrf.mxu0
        %v4882 = vadd.f32 0.0, %v4881
        %v4883 = vpop.f32.mrf.mxu0
        %4884 = vmatprep.mubr.bf16.mxu0 %v4697
        %4885 = vmatmul.mubr.bf16.gmra.mxu0 %v4696
        %v4886 = vpop.f32.mrf.mxu0
        %v4887 = vadd.f32 0.0, %v4886
        %v4888 = vpop.f32.mrf.mxu0
        %v4889 = vpop.f32.mrf.mxu0
        %v4890 = vadd.f32 0.0, %v4889
        %v4891 = vpop.f32.mrf.mxu0
        %4892 = vmatprep.mubr.bf16.mxu0 %v4699
        %4893 = vmatmul.mubr.bf16.gmra.mxu0 %v4698
        %v4894 = vpop.f32.mrf.mxu0
        %v4895 = vadd.f32 0.0, %v4894
        %v4896 = vpop.f32.mrf.mxu0
        %v4897 = vpop.f32.mrf.mxu0
        %v4898 = vadd.f32 0.0, %v4897
        %v4899 = vpop.f32.mrf.mxu0
        %4900 = vmatprep.mubr.bf16.mxu0 %v4701
        %4901 = vmatmul.mubr.bf16.gmra.mxu0 %v4700
        %v4902 = vpop.f32.mrf.mxu0
        %v4903 = vadd.f32 0.0, %v4902
        %v4904 = vpop.f32.mrf.mxu0
        %v4905 = vpop.f32.mrf.mxu0
        %v4906 = vadd.f32 0.0, %v4905
        %v4907 = vpop.f32.mrf.mxu0
        %4908 = vmatprep.mubr.bf16.mxu0 %v4703
        %4909 = vmatmul.mubr.bf16.gmra.mxu0 %v4702
        %v4910 = vpop.f32.mrf.mxu0
        %v4911 = vadd.f32 0.0, %v4910
        %v4912 = vpop.f32.mrf.mxu0
        %v4913 = vpop.f32.mrf.mxu0
        %v4914 = vadd.f32 0.0, %v4913
        %v4915 = vpop.f32.mrf.mxu0
        %4916 = vmatprep.mubr.bf16.mxu0 %v4705
        %4917 = vmatmul.mubr.bf16.gmra.mxu0 %v4704
        %v4918 = vpop.f32.mrf.mxu0
        %v4919 = vadd.f32 0.0, %v4918
        %v4920 = vpop.f32.mrf.mxu0
        %v4921 = vpop.f32.mrf.mxu0
        %v4922 = vadd.f32 0.0, %v4921
        %v4923 = vpop.f32.mrf.mxu0
        %4924 = vmatprep.mubr.bf16.mxu0 %v4707
        %4925 = vmatmul.mubr.bf16.gmra.mxu0 %v4706
        %v4926 = vpop.f32.mrf.mxu0
        %v4927 = vadd.f32 0.0, %v4926
        %v4928 = vpop.f32.mrf.mxu0
        %v4929 = vpop.f32.mrf.mxu0
        %v4930 = vadd.f32 0.0, %v4929
        %v4931 = vpop.f32.mrf.mxu0
        %4932 = vdwg.mxu0
        %v4933 = vadd.f32 %v4644, %v4807
        %v4934 = vadd.f32 %v4645, %v4810
        %v4935 = vadd.f32 %v4646, %v4815
        %v4936 = vadd.f32 %v4647, %v4818
        %v4937 = vadd.f32 %v4648, %v4823
        %v4938 = vadd.f32 %v4649, %v4826
        %v4939 = vadd.f32 %v4650, %v4831
        %v4940 = vadd.f32 %v4651, %v4834
        %v4941 = vadd.f32 %v4652, %v4839
        %v4942 = vadd.f32 %v4653, %v4842
        %v4943 = vadd.f32 %v4654, %v4847
        %v4944 = vadd.f32 %v4655, %v4850
        %v4945 = vadd.f32 %v4656, %v4855
        %v4946 = vadd.f32 %v4657, %v4858
        %v4947 = vadd.f32 %v4658, %v4863
        %v4948 = vadd.f32 %v4659, %v4866
        %v4949 = vadd.f32 %v4660, %v4871
        %v4950 = vadd.f32 %v4661, %v4874
        %v4951 = vadd.f32 %v4662, %v4879
        %v4952 = vadd.f32 %v4663, %v4882
        %v4953 = vadd.f32 %v4664, %v4887
        %v4954 = vadd.f32 %v4665, %v4890
        %v4955 = vadd.f32 %v4666, %v4895
        %v4956 = vadd.f32 %v4667, %v4898
        %v4957 = vadd.f32 %v4668, %v4903
        %v4958 = vadd.f32 %v4669, %v4906
        %v4959 = vadd.f32 %v4670, %v4911
        %v4960 = vadd.f32 %v4671, %v4914
        %v4961 = vadd.f32 %v4672, %v4919
        %v4962 = vadd.f32 %v4673, %v4922
        %v4963 = vadd.f32 %v4674, %v4927
        %v4964 = vadd.f32 %v4675, %v4930
        %4965 = vst [vmem:[#allocation7] sm:$0xff] %v4933
        %4966 = vst [vmem:[#allocation7 + $0x8] sm:$0xff] %v4934
        %4967 = vst [vmem:[#allocation7 + $0x10] sm:$0xff] %v4935
        %4968 = vst [vmem:[#allocation7 + $0x18] sm:$0xff] %v4936
        %4969 = vst [vmem:[#allocation7 + $0x20] sm:$0xff] %v4937
        %4970 = vst [vmem:[#allocation7 + $0x28] sm:$0xff] %v4938
        %4971 = vst [vmem:[#allocation7 + $0x30] sm:$0xff] %v4939
        %4972 = vst [vmem:[#allocation7 + $0x38] sm:$0xff] %v4940
        %4973 = vst [vmem:[#allocation7 + $0x40] sm:$0xff] %v4941
        %4974 = vst [vmem:[#allocation7 + $0x48] sm:$0xff] %v4942
        %4975 = vst [vmem:[#allocation7 + $0x50] sm:$0xff] %v4943
        %4976 = vst [vmem:[#allocation7 + $0x58] sm:$0xff] %v4944
        %4977 = vst [vmem:[#allocation7 + $0x60] sm:$0xff] %v4945
        %4978 = vst [vmem:[#allocation7 + $0x68] sm:$0xff] %v4946
        %4979 = vst [vmem:[#allocation7 + $0x70] sm:$0xff] %v4947
        %4980 = vst [vmem:[#allocation7 + $0x78] sm:$0xff] %v4948
        %4981 = vst [vmem:[#allocation7 + $0x80] sm:$0xff] %v4949
        %4982 = vst [vmem:[#allocation7 + $0x88] sm:$0xff] %v4950
        %4983 = vst [vmem:[#allocation7 + $0x90] sm:$0xff] %v4951
        %4984 = vst [vmem:[#allocation7 + $0x98] sm:$0xff] %v4952
        %4985 = vst [vmem:[#allocation7 + $0xa0] sm:$0xff] %v4953
        %4986 = vst [vmem:[#allocation7 + $0xa8] sm:$0xff] %v4954
        %4987 = vst [vmem:[#allocation7 + $0xb0] sm:$0xff] %v4955
        %4988 = vst [vmem:[#allocation7 + $0xb8] sm:$0xff] %v4956
        %4989 = vst [vmem:[#allocation7 + $0xc0] sm:$0xff] %v4957
        %4990 = vst [vmem:[#allocation7 + $0xc8] sm:$0xff] %v4958
        %4991 = vst [vmem:[#allocation7 + $0xd0] sm:$0xff] %v4959
        %4992 = vst [vmem:[#allocation7 + $0xd8] sm:$0xff] %v4960
        %4993 = vst [vmem:[#allocation7 + $0xe0] sm:$0xff] %v4961
        %4994 = vst [vmem:[#allocation7 + $0xe8] sm:$0xff] %v4962
        %4995 = vst [vmem:[#allocation7 + $0xf0] sm:$0xff] %v4963
        %4996 = vst [vmem:[#allocation7 + $0xf8] sm:$0xff] %v4964
        %4997 = vst.msk [vmem:[#allocation5] sm:$0xff] %vm2266, %v3684
        %4998 = vst.msk [vmem:[#allocation5 + $0x8] sm:$0xff] %vm2266, %v3685
        %4999 = vst.msk [vmem:[#allocation5 + $0x10] sm:$0xff] %vm2266, %v3686
        %5000 = vst.msk [vmem:[#allocation5 + $0x18] sm:$0xff] %vm2266, %v3687
        %5001 = vst.msk [vmem:[#allocation5 + $0x20] sm:$0xff] %vm2266, %v3688
        %5002 = vst.msk [vmem:[#allocation5 + $0x28] sm:$0xff] %vm2266, %v3689
        %5003 = vst.msk [vmem:[#allocation5 + $0x30] sm:$0xff] %vm2266, %v3690
        %5004 = vst.msk [vmem:[#allocation5 + $0x38] sm:$0xff] %vm2266, %v3691
        %5005 = vst.msk [vmem:[#allocation5 + $0x40] sm:$0xff] %vm2266, %v3692
        %5006 = vst.msk [vmem:[#allocation5 + $0x48] sm:$0xff] %vm2266, %v3693
        %5007 = vst.msk [vmem:[#allocation5 + $0x50] sm:$0xff] %vm2266, %v3694
        %5008 = vst.msk [vmem:[#allocation5 + $0x58] sm:$0xff] %vm2266, %v3695
        %5009 = vst.msk [vmem:[#allocation5 + $0x60] sm:$0xff] %vm2266, %v3696
        %5010 = vst.msk [vmem:[#allocation5 + $0x68] sm:$0xff] %vm2266, %v3697
        %5011 = vst.msk [vmem:[#allocation5 + $0x70] sm:$0xff] %vm2266, %v3698
        %5012 = vst.msk [vmem:[#allocation5 + $0x78] sm:$0xff] %vm2266, %v3699
        %5013 = vst.msk [vmem:[#allocation5 + $0x80] sm:$0xff] %vm2266, %v3700
        %5014 = vst.msk [vmem:[#allocation5 + $0x88] sm:$0xff] %vm2266, %v3701
        %5015 = vst.msk [vmem:[#allocation5 + $0x90] sm:$0xff] %vm2266, %v3702
        %5016 = vst.msk [vmem:[#allocation5 + $0x98] sm:$0xff] %vm2266, %v3703
        %5017 = vst.msk [vmem:[#allocation5 + $0xa0] sm:$0xff] %vm2266, %v3704
        %5018 = vst.msk [vmem:[#allocation5 + $0xa8] sm:$0xff] %vm2266, %v3705
        %5019 = vst.msk [vmem:[#allocation5 + $0xb0] sm:$0xff] %vm2266, %v3706
        %5020 = vst.msk [vmem:[#allocation5 + $0xb8] sm:$0xff] %vm2266, %v3707
        %5021 = vst.msk [vmem:[#allocation5 + $0xc0] sm:$0xff] %vm2266, %v3708
        %5022 = vst.msk [vmem:[#allocation5 + $0xc8] sm:$0xff] %vm2266, %v3709
        %5023 = vst.msk [vmem:[#allocation5 + $0xd0] sm:$0xff] %vm2266, %v3710
        %5024 = vst.msk [vmem:[#allocation5 + $0xd8] sm:$0xff] %vm2266, %v3711
        %5025 = vst.msk [vmem:[#allocation5 + $0xe0] sm:$0xff] %vm2266, %v3712
        %5026 = vst.msk [vmem:[#allocation5 + $0xe8] sm:$0xff] %vm2266, %v3713
        %5027 = vst.msk [vmem:[#allocation5 + $0xf0] sm:$0xff] %vm2266, %v3714
        %5028 = vst.msk [vmem:[#allocation5 + $0xf8] sm:$0xff] %vm2266, %v3715
        %p5029 = scmp.eq.s32.totalorder %s22, 1
        // Predicated region
        $region64: #{attention_digae_forward.4} parent=54 // pred_check
          %p5030 = pneg %p5029
        $region65: #{attention_digae_forward.4} parent=54 // pred_check_branch
          %5032 = sbr.rel (%p5030) target = $region67
        $region66: #{attention_digae_forward.4} parent=54 // pred_region
          %v5033 = vld [vmem:[#allocation3] sm:$0xff]
          %v5034 = vld [vmem:[#allocation3 + $0x8] sm:$0xff]
          %v5035 = vld [vmem:[#allocation3 + $0x10] sm:$0xff]
          %v5036 = vld [vmem:[#allocation3 + $0x18] sm:$0xff]
          %v5037 = vld [vmem:[#allocation3 + $0x20] sm:$0xff]
          %v5038 = vld [vmem:[#allocation3 + $0x28] sm:$0xff]
          %v5039 = vld [vmem:[#allocation3 + $0x30] sm:$0xff]
          %v5040 = vld [vmem:[#allocation3 + $0x38] sm:$0xff]
          %v5041 = vld [vmem:[#allocation3 + $0x40] sm:$0xff]
          %v5042 = vld [vmem:[#allocation3 + $0x48] sm:$0xff]
          %v5043 = vld [vmem:[#allocation3 + $0x50] sm:$0xff]
          %v5044 = vld [vmem:[#allocation3 + $0x58] sm:$0xff]
          %v5045 = vld [vmem:[#allocation3 + $0x60] sm:$0xff]
          %v5046 = vld [vmem:[#allocation3 + $0x68] sm:$0xff]
          %v5047 = vld [vmem:[#allocation3 + $0x70] sm:$0xff]
          %v5048 = vld [vmem:[#allocation3 + $0x78] sm:$0xff]
          %v5049 = vld [vmem:[#allocation3 + $0x80] sm:$0xff]
          %v5050 = vld [vmem:[#allocation3 + $0x88] sm:$0xff]
          %v5051 = vld [vmem:[#allocation3 + $0x90] sm:$0xff]
          %v5052 = vld [vmem:[#allocation3 + $0x98] sm:$0xff]
          %v5053 = vld [vmem:[#allocation3 + $0xa0] sm:$0xff]
          %v5054 = vld [vmem:[#allocation3 + $0xa8] sm:$0xff]
          %v5055 = vld [vmem:[#allocation3 + $0xb0] sm:$0xff]
          %v5056 = vld [vmem:[#allocation3 + $0xb8] sm:$0xff]
          %v5057 = vld [vmem:[#allocation3 + $0xc0] sm:$0xff]
          %v5058 = vld [vmem:[#allocation3 + $0xc8] sm:$0xff]
          %v5059 = vld [vmem:[#allocation3 + $0xd0] sm:$0xff]
          %v5060 = vld [vmem:[#allocation3 + $0xd8] sm:$0xff]
          %v5061 = vld [vmem:[#allocation3 + $0xe0] sm:$0xff]
          %v5062 = vld [vmem:[#allocation3 + $0xe8] sm:$0xff]
          %v5063 = vld [vmem:[#allocation3 + $0xf0] sm:$0xff]
          %v5064 = vld [vmem:[#allocation3 + $0xf8] sm:$0xff]
          %v5065 = vrcp.pop %v5033
          %v5066 = vrcp.pop %v5034
          %v5067 = vrcp.pop %v5035
          %v5068 = vrcp.pop %v5036
          %v5069 = vrcp.pop %v5037
          %v5070 = vrcp.pop %v5038
          %v5071 = vrcp.pop %v5039
          %v5072 = vrcp.pop %v5040
          %v5073 = vrcp.pop %v5041
          %v5074 = vrcp.pop %v5042
          %v5075 = vrcp.pop %v5043
          %v5076 = vrcp.pop %v5044
          %v5077 = vrcp.pop %v5045
          %v5078 = vrcp.pop %v5046
          %v5079 = vrcp.pop %v5047
          %v5080 = vrcp.pop %v5048
          %v5081 = vrcp.pop %v5049
          %v5082 = vrcp.pop %v5050
          %v5083 = vrcp.pop %v5051
          %v5084 = vrcp.pop %v5052
          %v5085 = vrcp.pop %v5053
          %v5086 = vrcp.pop %v5054
          %v5087 = vrcp.pop %v5055
          %v5088 = vrcp.pop %v5056
          %v5089 = vrcp.pop %v5057
          %v5090 = vrcp.pop %v5058
          %v5091 = vrcp.pop %v5059
          %v5092 = vrcp.pop %v5060
          %v5093 = vrcp.pop %v5061
          %v5094 = vrcp.pop %v5062
          %v5095 = vrcp.pop %v5063
          %v5096 = vrcp.pop %v5064
          %v5097 = vmul.f32 %v5033, %v5065
          %v5098 = vmul.f32 %v5034, %v5066
          %v5099 = vmul.f32 %v5035, %v5067
          %v5100 = vmul.f32 %v5036, %v5068
          %v5101 = vmul.f32 %v5037, %v5069
          %v5102 = vmul.f32 %v5038, %v5070
          %v5103 = vmul.f32 %v5039, %v5071
          %v5104 = vmul.f32 %v5040, %v5072
          %v5105 = vmul.f32 %v5041, %v5073
          %v5106 = vmul.f32 %v5042, %v5074
          %v5107 = vmul.f32 %v5043, %v5075
          %v5108 = vmul.f32 %v5044, %v5076
          %v5109 = vmul.f32 %v5045, %v5077
          %v5110 = vmul.f32 %v5046, %v5078
          %v5111 = vmul.f32 %v5047, %v5079
          %v5112 = vmul.f32 %v5048, %v5080
          %v5113 = vmul.f32 %v5049, %v5081
          %v5114 = vmul.f32 %v5050, %v5082
          %v5115 = vmul.f32 %v5051, %v5083
          %v5116 = vmul.f32 %v5052, %v5084
          %v5117 = vmul.f32 %v5053, %v5085
          %v5118 = vmul.f32 %v5054, %v5086
          %v5119 = vmul.f32 %v5055, %v5087
          %v5120 = vmul.f32 %v5056, %v5088
          %v5121 = vmul.f32 %v5057, %v5089
          %v5122 = vmul.f32 %v5058, %v5090
          %v5123 = vmul.f32 %v5059, %v5091
          %v5124 = vmul.f32 %v5060, %v5092
          %v5125 = vmul.f32 %v5061, %v5093
          %v5126 = vmul.f32 %v5062, %v5094
          %v5127 = vmul.f32 %v5063, %v5095
          %v5128 = vmul.f32 %v5064, %v5096
          %v5129 = vsub.f32 2.0, %v5097
          %v5130 = vsub.f32 2.0, %v5098
          %v5131 = vsub.f32 2.0, %v5099
          %v5132 = vsub.f32 2.0, %v5100
          %v5133 = vsub.f32 2.0, %v5101
          %v5134 = vsub.f32 2.0, %v5102
          %v5135 = vsub.f32 2.0, %v5103
          %v5136 = vsub.f32 2.0, %v5104
          %v5137 = vsub.f32 2.0, %v5105
          %v5138 = vsub.f32 2.0, %v5106
          %v5139 = vsub.f32 2.0, %v5107
          %v5140 = vsub.f32 2.0, %v5108
          %v5141 = vsub.f32 2.0, %v5109
          %v5142 = vsub.f32 2.0, %v5110
          %v5143 = vsub.f32 2.0, %v5111
          %v5144 = vsub.f32 2.0, %v5112
          %v5145 = vsub.f32 2.0, %v5113
          %v5146 = vsub.f32 2.0, %v5114
          %v5147 = vsub.f32 2.0, %v5115
          %v5148 = vsub.f32 2.0, %v5116
          %v5149 = vsub.f32 2.0, %v5117
          %v5150 = vsub.f32 2.0, %v5118
          %v5151 = vsub.f32 2.0, %v5119
          %v5152 = vsub.f32 2.0, %v5120
          %v5153 = vsub.f32 2.0, %v5121
          %v5154 = vsub.f32 2.0, %v5122
          %v5155 = vsub.f32 2.0, %v5123
          %v5156 = vsub.f32 2.0, %v5124
          %v5157 = vsub.f32 2.0, %v5125
          %v5158 = vsub.f32 2.0, %v5126
          %v5159 = vsub.f32 2.0, %v5127
          %v5160 = vsub.f32 2.0, %v5128
          %v5161 = vmul.f32 %v5065, %v5129
          %v5162 = vmul.f32 %v5066, %v5130
          %v5163 = vmul.f32 %v5067, %v5131
          %v5164 = vmul.f32 %v5068, %v5132
          %v5165 = vmul.f32 %v5069, %v5133
          %v5166 = vmul.f32 %v5070, %v5134
          %v5167 = vmul.f32 %v5071, %v5135
          %v5168 = vmul.f32 %v5072, %v5136
          %v5169 = vmul.f32 %v5073, %v5137
          %v5170 = vmul.f32 %v5074, %v5138
          %v5171 = vmul.f32 %v5075, %v5139
          %v5172 = vmul.f32 %v5076, %v5140
          %v5173 = vmul.f32 %v5077, %v5141
          %v5174 = vmul.f32 %v5078, %v5142
          %v5175 = vmul.f32 %v5079, %v5143
          %v5176 = vmul.f32 %v5080, %v5144
          %v5177 = vmul.f32 %v5081, %v5145
          %v5178 = vmul.f32 %v5082, %v5146
          %v5179 = vmul.f32 %v5083, %v5147
          %v5180 = vmul.f32 %v5084, %v5148
          %v5181 = vmul.f32 %v5085, %v5149
          %v5182 = vmul.f32 %v5086, %v5150
          %v5183 = vmul.f32 %v5087, %v5151
          %v5184 = vmul.f32 %v5088, %v5152
          %v5185 = vmul.f32 %v5089, %v5153
          %v5186 = vmul.f32 %v5090, %v5154
          %v5187 = vmul.f32 %v5091, %v5155
          %v5188 = vmul.f32 %v5092, %v5156
          %v5189 = vmul.f32 %v5093, %v5157
          %v5190 = vmul.f32 %v5094, %v5158
          %v5191 = vmul.f32 %v5095, %v5159
          %v5192 = vmul.f32 %v5096, %v5160
          %v5193 = vld [vmem:[#allocation4] sm:$0xff]
          %v5194 = vld [vmem:[#allocation4 + $0x8] sm:$0xff]
          %v5195 = vld [vmem:[#allocation4 + $0x10] sm:$0xff]
          %v5196 = vld [vmem:[#allocation4 + $0x18] sm:$0xff]
          %v5197 = vld [vmem:[#allocation4 + $0x20] sm:$0xff]
          %v5198 = vld [vmem:[#allocation4 + $0x28] sm:$0xff]
          %v5199 = vld [vmem:[#allocation4 + $0x30] sm:$0xff]
          %v5200 = vld [vmem:[#allocation4 + $0x38] sm:$0xff]
          %v5201 = vld [vmem:[#allocation4 + $0x40] sm:$0xff]
          %v5202 = vld [vmem:[#allocation4 + $0x48] sm:$0xff]
          %v5203 = vld [vmem:[#allocation4 + $0x50] sm:$0xff]
          %v5204 = vld [vmem:[#allocation4 + $0x58] sm:$0xff]
          %v5205 = vld [vmem:[#allocation4 + $0x60] sm:$0xff]
          %v5206 = vld [vmem:[#allocation4 + $0x68] sm:$0xff]
          %v5207 = vld [vmem:[#allocation4 + $0x70] sm:$0xff]
          %v5208 = vld [vmem:[#allocation4 + $0x78] sm:$0xff]
          %v5209 = vld [vmem:[#allocation4 + $0x80] sm:$0xff]
          %v5210 = vld [vmem:[#allocation4 + $0x88] sm:$0xff]
          %v5211 = vld [vmem:[#allocation4 + $0x90] sm:$0xff]
          %v5212 = vld [vmem:[#allocation4 + $0x98] sm:$0xff]
          %v5213 = vld [vmem:[#allocation4 + $0xa0] sm:$0xff]
          %v5214 = vld [vmem:[#allocation4 + $0xa8] sm:$0xff]
          %v5215 = vld [vmem:[#allocation4 + $0xb0] sm:$0xff]
          %v5216 = vld [vmem:[#allocation4 + $0xb8] sm:$0xff]
          %v5217 = vld [vmem:[#allocation4 + $0xc0] sm:$0xff]
          %v5218 = vld [vmem:[#allocation4 + $0xc8] sm:$0xff]
          %v5219 = vld [vmem:[#allocation4 + $0xd0] sm:$0xff]
          %v5220 = vld [vmem:[#allocation4 + $0xd8] sm:$0xff]
          %v5221 = vld [vmem:[#allocation4 + $0xe0] sm:$0xff]
          %v5222 = vld [vmem:[#allocation4 + $0xe8] sm:$0xff]
          %v5223 = vld [vmem:[#allocation4 + $0xf0] sm:$0xff]
          %v5224 = vld [vmem:[#allocation4 + $0xf8] sm:$0xff]
          %5226 = vset.pattern.permute.xlu0 0
          %5227 = vperm.xlu0 %5226, %v5161
          %v5228 = vpop.permute.xlu0 %5227
          %5231 = vset.pattern.permute.xlu0 0
          %5232 = vperm.xlu0 %5231, %v5162
          %v5233 = vpop.permute.xlu0 %5232
          %5236 = vset.pattern.permute.xlu0 0
          %5237 = vperm.xlu0 %5236, %v5163
          %v5238 = vpop.permute.xlu0 %5237
          %5241 = vset.pattern.permute.xlu0 0
          %5242 = vperm.xlu0 %5241, %v5164
          %v5243 = vpop.permute.xlu0 %5242
          %5246 = vset.pattern.permute.xlu0 0
          %5247 = vperm.xlu0 %5246, %v5165
          %v5248 = vpop.permute.xlu0 %5247
          %5251 = vset.pattern.permute.xlu0 0
          %5252 = vperm.xlu0 %5251, %v5166
          %v5253 = vpop.permute.xlu0 %5252
          %5256 = vset.pattern.permute.xlu0 0
          %5257 = vperm.xlu0 %5256, %v5167
          %v5258 = vpop.permute.xlu0 %5257
          %5261 = vset.pattern.permute.xlu0 0
          %5262 = vperm.xlu0 %5261, %v5168
          %v5263 = vpop.permute.xlu0 %5262
          %5266 = vset.pattern.permute.xlu0 0
          %5267 = vperm.xlu0 %5266, %v5169
          %v5268 = vpop.permute.xlu0 %5267
          %5271 = vset.pattern.permute.xlu0 0
          %5272 = vperm.xlu0 %5271, %v5170
          %v5273 = vpop.permute.xlu0 %5272
          %5276 = vset.pattern.permute.xlu0 0
          %5277 = vperm.xlu0 %5276, %v5171
          %v5278 = vpop.permute.xlu0 %5277
          %5281 = vset.pattern.permute.xlu0 0
          %5282 = vperm.xlu0 %5281, %v5172
          %v5283 = vpop.permute.xlu0 %5282
          %5286 = vset.pattern.permute.xlu0 0
          %5287 = vperm.xlu0 %5286, %v5173
          %v5288 = vpop.permute.xlu0 %5287
          %5291 = vset.pattern.permute.xlu0 0
          %5292 = vperm.xlu0 %5291, %v5174
          %v5293 = vpop.permute.xlu0 %5292
          %5296 = vset.pattern.permute.xlu0 0
          %5297 = vperm.xlu0 %5296, %v5175
          %v5298 = vpop.permute.xlu0 %5297
          %5301 = vset.pattern.permute.xlu0 0
          %5302 = vperm.xlu0 %5301, %v5176
          %v5303 = vpop.permute.xlu0 %5302
          %5306 = vset.pattern.permute.xlu0 0
          %5307 = vperm.xlu0 %5306, %v5177
          %v5308 = vpop.permute.xlu0 %5307
          %5311 = vset.pattern.permute.xlu0 0
          %5312 = vperm.xlu0 %5311, %v5178
          %v5313 = vpop.permute.xlu0 %5312
          %5316 = vset.pattern.permute.xlu0 0
          %5317 = vperm.xlu0 %5316, %v5179
          %v5318 = vpop.permute.xlu0 %5317
          %5321 = vset.pattern.permute.xlu0 0
          %5322 = vperm.xlu0 %5321, %v5180
          %v5323 = vpop.permute.xlu0 %5322
          %5326 = vset.pattern.permute.xlu0 0
          %5327 = vperm.xlu0 %5326, %v5181
          %v5328 = vpop.permute.xlu0 %5327
          %5331 = vset.pattern.permute.xlu0 0
          %5332 = vperm.xlu0 %5331, %v5182
          %v5333 = vpop.permute.xlu0 %5332
          %5336 = vset.pattern.permute.xlu0 0
          %5337 = vperm.xlu0 %5336, %v5183
          %v5338 = vpop.permute.xlu0 %5337
          %5341 = vset.pattern.permute.xlu0 0
          %5342 = vperm.xlu0 %5341, %v5184
          %v5343 = vpop.permute.xlu0 %5342
          %5346 = vset.pattern.permute.xlu0 0
          %5347 = vperm.xlu0 %5346, %v5185
          %v5348 = vpop.permute.xlu0 %5347
          %5351 = vset.pattern.permute.xlu0 0
          %5352 = vperm.xlu0 %5351, %v5186
          %v5353 = vpop.permute.xlu0 %5352
          %5356 = vset.pattern.permute.xlu0 0
          %5357 = vperm.xlu0 %5356, %v5187
          %v5358 = vpop.permute.xlu0 %5357
          %5361 = vset.pattern.permute.xlu0 0
          %5362 = vperm.xlu0 %5361, %v5188
          %v5363 = vpop.permute.xlu0 %5362
          %5366 = vset.pattern.permute.xlu0 0
          %5367 = vperm.xlu0 %5366, %v5189
          %v5368 = vpop.permute.xlu0 %5367
          %5371 = vset.pattern.permute.xlu0 0
          %5372 = vperm.xlu0 %5371, %v5190
          %v5373 = vpop.permute.xlu0 %5372
          %5376 = vset.pattern.permute.xlu0 0
          %5377 = vperm.xlu0 %5376, %v5191
          %v5378 = vpop.permute.xlu0 %5377
          %5381 = vset.pattern.permute.xlu0 0
          %5382 = vperm.xlu0 %5381, %v5192
          %v5383 = vpop.permute.xlu0 %5382
          %v5385 = vmul.f32 %v5193, %v5228
          %v5386 = vmul.f32 %v5194, %v5233
          %v5387 = vmul.f32 %v5195, %v5238
          %v5388 = vmul.f32 %v5196, %v5243
          %v5389 = vmul.f32 %v5197, %v5248
          %v5390 = vmul.f32 %v5198, %v5253
          %v5391 = vmul.f32 %v5199, %v5258
          %v5392 = vmul.f32 %v5200, %v5263
          %v5393 = vmul.f32 %v5201, %v5268
          %v5394 = vmul.f32 %v5202, %v5273
          %v5395 = vmul.f32 %v5203, %v5278
          %v5396 = vmul.f32 %v5204, %v5283
          %v5397 = vmul.f32 %v5205, %v5288
          %v5398 = vmul.f32 %v5206, %v5293
          %v5399 = vmul.f32 %v5207, %v5298
          %v5400 = vmul.f32 %v5208, %v5303
          %v5401 = vmul.f32 %v5209, %v5308
          %v5402 = vmul.f32 %v5210, %v5313
          %v5403 = vmul.f32 %v5211, %v5318
          %v5404 = vmul.f32 %v5212, %v5323
          %v5405 = vmul.f32 %v5213, %v5328
          %v5406 = vmul.f32 %v5214, %v5333
          %v5407 = vmul.f32 %v5215, %v5338
          %v5408 = vmul.f32 %v5216, %v5343
          %v5409 = vmul.f32 %v5217, %v5348
          %v5410 = vmul.f32 %v5218, %v5353
          %v5411 = vmul.f32 %v5219, %v5358
          %v5412 = vmul.f32 %v5220, %v5363
          %v5413 = vmul.f32 %v5221, %v5368
          %v5414 = vmul.f32 %v5222, %v5373
          %v5415 = vmul.f32 %v5223, %v5378
          %v5416 = vmul.f32 %v5224, %v5383
          %v5417 = vmax.f32 %v5385, 0.0
          %v5418 = vmax.f32 %v5386, 0.0
          %v5419 = vmax.f32 %v5387, 0.0
          %v5420 = vmax.f32 %v5388, 0.0
          %v5421 = vmax.f32 %v5389, 0.0
          %v5422 = vmax.f32 %v5390, 0.0
          %v5423 = vmax.f32 %v5391, 0.0
          %v5424 = vmax.f32 %v5392, 0.0
          %v5425 = vmax.f32 %v5393, 0.0
          %v5426 = vmax.f32 %v5394, 0.0
          %v5427 = vmax.f32 %v5395, 0.0
          %v5428 = vmax.f32 %v5396, 0.0
          %v5429 = vmax.f32 %v5397, 0.0
          %v5430 = vmax.f32 %v5398, 0.0
          %v5431 = vmax.f32 %v5399, 0.0
          %v5432 = vmax.f32 %v5400, 0.0
          %v5433 = vmax.f32 %v5401, 0.0
          %v5434 = vmax.f32 %v5402, 0.0
          %v5435 = vmax.f32 %v5403, 0.0
          %v5436 = vmax.f32 %v5404, 0.0
          %v5437 = vmax.f32 %v5405, 0.0
          %v5438 = vmax.f32 %v5406, 0.0
          %v5439 = vmax.f32 %v5407, 0.0
          %v5440 = vmax.f32 %v5408, 0.0
          %v5441 = vmax.f32 %v5409, 0.0
          %v5442 = vmax.f32 %v5410, 0.0
          %v5443 = vmax.f32 %v5411, 0.0
          %v5444 = vmax.f32 %v5412, 0.0
          %v5445 = vmax.f32 %v5413, 0.0
          %v5446 = vmax.f32 %v5414, 0.0
          %v5447 = vmax.f32 %v5415, 0.0
          %v5448 = vmax.f32 %v5416, 0.0
          %v5449 = vpack.c.bf16 %v5418, %v5417
          %v5450 = vpack.c.bf16 %v5420, %v5419
          %v5451 = vpack.c.bf16 %v5422, %v5421
          %v5452 = vpack.c.bf16 %v5424, %v5423
          %v5453 = vpack.c.bf16 %v5426, %v5425
          %v5454 = vpack.c.bf16 %v5428, %v5427
          %v5455 = vpack.c.bf16 %v5430, %v5429
          %v5456 = vpack.c.bf16 %v5432, %v5431
          %v5457 = vpack.c.bf16 %v5434, %v5433
          %v5458 = vpack.c.bf16 %v5436, %v5435
          %v5459 = vpack.c.bf16 %v5438, %v5437
          %v5460 = vpack.c.bf16 %v5440, %v5439
          %v5461 = vpack.c.bf16 %v5442, %v5441
          %v5462 = vpack.c.bf16 %v5444, %v5443
          %v5463 = vpack.c.bf16 %v5446, %v5445
          %v5464 = vpack.c.bf16 %v5448, %v5447
          %v5481 = vunpack.c.l.b16 %v5449
          %v5482 = vunpack.c.h.b16 %v5449
          %v5483 = vunpack.c.l.b16 %v5450
          %v5484 = vunpack.c.h.b16 %v5450
          %v5485 = vunpack.c.l.b16 %v5451
          %v5486 = vunpack.c.h.b16 %v5451
          %v5487 = vunpack.c.l.b16 %v5452
          %v5488 = vunpack.c.h.b16 %v5452
          %v5489 = vunpack.c.l.b16 %v5453
          %v5490 = vunpack.c.h.b16 %v5453
          %v5491 = vunpack.c.l.b16 %v5454
          %v5492 = vunpack.c.h.b16 %v5454
          %v5493 = vunpack.c.l.b16 %v5455
          %v5494 = vunpack.c.h.b16 %v5455
          %v5495 = vunpack.c.l.b16 %v5456
          %v5496 = vunpack.c.h.b16 %v5456
          %v5497 = vunpack.c.l.b16 %v5457
          %v5498 = vunpack.c.h.b16 %v5457
          %v5499 = vunpack.c.l.b16 %v5458
          %v5500 = vunpack.c.h.b16 %v5458
          %v5501 = vunpack.c.l.b16 %v5459
          %v5502 = vunpack.c.h.b16 %v5459
          %v5503 = vunpack.c.l.b16 %v5460
          %v5504 = vunpack.c.h.b16 %v5460
          %v5505 = vunpack.c.l.b16 %v5461
          %v5506 = vunpack.c.h.b16 %v5461
          %v5507 = vunpack.c.l.b16 %v5462
          %v5508 = vunpack.c.h.b16 %v5462
          %v5509 = vunpack.c.l.b16 %v5463
          %v5510 = vunpack.c.h.b16 %v5463
          %v5511 = vunpack.c.l.b16 %v5464
          %v5512 = vunpack.c.h.b16 %v5464
          %v5513 = vpack.c.b16 %v5481, %v5481
          %v5514 = vpack.c.b16 %v5482, %v5482
          %v5515 = vpack.c.b16 %v5483, %v5483
          %v5516 = vpack.c.b16 %v5484, %v5484
          %v5517 = vpack.c.b16 %v5485, %v5485
          %v5518 = vpack.c.b16 %v5486, %v5486
          %v5519 = vpack.c.b16 %v5487, %v5487
          %v5520 = vpack.c.b16 %v5488, %v5488
          %v5521 = vpack.c.b16 %v5489, %v5489
          %v5522 = vpack.c.b16 %v5490, %v5490
          %v5523 = vpack.c.b16 %v5491, %v5491
          %v5524 = vpack.c.b16 %v5492, %v5492
          %v5525 = vpack.c.b16 %v5493, %v5493
          %v5526 = vpack.c.b16 %v5494, %v5494
          %v5527 = vpack.c.b16 %v5495, %v5495
          %v5528 = vpack.c.b16 %v5496, %v5496
          %v5529 = vpack.c.b16 %v5497, %v5497
          %v5530 = vpack.c.b16 %v5498, %v5498
          %v5531 = vpack.c.b16 %v5499, %v5499
          %v5532 = vpack.c.b16 %v5500, %v5500
          %v5533 = vpack.c.b16 %v5501, %v5501
          %v5534 = vpack.c.b16 %v5502, %v5502
          %v5535 = vpack.c.b16 %v5503, %v5503
          %v5536 = vpack.c.b16 %v5504, %v5504
          %v5537 = vpack.c.b16 %v5505, %v5505
          %v5538 = vpack.c.b16 %v5506, %v5506
          %v5539 = vpack.c.b16 %v5507, %v5507
          %v5540 = vpack.c.b16 %v5508, %v5508
          %v5541 = vpack.c.b16 %v5509, %v5509
          %v5542 = vpack.c.b16 %v5510, %v5510
          %v5543 = vpack.c.b16 %v5511, %v5511
          %v5544 = vpack.c.b16 %v5512, %v5512
          %5577 = vst [vmem:[%s370] sm:$0xf] %v5513
          %5578 = vst [vmem:[%s370 + $0x4] sm:$0xf] %v5514
          %5579 = vst [vmem:[%s370 + $0x8] sm:$0xf] %v5515
          %5580 = vst [vmem:[%s370 + $0xc] sm:$0xf] %v5516
          %5581 = vst [vmem:[%s370 + $0x10] sm:$0xf] %v5517
          %5582 = vst [vmem:[%s370 + $0x14] sm:$0xf] %v5518
          %5583 = vst [vmem:[%s370 + $0x18] sm:$0xf] %v5519
          %5584 = vst [vmem:[%s370 + $0x1c] sm:$0xf] %v5520
          %5585 = vst [vmem:[%s370 + $0x20] sm:$0xf] %v5521
          %5586 = vst [vmem:[%s370 + $0x24] sm:$0xf] %v5522
          %5587 = vst [vmem:[%s370 + $0x28] sm:$0xf] %v5523
          %5588 = vst [vmem:[%s370 + $0x2c] sm:$0xf] %v5524
          %5589 = vst [vmem:[%s370 + $0x30] sm:$0xf] %v5525
          %5590 = vst [vmem:[%s370 + $0x34] sm:$0xf] %v5526
          %5591 = vst [vmem:[%s370 + $0x38] sm:$0xf] %v5527
          %5592 = vst [vmem:[%s370 + $0x3c] sm:$0xf] %v5528
          %5593 = vst [vmem:[%s370 + $0x40] sm:$0xf] %v5529
          %5594 = vst [vmem:[%s370 + $0x44] sm:$0xf] %v5530
          %5595 = vst [vmem:[%s370 + $0x48] sm:$0xf] %v5531
          %5596 = vst [vmem:[%s370 + $0x4c] sm:$0xf] %v5532
          %5597 = vst [vmem:[%s370 + $0x50] sm:$0xf] %v5533
          %5598 = vst [vmem:[%s370 + $0x54] sm:$0xf] %v5534
          %5599 = vst [vmem:[%s370 + $0x58] sm:$0xf] %v5535
          %5600 = vst [vmem:[%s370 + $0x5c] sm:$0xf] %v5536
          %5601 = vst [vmem:[%s370 + $0x60] sm:$0xf] %v5537
          %5602 = vst [vmem:[%s370 + $0x64] sm:$0xf] %v5538
          %5603 = vst [vmem:[%s370 + $0x68] sm:$0xf] %v5539
          %5604 = vst [vmem:[%s370 + $0x6c] sm:$0xf] %v5540
          %5605 = vst [vmem:[%s370 + $0x70] sm:$0xf] %v5541
          %5606 = vst [vmem:[%s370 + $0x74] sm:$0xf] %v5542
          %5607 = vst [vmem:[%s370 + $0x78] sm:$0xf] %v5543
          %5608 = vst [vmem:[%s370 + $0x7c] sm:$0xf] %v5544
          %v5609 = vld [vmem:[#allocation6] sm:$0xff]
          %v5610 = vld [vmem:[#allocation6 + $0x8] sm:$0xff]
          %v5611 = vld [vmem:[#allocation6 + $0x10] sm:$0xff]
          %v5612 = vld [vmem:[#allocation6 + $0x18] sm:$0xff]
          %v5613 = vld [vmem:[#allocation6 + $0x20] sm:$0xff]
          %v5614 = vld [vmem:[#allocation6 + $0x28] sm:$0xff]
          %v5615 = vld [vmem:[#allocation6 + $0x30] sm:$0xff]
          %v5616 = vld [vmem:[#allocation6 + $0x38] sm:$0xff]
          %v5617 = vld [vmem:[#allocation6 + $0x40] sm:$0xff]
          %v5618 = vld [vmem:[#allocation6 + $0x48] sm:$0xff]
          %v5619 = vld [vmem:[#allocation6 + $0x50] sm:$0xff]
          %v5620 = vld [vmem:[#allocation6 + $0x58] sm:$0xff]
          %v5621 = vld [vmem:[#allocation6 + $0x60] sm:$0xff]
          %v5622 = vld [vmem:[#allocation6 + $0x68] sm:$0xff]
          %v5623 = vld [vmem:[#allocation6 + $0x70] sm:$0xff]
          %v5624 = vld [vmem:[#allocation6 + $0x78] sm:$0xff]
          %v5625 = vld [vmem:[#allocation6 + $0x80] sm:$0xff]
          %v5626 = vld [vmem:[#allocation6 + $0x88] sm:$0xff]
          %v5627 = vld [vmem:[#allocation6 + $0x90] sm:$0xff]
          %v5628 = vld [vmem:[#allocation6 + $0x98] sm:$0xff]
          %v5629 = vld [vmem:[#allocation6 + $0xa0] sm:$0xff]
          %v5630 = vld [vmem:[#allocation6 + $0xa8] sm:$0xff]
          %v5631 = vld [vmem:[#allocation6 + $0xb0] sm:$0xff]
          %v5632 = vld [vmem:[#allocation6 + $0xb8] sm:$0xff]
          %v5633 = vld [vmem:[#allocation6 + $0xc0] sm:$0xff]
          %v5634 = vld [vmem:[#allocation6 + $0xc8] sm:$0xff]
          %v5635 = vld [vmem:[#allocation6 + $0xd0] sm:$0xff]
          %v5636 = vld [vmem:[#allocation6 + $0xd8] sm:$0xff]
          %v5637 = vld [vmem:[#allocation6 + $0xe0] sm:$0xff]
          %v5638 = vld [vmem:[#allocation6 + $0xe8] sm:$0xff]
          %v5639 = vld [vmem:[#allocation6 + $0xf0] sm:$0xff]
          %v5640 = vld [vmem:[#allocation6 + $0xf8] sm:$0xff]
          %v5641 = vrcp.pop %v5609
          %v5642 = vrcp.pop %v5610
          %v5643 = vrcp.pop %v5611
          %v5644 = vrcp.pop %v5612
          %v5645 = vrcp.pop %v5613
          %v5646 = vrcp.pop %v5614
          %v5647 = vrcp.pop %v5615
          %v5648 = vrcp.pop %v5616
          %v5649 = vrcp.pop %v5617
          %v5650 = vrcp.pop %v5618
          %v5651 = vrcp.pop %v5619
          %v5652 = vrcp.pop %v5620
          %v5653 = vrcp.pop %v5621
          %v5654 = vrcp.pop %v5622
          %v5655 = vrcp.pop %v5623
          %v5656 = vrcp.pop %v5624
          %v5657 = vrcp.pop %v5625
          %v5658 = vrcp.pop %v5626
          %v5659 = vrcp.pop %v5627
          %v5660 = vrcp.pop %v5628
          %v5661 = vrcp.pop %v5629
          %v5662 = vrcp.pop %v5630
          %v5663 = vrcp.pop %v5631
          %v5664 = vrcp.pop %v5632
          %v5665 = vrcp.pop %v5633
          %v5666 = vrcp.pop %v5634
          %v5667 = vrcp.pop %v5635
          %v5668 = vrcp.pop %v5636
          %v5669 = vrcp.pop %v5637
          %v5670 = vrcp.pop %v5638
          %v5671 = vrcp.pop %v5639
          %v5672 = vrcp.pop %v5640
          %v5673 = vmul.f32 %v5609, %v5641
          %v5674 = vmul.f32 %v5610, %v5642
          %v5675 = vmul.f32 %v5611, %v5643
          %v5676 = vmul.f32 %v5612, %v5644
          %v5677 = vmul.f32 %v5613, %v5645
          %v5678 = vmul.f32 %v5614, %v5646
          %v5679 = vmul.f32 %v5615, %v5647
          %v5680 = vmul.f32 %v5616, %v5648
          %v5681 = vmul.f32 %v5617, %v5649
          %v5682 = vmul.f32 %v5618, %v5650
          %v5683 = vmul.f32 %v5619, %v5651
          %v5684 = vmul.f32 %v5620, %v5652
          %v5685 = vmul.f32 %v5621, %v5653
          %v5686 = vmul.f32 %v5622, %v5654
          %v5687 = vmul.f32 %v5623, %v5655
          %v5688 = vmul.f32 %v5624, %v5656
          %v5689 = vmul.f32 %v5625, %v5657
          %v5690 = vmul.f32 %v5626, %v5658
          %v5691 = vmul.f32 %v5627, %v5659
          %v5692 = vmul.f32 %v5628, %v5660
          %v5693 = vmul.f32 %v5629, %v5661
          %v5694 = vmul.f32 %v5630, %v5662
          %v5695 = vmul.f32 %v5631, %v5663
          %v5696 = vmul.f32 %v5632, %v5664
          %v5697 = vmul.f32 %v5633, %v5665
          %v5698 = vmul.f32 %v5634, %v5666
          %v5699 = vmul.f32 %v5635, %v5667
          %v5700 = vmul.f32 %v5636, %v5668
          %v5701 = vmul.f32 %v5637, %v5669
          %v5702 = vmul.f32 %v5638, %v5670
          %v5703 = vmul.f32 %v5639, %v5671
          %v5704 = vmul.f32 %v5640, %v5672
          %v5705 = vsub.f32 2.0, %v5673
          %v5706 = vsub.f32 2.0, %v5674
          %v5707 = vsub.f32 2.0, %v5675
          %v5708 = vsub.f32 2.0, %v5676
          %v5709 = vsub.f32 2.0, %v5677
          %v5710 = vsub.f32 2.0, %v5678
          %v5711 = vsub.f32 2.0, %v5679
          %v5712 = vsub.f32 2.0, %v5680
          %v5713 = vsub.f32 2.0, %v5681
          %v5714 = vsub.f32 2.0, %v5682
          %v5715 = vsub.f32 2.0, %v5683
          %v5716 = vsub.f32 2.0, %v5684
          %v5717 = vsub.f32 2.0, %v5685
          %v5718 = vsub.f32 2.0, %v5686
          %v5719 = vsub.f32 2.0, %v5687
          %v5720 = vsub.f32 2.0, %v5688
          %v5721 = vsub.f32 2.0, %v5689
          %v5722 = vsub.f32 2.0, %v5690
          %v5723 = vsub.f32 2.0, %v5691
          %v5724 = vsub.f32 2.0, %v5692
          %v5725 = vsub.f32 2.0, %v5693
          %v5726 = vsub.f32 2.0, %v5694
          %v5727 = vsub.f32 2.0, %v5695
          %v5728 = vsub.f32 2.0, %v5696
          %v5729 = vsub.f32 2.0, %v5697
          %v5730 = vsub.f32 2.0, %v5698
          %v5731 = vsub.f32 2.0, %v5699
          %v5732 = vsub.f32 2.0, %v5700
          %v5733 = vsub.f32 2.0, %v5701
          %v5734 = vsub.f32 2.0, %v5702
          %v5735 = vsub.f32 2.0, %v5703
          %v5736 = vsub.f32 2.0, %v5704
          %v5737 = vmul.f32 %v5641, %v5705
          %v5738 = vmul.f32 %v5642, %v5706
          %v5739 = vmul.f32 %v5643, %v5707
          %v5740 = vmul.f32 %v5644, %v5708
          %v5741 = vmul.f32 %v5645, %v5709
          %v5742 = vmul.f32 %v5646, %v5710
          %v5743 = vmul.f32 %v5647, %v5711
          %v5744 = vmul.f32 %v5648, %v5712
          %v5745 = vmul.f32 %v5649, %v5713
          %v5746 = vmul.f32 %v5650, %v5714
          %v5747 = vmul.f32 %v5651, %v5715
          %v5748 = vmul.f32 %v5652, %v5716
          %v5749 = vmul.f32 %v5653, %v5717
          %v5750 = vmul.f32 %v5654, %v5718
          %v5751 = vmul.f32 %v5655, %v5719
          %v5752 = vmul.f32 %v5656, %v5720
          %v5753 = vmul.f32 %v5657, %v5721
          %v5754 = vmul.f32 %v5658, %v5722
          %v5755 = vmul.f32 %v5659, %v5723
          %v5756 = vmul.f32 %v5660, %v5724
          %v5757 = vmul.f32 %v5661, %v5725
          %v5758 = vmul.f32 %v5662, %v5726
          %v5759 = vmul.f32 %v5663, %v5727
          %v5760 = vmul.f32 %v5664, %v5728
          %v5761 = vmul.f32 %v5665, %v5729
          %v5762 = vmul.f32 %v5666, %v5730
          %v5763 = vmul.f32 %v5667, %v5731
          %v5764 = vmul.f32 %v5668, %v5732
          %v5765 = vmul.f32 %v5669, %v5733
          %v5766 = vmul.f32 %v5670, %v5734
          %v5767 = vmul.f32 %v5671, %v5735
          %v5768 = vmul.f32 %v5672, %v5736
          %v5769 = vld [vmem:[#allocation7] sm:$0xff]
          %v5770 = vld [vmem:[#allocation7 + $0x8] sm:$0xff]
          %v5771 = vld [vmem:[#allocation7 + $0x10] sm:$0xff]
          %v5772 = vld [vmem:[#allocation7 + $0x18] sm:$0xff]
          %v5773 = vld [vmem:[#allocation7 + $0x20] sm:$0xff]
          %v5774 = vld [vmem:[#allocation7 + $0x28] sm:$0xff]
          %v5775 = vld [vmem:[#allocation7 + $0x30] sm:$0xff]
          %v5776 = vld [vmem:[#allocation7 + $0x38] sm:$0xff]
          %v5777 = vld [vmem:[#allocation7 + $0x40] sm:$0xff]
          %v5778 = vld [vmem:[#allocation7 + $0x48] sm:$0xff]
          %v5779 = vld [vmem:[#allocation7 + $0x50] sm:$0xff]
          %v5780 = vld [vmem:[#allocation7 + $0x58] sm:$0xff]
          %v5781 = vld [vmem:[#allocation7 + $0x60] sm:$0xff]
          %v5782 = vld [vmem:[#allocation7 + $0x68] sm:$0xff]
          %v5783 = vld [vmem:[#allocation7 + $0x70] sm:$0xff]
          %v5784 = vld [vmem:[#allocation7 + $0x78] sm:$0xff]
          %v5785 = vld [vmem:[#allocation7 + $0x80] sm:$0xff]
          %v5786 = vld [vmem:[#allocation7 + $0x88] sm:$0xff]
          %v5787 = vld [vmem:[#allocation7 + $0x90] sm:$0xff]
          %v5788 = vld [vmem:[#allocation7 + $0x98] sm:$0xff]
          %v5789 = vld [vmem:[#allocation7 + $0xa0] sm:$0xff]
          %v5790 = vld [vmem:[#allocation7 + $0xa8] sm:$0xff]
          %v5791 = vld [vmem:[#allocation7 + $0xb0] sm:$0xff]
          %v5792 = vld [vmem:[#allocation7 + $0xb8] sm:$0xff]
          %v5793 = vld [vmem:[#allocation7 + $0xc0] sm:$0xff]
          %v5794 = vld [vmem:[#allocation7 + $0xc8] sm:$0xff]
          %v5795 = vld [vmem:[#allocation7 + $0xd0] sm:$0xff]
          %v5796 = vld [vmem:[#allocation7 + $0xd8] sm:$0xff]
          %v5797 = vld [vmem:[#allocation7 + $0xe0] sm:$0xff]
          %v5798 = vld [vmem:[#allocation7 + $0xe8] sm:$0xff]
          %v5799 = vld [vmem:[#allocation7 + $0xf0] sm:$0xff]
          %v5800 = vld [vmem:[#allocation7 + $0xf8] sm:$0xff]
          %5802 = vset.pattern.permute.xlu0 0
          %5803 = vperm.xlu0 %5802, %v5737
          %v5804 = vpop.permute.xlu0 %5803
          %5807 = vset.pattern.permute.xlu0 0
          %5808 = vperm.xlu0 %5807, %v5738
          %v5809 = vpop.permute.xlu0 %5808
          %5812 = vset.pattern.permute.xlu0 0
          %5813 = vperm.xlu0 %5812, %v5739
          %v5814 = vpop.permute.xlu0 %5813
          %5817 = vset.pattern.permute.xlu0 0
          %5818 = vperm.xlu0 %5817, %v5740
          %v5819 = vpop.permute.xlu0 %5818
          %5822 = vset.pattern.permute.xlu0 0
          %5823 = vperm.xlu0 %5822, %v5741
          %v5824 = vpop.permute.xlu0 %5823
          %5827 = vset.pattern.permute.xlu0 0
          %5828 = vperm.xlu0 %5827, %v5742
          %v5829 = vpop.permute.xlu0 %5828
          %5832 = vset.pattern.permute.xlu0 0
          %5833 = vperm.xlu0 %5832, %v5743
          %v5834 = vpop.permute.xlu0 %5833
          %5837 = vset.pattern.permute.xlu0 0
          %5838 = vperm.xlu0 %5837, %v5744
          %v5839 = vpop.permute.xlu0 %5838
          %5842 = vset.pattern.permute.xlu0 0
          %5843 = vperm.xlu0 %5842, %v5745
          %v5844 = vpop.permute.xlu0 %5843
          %5847 = vset.pattern.permute.xlu0 0
          %5848 = vperm.xlu0 %5847, %v5746
          %v5849 = vpop.permute.xlu0 %5848
          %5852 = vset.pattern.permute.xlu0 0
          %5853 = vperm.xlu0 %5852, %v5747
          %v5854 = vpop.permute.xlu0 %5853
          %5857 = vset.pattern.permute.xlu0 0
          %5858 = vperm.xlu0 %5857, %v5748
          %v5859 = vpop.permute.xlu0 %5858
          %5862 = vset.pattern.permute.xlu0 0
          %5863 = vperm.xlu0 %5862, %v5749
          %v5864 = vpop.permute.xlu0 %5863
          %5867 = vset.pattern.permute.xlu0 0
          %5868 = vperm.xlu0 %5867, %v5750
          %v5869 = vpop.permute.xlu0 %5868
          %5872 = vset.pattern.permute.xlu0 0
          %5873 = vperm.xlu0 %5872, %v5751
          %v5874 = vpop.permute.xlu0 %5873
          %5877 = vset.pattern.permute.xlu0 0
          %5878 = vperm.xlu0 %5877, %v5752
          %v5879 = vpop.permute.xlu0 %5878
          %5882 = vset.pattern.permute.xlu0 0
          %5883 = vperm.xlu0 %5882, %v5753
          %v5884 = vpop.permute.xlu0 %5883
          %5887 = vset.pattern.permute.xlu0 0
          %5888 = vperm.xlu0 %5887, %v5754
          %v5889 = vpop.permute.xlu0 %5888
          %5892 = vset.pattern.permute.xlu0 0
          %5893 = vperm.xlu0 %5892, %v5755
          %v5894 = vpop.permute.xlu0 %5893
          %5897 = vset.pattern.permute.xlu0 0
          %5898 = vperm.xlu0 %5897, %v5756
          %v5899 = vpop.permute.xlu0 %5898
          %5902 = vset.pattern.permute.xlu0 0
          %5903 = vperm.xlu0 %5902, %v5757
          %v5904 = vpop.permute.xlu0 %5903
          %5907 = vset.pattern.permute.xlu0 0
          %5908 = vperm.xlu0 %5907, %v5758
          %v5909 = vpop.permute.xlu0 %5908
          %5912 = vset.pattern.permute.xlu0 0
          %5913 = vperm.xlu0 %5912, %v5759
          %v5914 = vpop.permute.xlu0 %5913
          %5917 = vset.pattern.permute.xlu0 0
          %5918 = vperm.xlu0 %5917, %v5760
          %v5919 = vpop.permute.xlu0 %5918
          %5922 = vset.pattern.permute.xlu0 0
          %5923 = vperm.xlu0 %5922, %v5761
          %v5924 = vpop.permute.xlu0 %5923
          %5927 = vset.pattern.permute.xlu0 0
          %5928 = vperm.xlu0 %5927, %v5762
          %v5929 = vpop.permute.xlu0 %5928
          %5932 = vset.pattern.permute.xlu0 0
          %5933 = vperm.xlu0 %5932, %v5763
          %v5934 = vpop.permute.xlu0 %5933
          %5937 = vset.pattern.permute.xlu0 0
          %5938 = vperm.xlu0 %5937, %v5764
          %v5939 = vpop.permute.xlu0 %5938
          %5942 = vset.pattern.permute.xlu0 0
          %5943 = vperm.xlu0 %5942, %v5765
          %v5944 = vpop.permute.xlu0 %5943
          %5947 = vset.pattern.permute.xlu0 0
          %5948 = vperm.xlu0 %5947, %v5766
          %v5949 = vpop.permute.xlu0 %5948
          %5952 = vset.pattern.permute.xlu0 0
          %5953 = vperm.xlu0 %5952, %v5767
          %v5954 = vpop.permute.xlu0 %5953
          %5957 = vset.pattern.permute.xlu0 0
          %5958 = vperm.xlu0 %5957, %v5768
          %v5959 = vpop.permute.xlu0 %5958
          %v5961 = vmul.f32 %v5769, %v5804
          %v5962 = vmul.f32 %v5770, %v5809
          %v5963 = vmul.f32 %v5771, %v5814
          %v5964 = vmul.f32 %v5772, %v5819
          %v5965 = vmul.f32 %v5773, %v5824
          %v5966 = vmul.f32 %v5774, %v5829
          %v5967 = vmul.f32 %v5775, %v5834
          %v5968 = vmul.f32 %v5776, %v5839
          %v5969 = vmul.f32 %v5777, %v5844
          %v5970 = vmul.f32 %v5778, %v5849
          %v5971 = vmul.f32 %v5779, %v5854
          %v5972 = vmul.f32 %v5780, %v5859
          %v5973 = vmul.f32 %v5781, %v5864
          %v5974 = vmul.f32 %v5782, %v5869
          %v5975 = vmul.f32 %v5783, %v5874
          %v5976 = vmul.f32 %v5784, %v5879
          %v5977 = vmul.f32 %v5785, %v5884
          %v5978 = vmul.f32 %v5786, %v5889
          %v5979 = vmul.f32 %v5787, %v5894
          %v5980 = vmul.f32 %v5788, %v5899
          %v5981 = vmul.f32 %v5789, %v5904
          %v5982 = vmul.f32 %v5790, %v5909
          %v5983 = vmul.f32 %v5791, %v5914
          %v5984 = vmul.f32 %v5792, %v5919
          %v5985 = vmul.f32 %v5793, %v5924
          %v5986 = vmul.f32 %v5794, %v5929
          %v5987 = vmul.f32 %v5795, %v5934
          %v5988 = vmul.f32 %v5796, %v5939
          %v5989 = vmul.f32 %v5797, %v5944
          %v5990 = vmul.f32 %v5798, %v5949
          %v5991 = vmul.f32 %v5799, %v5954
          %v5992 = vmul.f32 %v5800, %v5959
          %v5993 = vmax.f32 %v5961, 0.0
          %v5994 = vmax.f32 %v5962, 0.0
          %v5995 = vmax.f32 %v5963, 0.0
          %v5996 = vmax.f32 %v5964, 0.0
          %v5997 = vmax.f32 %v5965, 0.0
          %v5998 = vmax.f32 %v5966, 0.0
          %v5999 = vmax.f32 %v5967, 0.0
          %v6000 = vmax.f32 %v5968, 0.0
          %v6001 = vmax.f32 %v5969, 0.0
          %v6002 = vmax.f32 %v5970, 0.0
          %v6003 = vmax.f32 %v5971, 0.0
          %v6004 = vmax.f32 %v5972, 0.0
          %v6005 = vmax.f32 %v5973, 0.0
          %v6006 = vmax.f32 %v5974, 0.0
          %v6007 = vmax.f32 %v5975, 0.0
          %v6008 = vmax.f32 %v5976, 0.0
          %v6009 = vmax.f32 %v5977, 0.0
          %v6010 = vmax.f32 %v5978, 0.0
          %v6011 = vmax.f32 %v5979, 0.0
          %v6012 = vmax.f32 %v5980, 0.0
          %v6013 = vmax.f32 %v5981, 0.0
          %v6014 = vmax.f32 %v5982, 0.0
          %v6015 = vmax.f32 %v5983, 0.0
          %v6016 = vmax.f32 %v5984, 0.0
          %v6017 = vmax.f32 %v5985, 0.0
          %v6018 = vmax.f32 %v5986, 0.0
          %v6019 = vmax.f32 %v5987, 0.0
          %v6020 = vmax.f32 %v5988, 0.0
          %v6021 = vmax.f32 %v5989, 0.0
          %v6022 = vmax.f32 %v5990, 0.0
          %v6023 = vmax.f32 %v5991, 0.0
          %v6024 = vmax.f32 %v5992, 0.0
          %v6025 = vpack.c.bf16 %v5994, %v5993
          %v6026 = vpack.c.bf16 %v5996, %v5995
          %v6027 = vpack.c.bf16 %v5998, %v5997
          %v6028 = vpack.c.bf16 %v6000, %v5999
          %v6029 = vpack.c.bf16 %v6002, %v6001
          %v6030 = vpack.c.bf16 %v6004, %v6003
          %v6031 = vpack.c.bf16 %v6006, %v6005
          %v6032 = vpack.c.bf16 %v6008, %v6007
          %v6033 = vpack.c.bf16 %v6010, %v6009
          %v6034 = vpack.c.bf16 %v6012, %v6011
          %v6035 = vpack.c.bf16 %v6014, %v6013
          %v6036 = vpack.c.bf16 %v6016, %v6015
          %v6037 = vpack.c.bf16 %v6018, %v6017
          %v6038 = vpack.c.bf16 %v6020, %v6019
          %v6039 = vpack.c.bf16 %v6022, %v6021
          %v6040 = vpack.c.bf16 %v6024, %v6023
          %v6057 = vunpack.c.l.b16 %v6025
          %v6058 = vunpack.c.h.b16 %v6025
          %v6059 = vunpack.c.l.b16 %v6026
          %v6060 = vunpack.c.h.b16 %v6026
          %v6061 = vunpack.c.l.b16 %v6027
          %v6062 = vunpack.c.h.b16 %v6027
          %v6063 = vunpack.c.l.b16 %v6028
          %v6064 = vunpack.c.h.b16 %v6028
          %v6065 = vunpack.c.l.b16 %v6029
          %v6066 = vunpack.c.h.b16 %v6029
          %v6067 = vunpack.c.l.b16 %v6030
          %v6068 = vunpack.c.h.b16 %v6030
          %v6069 = vunpack.c.l.b16 %v6031
          %v6070 = vunpack.c.h.b16 %v6031
          %v6071 = vunpack.c.l.b16 %v6032
          %v6072 = vunpack.c.h.b16 %v6032
          %v6073 = vunpack.c.l.b16 %v6033
          %v6074 = vunpack.c.h.b16 %v6033
          %v6075 = vunpack.c.l.b16 %v6034
          %v6076 = vunpack.c.h.b16 %v6034
          %v6077 = vunpack.c.l.b16 %v6035
          %v6078 = vunpack.c.h.b16 %v6035
          %v6079 = vunpack.c.l.b16 %v6036
          %v6080 = vunpack.c.h.b16 %v6036
          %v6081 = vunpack.c.l.b16 %v6037
          %v6082 = vunpack.c.h.b16 %v6037
          %v6083 = vunpack.c.l.b16 %v6038
          %v6084 = vunpack.c.h.b16 %v6038
          %v6085 = vunpack.c.l.b16 %v6039
          %v6086 = vunpack.c.h.b16 %v6039
          %v6087 = vunpack.c.l.b16 %v6040
          %v6088 = vunpack.c.h.b16 %v6040
          %v6089 = vpack.c.b16 %v6057, %v6057
          %v6090 = vpack.c.b16 %v6058, %v6058
          %v6091 = vpack.c.b16 %v6059, %v6059
          %v6092 = vpack.c.b16 %v6060, %v6060
          %v6093 = vpack.c.b16 %v6061, %v6061
          %v6094 = vpack.c.b16 %v6062, %v6062
          %v6095 = vpack.c.b16 %v6063, %v6063
          %v6096 = vpack.c.b16 %v6064, %v6064
          %v6097 = vpack.c.b16 %v6065, %v6065
          %v6098 = vpack.c.b16 %v6066, %v6066
          %v6099 = vpack.c.b16 %v6067, %v6067
          %v6100 = vpack.c.b16 %v6068, %v6068
          %v6101 = vpack.c.b16 %v6069, %v6069
          %v6102 = vpack.c.b16 %v6070, %v6070
          %v6103 = vpack.c.b16 %v6071, %v6071
          %v6104 = vpack.c.b16 %v6072, %v6072
          %v6105 = vpack.c.b16 %v6073, %v6073
          %v6106 = vpack.c.b16 %v6074, %v6074
          %v6107 = vpack.c.b16 %v6075, %v6075
          %v6108 = vpack.c.b16 %v6076, %v6076
          %v6109 = vpack.c.b16 %v6077, %v6077
          %v6110 = vpack.c.b16 %v6078, %v6078
          %v6111 = vpack.c.b16 %v6079, %v6079
          %v6112 = vpack.c.b16 %v6080, %v6080
          %v6113 = vpack.c.b16 %v6081, %v6081
          %v6114 = vpack.c.b16 %v6082, %v6082
          %v6115 = vpack.c.b16 %v6083, %v6083
          %v6116 = vpack.c.b16 %v6084, %v6084
          %v6117 = vpack.c.b16 %v6085, %v6085
          %v6118 = vpack.c.b16 %v6086, %v6086
          %v6119 = vpack.c.b16 %v6087, %v6087
          %v6120 = vpack.c.b16 %v6088, %v6088
          %6153 = vst [vmem:[%s376] sm:$0xf] %v6089
          %6154 = vst [vmem:[%s376 + $0x4] sm:$0xf] %v6090
          %6155 = vst [vmem:[%s376 + $0x8] sm:$0xf] %v6091
          %6156 = vst [vmem:[%s376 + $0xc] sm:$0xf] %v6092
          %6157 = vst [vmem:[%s376 + $0x10] sm:$0xf] %v6093
          %6158 = vst [vmem:[%s376 + $0x14] sm:$0xf] %v6094
          %6159 = vst [vmem:[%s376 + $0x18] sm:$0xf] %v6095
          %6160 = vst [vmem:[%s376 + $0x1c] sm:$0xf] %v6096
          %6161 = vst [vmem:[%s376 + $0x20] sm:$0xf] %v6097
          %6162 = vst [vmem:[%s376 + $0x24] sm:$0xf] %v6098
          %6163 = vst [vmem:[%s376 + $0x28] sm:$0xf] %v6099
          %6164 = vst [vmem:[%s376 + $0x2c] sm:$0xf] %v6100
          %6165 = vst [vmem:[%s376 + $0x30] sm:$0xf] %v6101
          %6166 = vst [vmem:[%s376 + $0x34] sm:$0xf] %v6102
          %6167 = vst [vmem:[%s376 + $0x38] sm:$0xf] %v6103
          %6168 = vst [vmem:[%s376 + $0x3c] sm:$0xf] %v6104
          %6169 = vst [vmem:[%s376 + $0x40] sm:$0xf] %v6105
          %6170 = vst [vmem:[%s376 + $0x44] sm:$0xf] %v6106
          %6171 = vst [vmem:[%s376 + $0x48] sm:$0xf] %v6107
          %6172 = vst [vmem:[%s376 + $0x4c] sm:$0xf] %v6108
          %6173 = vst [vmem:[%s376 + $0x50] sm:$0xf] %v6109
          %6174 = vst [vmem:[%s376 + $0x54] sm:$0xf] %v6110
          %6175 = vst [vmem:[%s376 + $0x58] sm:$0xf] %v6111
          %6176 = vst [vmem:[%s376 + $0x5c] sm:$0xf] %v6112
          %6177 = vst [vmem:[%s376 + $0x60] sm:$0xf] %v6113
          %6178 = vst [vmem:[%s376 + $0x64] sm:$0xf] %v6114
          %6179 = vst [vmem:[%s376 + $0x68] sm:$0xf] %v6115
          %6180 = vst [vmem:[%s376 + $0x6c] sm:$0xf] %v6116
          %6181 = vst [vmem:[%s376 + $0x70] sm:$0xf] %v6117
          %6182 = vst [vmem:[%s376 + $0x74] sm:$0xf] %v6118
          %6183 = vst [vmem:[%s376 + $0x78] sm:$0xf] %v6119
          %6184 = vst [vmem:[%s376 + $0x7c] sm:$0xf] %v6120
        $region67: #{attention_digae_forward.4} parent=54 // pred_fallthru
          _
        %s6185 = smul.u32 32, %s21
        %p6186 = scmp.lt.s32.totalorder %s6185, 63
        %s6187 = scalar_select %p6186, %s6185, 63
        %s6188 = smul.addr %s6187, 4
        %s6189 = scalar_lea.vmem %s4, %s6188
        %s6190 = smul.u32 32, %s21
        %p6191 = scmp.lt.s32.totalorder %s6190, 63
        %s6192 = scalar_select %p6191, %s6190, 63
        %s6193 = smul.addr %s6192, 4
        %s6194 = scalar_lea.vmem %s5, %s6193
        // Predicated region
        $region68: #{attention_digae_forward.4} parent=54 // pred_check
          %p6195 = pneg %p153
        $region69: #{attention_digae_forward.4} parent=54 // pred_check_branch
          %6197 = sbr.rel (%p6195) target = $region71
        $region70: #{attention_digae_forward.4} parent=54 // pred_region
          %s6198 = smul.u32 32, %s21
        $region71: #{attention_digae_forward.4} parent=54 // pred_fallthru
          _
        // Predicated region
        $region72: #{attention_digae_forward.4} parent=54 // pred_check
          %p6199 = pneg %p179
        $region73: #{attention_digae_forward.4} parent=54 // pred_check_branch
          %6201 = sbr.rel (%p6199) target = $region75
        $region74: #{attention_digae_forward.4} parent=54 // pred_region
          %s6202 = smul.u32 32, %s21
        $region75: #{attention_digae_forward.4} parent=54 // pred_fallthru
          _
      $region55: #{attention_digae_forward.4} parent=5 // pred_fallthru
        _
      %p6203 = scmp.le.s32.totalorder 2, %s12
      // Predicated region
      $region76: #{attention_digae_forward.4} parent=5 // pred_check
        %p6204 = pneg %p6203
      $region77: #{attention_digae_forward.4} parent=5 // pred_check_branch
        %6206 = sbr.rel (%p6204) target = $region79
      $region78: #{attention_digae_forward.4} parent=5 // pred_region
        %s6207 = ssub.s32 %s12, 2
        // Predicated region
        $region80: #{attention_digae_forward.4} parent=78 // pred_check
          %p6208 = pneg %p159
        $region81: #{attention_digae_forward.4} parent=78 // pred_check_branch
          %6210 = sbr.rel (%p6208) target = $region83
        $region82: #{attention_digae_forward.4} parent=78 // pred_region
          %s6211 = smul.u32 32, %s23
          %p6212 = scmp.lt.s32.totalorder %s6211, 63
          %s6213 = scalar_select %p6212, %s6211, 63
          %s6214 = smul.addr %s6213, 4
          %s6215 = scalar_lea.vmem %s4, %s6214
        $region83: #{attention_digae_forward.4} parent=78 // pred_fallthru
          _
        // Predicated region
        $region84: #{attention_digae_forward.4} parent=78 // pred_check
          %p6216 = pneg %p185
        $region85: #{attention_digae_forward.4} parent=78 // pred_check_branch
          %6218 = sbr.rel (%p6216) target = $region87
        $region86: #{attention_digae_forward.4} parent=78 // pred_region
          %s6219 = smul.u32 32, %s23
          %p6220 = scmp.lt.s32.totalorder %s6219, 63
          %s6221 = scalar_select %p6220, %s6219, 63
          %s6222 = smul.addr %s6221, 4
          %s6223 = scalar_lea.vmem %s5, %s6222
        $region87: #{attention_digae_forward.4} parent=78 // pred_fallthru
          _
      $region79: #{attention_digae_forward.4} parent=5 // pred_fallthru
        _
    $region6: #{attention_digae_forward.4} parent=1 // loop_footer
      %s16 = sadd.s32 1, %s12
    $region7: #{attention_digae_forward.4} parent=1 // loop_footer_branch
      %11 = sbr.rel target = $region3
    $region8: #{attention_digae_forward.4} parent=1 // loop_exit
      _

</llo_original>
